<compile_context>
chip_gen: v5e
topology: v5e:2x2
jax: 0.10.0
libtpu: 0.0.40
codegen_flags: <defaults>
</compile_context>

<pallas_src>
import functools

import numpy as np
import jax
import jax.numpy as jnp
from jax import lax
from jax.experimental import pallas as pl
from jax.experimental.pallas import tpu as pltpu


def _round_up(x, m):
    return (x + m - 1) // m * m


# ----------------------------------------------------------------------------
# Fused double-conv kernel: whole batch in one grid step.
# ----------------------------------------------------------------------------
def _double_conv_kernel(x_ref, w_ref, o_ref, pad_ref, patch_ref, *, k, pad):
    # x_ref:     (N, D, H, W*C)         unpadded input (f32), channels in lanes
    # w_ref:     (k*k*W*C, W*C)         K-stacked block-band weights (compute dtype)
    # o_ref:     (N, D, H, W*C)         lane-dense f32 output
    # pad_ref:   (N, D+2p, Hp_al, W*C)  f32 scratch: zero-haloed padded activations
    # patch_ref: (N*D*H, k*k*W*C)       compute-dtype scratch: im2col patch
    N, D, H, WC = x_ref.shape
    Dp = pad_ref.shape[1]
    Hp_al = pad_ref.shape[2]
    MM = N * D * H

    # One-time zeroing of ONLY the halo rows/cols the k*k taps actually read
    # (the interior is fully overwritten each pass; the scratch persists across
    # grid steps, so this runs exactly once).
    @pl.when(pl.program_id(0) == 0)
    def _zero_halo():
        zd = jnp.zeros((N, pad, Hp_al, WC), pad_ref.dtype)
        pad_ref[:, 0:pad, :, :] = zd                   # leading D halo planes
        pad_ref[:, pad + D:Dp, :, :] = zd              # trailing D halo planes
        zh = jnp.zeros((N, Dp, pad, WC), pad_ref.dtype)
        pad_ref[:, :, 0:pad, :] = zh                   # leading H halo columns
        pad_ref[:, :, pad + H:2 * pad + H, :] = zh     # trailing H halo columns

    # In-kernel 'same' padding: unpadded batch lands in the interior (no jnp.pad
    # / extra HBM pass in the wrapper).
    pad_ref[:, pad:pad + D, pad:pad + H, :] = x_ref[...].astype(pad_ref.dtype)

    def conv_pass():
        # im2col: K-stack all k*k (kd, kh) taps.  Each (W*C)-wide chunk is stored
        # at a lane offset that's a multiple of 128 -> unmasked, lane-dense stores.
        for kd in range(k):
            for kh in range(k):
                t = kd * k + kh
                patch_ref[:, t * WC:(t + 1) * WC] = (
                    pad_ref[:, kd:kd + D, kh:kh + H, :]
                    .reshape(MM, WC).astype(patch_ref.dtype))
        # ONE MXU matmul per conv application: (N*D*H, k*k*WC) @ (k*k*WC, WC),
        # f32 accumulation inside the MXU.
        return jnp.dot(patch_ref[...], w_ref[...],
                       preferred_element_type=jnp.float32)

    # conv pass 1: padded input -> intermediate (kept in f32; halo stays zero,
    # so the same padded scratch is reused directly for pass 2).
    y = conv_pass()
    pad_ref[:, pad:pad + D, pad:pad + H, :] = y.reshape(N, D, H, WC)

    # conv pass 2: intermediate -> output (same shared weights).
    o_ref[...] = conv_pass().reshape(N, D, H, WC).astype(o_ref.dtype)


# ----------------------------------------------------------------------------
# Weight preparation: (Cout, Cin, k, k, k) -> (k*k*W*Cin, W*Cout) K-stacked
# block-band matrix.  Row = ((kd*k+kh)*W + w_in)*Cin + c_in, col = w_out*Cout + c_out.
# The w-taps, Cin->Cout mixing and 'same' zero-padding along W are baked in
# (out-of-range w_in rows stay zero).
# ----------------------------------------------------------------------------
def build_band_weights(w_oidhw, W_spatial):
    w = np.asarray(w_oidhw, dtype=np.float32)
    Co, Ci, k = w.shape[0], w.shape[1], w.shape[2]
    pad = (k - 1) // 2
    M = np.zeros((k * k, W_spatial * Ci, W_spatial * Co), np.float32)
    for kd in range(k):
        for kh in range(k):
            for kw_ in range(k):
                blk = w[:, :, kd, kh, kw_].T            # (Cin, Cout)
                for wo in range(W_spatial):
                    wi = wo + kw_ - pad
                    if 0 <= wi < W_spatial:
                        M[kd * k + kh,
                          wi * Ci:(wi + 1) * Ci,
                          wo * Co:(wo + 1) * Co] = blk
    return jnp.asarray(M.reshape(k * k * W_spatial * Ci, W_spatial * Co))


# ----------------------------------------------------------------------------
# Forward wrapper: NCDHW in, NCDHW out (matches the PyTorch module).
# ----------------------------------------------------------------------------
def linear_kernel_double_forward(x_ncdhw, w_oidhw, *, kernel_size,
                                 compute_dtype=jnp.bfloat16):
    N, C, D, H, W = x_ncdhw.shape
    Co, Ci = w_oidhw.shape[0], w_oidhw.shape[1]
    assert Ci == C and Co == C, "same conv applied twice => input_nc == output_nc"
    k = kernel_size
    assert k % 2 == 1, "odd kernel_size expected ('same' spatial output)"
    pad = (k - 1) // 2
    WC = W * C
    KK = k * k * WC
    # NOTE: W*C a multiple of 128 keeps every load/store lane-dense & unmasked
    # (here 16*8 = 128); other sizes remain correct but use masked ops.

    band_w = build_band_weights(w_oidhw, W).astype(compute_dtype)

    # NCDHW -> (N, D, H, W*C): channels folded into the lane axis; NO padding here.
    x = jnp.transpose(x_ncdhw, (0, 2, 3, 4, 1)).reshape(N, D, H, WC).astype(jnp.float32)

    Dp = D + 2 * pad
    Hp_al = _round_up(H + 2 * pad, 8)   # sublane-aligned padded-H scratch extent

    out = pl.pallas_call(
        functools.partial(_double_conv_kernel, k=k, pad=pad),
        out_shape=jax.ShapeDtypeStruct((N, D, H, WC), jnp.float32),
        grid_spec=pltpu.PrefetchScalarGridSpec(
            num_scalar_prefetch=0,
            grid=(1,),   # whole batch in one step (M = N*D*H): no per-step overhead
                         # on single-TC v5e/v6e; amortizes MXU weight push / drain.
            in_specs=[
                pl.BlockSpec((N, D, H, WC), lambda i: (0, 0, 0, 0)),
                # grid-invariant weights (single grid step => effectively
                # single-buffered; no need for pipeline_mode here).
                pl.BlockSpec((KK, WC), lambda i: (0, 0)),
            ],
            out_specs=pl.BlockSpec((N, D, H, WC), lambda i: (0, 0, 0, 0)),
            scratch_shapes=[
                pltpu.VMEM((N, Dp, Hp_al, WC), jnp.float32),   # padded activations
                pltpu.VMEM((N * D * H, KK), compute_dtype),    # im2col patch
            ],
        ),
        compiler_params=pltpu.CompilerParams(
            dimension_semantics=("arbitrary",)),
    )(x, band_w)

    out = out.reshape(N, D, H, W, C)
    return jnp.transpose(out, (0, 4, 1, 2, 3))    # back to NCDHW


# ----------------------------------------------------------------------------
# Pure-JAX reference (mirrors the PyTorch module) for correctness checking.
# ----------------------------------------------------------------------------
def reference_forward(x, w, kernel_size):
    pad = int(np.round((kernel_size - 1) / 2))
    dn = ("NCDHW", "OIDHW", "NCDHW")
    padding = [(pad, pad)] * 3
    y = lax.conv_general_dilated(x, w, (1, 1, 1), padding, dimension_numbers=dn,
                                 precision=lax.Precision.HIGHEST)
    y = lax.conv_general_dilated(y, w, (1, 1, 1), padding, dimension_numbers=dn,
                                 precision=lax.Precision.HIGHEST)
    return y


if __name__ == "__main__":
    # forward applies the SAME conv layer twice => input_nc must equal output_nc
    input_nc = output_nc = 8
    kernel_size = 3
    N, D, H, W = 2, 16, 16, 16        # W * C = 128 -> exactly one lane tile

    key = jax.random.PRNGKey(0)
    kx, kwt = jax.random.split(key)
    x = jax.random.normal(kx, (N, input_nc, D, H, W), jnp.float32)
    w = jax.random.normal(
        kwt, (output_nc, input_nc, kernel_size, kernel_size, kernel_size),
        jnp.float32) * 0.05

    ref = np.asarray(reference_forward(x, w, kernel_size))

    # Full-f32 MXU operands: matches the module semantics at tight tolerance.
    out_f32 = jax.block_until_ready(
        linear_kernel_double_forward(x, w, kernel_size=kernel_size,
                                     compute_dtype=jnp.float32))
    assert out_f32.shape == (N, output_nc, D, H, W), out_f32.shape
    np.testing.assert_allclose(np.asarray(out_f32), ref, rtol=1e-3, atol=1e-3)

    # bf16 MXU operands (f32 accumulation): the fast path on v6e/v7x.  Tolerance
    # widened to bf16-operand precision for the two chained 216-term reductions.
    out_bf16 = jax.block_until_ready(
        linear_kernel_double_forward(x, w, kernel_size=kernel_size,
                                     compute_dtype=jnp.bfloat16))
    assert out_bf16.shape == (N, output_nc, D, H, W), out_bf16.shape
    np.testing.assert_allclose(np.asarray(out_bf16), ref, rtol=2e-2, atol=2e-2)

    print("KERNEL_OK")
</pallas_src>

<mosaic_0001>
module attributes {stable_mosaic.version = 11 : i64} {
  func.func @_double_conv_kernel(%arg0: i32, %arg1: memref<2x16x16x128xf32, #tpu.memory_space<vmem>>, %arg2: memref<1152x128xf32, #tpu.memory_space<vmem>>, %arg3: memref<2x16x16x128xf32, #tpu.memory_space<vmem>>, %arg4: memref<2x18x24x128xf32, #tpu.memory_space<vmem>>, %arg5: memref<512x1152xf32, #tpu.memory_space<vmem>>) attributes {dimension_semantics = [#tpu.dimension_semantics<arbitrary>], iteration_bounds = array<i64: 1>, scalar_prefetch = 0 : i64, scratch_operands = 2 : i64, tpu.core_type = #tpu.core_type<tc>, window_params = [{pipeline_mode = #tpu.pipeline_mode<synchronous>, transform_indices = @transform_0, window_bounds = array<i64: 2, 16, 16, 128>}, {pipeline_mode = #tpu.pipeline_mode<synchronous>, transform_indices = @transform_1, window_bounds = array<i64: 1152, 128>}, {pipeline_mode = #tpu.pipeline_mode<synchronous>, transform_indices = @transform_2, window_bounds = array<i64: 2, 16, 16, 128>}]} {
    %c0_i32 = arith.constant 0 : i32
    %0 = arith.cmpi eq, %arg0, %c0_i32 : i32
    %1 = arith.extui %0 : i1 to i32
    %c0_i32_0 = arith.constant 0 : i32
    %2 = arith.cmpi ne, %1, %c0_i32_0 : i32
    scf.if %2 {
      %cst_123 = arith.constant 0.000000e+00 : f32
      %69 = vector.broadcast %cst_123 : f32 to vector<2x1x24x128xf32>
      %c0_124 = arith.constant 0 : index
      %c0_125 = arith.constant 0 : index
      %c0_126 = arith.constant 0 : index
      %c0_127 = arith.constant 0 : index
      %70 = vector.load %arg4[%c0_124, %c0_125, %c0_126, %c0_127] : memref<2x18x24x128xf32, #tpu.memory_space<vmem>>, vector<2x1x24x128xf32>
      tpu.vector_store %arg4[%c0_124, %c0_125, %c0_126, %c0_127], %69 {strides = array<i32>} : memref<2x18x24x128xf32, #tpu.memory_space<vmem>>, vector<2x1x24x128xf32>,
      %c0_128 = arith.constant 0 : index
      %c17 = arith.constant 17 : index
      %c0_129 = arith.constant 0 : index
      %c0_130 = arith.constant 0 : index
      %71 = vector.load %arg4[%c0_128, %c17, %c0_129, %c0_130] : memref<2x18x24x128xf32, #tpu.memory_space<vmem>>, vector<2x1x24x128xf32>
      tpu.vector_store %arg4[%c0_128, %c17, %c0_129, %c0_130], %69 {strides = array<i32>} : memref<2x18x24x128xf32, #tpu.memory_space<vmem>>, vector<2x1x24x128xf32>,
      %cst_131 = arith.constant 0.000000e+00 : f32
      %72 = vector.broadcast %cst_131 : f32 to vector<2x18x1x128xf32>
      %c0_132 = arith.constant 0 : index
      %c0_133 = arith.constant 0 : index
      %c0_134 = arith.constant 0 : index
      %c0_135 = arith.constant 0 : index
      %73 = vector.load %arg4[%c0_132, %c0_133, %c0_134, %c0_135] : memref<2x18x24x128xf32, #tpu.memory_space<vmem>>, vector<2x18x1x128xf32>
      tpu.vector_store %arg4[%c0_132, %c0_133, %c0_134, %c0_135], %72 {strides = array<i32>} : memref<2x18x24x128xf32, #tpu.memory_space<vmem>>, vector<2x18x1x128xf32>,
      %c0_136 = arith.constant 0 : index
      %c0_137 = arith.constant 0 : index
      %c17_138 = arith.constant 17 : index
      %c0_139 = arith.constant 0 : index
      %74 = vector.load %arg4[%c0_136, %c0_137, %c17_138, %c0_139] : memref<2x18x24x128xf32, #tpu.memory_space<vmem>>, vector<2x18x1x128xf32>
      tpu.vector_store %arg4[%c0_136, %c0_137, %c17_138, %c0_139], %72 {strides = array<i32>} : memref<2x18x24x128xf32, #tpu.memory_space<vmem>>, vector<2x18x1x128xf32>,
    } else {
    }
    %c0 = arith.constant 0 : index
    %c0_1 = arith.constant 0 : index
    %c0_2 = arith.constant 0 : index
    %c0_3 = arith.constant 0 : index
    %3 = vector.load %arg1[%c0, %c0_1, %c0_2, %c0_3] : memref<2x16x16x128xf32, #tpu.memory_space<vmem>>, vector<2x16x16x128xf32>
    %c0_4 = arith.constant 0 : index
    %c1 = arith.constant 1 : index
    %c1_5 = arith.constant 1 : index
    %c0_6 = arith.constant 0 : index
    %4 = vector.load %arg4[%c0_4, %c1, %c1_5, %c0_6] : memref<2x18x24x128xf32, #tpu.memory_space<vmem>>, vector<2x16x16x128xf32>
    tpu.vector_store %arg4[%c0_4, %c1, %c1_5, %c0_6], %3 {strides = array<i32>} : memref<2x18x24x128xf32, #tpu.memory_space<vmem>>, vector<2x16x16x128xf32>,
    %c0_7 = arith.constant 0 : index
    %c0_8 = arith.constant 0 : index
    %c0_9 = arith.constant 0 : index
    %c0_10 = arith.constant 0 : index
    %5 = vector.load %arg4[%c0_7, %c0_8, %c0_9, %c0_10] : memref<2x18x24x128xf32, #tpu.memory_space<vmem>>, vector<2x16x16x128xf32>
    %6 = vector.shape_cast %5 : vector<2x16x16x128xf32> to vector<512x128xf32>
    %c0_11 = arith.constant 0 : index
    %c0_12 = arith.constant 0 : index
    %7 = vector.load %arg5[%c0_11, %c0_12] : memref<512x1152xf32, #tpu.memory_space<vmem>>, vector<512x128xf32>
    tpu.vector_store %arg5[%c0_11, %c0_12], %6 {strides = array<i32>} : memref<512x1152xf32, #tpu.memory_space<vmem>>, vector<512x128xf32>,
    %c0_13 = arith.constant 0 : index
    %c0_14 = arith.constant 0 : index
    %c1_15 = arith.constant 1 : index
    %c0_16 = arith.constant 0 : index
    %8 = vector.load %arg4[%c0_13, %c0_14, %c1_15, %c0_16] : memref<2x18x24x128xf32, #tpu.memory_space<vmem>>, vector<2x16x16x128xf32>
    %9 = vector.shape_cast %8 : vector<2x16x16x128xf32> to vector<512x128xf32>
    %c0_17 = arith.constant 0 : index
    %c128 = arith.constant 128 : index
    %10 = vector.load %arg5[%c0_17, %c128] : memref<512x1152xf32, #tpu.memory_space<vmem>>, vector<512x128xf32>
    tpu.vector_store %arg5[%c0_17, %c128], %9 {strides = array<i32>} : memref<512x1152xf32, #tpu.memory_space<vmem>>, vector<512x128xf32>,
    %c0_18 = arith.constant 0 : index
    %c0_19 = arith.constant 0 : index
    %c2 = arith.constant 2 : index
    %c0_20 = arith.constant 0 : index
    %11 = vector.load %arg4[%c0_18, %c0_19, %c2, %c0_20] : memref<2x18x24x128xf32, #tpu.memory_space<vmem>>, vector<2x16x16x128xf32>
    %12 = vector.shape_cast %11 : vector<2x16x16x128xf32> to vector<512x128xf32>
    %c0_21 = arith.constant 0 : index
    %c256 = arith.constant 256 : index
    %13 = vector.load %arg5[%c0_21, %c256] : memref<512x1152xf32, #tpu.memory_space<vmem>>, vector<512x128xf32>
    tpu.vector_store %arg5[%c0_21, %c256], %12 {strides = array<i32>} : memref<512x1152xf32, #tpu.memory_space<vmem>>, vector<512x128xf32>,
    %c0_22 = arith.constant 0 : index
    %c1_23 = arith.constant 1 : index
    %c0_24 = arith.constant 0 : index
    %c0_25 = arith.constant 0 : index
    %14 = vector.load %arg4[%c0_22, %c1_23, %c0_24, %c0_25] : memref<2x18x24x128xf32, #tpu.memory_space<vmem>>, vector<2x16x16x128xf32>
    %15 = vector.shape_cast %14 : vector<2x16x16x128xf32> to vector<512x128xf32>
    %c0_26 = arith.constant 0 : index
    %c384 = arith.constant 384 : index
    %16 = vector.load %arg5[%c0_26, %c384] : memref<512x1152xf32, #tpu.memory_space<vmem>>, vector<512x128xf32>
    tpu.vector_store %arg5[%c0_26, %c384], %15 {strides = array<i32>} : memref<512x1152xf32, #tpu.memory_space<vmem>>, vector<512x128xf32>,
    %c0_27 = arith.constant 0 : index
    %c1_28 = arith.constant 1 : index
    %c1_29 = arith.constant 1 : index
    %c0_30 = arith.constant 0 : index
    %17 = vector.load %arg4[%c0_27, %c1_28, %c1_29, %c0_30] : memref<2x18x24x128xf32, #tpu.memory_space<vmem>>, vector<2x16x16x128xf32>
    %18 = vector.shape_cast %17 : vector<2x16x16x128xf32> to vector<512x128xf32>
    %c0_31 = arith.constant 0 : index
    %c512 = arith.constant 512 : index
    %19 = vector.load %arg5[%c0_31, %c512] : memref<512x1152xf32, #tpu.memory_space<vmem>>, vector<512x128xf32>
    tpu.vector_store %arg5[%c0_31, %c512], %18 {strides = array<i32>} : memref<512x1152xf32, #tpu.memory_space<vmem>>, vector<512x128xf32>,
    %c0_32 = arith.constant 0 : index
    %c1_33 = arith.constant 1 : index
    %c2_34 = arith.constant 2 : index
    %c0_35 = arith.constant 0 : index
    %20 = vector.load %arg4[%c0_32, %c1_33, %c2_34, %c0_35] : memref<2x18x24x128xf32, #tpu.memory_space<vmem>>, vector<2x16x16x128xf32>
    %21 = vector.shape_cast %20 : vector<2x16x16x128xf32> to vector<512x128xf32>
    %c0_36 = arith.constant 0 : index
    %c640 = arith.constant 640 : index
    %22 = vector.load %arg5[%c0_36, %c640] : memref<512x1152xf32, #tpu.memory_space<vmem>>, vector<512x128xf32>
    tpu.vector_store %arg5[%c0_36, %c640], %21 {strides = array<i32>} : memref<512x1152xf32, #tpu.memory_space<vmem>>, vector<512x128xf32>,
    %c0_37 = arith.constant 0 : index
    %c2_38 = arith.constant 2 : index
    %c0_39 = arith.constant 0 : index
    %c0_40 = arith.constant 0 : index
    %23 = vector.load %arg4[%c0_37, %c2_38, %c0_39, %c0_40] : memref<2x18x24x128xf32, #tpu.memory_space<vmem>>, vector<2x16x16x128xf32>
    %24 = vector.shape_cast %23 : vector<2x16x16x128xf32> to vector<512x128xf32>
    %c0_41 = arith.constant 0 : index
    %c768 = arith.constant 768 : index
    %25 = vector.load %arg5[%c0_41, %c768] : memref<512x1152xf32, #tpu.memory_space<vmem>>, vector<512x128xf32>
    tpu.vector_store %arg5[%c0_41, %c768], %24 {strides = array<i32>} : memref<512x1152xf32, #tpu.memory_space<vmem>>, vector<512x128xf32>,
    %c0_42 = arith.constant 0 : index
    %c2_43 = arith.constant 2 : index
    %c1_44 = arith.constant 1 : index
    %c0_45 = arith.constant 0 : index
    %26 = vector.load %arg4[%c0_42, %c2_43, %c1_44, %c0_45] : memref<2x18x24x128xf32, #tpu.memory_space<vmem>>, vector<2x16x16x128xf32>
    %27 = vector.shape_cast %26 : vector<2x16x16x128xf32> to vector<512x128xf32>
    %c0_46 = arith.constant 0 : index
    %c896 = arith.constant 896 : index
    %28 = vector.load %arg5[%c0_46, %c896] : memref<512x1152xf32, #tpu.memory_space<vmem>>, vector<512x128xf32>
    tpu.vector_store %arg5[%c0_46, %c896], %27 {strides = array<i32>} : memref<512x1152xf32, #tpu.memory_space<vmem>>, vector<512x128xf32>,
    %c0_47 = arith.constant 0 : index
    %c2_48 = arith.constant 2 : index
    %c2_49 = arith.constant 2 : index
    %c0_50 = arith.constant 0 : index
    %29 = vector.load %arg4[%c0_47, %c2_48, %c2_49, %c0_50] : memref<2x18x24x128xf32, #tpu.memory_space<vmem>>, vector<2x16x16x128xf32>
    %30 = vector.shape_cast %29 : vector<2x16x16x128xf32> to vector<512x128xf32>
    %c0_51 = arith.constant 0 : index
    %c1024 = arith.constant 1024 : index
    %31 = vector.load %arg5[%c0_51, %c1024] : memref<512x1152xf32, #tpu.memory_space<vmem>>, vector<512x128xf32>
    tpu.vector_store %arg5[%c0_51, %c1024], %30 {strides = array<i32>} : memref<512x1152xf32, #tpu.memory_space<vmem>>, vector<512x128xf32>,
    %c0_52 = arith.constant 0 : index
    %c0_53 = arith.constant 0 : index
    %32 = vector.load %arg5[%c0_52, %c0_53] : memref<512x1152xf32, #tpu.memory_space<vmem>>, vector<512x1152xf32>
    %c0_54 = arith.constant 0 : index
    %c0_55 = arith.constant 0 : index
    %33 = vector.load %arg2[%c0_54, %c0_55] : memref<1152x128xf32, #tpu.memory_space<vmem>>, vector<1152x128xf32>
    %cst = arith.constant dense<0.000000e+00> : vector<512x128xf32>
    %34 = tpu.matmul %32, %33, %cst {dimension_numbers = #tpu.dot_dimension_numbers<[1], [0], [0], [1], [0, 0, 1, 1], [], []>} : vector<512x1152xf32>, vector<1152x128xf32>, vector<512x128xf32> -> vector<512x128xf32>
    %35 = vector.shape_cast %34 : vector<512x128xf32> to vector<2x16x16x128xf32>
    %c0_56 = arith.constant 0 : index
    %c1_57 = arith.constant 1 : index
    %c1_58 = arith.constant 1 : index
    %c0_59 = arith.constant 0 : index
    %36 = vector.load %arg4[%c0_56, %c1_57, %c1_58, %c0_59] : memref<2x18x24x128xf32, #tpu.memory_space<vmem>>, vector<2x16x16x128xf32>
    tpu.vector_store %arg4[%c0_56, %c1_57, %c1_58, %c0_59], %35 {strides = array<i32>} : memref<2x18x24x128xf32, #tpu.memory_space<vmem>>, vector<2x16x16x128xf32>,
    %c0_60 = arith.constant 0 : index
    %c0_61 = arith.constant 0 : index
    %c0_62 = arith.constant 0 : index
    %c0_63 = arith.constant 0 : index
    %37 = vector.load %arg4[%c0_60, %c0_61, %c0_62, %c0_63] : memref<2x18x24x128xf32, #tpu.memory_space<vmem>>, vector<2x16x16x128xf32>
    %38 = vector.shape_cast %37 : vector<2x16x16x128xf32> to vector<512x128xf32>
    %c0_64 = arith.constant 0 : index
    %c0_65 = arith.constant 0 : index
    %39 = vector.load %arg5[%c0_64, %c0_65] : memref<512x1152xf32, #tpu.memory_space<vmem>>, vector<512x128xf32>
    tpu.vector_store %arg5[%c0_64, %c0_65], %38 {strides = array<i32>} : memref<512x1152xf32, #tpu.memory_space<vmem>>, vector<512x128xf32>,
    %c0_66 = arith.constant 0 : index
    %c0_67 = arith.constant 0 : index
    %c1_68 = arith.constant 1 : index
    %c0_69 = arith.constant 0 : index
    %40 = vector.load %arg4[%c0_66, %c0_67, %c1_68, %c0_69] : memref<2x18x24x128xf32, #tpu.memory_space<vmem>>, vector<2x16x16x128xf32>
    %41 = vector.shape_cast %40 : vector<2x16x16x128xf32> to vector<512x128xf32>
    %c0_70 = arith.constant 0 : index
    %c128_71 = arith.constant 128 : index
    %42 = vector.load %arg5[%c0_70, %c128_71] : memref<512x1152xf32, #tpu.memory_space<vmem>>, vector<512x128xf32>
    tpu.vector_store %arg5[%c0_70, %c128_71], %41 {strides = array<i32>} : memref<512x1152xf32, #tpu.memory_space<vmem>>, vector<512x128xf32>,
    %c0_72 = arith.constant 0 : index
    %c0_73 = arith.constant 0 : index
    %c2_74 = arith.constant 2 : index
    %c0_75 = arith.constant 0 : index
    %43 = vector.load %arg4[%c0_72, %c0_73, %c2_74, %c0_75] : memref<2x18x24x128xf32, #tpu.memory_space<vmem>>, vector<2x16x16x128xf32>
    %44 = vector.shape_cast %43 : vector<2x16x16x128xf32> to vector<512x128xf32>
    %c0_76 = arith.constant 0 : index
    %c256_77 = arith.constant 256 : index
    %45 = vector.load %arg5[%c0_76, %c256_77] : memref<512x1152xf32, #tpu.memory_space<vmem>>, vector<512x128xf32>
    tpu.vector_store %arg5[%c0_76, %c256_77], %44 {strides = array<i32>} : memref<512x1152xf32, #tpu.memory_space<vmem>>, vector<512x128xf32>,
    %c0_78 = arith.constant 0 : index
    %c1_79 = arith.constant 1 : index
    %c0_80 = arith.constant 0 : index
    %c0_81 = arith.constant 0 : index
    %46 = vector.load %arg4[%c0_78, %c1_79, %c0_80, %c0_81] : memref<2x18x24x128xf32, #tpu.memory_space<vmem>>, vector<2x16x16x128xf32>
    %47 = vector.shape_cast %46 : vector<2x16x16x128xf32> to vector<512x128xf32>
    %c0_82 = arith.constant 0 : index
    %c384_83 = arith.constant 384 : index
    %48 = vector.load %arg5[%c0_82, %c384_83] : memref<512x1152xf32, #tpu.memory_space<vmem>>, vector<512x128xf32>
    tpu.vector_store %arg5[%c0_82, %c384_83], %47 {strides = array<i32>} : memref<512x1152xf32, #tpu.memory_space<vmem>>, vector<512x128xf32>,
    %c0_84 = arith.constant 0 : index
    %c1_85 = arith.constant 1 : index
    %c1_86 = arith.constant 1 : index
    %c0_87 = arith.constant 0 : index
    %49 = vector.load %arg4[%c0_84, %c1_85, %c1_86, %c0_87] : memref<2x18x24x128xf32, #tpu.memory_space<vmem>>, vector<2x16x16x128xf32>
    %50 = vector.shape_cast %49 : vector<2x16x16x128xf32> to vector<512x128xf32>
    %c0_88 = arith.constant 0 : index
    %c512_89 = arith.constant 512 : index
    %51 = vector.load %arg5[%c0_88, %c512_89] : memref<512x1152xf32, #tpu.memory_space<vmem>>, vector<512x128xf32>
    tpu.vector_store %arg5[%c0_88, %c512_89], %50 {strides = array<i32>} : memref<512x1152xf32, #tpu.memory_space<vmem>>, vector<512x128xf32>,
    %c0_90 = arith.constant 0 : index
    %c1_91 = arith.constant 1 : index
    %c2_92 = arith.constant 2 : index
    %c0_93 = arith.constant 0 : index
    %52 = vector.load %arg4[%c0_90, %c1_91, %c2_92, %c0_93] : memref<2x18x24x128xf32, #tpu.memory_space<vmem>>, vector<2x16x16x128xf32>
    %53 = vector.shape_cast %52 : vector<2x16x16x128xf32> to vector<512x128xf32>
    %c0_94 = arith.constant 0 : index
    %c640_95 = arith.constant 640 : index
    %54 = vector.load %arg5[%c0_94, %c640_95] : memref<512x1152xf32, #tpu.memory_space<vmem>>, vector<512x128xf32>
    tpu.vector_store %arg5[%c0_94, %c640_95], %53 {strides = array<i32>} : memref<512x1152xf32, #tpu.memory_space<vmem>>, vector<512x128xf32>,
    %c0_96 = arith.constant 0 : index
    %c2_97 = arith.constant 2 : index
    %c0_98 = arith.constant 0 : index
    %c0_99 = arith.constant 0 : index
    %55 = vector.load %arg4[%c0_96, %c2_97, %c0_98, %c0_99] : memref<2x18x24x128xf32, #tpu.memory_space<vmem>>, vector<2x16x16x128xf32>
    %56 = vector.shape_cast %55 : vector<2x16x16x128xf32> to vector<512x128xf32>
    %c0_100 = arith.constant 0 : index
    %c768_101 = arith.constant 768 : index
    %57 = vector.load %arg5[%c0_100, %c768_101] : memref<512x1152xf32, #tpu.memory_space<vmem>>, vector<512x128xf32>
    tpu.vector_store %arg5[%c0_100, %c768_101], %56 {strides = array<i32>} : memref<512x1152xf32, #tpu.memory_space<vmem>>, vector<512x128xf32>,
    %c0_102 = arith.constant 0 : index
    %c2_103 = arith.constant 2 : index
    %c1_104 = arith.constant 1 : index
    %c0_105 = arith.constant 0 : index
    %58 = vector.load %arg4[%c0_102, %c2_103, %c1_104, %c0_105] : memref<2x18x24x128xf32, #tpu.memory_space<vmem>>, vector<2x16x16x128xf32>
    %59 = vector.shape_cast %58 : vector<2x16x16x128xf32> to vector<512x128xf32>
    %c0_106 = arith.constant 0 : index
    %c896_107 = arith.constant 896 : index
    %60 = vector.load %arg5[%c0_106, %c896_107] : memref<512x1152xf32, #tpu.memory_space<vmem>>, vector<512x128xf32>
    tpu.vector_store %arg5[%c0_106, %c896_107], %59 {strides = array<i32>} : memref<512x1152xf32, #tpu.memory_space<vmem>>, vector<512x128xf32>,
    %c0_108 = arith.constant 0 : index
    %c2_109 = arith.constant 2 : index
    %c2_110 = arith.constant 2 : index
    %c0_111 = arith.constant 0 : index
    %61 = vector.load %arg4[%c0_108, %c2_109, %c2_110, %c0_111] : memref<2x18x24x128xf32, #tpu.memory_space<vmem>>, vector<2x16x16x128xf32>
    %62 = vector.shape_cast %61 : vector<2x16x16x128xf32> to vector<512x128xf32>
    %c0_112 = arith.constant 0 : index
    %c1024_113 = arith.constant 1024 : index
    %63 = vector.load %arg5[%c0_112, %c1024_113] : memref<512x1152xf32, #tpu.memory_space<vmem>>, vector<512x128xf32>
    tpu.vector_store %arg5[%c0_112, %c1024_113], %62 {strides = array<i32>} : memref<512x1152xf32, #tpu.memory_space<vmem>>, vector<512x128xf32>,
    %c0_114 = arith.constant 0 : index
    %c0_115 = arith.constant 0 : index
    %64 = vector.load %arg5[%c0_114, %c0_115] : memref<512x1152xf32, #tpu.memory_space<vmem>>, vector<512x1152xf32>
    %c0_116 = arith.constant 0 : index
    %c0_117 = arith.constant 0 : index
    %65 = vector.load %arg2[%c0_116, %c0_117] : memref<1152x128xf32, #tpu.memory_space<vmem>>, vector<1152x128xf32>
    %cst_118 = arith.constant dense<0.000000e+00> : vector<512x128xf32>
    %66 = tpu.matmul %64, %65, %cst_118 {dimension_numbers = #tpu.dot_dimension_numbers<[1], [0], [0], [1], [0, 0, 1, 1], [], []>} : vector<512x1152xf32>, vector<1152x128xf32>, vector<512x128xf32> -> vector<512x128xf32>
    %67 = vector.shape_cast %66 : vector<512x128xf32> to vector<2x16x16x128xf32>
    %c0_119 = arith.constant 0 : index
    %c0_120 = arith.constant 0 : index
    %c0_121 = arith.constant 0 : index
    %c0_122 = arith.constant 0 : index
    %68 = vector.load %arg3[%c0_119, %c0_120, %c0_121, %c0_122] : memref<2x16x16x128xf32, #tpu.memory_space<vmem>>, vector<2x16x16x128xf32>
    tpu.vector_store %arg3[%c0_119, %c0_120, %c0_121, %c0_122], %67 {strides = array<i32>} : memref<2x16x16x128xf32, #tpu.memory_space<vmem>>, vector<2x16x16x128xf32>,
    return
  }
  func.func @transform_0(%arg0: i32) -> (i32, i32, i32, i32) {
    %c0_i32 = arith.constant 0 : i32
    %c0_i32_0 = arith.constant 0 : i32
    %c0_i32_1 = arith.constant 0 : i32
    %c0_i32_2 = arith.constant 0 : i32
    %c0_i32_3 = arith.constant 0 : i32
    return %c0_i32, %c0_i32_0, %c0_i32_1, %c0_i32_2 : i32, i32, i32, i32
  }
  func.func @transform_1(%arg0: i32) -> (i32, i32) {
    %c0_i32 = arith.constant 0 : i32
    %c0_i32_0 = arith.constant 0 : i32
    %c0_i32_1 = arith.constant 0 : i32
    return %c0_i32, %c0_i32_0 : i32, i32
  }
  func.func @transform_2(%arg0: i32) -> (i32, i32, i32, i32) {
    %c0_i32 = arith.constant 0 : i32
    %c0_i32_0 = arith.constant 0 : i32
    %c0_i32_1 = arith.constant 0 : i32
    %c0_i32_2 = arith.constant 0 : i32
    %c0_i32_3 = arith.constant 0 : i32
    return %c0_i32, %c0_i32_0, %c0_i32_1, %c0_i32_2 : i32, i32, i32, i32
  }
}

</mosaic_0001>

<llo_original>
// kernel: tpu_custom_call.1
$region0: #{tpu_custom_call.1}
  #allocation0 [shape = 'u32[]', space=smem, size = 0x4, offset = 0x4, fixed_abs, tag = 'smem constant byte address 0x4 - core index']
  #allocation1 [shape = 'u32[72,128]{1,0:T(1,128)}', space=vmem, size = 0x9000, scoped, tag = 'internal scratch']
  #allocation2 [shape = 'f32[2,18,24,128]{3,2,1,0:T(8,128)}', space=vmem, size = 0x6c000, scoped, tag = 'scratch operand']
  #allocation3 [shape = 'f32[512,1152]{1,0:T(8,128)}', space=vmem, size = 0x240000, scoped, tag = 'scratch operand']
  %s0 = inlined_call_operand.hbm [shape: f32[2,16,16,128], index: 0, kind: input, shape index: {}]
  %s1 = inlined_call_operand.hbm [shape: f32[1152,128], index: 1, kind: input, shape index: {}]
  %s2 = inlined_call_operand.hbm [shape: f32[2,16,16,128], index: 2, kind: output, shape index: {}]
  %s3 = sld [smem:[#allocation0]]
  $region30: #{tpu_custom_call.1} parent=0
    _
  %s5 = ssub.s32 1, %s3
  %s6 = scalar_select 0, %s5, %s3
  $region1: #{tpu_custom_call.1} parent=0
    #allocation4 [shape = 'u8[262144]{0}', space=vmem, size = 0x40000, scoped, tag = 'input window, operand 0, single buffered']
    #allocation5 [shape = 's32[1]{0}', space=sflag, size = 0x4, scoped, tag = 'scoped memory for tpu_custom_call.1']
    #allocation6 [shape = 's32[1]{0}', space=sflag, size = 0x4, scoped, tag = 'scoped memory for tpu_custom_call.1']
    #allocation7 [shape = 'u8[589824]{0}', space=vmem, size = 0x90000, scoped, tag = 'input window, operand 1, single buffered']
    #allocation8 [shape = 's32[1]{0}', space=sflag, size = 0x4, scoped, tag = 'scoped memory for tpu_custom_call.1']
    #allocation9 [shape = 'u8[262144]{0}', space=vmem, size = 0x40000, scoped, tag = 'output window, operand 0, single buffered']
    %7 = vsyncpa [#allocation5], 0
    %8 = vsyncpa [#allocation8], 0
    %9 = vsyncpa [#allocation6], 0
    // Predicated region
    $region2: #{tpu_custom_call.1} parent=1 // pred_check
      _
    $region3: #{tpu_custom_call.1} parent=1 // pred_check_branch
      %11 = sbr.rel (0) target = $region5
    $region4: #{tpu_custom_call.1} parent=1 // pred_region
      %13 = vsyncadd [#allocation5], 0
      %s14 = sshll.u32 %s0, 4
      %s15 = int_to_ptr.hbm [resolvable:$true] %s14
      %s16 = sshll.u32 [#allocation4], 4
      %s17 = int_to_ptr.vmem [resolvable:$true] %s16
      %22 = dma.hbm_to_vmem [thread:$0]  %s15, 8192, %s17, [#allocation5], 128, 128, 8
    $region5: #{tpu_custom_call.1} parent=1 // pred_fallthru
      _
    // Predicated region
    $region6: #{tpu_custom_call.1} parent=1 // pred_check
      _
    $region7: #{tpu_custom_call.1} parent=1 // pred_check_branch
      %24 = sbr.rel (0) target = $region9
    $region8: #{tpu_custom_call.1} parent=1 // pred_region
      %26 = vsyncadd [#allocation8], 0
      %s27 = sshll.u32 %s1, 4
      %s28 = int_to_ptr.hbm [resolvable:$true] %s27
      %s29 = sshll.u32 [#allocation7], 4
      %s30 = int_to_ptr.vmem [resolvable:$true] %s29
      %35 = dma.hbm_to_vmem [thread:$0]  %s28, 18432, %s30, [#allocation8], 128, 128, 8
    $region9: #{tpu_custom_call.1} parent=1 // pred_fallthru
      _
    // Predicated region
    $region10: #{tpu_custom_call.1} parent=1 // pred_check
      _
    $region11: #{tpu_custom_call.1} parent=1 // pred_check_branch
      %37 = sbr.rel (0) target = $region13
    $region12: #{tpu_custom_call.1} parent=1 // pred_region
      %39 = dma.done [#allocation5], 8192
    $region13: #{tpu_custom_call.1} parent=1 // pred_fallthru
      _
    // Predicated region
    $region14: #{tpu_custom_call.1} parent=1 // pred_check
      _
    $region15: #{tpu_custom_call.1} parent=1 // pred_check_branch
      %41 = sbr.rel (0) target = $region17
    $region16: #{tpu_custom_call.1} parent=1 // pred_region
      %43 = dma.done [#allocation8], 18432
    $region17: #{tpu_custom_call.1} parent=1 // pred_fallthru
      _
    %p44 = scmp.eq.s32.totalorder 0, 0
    // Predicated region
    $region18: #{tpu_custom_call.1} parent=1 // pred_check
      %p45 = pneg %p44
    $region19: #{tpu_custom_call.1} parent=1 // pred_check_branch
      %47 = sbr.rel (%p45) target = $region21
    $region20: #{tpu_custom_call.1} parent=1 // pred_region
      %48 = vst [vmem:[#allocation2] sm:$0xff] 0.0
      %49 = vst [vmem:[#allocation2 + $0x8] sm:$0xff] 0.0
      %50 = vst [vmem:[#allocation2 + $0x10] sm:$0xff] 0.0
      %51 = vst [vmem:[#allocation2 + $0x1b0] sm:$0xff] 0.0
      %52 = vst [vmem:[#allocation2 + $0x1b8] sm:$0xff] 0.0
      %53 = vst [vmem:[#allocation2 + $0x1c0] sm:$0xff] 0.0
      %s54 = scalar_lea.vmem [#allocation2], 408
      %55 = vst [vmem:[%s54] sm:$0xff] 0.0
      %56 = vst [vmem:[%s54 + $0x8] sm:$0xff] 0.0
      %57 = vst [vmem:[%s54 + $0x10] sm:$0xff] 0.0
      %58 = vst [vmem:[%s54 + $0x1b0] sm:$0xff] 0.0
      %59 = vst [vmem:[%s54 + $0x1b8] sm:$0xff] 0.0
      %60 = vst [vmem:[%s54 + $0x1c0] sm:$0xff] 0.0
      %61 = vst [vmem:[#allocation2] sm:$0x1] 0.0
      %62 = vst [vmem:[#allocation2 + $0x18] sm:$0x1] 0.0
      %63 = vst [vmem:[#allocation2 + $0x30] sm:$0x1] 0.0
      %64 = vst [vmem:[#allocation2 + $0x48] sm:$0x1] 0.0
      %65 = vst [vmem:[#allocation2 + $0x60] sm:$0x1] 0.0
      %66 = vst [vmem:[#allocation2 + $0x78] sm:$0x1] 0.0
      %67 = vst [vmem:[#allocation2 + $0x90] sm:$0x1] 0.0
      %68 = vst [vmem:[#allocation2 + $0xa8] sm:$0x1] 0.0
      %69 = vst [vmem:[#allocation2 + $0xc0] sm:$0x1] 0.0
      %70 = vst [vmem:[#allocation2 + $0xd8] sm:$0x1] 0.0
      %71 = vst [vmem:[#allocation2 + $0xf0] sm:$0x1] 0.0
      %72 = vst [vmem:[#allocation2 + $0x108] sm:$0x1] 0.0
      %73 = vst [vmem:[#allocation2 + $0x120] sm:$0x1] 0.0
      %74 = vst [vmem:[#allocation2 + $0x138] sm:$0x1] 0.0
      %75 = vst [vmem:[#allocation2 + $0x150] sm:$0x1] 0.0
      %76 = vst [vmem:[#allocation2 + $0x168] sm:$0x1] 0.0
      %77 = vst [vmem:[#allocation2 + $0x180] sm:$0x1] 0.0
      %78 = vst [vmem:[#allocation2 + $0x198] sm:$0x1] 0.0
      %79 = vst [vmem:[#allocation2 + $0x1b0] sm:$0x1] 0.0
      %80 = vst [vmem:[#allocation2 + $0x1c8] sm:$0x1] 0.0
      %81 = vst [vmem:[#allocation2 + $0x1e0] sm:$0x1] 0.0
      %82 = vst [vmem:[#allocation2 + $0x1f8] sm:$0x1] 0.0
      %83 = vst [vmem:[#allocation2 + $0x210] sm:$0x1] 0.0
      %84 = vst [vmem:[#allocation2 + $0x228] sm:$0x1] 0.0
      %85 = vst [vmem:[#allocation2 + $0x240] sm:$0x1] 0.0
      %86 = vst [vmem:[#allocation2 + $0x258] sm:$0x1] 0.0
      %87 = vst [vmem:[#allocation2 + $0x270] sm:$0x1] 0.0
      %88 = vst [vmem:[#allocation2 + $0x288] sm:$0x1] 0.0
      %89 = vst [vmem:[#allocation2 + $0x2a0] sm:$0x1] 0.0
      %90 = vst [vmem:[#allocation2 + $0x2b8] sm:$0x1] 0.0
      %91 = vst [vmem:[#allocation2 + $0x2d0] sm:$0x1] 0.0
      %92 = vst [vmem:[#allocation2 + $0x2e8] sm:$0x1] 0.0
      %93 = vst [vmem:[#allocation2 + $0x300] sm:$0x1] 0.0
      %94 = vst [vmem:[#allocation2 + $0x318] sm:$0x1] 0.0
      %95 = vst [vmem:[#allocation2 + $0x330] sm:$0x1] 0.0
      %96 = vst [vmem:[#allocation2 + $0x348] sm:$0x1] 0.0
      %97 = vst [vmem:[#allocation2 + $0x11] sm:$0x1] 0.0
      %98 = vst [vmem:[#allocation2 + $0x29] sm:$0x1] 0.0
      %99 = vst [vmem:[#allocation2 + $0x41] sm:$0x1] 0.0
      %100 = vst [vmem:[#allocation2 + $0x59] sm:$0x1] 0.0
      %101 = vst [vmem:[#allocation2 + $0x71] sm:$0x1] 0.0
      %102 = vst [vmem:[#allocation2 + $0x89] sm:$0x1] 0.0
      %103 = vst [vmem:[#allocation2 + $0xa1] sm:$0x1] 0.0
      %104 = vst [vmem:[#allocation2 + $0xb9] sm:$0x1] 0.0
      %105 = vst [vmem:[#allocation2 + $0xd1] sm:$0x1] 0.0
      %106 = vst [vmem:[#allocation2 + $0xe9] sm:$0x1] 0.0
      %107 = vst [vmem:[#allocation2 + $0x101] sm:$0x1] 0.0
      %108 = vst [vmem:[#allocation2 + $0x119] sm:$0x1] 0.0
      %109 = vst [vmem:[#allocation2 + $0x131] sm:$0x1] 0.0
      %110 = vst [vmem:[#allocation2 + $0x149] sm:$0x1] 0.0
      %111 = vst [vmem:[#allocation2 + $0x161] sm:$0x1] 0.0
      %112 = vst [vmem:[#allocation2 + $0x179] sm:$0x1] 0.0
      %113 = vst [vmem:[#allocation2 + $0x191] sm:$0x1] 0.0
      %114 = vst [vmem:[#allocation2 + $0x1a9] sm:$0x1] 0.0
      %115 = vst [vmem:[#allocation2 + $0x1c1] sm:$0x1] 0.0
      %116 = vst [vmem:[#allocation2 + $0x1d9] sm:$0x1] 0.0
      %117 = vst [vmem:[#allocation2 + $0x1f1] sm:$0x1] 0.0
      %118 = vst [vmem:[#allocation2 + $0x209] sm:$0x1] 0.0
      %119 = vst [vmem:[#allocation2 + $0x221] sm:$0x1] 0.0
      %120 = vst [vmem:[#allocation2 + $0x239] sm:$0x1] 0.0
      %121 = vst [vmem:[#allocation2 + $0x251] sm:$0x1] 0.0
      %122 = vst [vmem:[#allocation2 + $0x269] sm:$0x1] 0.0
      %123 = vst [vmem:[#allocation2 + $0x281] sm:$0x1] 0.0
      %124 = vst [vmem:[#allocation2 + $0x299] sm:$0x1] 0.0
      %125 = vst [vmem:[#allocation2 + $0x2b1] sm:$0x1] 0.0
      %126 = vst [vmem:[#allocation2 + $0x2c9] sm:$0x1] 0.0
      %127 = vst [vmem:[#allocation2 + $0x2e1] sm:$0x1] 0.0
      %128 = vst [vmem:[#allocation2 + $0x2f9] sm:$0x1] 0.0
      %129 = vst [vmem:[#allocation2 + $0x311] sm:$0x1] 0.0
      %130 = vst [vmem:[#allocation2 + $0x329] sm:$0x1] 0.0
      %131 = vst [vmem:[#allocation2 + $0x341] sm:$0x1] 0.0
      %132 = vst [vmem:[#allocation2 + $0x359] sm:$0x1] 0.0
    $region21: #{tpu_custom_call.1} parent=1 // pred_fallthru
      _
    %v133 = vld [vmem:[#allocation4] sm:$0xff]
    %v134 = vld [vmem:[#allocation4 + $0x8] sm:$0xff]
    %v135 = vld [vmem:[#allocation4 + $0x10] sm:$0xff]
    %v136 = vld [vmem:[#allocation4 + $0x18] sm:$0xff]
    %v137 = vld [vmem:[#allocation4 + $0x20] sm:$0xff]
    %v138 = vld [vmem:[#allocation4 + $0x28] sm:$0xff]
    %v139 = vld [vmem:[#allocation4 + $0x30] sm:$0xff]
    %v140 = vld [vmem:[#allocation4 + $0x38] sm:$0xff]
    %v141 = vld [vmem:[#allocation4 + $0x40] sm:$0xff]
    %v142 = vld [vmem:[#allocation4 + $0x48] sm:$0xff]
    %v143 = vld [vmem:[#allocation4 + $0x50] sm:$0xff]
    %v144 = vld [vmem:[#allocation4 + $0x58] sm:$0xff]
    %v145 = vld [vmem:[#allocation4 + $0x60] sm:$0xff]
    %v146 = vld [vmem:[#allocation4 + $0x68] sm:$0xff]
    %v147 = vld [vmem:[#allocation4 + $0x70] sm:$0xff]
    %v148 = vld [vmem:[#allocation4 + $0x78] sm:$0xff]
    %v149 = vld [vmem:[#allocation4 + $0x80] sm:$0xff]
    %v150 = vld [vmem:[#allocation4 + $0x88] sm:$0xff]
    %v151 = vld [vmem:[#allocation4 + $0x90] sm:$0xff]
    %v152 = vld [vmem:[#allocation4 + $0x98] sm:$0xff]
    %v153 = vld [vmem:[#allocation4 + $0xa0] sm:$0xff]
    %v154 = vld [vmem:[#allocation4 + $0xa8] sm:$0xff]
    %v155 = vld [vmem:[#allocation4 + $0xb0] sm:$0xff]
    %v156 = vld [vmem:[#allocation4 + $0xb8] sm:$0xff]
    %v157 = vld [vmem:[#allocation4 + $0xc0] sm:$0xff]
    %v158 = vld [vmem:[#allocation4 + $0xc8] sm:$0xff]
    %v159 = vld [vmem:[#allocation4 + $0xd0] sm:$0xff]
    %v160 = vld [vmem:[#allocation4 + $0xd8] sm:$0xff]
    %v161 = vld [vmem:[#allocation4 + $0xe0] sm:$0xff]
    %v162 = vld [vmem:[#allocation4 + $0xe8] sm:$0xff]
    %v163 = vld [vmem:[#allocation4 + $0xf0] sm:$0xff]
    %v164 = vld [vmem:[#allocation4 + $0xf8] sm:$0xff]
    %v165 = vld [vmem:[#allocation4 + $0x100] sm:$0xff]
    %v166 = vld [vmem:[#allocation4 + $0x108] sm:$0xff]
    %v167 = vld [vmem:[#allocation4 + $0x110] sm:$0xff]
    %v168 = vld [vmem:[#allocation4 + $0x118] sm:$0xff]
    %v169 = vld [vmem:[#allocation4 + $0x120] sm:$0xff]
    %v170 = vld [vmem:[#allocation4 + $0x128] sm:$0xff]
    %v171 = vld [vmem:[#allocation4 + $0x130] sm:$0xff]
    %v172 = vld [vmem:[#allocation4 + $0x138] sm:$0xff]
    %v173 = vld [vmem:[#allocation4 + $0x140] sm:$0xff]
    %v174 = vld [vmem:[#allocation4 + $0x148] sm:$0xff]
    %v175 = vld [vmem:[#allocation4 + $0x150] sm:$0xff]
    %v176 = vld [vmem:[#allocation4 + $0x158] sm:$0xff]
    %v177 = vld [vmem:[#allocation4 + $0x160] sm:$0xff]
    %v178 = vld [vmem:[#allocation4 + $0x168] sm:$0xff]
    %v179 = vld [vmem:[#allocation4 + $0x170] sm:$0xff]
    %v180 = vld [vmem:[#allocation4 + $0x178] sm:$0xff]
    %v181 = vld [vmem:[#allocation4 + $0x180] sm:$0xff]
    %v182 = vld [vmem:[#allocation4 + $0x188] sm:$0xff]
    %v183 = vld [vmem:[#allocation4 + $0x190] sm:$0xff]
    %v184 = vld [vmem:[#allocation4 + $0x198] sm:$0xff]
    %v185 = vld [vmem:[#allocation4 + $0x1a0] sm:$0xff]
    %v186 = vld [vmem:[#allocation4 + $0x1a8] sm:$0xff]
    %v187 = vld [vmem:[#allocation4 + $0x1b0] sm:$0xff]
    %v188 = vld [vmem:[#allocation4 + $0x1b8] sm:$0xff]
    %v189 = vld [vmem:[#allocation4 + $0x1c0] sm:$0xff]
    %v190 = vld [vmem:[#allocation4 + $0x1c8] sm:$0xff]
    %v191 = vld [vmem:[#allocation4 + $0x1d0] sm:$0xff]
    %v192 = vld [vmem:[#allocation4 + $0x1d8] sm:$0xff]
    %v193 = vld [vmem:[#allocation4 + $0x1e0] sm:$0xff]
    %v194 = vld [vmem:[#allocation4 + $0x1e8] sm:$0xff]
    %v195 = vld [vmem:[#allocation4 + $0x1f0] sm:$0xff]
    %v196 = vld [vmem:[#allocation4 + $0x1f8] sm:$0xff]
    %s197 = scalar_lea.vmem [#allocation2], 24
    %198 = vst [vmem:[%s197 + $0x1] sm:$0xff] %v133
    %199 = vst [vmem:[%s197 + $0x9] sm:$0xff] %v134
    %200 = vst [vmem:[%s197 + $0x19] sm:$0xff] %v135
    %201 = vst [vmem:[%s197 + $0x21] sm:$0xff] %v136
    %202 = vst [vmem:[%s197 + $0x31] sm:$0xff] %v137
    %203 = vst [vmem:[%s197 + $0x39] sm:$0xff] %v138
    %204 = vst [vmem:[%s197 + $0x49] sm:$0xff] %v139
    %205 = vst [vmem:[%s197 + $0x51] sm:$0xff] %v140
    %206 = vst [vmem:[%s197 + $0x61] sm:$0xff] %v141
    %207 = vst [vmem:[%s197 + $0x69] sm:$0xff] %v142
    %208 = vst [vmem:[%s197 + $0x79] sm:$0xff] %v143
    %209 = vst [vmem:[%s197 + $0x81] sm:$0xff] %v144
    %210 = vst [vmem:[%s197 + $0x91] sm:$0xff] %v145
    %211 = vst [vmem:[%s197 + $0x99] sm:$0xff] %v146
    %212 = vst [vmem:[%s197 + $0xa9] sm:$0xff] %v147
    %213 = vst [vmem:[%s197 + $0xb1] sm:$0xff] %v148
    %214 = vst [vmem:[%s197 + $0xc1] sm:$0xff] %v149
    %215 = vst [vmem:[%s197 + $0xc9] sm:$0xff] %v150
    %216 = vst [vmem:[%s197 + $0xd9] sm:$0xff] %v151
    %217 = vst [vmem:[%s197 + $0xe1] sm:$0xff] %v152
    %218 = vst [vmem:[%s197 + $0xf1] sm:$0xff] %v153
    %219 = vst [vmem:[%s197 + $0xf9] sm:$0xff] %v154
    %220 = vst [vmem:[%s197 + $0x109] sm:$0xff] %v155
    %221 = vst [vmem:[%s197 + $0x111] sm:$0xff] %v156
    %222 = vst [vmem:[%s197 + $0x121] sm:$0xff] %v157
    %223 = vst [vmem:[%s197 + $0x129] sm:$0xff] %v158
    %224 = vst [vmem:[%s197 + $0x139] sm:$0xff] %v159
    %225 = vst [vmem:[%s197 + $0x141] sm:$0xff] %v160
    %226 = vst [vmem:[%s197 + $0x151] sm:$0xff] %v161
    %227 = vst [vmem:[%s197 + $0x159] sm:$0xff] %v162
    %228 = vst [vmem:[%s197 + $0x169] sm:$0xff] %v163
    %229 = vst [vmem:[%s197 + $0x171] sm:$0xff] %v164
    %230 = vst [vmem:[%s197 + $0x1b1] sm:$0xff] %v165
    %231 = vst [vmem:[%s197 + $0x1b9] sm:$0xff] %v166
    %232 = vst [vmem:[%s197 + $0x1c9] sm:$0xff] %v167
    %233 = vst [vmem:[%s197 + $0x1d1] sm:$0xff] %v168
    %234 = vst [vmem:[%s197 + $0x1e1] sm:$0xff] %v169
    %235 = vst [vmem:[%s197 + $0x1e9] sm:$0xff] %v170
    %236 = vst [vmem:[%s197 + $0x1f9] sm:$0xff] %v171
    %237 = vst [vmem:[%s197 + $0x201] sm:$0xff] %v172
    %238 = vst [vmem:[%s197 + $0x211] sm:$0xff] %v173
    %239 = vst [vmem:[%s197 + $0x219] sm:$0xff] %v174
    %240 = vst [vmem:[%s197 + $0x229] sm:$0xff] %v175
    %241 = vst [vmem:[%s197 + $0x231] sm:$0xff] %v176
    %242 = vst [vmem:[%s197 + $0x241] sm:$0xff] %v177
    %243 = vst [vmem:[%s197 + $0x249] sm:$0xff] %v178
    %244 = vst [vmem:[%s197 + $0x259] sm:$0xff] %v179
    %245 = vst [vmem:[%s197 + $0x261] sm:$0xff] %v180
    %246 = vst [vmem:[%s197 + $0x271] sm:$0xff] %v181
    %247 = vst [vmem:[%s197 + $0x279] sm:$0xff] %v182
    %248 = vst [vmem:[%s197 + $0x289] sm:$0xff] %v183
    %249 = vst [vmem:[%s197 + $0x291] sm:$0xff] %v184
    %250 = vst [vmem:[%s197 + $0x2a1] sm:$0xff] %v185
    %251 = vst [vmem:[%s197 + $0x2a9] sm:$0xff] %v186
    %252 = vst [vmem:[%s197 + $0x2b9] sm:$0xff] %v187
    %253 = vst [vmem:[%s197 + $0x2c1] sm:$0xff] %v188
    %254 = vst [vmem:[%s197 + $0x2d1] sm:$0xff] %v189
    %255 = vst [vmem:[%s197 + $0x2d9] sm:$0xff] %v190
    %256 = vst [vmem:[%s197 + $0x2e9] sm:$0xff] %v191
    %257 = vst [vmem:[%s197 + $0x2f1] sm:$0xff] %v192
    %258 = vst [vmem:[%s197 + $0x301] sm:$0xff] %v193
    %259 = vst [vmem:[%s197 + $0x309] sm:$0xff] %v194
    %260 = vst [vmem:[%s197 + $0x319] sm:$0xff] %v195
    %261 = vst [vmem:[%s197 + $0x321] sm:$0xff] %v196
    %v262 = vld [vmem:[#allocation2] sm:$0xff]
    %v263 = vld [vmem:[#allocation2 + $0x8] sm:$0xff]
    %v264 = vld [vmem:[#allocation2 + $0x18] sm:$0xff]
    %v265 = vld [vmem:[#allocation2 + $0x20] sm:$0xff]
    %v266 = vld [vmem:[#allocation2 + $0x30] sm:$0xff]
    %v267 = vld [vmem:[#allocation2 + $0x38] sm:$0xff]
    %v268 = vld [vmem:[#allocation2 + $0x48] sm:$0xff]
    %v269 = vld [vmem:[#allocation2 + $0x50] sm:$0xff]
    %v270 = vld [vmem:[#allocation2 + $0x60] sm:$0xff]
    %v271 = vld [vmem:[#allocation2 + $0x68] sm:$0xff]
    %v272 = vld [vmem:[#allocation2 + $0x78] sm:$0xff]
    %v273 = vld [vmem:[#allocation2 + $0x80] sm:$0xff]
    %v274 = vld [vmem:[#allocation2 + $0x90] sm:$0xff]
    %v275 = vld [vmem:[#allocation2 + $0x98] sm:$0xff]
    %v276 = vld [vmem:[#allocation2 + $0xa8] sm:$0xff]
    %v277 = vld [vmem:[#allocation2 + $0xb0] sm:$0xff]
    %v278 = vld [vmem:[#allocation2 + $0xc0] sm:$0xff]
    %v279 = vld [vmem:[#allocation2 + $0xc8] sm:$0xff]
    %v280 = vld [vmem:[#allocation2 + $0xd8] sm:$0xff]
    %v281 = vld [vmem:[#allocation2 + $0xe0] sm:$0xff]
    %v282 = vld [vmem:[#allocation2 + $0xf0] sm:$0xff]
    %v283 = vld [vmem:[#allocation2 + $0xf8] sm:$0xff]
    %v284 = vld [vmem:[#allocation2 + $0x108] sm:$0xff]
    %v285 = vld [vmem:[#allocation2 + $0x110] sm:$0xff]
    %v286 = vld [vmem:[#allocation2 + $0x120] sm:$0xff]
    %v287 = vld [vmem:[#allocation2 + $0x128] sm:$0xff]
    %v288 = vld [vmem:[#allocation2 + $0x138] sm:$0xff]
    %v289 = vld [vmem:[#allocation2 + $0x140] sm:$0xff]
    %v290 = vld [vmem:[#allocation2 + $0x150] sm:$0xff]
    %v291 = vld [vmem:[#allocation2 + $0x158] sm:$0xff]
    %v292 = vld [vmem:[#allocation2 + $0x168] sm:$0xff]
    %v293 = vld [vmem:[#allocation2 + $0x170] sm:$0xff]
    %v294 = vld [vmem:[#allocation2 + $0x1b0] sm:$0xff]
    %v295 = vld [vmem:[#allocation2 + $0x1b8] sm:$0xff]
    %v296 = vld [vmem:[#allocation2 + $0x1c8] sm:$0xff]
    %v297 = vld [vmem:[#allocation2 + $0x1d0] sm:$0xff]
    %v298 = vld [vmem:[#allocation2 + $0x1e0] sm:$0xff]
    %v299 = vld [vmem:[#allocation2 + $0x1e8] sm:$0xff]
    %v300 = vld [vmem:[#allocation2 + $0x1f8] sm:$0xff]
    %v301 = vld [vmem:[#allocation2 + $0x200] sm:$0xff]
    %v302 = vld [vmem:[#allocation2 + $0x210] sm:$0xff]
    %v303 = vld [vmem:[#allocation2 + $0x218] sm:$0xff]
    %v304 = vld [vmem:[#allocation2 + $0x228] sm:$0xff]
    %v305 = vld [vmem:[#allocation2 + $0x230] sm:$0xff]
    %v306 = vld [vmem:[#allocation2 + $0x240] sm:$0xff]
    %v307 = vld [vmem:[#allocation2 + $0x248] sm:$0xff]
    %v308 = vld [vmem:[#allocation2 + $0x258] sm:$0xff]
    %v309 = vld [vmem:[#allocation2 + $0x260] sm:$0xff]
    %v310 = vld [vmem:[#allocation2 + $0x270] sm:$0xff]
    %v311 = vld [vmem:[#allocation2 + $0x278] sm:$0xff]
    %v312 = vld [vmem:[#allocation2 + $0x288] sm:$0xff]
    %v313 = vld [vmem:[#allocation2 + $0x290] sm:$0xff]
    %v314 = vld [vmem:[#allocation2 + $0x2a0] sm:$0xff]
    %v315 = vld [vmem:[#allocation2 + $0x2a8] sm:$0xff]
    %v316 = vld [vmem:[#allocation2 + $0x2b8] sm:$0xff]
    %v317 = vld [vmem:[#allocation2 + $0x2c0] sm:$0xff]
    %v318 = vld [vmem:[#allocation2 + $0x2d0] sm:$0xff]
    %v319 = vld [vmem:[#allocation2 + $0x2d8] sm:$0xff]
    %v320 = vld [vmem:[#allocation2 + $0x2e8] sm:$0xff]
    %v321 = vld [vmem:[#allocation2 + $0x2f0] sm:$0xff]
    %v322 = vld [vmem:[#allocation2 + $0x300] sm:$0xff]
    %v323 = vld [vmem:[#allocation2 + $0x308] sm:$0xff]
    %v324 = vld [vmem:[#allocation2 + $0x318] sm:$0xff]
    %v325 = vld [vmem:[#allocation2 + $0x320] sm:$0xff]
    %326 = vst [vmem:[#allocation3] sm:$0xff] %v262
    %327 = vst [vmem:[#allocation3 + $0x48] sm:$0xff] %v263
    %328 = vst [vmem:[#allocation3 + $0x90] sm:$0xff] %v264
    %329 = vst [vmem:[#allocation3 + $0xd8] sm:$0xff] %v265
    %330 = vst [vmem:[#allocation3 + $0x120] sm:$0xff] %v266
    %331 = vst [vmem:[#allocation3 + $0x168] sm:$0xff] %v267
    %332 = vst [vmem:[#allocation3 + $0x1b0] sm:$0xff] %v268
    %333 = vst [vmem:[#allocation3 + $0x1f8] sm:$0xff] %v269
    %334 = vst [vmem:[#allocation3 + $0x240] sm:$0xff] %v270
    %335 = vst [vmem:[#allocation3 + $0x288] sm:$0xff] %v271
    %336 = vst [vmem:[#allocation3 + $0x2d0] sm:$0xff] %v272
    %337 = vst [vmem:[#allocation3 + $0x318] sm:$0xff] %v273
    %338 = vst [vmem:[#allocation3 + $0x360] sm:$0xff] %v274
    %339 = vst [vmem:[#allocation3 + $0x3a8] sm:$0xff] %v275
    %340 = vst [vmem:[#allocation3 + $0x3f0] sm:$0xff] %v276
    %341 = vst [vmem:[#allocation3 + $0x438] sm:$0xff] %v277
    %342 = vst [vmem:[#allocation3 + $0x480] sm:$0xff] %v278
    %343 = vst [vmem:[#allocation3 + $0x4c8] sm:$0xff] %v279
    %344 = vst [vmem:[#allocation3 + $0x510] sm:$0xff] %v280
    %345 = vst [vmem:[#allocation3 + $0x558] sm:$0xff] %v281
    %346 = vst [vmem:[#allocation3 + $0x5a0] sm:$0xff] %v282
    %347 = vst [vmem:[#allocation3 + $0x5e8] sm:$0xff] %v283
    %348 = vst [vmem:[#allocation3 + $0x630] sm:$0xff] %v284
    %349 = vst [vmem:[#allocation3 + $0x678] sm:$0xff] %v285
    %350 = vst [vmem:[#allocation3 + $0x6c0] sm:$0xff] %v286
    %351 = vst [vmem:[#allocation3 + $0x708] sm:$0xff] %v287
    %352 = vst [vmem:[#allocation3 + $0x750] sm:$0xff] %v288
    %353 = vst [vmem:[#allocation3 + $0x798] sm:$0xff] %v289
    %354 = vst [vmem:[#allocation3 + $0x7e0] sm:$0xff] %v290
    %355 = vst [vmem:[#allocation3 + $0x828] sm:$0xff] %v291
    %356 = vst [vmem:[#allocation3 + $0x870] sm:$0xff] %v292
    %357 = vst [vmem:[#allocation3 + $0x8b8] sm:$0xff] %v293
    %358 = vst [vmem:[#allocation3 + $0x900] sm:$0xff] %v294
    %359 = vst [vmem:[#allocation3 + $0x948] sm:$0xff] %v295
    %360 = vst [vmem:[#allocation3 + $0x990] sm:$0xff] %v296
    %361 = vst [vmem:[#allocation3 + $0x9d8] sm:$0xff] %v297
    %362 = vst [vmem:[#allocation3 + $0xa20] sm:$0xff] %v298
    %363 = vst [vmem:[#allocation3 + $0xa68] sm:$0xff] %v299
    %364 = vst [vmem:[#allocation3 + $0xab0] sm:$0xff] %v300
    %365 = vst [vmem:[#allocation3 + $0xaf8] sm:$0xff] %v301
    %366 = vst [vmem:[#allocation3 + $0xb40] sm:$0xff] %v302
    %367 = vst [vmem:[#allocation3 + $0xb88] sm:$0xff] %v303
    %368 = vst [vmem:[#allocation3 + $0xbd0] sm:$0xff] %v304
    %369 = vst [vmem:[#allocation3 + $0xc18] sm:$0xff] %v305
    %370 = vst [vmem:[#allocation3 + $0xc60] sm:$0xff] %v306
    %371 = vst [vmem:[#allocation3 + $0xca8] sm:$0xff] %v307
    %372 = vst [vmem:[#allocation3 + $0xcf0] sm:$0xff] %v308
    %373 = vst [vmem:[#allocation3 + $0xd38] sm:$0xff] %v309
    %374 = vst [vmem:[#allocation3 + $0xd80] sm:$0xff] %v310
    %375 = vst [vmem:[#allocation3 + $0xdc8] sm:$0xff] %v311
    %376 = vst [vmem:[#allocation3 + $0xe10] sm:$0xff] %v312
    %377 = vst [vmem:[#allocation3 + $0xe58] sm:$0xff] %v313
    %378 = vst [vmem:[#allocation3 + $0xea0] sm:$0xff] %v314
    %379 = vst [vmem:[#allocation3 + $0xee8] sm:$0xff] %v315
    %380 = vst [vmem:[#allocation3 + $0xf30] sm:$0xff] %v316
    %381 = vst [vmem:[#allocation3 + $0xf78] sm:$0xff] %v317
    %382 = vst [vmem:[#allocation3 + $0xfc0] sm:$0xff] %v318
    %383 = vst [vmem:[#allocation3 + $0x1008] sm:$0xff] %v319
    %384 = vst [vmem:[#allocation3 + $0x1050] sm:$0xff] %v320
    %385 = vst [vmem:[#allocation3 + $0x1098] sm:$0xff] %v321
    %386 = vst [vmem:[#allocation3 + $0x10e0] sm:$0xff] %v322
    %387 = vst [vmem:[#allocation3 + $0x1128] sm:$0xff] %v323
    %388 = vst [vmem:[#allocation3 + $0x1170] sm:$0xff] %v324
    %389 = vst [vmem:[#allocation3 + $0x11b8] sm:$0xff] %v325
    %v390 = vld [vmem:[#allocation2 + $0x1] sm:$0xff]
    %v391 = vld [vmem:[#allocation2 + $0x9] sm:$0xff]
    %v392 = vld [vmem:[#allocation2 + $0x19] sm:$0xff]
    %v393 = vld [vmem:[#allocation2 + $0x21] sm:$0xff]
    %v394 = vld [vmem:[#allocation2 + $0x31] sm:$0xff]
    %v395 = vld [vmem:[#allocation2 + $0x39] sm:$0xff]
    %v396 = vld [vmem:[#allocation2 + $0x49] sm:$0xff]
    %v397 = vld [vmem:[#allocation2 + $0x51] sm:$0xff]
    %v398 = vld [vmem:[#allocation2 + $0x61] sm:$0xff]
    %v399 = vld [vmem:[#allocation2 + $0x69] sm:$0xff]
    %v400 = vld [vmem:[#allocation2 + $0x79] sm:$0xff]
    %v401 = vld [vmem:[#allocation2 + $0x81] sm:$0xff]
    %v402 = vld [vmem:[#allocation2 + $0x91] sm:$0xff]
    %v403 = vld [vmem:[#allocation2 + $0x99] sm:$0xff]
    %v404 = vld [vmem:[#allocation2 + $0xa9] sm:$0xff]
    %v405 = vld [vmem:[#allocation2 + $0xb1] sm:$0xff]
    %v406 = vld [vmem:[#allocation2 + $0xc1] sm:$0xff]
    %v407 = vld [vmem:[#allocation2 + $0xc9] sm:$0xff]
    %v408 = vld [vmem:[#allocation2 + $0xd9] sm:$0xff]
    %v409 = vld [vmem:[#allocation2 + $0xe1] sm:$0xff]
    %v410 = vld [vmem:[#allocation2 + $0xf1] sm:$0xff]
    %v411 = vld [vmem:[#allocation2 + $0xf9] sm:$0xff]
    %v412 = vld [vmem:[#allocation2 + $0x109] sm:$0xff]
    %v413 = vld [vmem:[#allocation2 + $0x111] sm:$0xff]
    %v414 = vld [vmem:[#allocation2 + $0x121] sm:$0xff]
    %v415 = vld [vmem:[#allocation2 + $0x129] sm:$0xff]
    %v416 = vld [vmem:[#allocation2 + $0x139] sm:$0xff]
    %v417 = vld [vmem:[#allocation2 + $0x141] sm:$0xff]
    %v418 = vld [vmem:[#allocation2 + $0x151] sm:$0xff]
    %v419 = vld [vmem:[#allocation2 + $0x159] sm:$0xff]
    %v420 = vld [vmem:[#allocation2 + $0x169] sm:$0xff]
    %v421 = vld [vmem:[#allocation2 + $0x171] sm:$0xff]
    %v422 = vld [vmem:[#allocation2 + $0x1b1] sm:$0xff]
    %v423 = vld [vmem:[#allocation2 + $0x1b9] sm:$0xff]
    %v424 = vld [vmem:[#allocation2 + $0x1c9] sm:$0xff]
    %v425 = vld [vmem:[#allocation2 + $0x1d1] sm:$0xff]
    %v426 = vld [vmem:[#allocation2 + $0x1e1] sm:$0xff]
    %v427 = vld [vmem:[#allocation2 + $0x1e9] sm:$0xff]
    %v428 = vld [vmem:[#allocation2 + $0x1f9] sm:$0xff]
    %v429 = vld [vmem:[#allocation2 + $0x201] sm:$0xff]
    %v430 = vld [vmem:[#allocation2 + $0x211] sm:$0xff]
    %v431 = vld [vmem:[#allocation2 + $0x219] sm:$0xff]
    %v432 = vld [vmem:[#allocation2 + $0x229] sm:$0xff]
    %v433 = vld [vmem:[#allocation2 + $0x231] sm:$0xff]
    %v434 = vld [vmem:[#allocation2 + $0x241] sm:$0xff]
    %v435 = vld [vmem:[#allocation2 + $0x249] sm:$0xff]
    %v436 = vld [vmem:[#allocation2 + $0x259] sm:$0xff]
    %v437 = vld [vmem:[#allocation2 + $0x261] sm:$0xff]
    %v438 = vld [vmem:[#allocation2 + $0x271] sm:$0xff]
    %v439 = vld [vmem:[#allocation2 + $0x279] sm:$0xff]
    %v440 = vld [vmem:[#allocation2 + $0x289] sm:$0xff]
    %v441 = vld [vmem:[#allocation2 + $0x291] sm:$0xff]
    %v442 = vld [vmem:[#allocation2 + $0x2a1] sm:$0xff]
    %v443 = vld [vmem:[#allocation2 + $0x2a9] sm:$0xff]
    %v444 = vld [vmem:[#allocation2 + $0x2b9] sm:$0xff]
    %v445 = vld [vmem:[#allocation2 + $0x2c1] sm:$0xff]
    %v446 = vld [vmem:[#allocation2 + $0x2d1] sm:$0xff]
    %v447 = vld [vmem:[#allocation2 + $0x2d9] sm:$0xff]
    %v448 = vld [vmem:[#allocation2 + $0x2e9] sm:$0xff]
    %v449 = vld [vmem:[#allocation2 + $0x2f1] sm:$0xff]
    %v450 = vld [vmem:[#allocation2 + $0x301] sm:$0xff]
    %v451 = vld [vmem:[#allocation2 + $0x309] sm:$0xff]
    %v452 = vld [vmem:[#allocation2 + $0x319] sm:$0xff]
    %v453 = vld [vmem:[#allocation2 + $0x321] sm:$0xff]
    %454 = vst [vmem:[#allocation3 + $0x8] sm:$0xff] %v390
    %455 = vst [vmem:[#allocation3 + $0x50] sm:$0xff] %v391
    %456 = vst [vmem:[#allocation3 + $0x98] sm:$0xff] %v392
    %457 = vst [vmem:[#allocation3 + $0xe0] sm:$0xff] %v393
    %458 = vst [vmem:[#allocation3 + $0x128] sm:$0xff] %v394
    %459 = vst [vmem:[#allocation3 + $0x170] sm:$0xff] %v395
    %460 = vst [vmem:[#allocation3 + $0x1b8] sm:$0xff] %v396
    %461 = vst [vmem:[#allocation3 + $0x200] sm:$0xff] %v397
    %462 = vst [vmem:[#allocation3 + $0x248] sm:$0xff] %v398
    %463 = vst [vmem:[#allocation3 + $0x290] sm:$0xff] %v399
    %464 = vst [vmem:[#allocation3 + $0x2d8] sm:$0xff] %v400
    %465 = vst [vmem:[#allocation3 + $0x320] sm:$0xff] %v401
    %466 = vst [vmem:[#allocation3 + $0x368] sm:$0xff] %v402
    %467 = vst [vmem:[#allocation3 + $0x3b0] sm:$0xff] %v403
    %468 = vst [vmem:[#allocation3 + $0x3f8] sm:$0xff] %v404
    %469 = vst [vmem:[#allocation3 + $0x440] sm:$0xff] %v405
    %470 = vst [vmem:[#allocation3 + $0x488] sm:$0xff] %v406
    %471 = vst [vmem:[#allocation3 + $0x4d0] sm:$0xff] %v407
    %472 = vst [vmem:[#allocation3 + $0x518] sm:$0xff] %v408
    %473 = vst [vmem:[#allocation3 + $0x560] sm:$0xff] %v409
    %474 = vst [vmem:[#allocation3 + $0x5a8] sm:$0xff] %v410
    %475 = vst [vmem:[#allocation3 + $0x5f0] sm:$0xff] %v411
    %476 = vst [vmem:[#allocation3 + $0x638] sm:$0xff] %v412
    %477 = vst [vmem:[#allocation3 + $0x680] sm:$0xff] %v413
    %478 = vst [vmem:[#allocation3 + $0x6c8] sm:$0xff] %v414
    %479 = vst [vmem:[#allocation3 + $0x710] sm:$0xff] %v415
    %480 = vst [vmem:[#allocation3 + $0x758] sm:$0xff] %v416
    %481 = vst [vmem:[#allocation3 + $0x7a0] sm:$0xff] %v417
    %482 = vst [vmem:[#allocation3 + $0x7e8] sm:$0xff] %v418
    %483 = vst [vmem:[#allocation3 + $0x830] sm:$0xff] %v419
    %484 = vst [vmem:[#allocation3 + $0x878] sm:$0xff] %v420
    %485 = vst [vmem:[#allocation3 + $0x8c0] sm:$0xff] %v421
    %486 = vst [vmem:[#allocation3 + $0x908] sm:$0xff] %v422
    %487 = vst [vmem:[#allocation3 + $0x950] sm:$0xff] %v423
    %488 = vst [vmem:[#allocation3 + $0x998] sm:$0xff] %v424
    %489 = vst [vmem:[#allocation3 + $0x9e0] sm:$0xff] %v425
    %490 = vst [vmem:[#allocation3 + $0xa28] sm:$0xff] %v426
    %491 = vst [vmem:[#allocation3 + $0xa70] sm:$0xff] %v427
    %492 = vst [vmem:[#allocation3 + $0xab8] sm:$0xff] %v428
    %493 = vst [vmem:[#allocation3 + $0xb00] sm:$0xff] %v429
    %494 = vst [vmem:[#allocation3 + $0xb48] sm:$0xff] %v430
    %495 = vst [vmem:[#allocation3 + $0xb90] sm:$0xff] %v431
    %496 = vst [vmem:[#allocation3 + $0xbd8] sm:$0xff] %v432
    %497 = vst [vmem:[#allocation3 + $0xc20] sm:$0xff] %v433
    %498 = vst [vmem:[#allocation3 + $0xc68] sm:$0xff] %v434
    %499 = vst [vmem:[#allocation3 + $0xcb0] sm:$0xff] %v435
    %500 = vst [vmem:[#allocation3 + $0xcf8] sm:$0xff] %v436
    %501 = vst [vmem:[#allocation3 + $0xd40] sm:$0xff] %v437
    %502 = vst [vmem:[#allocation3 + $0xd88] sm:$0xff] %v438
    %503 = vst [vmem:[#allocation3 + $0xdd0] sm:$0xff] %v439
    %504 = vst [vmem:[#allocation3 + $0xe18] sm:$0xff] %v440
    %505 = vst [vmem:[#allocation3 + $0xe60] sm:$0xff] %v441
    %506 = vst [vmem:[#allocation3 + $0xea8] sm:$0xff] %v442
    %507 = vst [vmem:[#allocation3 + $0xef0] sm:$0xff] %v443
    %508 = vst [vmem:[#allocation3 + $0xf38] sm:$0xff] %v444
    %509 = vst [vmem:[#allocation3 + $0xf80] sm:$0xff] %v445
    %510 = vst [vmem:[#allocation3 + $0xfc8] sm:$0xff] %v446
    %511 = vst [vmem:[#allocation3 + $0x1010] sm:$0xff] %v447
    %512 = vst [vmem:[#allocation3 + $0x1058] sm:$0xff] %v448
    %513 = vst [vmem:[#allocation3 + $0x10a0] sm:$0xff] %v449
    %514 = vst [vmem:[#allocation3 + $0x10e8] sm:$0xff] %v450
    %515 = vst [vmem:[#allocation3 + $0x1130] sm:$0xff] %v451
    %516 = vst [vmem:[#allocation3 + $0x1178] sm:$0xff] %v452
    %517 = vst [vmem:[#allocation3 + $0x11c0] sm:$0xff] %v453
    %v518 = vld [vmem:[#allocation2 + $0x2] sm:$0xff]
    %v519 = vld [vmem:[#allocation2 + $0xa] sm:$0xff]
    %v520 = vld [vmem:[#allocation2 + $0x1a] sm:$0xff]
    %v521 = vld [vmem:[#allocation2 + $0x22] sm:$0xff]
    %v522 = vld [vmem:[#allocation2 + $0x32] sm:$0xff]
    %v523 = vld [vmem:[#allocation2 + $0x3a] sm:$0xff]
    %v524 = vld [vmem:[#allocation2 + $0x4a] sm:$0xff]
    %v525 = vld [vmem:[#allocation2 + $0x52] sm:$0xff]
    %v526 = vld [vmem:[#allocation2 + $0x62] sm:$0xff]
    %v527 = vld [vmem:[#allocation2 + $0x6a] sm:$0xff]
    %v528 = vld [vmem:[#allocation2 + $0x7a] sm:$0xff]
    %v529 = vld [vmem:[#allocation2 + $0x82] sm:$0xff]
    %v530 = vld [vmem:[#allocation2 + $0x92] sm:$0xff]
    %v531 = vld [vmem:[#allocation2 + $0x9a] sm:$0xff]
    %v532 = vld [vmem:[#allocation2 + $0xaa] sm:$0xff]
    %v533 = vld [vmem:[#allocation2 + $0xb2] sm:$0xff]
    %v534 = vld [vmem:[#allocation2 + $0xc2] sm:$0xff]
    %v535 = vld [vmem:[#allocation2 + $0xca] sm:$0xff]
    %v536 = vld [vmem:[#allocation2 + $0xda] sm:$0xff]
    %v537 = vld [vmem:[#allocation2 + $0xe2] sm:$0xff]
    %v538 = vld [vmem:[#allocation2 + $0xf2] sm:$0xff]
    %v539 = vld [vmem:[#allocation2 + $0xfa] sm:$0xff]
    %v540 = vld [vmem:[#allocation2 + $0x10a] sm:$0xff]
    %v541 = vld [vmem:[#allocation2 + $0x112] sm:$0xff]
    %v542 = vld [vmem:[#allocation2 + $0x122] sm:$0xff]
    %v543 = vld [vmem:[#allocation2 + $0x12a] sm:$0xff]
    %v544 = vld [vmem:[#allocation2 + $0x13a] sm:$0xff]
    %v545 = vld [vmem:[#allocation2 + $0x142] sm:$0xff]
    %v546 = vld [vmem:[#allocation2 + $0x152] sm:$0xff]
    %v547 = vld [vmem:[#allocation2 + $0x15a] sm:$0xff]
    %v548 = vld [vmem:[#allocation2 + $0x16a] sm:$0xff]
    %v549 = vld [vmem:[#allocation2 + $0x172] sm:$0xff]
    %v550 = vld [vmem:[#allocation2 + $0x1b2] sm:$0xff]
    %v551 = vld [vmem:[#allocation2 + $0x1ba] sm:$0xff]
    %v552 = vld [vmem:[#allocation2 + $0x1ca] sm:$0xff]
    %v553 = vld [vmem:[#allocation2 + $0x1d2] sm:$0xff]
    %v554 = vld [vmem:[#allocation2 + $0x1e2] sm:$0xff]
    %v555 = vld [vmem:[#allocation2 + $0x1ea] sm:$0xff]
    %v556 = vld [vmem:[#allocation2 + $0x1fa] sm:$0xff]
    %v557 = vld [vmem:[#allocation2 + $0x202] sm:$0xff]
    %v558 = vld [vmem:[#allocation2 + $0x212] sm:$0xff]
    %v559 = vld [vmem:[#allocation2 + $0x21a] sm:$0xff]
    %v560 = vld [vmem:[#allocation2 + $0x22a] sm:$0xff]
    %v561 = vld [vmem:[#allocation2 + $0x232] sm:$0xff]
    %v562 = vld [vmem:[#allocation2 + $0x242] sm:$0xff]
    %v563 = vld [vmem:[#allocation2 + $0x24a] sm:$0xff]
    %v564 = vld [vmem:[#allocation2 + $0x25a] sm:$0xff]
    %v565 = vld [vmem:[#allocation2 + $0x262] sm:$0xff]
    %v566 = vld [vmem:[#allocation2 + $0x272] sm:$0xff]
    %v567 = vld [vmem:[#allocation2 + $0x27a] sm:$0xff]
    %v568 = vld [vmem:[#allocation2 + $0x28a] sm:$0xff]
    %v569 = vld [vmem:[#allocation2 + $0x292] sm:$0xff]
    %v570 = vld [vmem:[#allocation2 + $0x2a2] sm:$0xff]
    %v571 = vld [vmem:[#allocation2 + $0x2aa] sm:$0xff]
    %v572 = vld [vmem:[#allocation2 + $0x2ba] sm:$0xff]
    %v573 = vld [vmem:[#allocation2 + $0x2c2] sm:$0xff]
    %v574 = vld [vmem:[#allocation2 + $0x2d2] sm:$0xff]
    %v575 = vld [vmem:[#allocation2 + $0x2da] sm:$0xff]
    %v576 = vld [vmem:[#allocation2 + $0x2ea] sm:$0xff]
    %v577 = vld [vmem:[#allocation2 + $0x2f2] sm:$0xff]
    %v578 = vld [vmem:[#allocation2 + $0x302] sm:$0xff]
    %v579 = vld [vmem:[#allocation2 + $0x30a] sm:$0xff]
    %v580 = vld [vmem:[#allocation2 + $0x31a] sm:$0xff]
    %v581 = vld [vmem:[#allocation2 + $0x322] sm:$0xff]
    %582 = vst [vmem:[#allocation3 + $0x10] sm:$0xff] %v518
    %583 = vst [vmem:[#allocation3 + $0x58] sm:$0xff] %v519
    %584 = vst [vmem:[#allocation3 + $0xa0] sm:$0xff] %v520
    %585 = vst [vmem:[#allocation3 + $0xe8] sm:$0xff] %v521
    %586 = vst [vmem:[#allocation3 + $0x130] sm:$0xff] %v522
    %587 = vst [vmem:[#allocation3 + $0x178] sm:$0xff] %v523
    %588 = vst [vmem:[#allocation3 + $0x1c0] sm:$0xff] %v524
    %589 = vst [vmem:[#allocation3 + $0x208] sm:$0xff] %v525
    %590 = vst [vmem:[#allocation3 + $0x250] sm:$0xff] %v526
    %591 = vst [vmem:[#allocation3 + $0x298] sm:$0xff] %v527
    %592 = vst [vmem:[#allocation3 + $0x2e0] sm:$0xff] %v528
    %593 = vst [vmem:[#allocation3 + $0x328] sm:$0xff] %v529
    %594 = vst [vmem:[#allocation3 + $0x370] sm:$0xff] %v530
    %595 = vst [vmem:[#allocation3 + $0x3b8] sm:$0xff] %v531
    %596 = vst [vmem:[#allocation3 + $0x400] sm:$0xff] %v532
    %597 = vst [vmem:[#allocation3 + $0x448] sm:$0xff] %v533
    %598 = vst [vmem:[#allocation3 + $0x490] sm:$0xff] %v534
    %599 = vst [vmem:[#allocation3 + $0x4d8] sm:$0xff] %v535
    %600 = vst [vmem:[#allocation3 + $0x520] sm:$0xff] %v536
    %601 = vst [vmem:[#allocation3 + $0x568] sm:$0xff] %v537
    %602 = vst [vmem:[#allocation3 + $0x5b0] sm:$0xff] %v538
    %603 = vst [vmem:[#allocation3 + $0x5f8] sm:$0xff] %v539
    %604 = vst [vmem:[#allocation3 + $0x640] sm:$0xff] %v540
    %605 = vst [vmem:[#allocation3 + $0x688] sm:$0xff] %v541
    %606 = vst [vmem:[#allocation3 + $0x6d0] sm:$0xff] %v542
    %607 = vst [vmem:[#allocation3 + $0x718] sm:$0xff] %v543
    %608 = vst [vmem:[#allocation3 + $0x760] sm:$0xff] %v544
    %609 = vst [vmem:[#allocation3 + $0x7a8] sm:$0xff] %v545
    %610 = vst [vmem:[#allocation3 + $0x7f0] sm:$0xff] %v546
    %611 = vst [vmem:[#allocation3 + $0x838] sm:$0xff] %v547
    %612 = vst [vmem:[#allocation3 + $0x880] sm:$0xff] %v548
    %613 = vst [vmem:[#allocation3 + $0x8c8] sm:$0xff] %v549
    %614 = vst [vmem:[#allocation3 + $0x910] sm:$0xff] %v550
    %615 = vst [vmem:[#allocation3 + $0x958] sm:$0xff] %v551
    %616 = vst [vmem:[#allocation3 + $0x9a0] sm:$0xff] %v552
    %617 = vst [vmem:[#allocation3 + $0x9e8] sm:$0xff] %v553
    %618 = vst [vmem:[#allocation3 + $0xa30] sm:$0xff] %v554
    %619 = vst [vmem:[#allocation3 + $0xa78] sm:$0xff] %v555
    %620 = vst [vmem:[#allocation3 + $0xac0] sm:$0xff] %v556
    %621 = vst [vmem:[#allocation3 + $0xb08] sm:$0xff] %v557
    %622 = vst [vmem:[#allocation3 + $0xb50] sm:$0xff] %v558
    %623 = vst [vmem:[#allocation3 + $0xb98] sm:$0xff] %v559
    %624 = vst [vmem:[#allocation3 + $0xbe0] sm:$0xff] %v560
    %625 = vst [vmem:[#allocation3 + $0xc28] sm:$0xff] %v561
    %626 = vst [vmem:[#allocation3 + $0xc70] sm:$0xff] %v562
    %627 = vst [vmem:[#allocation3 + $0xcb8] sm:$0xff] %v563
    %628 = vst [vmem:[#allocation3 + $0xd00] sm:$0xff] %v564
    %629 = vst [vmem:[#allocation3 + $0xd48] sm:$0xff] %v565
    %630 = vst [vmem:[#allocation3 + $0xd90] sm:$0xff] %v566
    %631 = vst [vmem:[#allocation3 + $0xdd8] sm:$0xff] %v567
    %632 = vst [vmem:[#allocation3 + $0xe20] sm:$0xff] %v568
    %633 = vst [vmem:[#allocation3 + $0xe68] sm:$0xff] %v569
    %634 = vst [vmem:[#allocation3 + $0xeb0] sm:$0xff] %v570
    %635 = vst [vmem:[#allocation3 + $0xef8] sm:$0xff] %v571
    %636 = vst [vmem:[#allocation3 + $0xf40] sm:$0xff] %v572
    %637 = vst [vmem:[#allocation3 + $0xf88] sm:$0xff] %v573
    %638 = vst [vmem:[#allocation3 + $0xfd0] sm:$0xff] %v574
    %639 = vst [vmem:[#allocation3 + $0x1018] sm:$0xff] %v575
    %640 = vst [vmem:[#allocation3 + $0x1060] sm:$0xff] %v576
    %641 = vst [vmem:[#allocation3 + $0x10a8] sm:$0xff] %v577
    %642 = vst [vmem:[#allocation3 + $0x10f0] sm:$0xff] %v578
    %643 = vst [vmem:[#allocation3 + $0x1138] sm:$0xff] %v579
    %644 = vst [vmem:[#allocation3 + $0x1180] sm:$0xff] %v580
    %645 = vst [vmem:[#allocation3 + $0x11c8] sm:$0xff] %v581
    %v646 = vld [vmem:[%s197] sm:$0xff]
    %v647 = vld [vmem:[%s197 + $0x8] sm:$0xff]
    %v648 = vld [vmem:[%s197 + $0x18] sm:$0xff]
    %v649 = vld [vmem:[%s197 + $0x20] sm:$0xff]
    %v650 = vld [vmem:[%s197 + $0x30] sm:$0xff]
    %v651 = vld [vmem:[%s197 + $0x38] sm:$0xff]
    %v652 = vld [vmem:[%s197 + $0x48] sm:$0xff]
    %v653 = vld [vmem:[%s197 + $0x50] sm:$0xff]
    %v654 = vld [vmem:[%s197 + $0x60] sm:$0xff]
    %v655 = vld [vmem:[%s197 + $0x68] sm:$0xff]
    %v656 = vld [vmem:[%s197 + $0x78] sm:$0xff]
    %v657 = vld [vmem:[%s197 + $0x80] sm:$0xff]
    %v658 = vld [vmem:[%s197 + $0x90] sm:$0xff]
    %v659 = vld [vmem:[%s197 + $0x98] sm:$0xff]
    %v660 = vld [vmem:[%s197 + $0xa8] sm:$0xff]
    %v661 = vld [vmem:[%s197 + $0xb0] sm:$0xff]
    %v662 = vld [vmem:[%s197 + $0xc0] sm:$0xff]
    %v663 = vld [vmem:[%s197 + $0xc8] sm:$0xff]
    %v664 = vld [vmem:[%s197 + $0xd8] sm:$0xff]
    %v665 = vld [vmem:[%s197 + $0xe0] sm:$0xff]
    %v666 = vld [vmem:[%s197 + $0xf0] sm:$0xff]
    %v667 = vld [vmem:[%s197 + $0xf8] sm:$0xff]
    %v668 = vld [vmem:[%s197 + $0x108] sm:$0xff]
    %v669 = vld [vmem:[%s197 + $0x110] sm:$0xff]
    %v670 = vld [vmem:[%s197 + $0x120] sm:$0xff]
    %v671 = vld [vmem:[%s197 + $0x128] sm:$0xff]
    %v672 = vld [vmem:[%s197 + $0x138] sm:$0xff]
    %v673 = vld [vmem:[%s197 + $0x140] sm:$0xff]
    %v674 = vld [vmem:[%s197 + $0x150] sm:$0xff]
    %v675 = vld [vmem:[%s197 + $0x158] sm:$0xff]
    %v676 = vld [vmem:[%s197 + $0x168] sm:$0xff]
    %v677 = vld [vmem:[%s197 + $0x170] sm:$0xff]
    %v678 = vld [vmem:[%s197 + $0x1b0] sm:$0xff]
    %v679 = vld [vmem:[%s197 + $0x1b8] sm:$0xff]
    %v680 = vld [vmem:[%s197 + $0x1c8] sm:$0xff]
    %v681 = vld [vmem:[%s197 + $0x1d0] sm:$0xff]
    %v682 = vld [vmem:[%s197 + $0x1e0] sm:$0xff]
    %v683 = vld [vmem:[%s197 + $0x1e8] sm:$0xff]
    %v684 = vld [vmem:[%s197 + $0x1f8] sm:$0xff]
    %v685 = vld [vmem:[%s197 + $0x200] sm:$0xff]
    %v686 = vld [vmem:[%s197 + $0x210] sm:$0xff]
    %v687 = vld [vmem:[%s197 + $0x218] sm:$0xff]
    %v688 = vld [vmem:[%s197 + $0x228] sm:$0xff]
    %v689 = vld [vmem:[%s197 + $0x230] sm:$0xff]
    %v690 = vld [vmem:[%s197 + $0x240] sm:$0xff]
    %v691 = vld [vmem:[%s197 + $0x248] sm:$0xff]
    %v692 = vld [vmem:[%s197 + $0x258] sm:$0xff]
    %v693 = vld [vmem:[%s197 + $0x260] sm:$0xff]
    %v694 = vld [vmem:[%s197 + $0x270] sm:$0xff]
    %v695 = vld [vmem:[%s197 + $0x278] sm:$0xff]
    %v696 = vld [vmem:[%s197 + $0x288] sm:$0xff]
    %v697 = vld [vmem:[%s197 + $0x290] sm:$0xff]
    %v698 = vld [vmem:[%s197 + $0x2a0] sm:$0xff]
    %v699 = vld [vmem:[%s197 + $0x2a8] sm:$0xff]
    %v700 = vld [vmem:[%s197 + $0x2b8] sm:$0xff]
    %v701 = vld [vmem:[%s197 + $0x2c0] sm:$0xff]
    %v702 = vld [vmem:[%s197 + $0x2d0] sm:$0xff]
    %v703 = vld [vmem:[%s197 + $0x2d8] sm:$0xff]
    %v704 = vld [vmem:[%s197 + $0x2e8] sm:$0xff]
    %v705 = vld [vmem:[%s197 + $0x2f0] sm:$0xff]
    %v706 = vld [vmem:[%s197 + $0x300] sm:$0xff]
    %v707 = vld [vmem:[%s197 + $0x308] sm:$0xff]
    %v708 = vld [vmem:[%s197 + $0x318] sm:$0xff]
    %v709 = vld [vmem:[%s197 + $0x320] sm:$0xff]
    %710 = vst [vmem:[#allocation3 + $0x18] sm:$0xff] %v646
    %711 = vst [vmem:[#allocation3 + $0x60] sm:$0xff] %v647
    %712 = vst [vmem:[#allocation3 + $0xa8] sm:$0xff] %v648
    %713 = vst [vmem:[#allocation3 + $0xf0] sm:$0xff] %v649
    %714 = vst [vmem:[#allocation3 + $0x138] sm:$0xff] %v650
    %715 = vst [vmem:[#allocation3 + $0x180] sm:$0xff] %v651
    %716 = vst [vmem:[#allocation3 + $0x1c8] sm:$0xff] %v652
    %717 = vst [vmem:[#allocation3 + $0x210] sm:$0xff] %v653
    %718 = vst [vmem:[#allocation3 + $0x258] sm:$0xff] %v654
    %719 = vst [vmem:[#allocation3 + $0x2a0] sm:$0xff] %v655
    %720 = vst [vmem:[#allocation3 + $0x2e8] sm:$0xff] %v656
    %721 = vst [vmem:[#allocation3 + $0x330] sm:$0xff] %v657
    %722 = vst [vmem:[#allocation3 + $0x378] sm:$0xff] %v658
    %723 = vst [vmem:[#allocation3 + $0x3c0] sm:$0xff] %v659
    %724 = vst [vmem:[#allocation3 + $0x408] sm:$0xff] %v660
    %725 = vst [vmem:[#allocation3 + $0x450] sm:$0xff] %v661
    %726 = vst [vmem:[#allocation3 + $0x498] sm:$0xff] %v662
    %727 = vst [vmem:[#allocation3 + $0x4e0] sm:$0xff] %v663
    %728 = vst [vmem:[#allocation3 + $0x528] sm:$0xff] %v664
    %729 = vst [vmem:[#allocation3 + $0x570] sm:$0xff] %v665
    %730 = vst [vmem:[#allocation3 + $0x5b8] sm:$0xff] %v666
    %731 = vst [vmem:[#allocation3 + $0x600] sm:$0xff] %v667
    %732 = vst [vmem:[#allocation3 + $0x648] sm:$0xff] %v668
    %733 = vst [vmem:[#allocation3 + $0x690] sm:$0xff] %v669
    %734 = vst [vmem:[#allocation3 + $0x6d8] sm:$0xff] %v670
    %735 = vst [vmem:[#allocation3 + $0x720] sm:$0xff] %v671
    %736 = vst [vmem:[#allocation3 + $0x768] sm:$0xff] %v672
    %737 = vst [vmem:[#allocation3 + $0x7b0] sm:$0xff] %v673
    %738 = vst [vmem:[#allocation3 + $0x7f8] sm:$0xff] %v674
    %739 = vst [vmem:[#allocation3 + $0x840] sm:$0xff] %v675
    %740 = vst [vmem:[#allocation3 + $0x888] sm:$0xff] %v676
    %741 = vst [vmem:[#allocation3 + $0x8d0] sm:$0xff] %v677
    %742 = vst [vmem:[#allocation3 + $0x918] sm:$0xff] %v678
    %743 = vst [vmem:[#allocation3 + $0x960] sm:$0xff] %v679
    %744 = vst [vmem:[#allocation3 + $0x9a8] sm:$0xff] %v680
    %745 = vst [vmem:[#allocation3 + $0x9f0] sm:$0xff] %v681
    %746 = vst [vmem:[#allocation3 + $0xa38] sm:$0xff] %v682
    %747 = vst [vmem:[#allocation3 + $0xa80] sm:$0xff] %v683
    %748 = vst [vmem:[#allocation3 + $0xac8] sm:$0xff] %v684
    %749 = vst [vmem:[#allocation3 + $0xb10] sm:$0xff] %v685
    %750 = vst [vmem:[#allocation3 + $0xb58] sm:$0xff] %v686
    %751 = vst [vmem:[#allocation3 + $0xba0] sm:$0xff] %v687
    %752 = vst [vmem:[#allocation3 + $0xbe8] sm:$0xff] %v688
    %753 = vst [vmem:[#allocation3 + $0xc30] sm:$0xff] %v689
    %754 = vst [vmem:[#allocation3 + $0xc78] sm:$0xff] %v690
    %755 = vst [vmem:[#allocation3 + $0xcc0] sm:$0xff] %v691
    %756 = vst [vmem:[#allocation3 + $0xd08] sm:$0xff] %v692
    %757 = vst [vmem:[#allocation3 + $0xd50] sm:$0xff] %v693
    %758 = vst [vmem:[#allocation3 + $0xd98] sm:$0xff] %v694
    %759 = vst [vmem:[#allocation3 + $0xde0] sm:$0xff] %v695
    %760 = vst [vmem:[#allocation3 + $0xe28] sm:$0xff] %v696
    %761 = vst [vmem:[#allocation3 + $0xe70] sm:$0xff] %v697
    %762 = vst [vmem:[#allocation3 + $0xeb8] sm:$0xff] %v698
    %763 = vst [vmem:[#allocation3 + $0xf00] sm:$0xff] %v699
    %764 = vst [vmem:[#allocation3 + $0xf48] sm:$0xff] %v700
    %765 = vst [vmem:[#allocation3 + $0xf90] sm:$0xff] %v701
    %766 = vst [vmem:[#allocation3 + $0xfd8] sm:$0xff] %v702
    %767 = vst [vmem:[#allocation3 + $0x1020] sm:$0xff] %v703
    %768 = vst [vmem:[#allocation3 + $0x1068] sm:$0xff] %v704
    %769 = vst [vmem:[#allocation3 + $0x10b0] sm:$0xff] %v705
    %770 = vst [vmem:[#allocation3 + $0x10f8] sm:$0xff] %v706
    %771 = vst [vmem:[#allocation3 + $0x1140] sm:$0xff] %v707
    %772 = vst [vmem:[#allocation3 + $0x1188] sm:$0xff] %v708
    %773 = vst [vmem:[#allocation3 + $0x11d0] sm:$0xff] %v709
    %v774 = vld [vmem:[%s197 + $0x1] sm:$0xff]
    %v775 = vld [vmem:[%s197 + $0x9] sm:$0xff]
    %v776 = vld [vmem:[%s197 + $0x19] sm:$0xff]
    %v777 = vld [vmem:[%s197 + $0x21] sm:$0xff]
    %v778 = vld [vmem:[%s197 + $0x31] sm:$0xff]
    %v779 = vld [vmem:[%s197 + $0x39] sm:$0xff]
    %v780 = vld [vmem:[%s197 + $0x49] sm:$0xff]
    %v781 = vld [vmem:[%s197 + $0x51] sm:$0xff]
    %v782 = vld [vmem:[%s197 + $0x61] sm:$0xff]
    %v783 = vld [vmem:[%s197 + $0x69] sm:$0xff]
    %v784 = vld [vmem:[%s197 + $0x79] sm:$0xff]
    %v785 = vld [vmem:[%s197 + $0x81] sm:$0xff]
    %v786 = vld [vmem:[%s197 + $0x91] sm:$0xff]
    %v787 = vld [vmem:[%s197 + $0x99] sm:$0xff]
    %v788 = vld [vmem:[%s197 + $0xa9] sm:$0xff]
    %v789 = vld [vmem:[%s197 + $0xb1] sm:$0xff]
    %v790 = vld [vmem:[%s197 + $0xc1] sm:$0xff]
    %v791 = vld [vmem:[%s197 + $0xc9] sm:$0xff]
    %v792 = vld [vmem:[%s197 + $0xd9] sm:$0xff]
    %v793 = vld [vmem:[%s197 + $0xe1] sm:$0xff]
    %v794 = vld [vmem:[%s197 + $0xf1] sm:$0xff]
    %v795 = vld [vmem:[%s197 + $0xf9] sm:$0xff]
    %v796 = vld [vmem:[%s197 + $0x109] sm:$0xff]
    %v797 = vld [vmem:[%s197 + $0x111] sm:$0xff]
    %v798 = vld [vmem:[%s197 + $0x121] sm:$0xff]
    %v799 = vld [vmem:[%s197 + $0x129] sm:$0xff]
    %v800 = vld [vmem:[%s197 + $0x139] sm:$0xff]
    %v801 = vld [vmem:[%s197 + $0x141] sm:$0xff]
    %v802 = vld [vmem:[%s197 + $0x151] sm:$0xff]
    %v803 = vld [vmem:[%s197 + $0x159] sm:$0xff]
    %v804 = vld [vmem:[%s197 + $0x169] sm:$0xff]
    %v805 = vld [vmem:[%s197 + $0x171] sm:$0xff]
    %v806 = vld [vmem:[%s197 + $0x1b1] sm:$0xff]
    %v807 = vld [vmem:[%s197 + $0x1b9] sm:$0xff]
    %v808 = vld [vmem:[%s197 + $0x1c9] sm:$0xff]
    %v809 = vld [vmem:[%s197 + $0x1d1] sm:$0xff]
    %v810 = vld [vmem:[%s197 + $0x1e1] sm:$0xff]
    %v811 = vld [vmem:[%s197 + $0x1e9] sm:$0xff]
    %v812 = vld [vmem:[%s197 + $0x1f9] sm:$0xff]
    %v813 = vld [vmem:[%s197 + $0x201] sm:$0xff]
    %v814 = vld [vmem:[%s197 + $0x211] sm:$0xff]
    %v815 = vld [vmem:[%s197 + $0x219] sm:$0xff]
    %v816 = vld [vmem:[%s197 + $0x229] sm:$0xff]
    %v817 = vld [vmem:[%s197 + $0x231] sm:$0xff]
    %v818 = vld [vmem:[%s197 + $0x241] sm:$0xff]
    %v819 = vld [vmem:[%s197 + $0x249] sm:$0xff]
    %v820 = vld [vmem:[%s197 + $0x259] sm:$0xff]
    %v821 = vld [vmem:[%s197 + $0x261] sm:$0xff]
    %v822 = vld [vmem:[%s197 + $0x271] sm:$0xff]
    %v823 = vld [vmem:[%s197 + $0x279] sm:$0xff]
    %v824 = vld [vmem:[%s197 + $0x289] sm:$0xff]
    %v825 = vld [vmem:[%s197 + $0x291] sm:$0xff]
    %v826 = vld [vmem:[%s197 + $0x2a1] sm:$0xff]
    %v827 = vld [vmem:[%s197 + $0x2a9] sm:$0xff]
    %v828 = vld [vmem:[%s197 + $0x2b9] sm:$0xff]
    %v829 = vld [vmem:[%s197 + $0x2c1] sm:$0xff]
    %v830 = vld [vmem:[%s197 + $0x2d1] sm:$0xff]
    %v831 = vld [vmem:[%s197 + $0x2d9] sm:$0xff]
    %v832 = vld [vmem:[%s197 + $0x2e9] sm:$0xff]
    %v833 = vld [vmem:[%s197 + $0x2f1] sm:$0xff]
    %v834 = vld [vmem:[%s197 + $0x301] sm:$0xff]
    %v835 = vld [vmem:[%s197 + $0x309] sm:$0xff]
    %v836 = vld [vmem:[%s197 + $0x319] sm:$0xff]
    %v837 = vld [vmem:[%s197 + $0x321] sm:$0xff]
    %838 = vst [vmem:[#allocation3 + $0x20] sm:$0xff] %v774
    %839 = vst [vmem:[#allocation3 + $0x68] sm:$0xff] %v775
    %840 = vst [vmem:[#allocation3 + $0xb0] sm:$0xff] %v776
    %841 = vst [vmem:[#allocation3 + $0xf8] sm:$0xff] %v777
    %842 = vst [vmem:[#allocation3 + $0x140] sm:$0xff] %v778
    %843 = vst [vmem:[#allocation3 + $0x188] sm:$0xff] %v779
    %844 = vst [vmem:[#allocation3 + $0x1d0] sm:$0xff] %v780
    %845 = vst [vmem:[#allocation3 + $0x218] sm:$0xff] %v781
    %846 = vst [vmem:[#allocation3 + $0x260] sm:$0xff] %v782
    %847 = vst [vmem:[#allocation3 + $0x2a8] sm:$0xff] %v783
    %848 = vst [vmem:[#allocation3 + $0x2f0] sm:$0xff] %v784
    %849 = vst [vmem:[#allocation3 + $0x338] sm:$0xff] %v785
    %850 = vst [vmem:[#allocation3 + $0x380] sm:$0xff] %v786
    %851 = vst [vmem:[#allocation3 + $0x3c8] sm:$0xff] %v787
    %852 = vst [vmem:[#allocation3 + $0x410] sm:$0xff] %v788
    %853 = vst [vmem:[#allocation3 + $0x458] sm:$0xff] %v789
    %854 = vst [vmem:[#allocation3 + $0x4a0] sm:$0xff] %v790
    %855 = vst [vmem:[#allocation3 + $0x4e8] sm:$0xff] %v791
    %856 = vst [vmem:[#allocation3 + $0x530] sm:$0xff] %v792
    %857 = vst [vmem:[#allocation3 + $0x578] sm:$0xff] %v793
    %858 = vst [vmem:[#allocation3 + $0x5c0] sm:$0xff] %v794
    %859 = vst [vmem:[#allocation3 + $0x608] sm:$0xff] %v795
    %860 = vst [vmem:[#allocation3 + $0x650] sm:$0xff] %v796
    %861 = vst [vmem:[#allocation3 + $0x698] sm:$0xff] %v797
    %862 = vst [vmem:[#allocation3 + $0x6e0] sm:$0xff] %v798
    %863 = vst [vmem:[#allocation3 + $0x728] sm:$0xff] %v799
    %864 = vst [vmem:[#allocation3 + $0x770] sm:$0xff] %v800
    %865 = vst [vmem:[#allocation3 + $0x7b8] sm:$0xff] %v801
    %866 = vst [vmem:[#allocation3 + $0x800] sm:$0xff] %v802
    %867 = vst [vmem:[#allocation3 + $0x848] sm:$0xff] %v803
    %868 = vst [vmem:[#allocation3 + $0x890] sm:$0xff] %v804
    %869 = vst [vmem:[#allocation3 + $0x8d8] sm:$0xff] %v805
    %870 = vst [vmem:[#allocation3 + $0x920] sm:$0xff] %v806
    %871 = vst [vmem:[#allocation3 + $0x968] sm:$0xff] %v807
    %872 = vst [vmem:[#allocation3 + $0x9b0] sm:$0xff] %v808
    %873 = vst [vmem:[#allocation3 + $0x9f8] sm:$0xff] %v809
    %874 = vst [vmem:[#allocation3 + $0xa40] sm:$0xff] %v810
    %875 = vst [vmem:[#allocation3 + $0xa88] sm:$0xff] %v811
    %876 = vst [vmem:[#allocation3 + $0xad0] sm:$0xff] %v812
    %877 = vst [vmem:[#allocation3 + $0xb18] sm:$0xff] %v813
    %878 = vst [vmem:[#allocation3 + $0xb60] sm:$0xff] %v814
    %879 = vst [vmem:[#allocation3 + $0xba8] sm:$0xff] %v815
    %880 = vst [vmem:[#allocation3 + $0xbf0] sm:$0xff] %v816
    %881 = vst [vmem:[#allocation3 + $0xc38] sm:$0xff] %v817
    %882 = vst [vmem:[#allocation3 + $0xc80] sm:$0xff] %v818
    %883 = vst [vmem:[#allocation3 + $0xcc8] sm:$0xff] %v819
    %884 = vst [vmem:[#allocation3 + $0xd10] sm:$0xff] %v820
    %885 = vst [vmem:[#allocation3 + $0xd58] sm:$0xff] %v821
    %886 = vst [vmem:[#allocation3 + $0xda0] sm:$0xff] %v822
    %887 = vst [vmem:[#allocation3 + $0xde8] sm:$0xff] %v823
    %888 = vst [vmem:[#allocation3 + $0xe30] sm:$0xff] %v824
    %889 = vst [vmem:[#allocation3 + $0xe78] sm:$0xff] %v825
    %890 = vst [vmem:[#allocation3 + $0xec0] sm:$0xff] %v826
    %891 = vst [vmem:[#allocation3 + $0xf08] sm:$0xff] %v827
    %892 = vst [vmem:[#allocation3 + $0xf50] sm:$0xff] %v828
    %893 = vst [vmem:[#allocation3 + $0xf98] sm:$0xff] %v829
    %894 = vst [vmem:[#allocation3 + $0xfe0] sm:$0xff] %v830
    %895 = vst [vmem:[#allocation3 + $0x1028] sm:$0xff] %v831
    %896 = vst [vmem:[#allocation3 + $0x1070] sm:$0xff] %v832
    %897 = vst [vmem:[#allocation3 + $0x10b8] sm:$0xff] %v833
    %898 = vst [vmem:[#allocation3 + $0x1100] sm:$0xff] %v834
    %899 = vst [vmem:[#allocation3 + $0x1148] sm:$0xff] %v835
    %900 = vst [vmem:[#allocation3 + $0x1190] sm:$0xff] %v836
    %901 = vst [vmem:[#allocation3 + $0x11d8] sm:$0xff] %v837
    %v902 = vld [vmem:[%s197 + $0x2] sm:$0xff]
    %v903 = vld [vmem:[%s197 + $0xa] sm:$0xff]
    %v904 = vld [vmem:[%s197 + $0x1a] sm:$0xff]
    %v905 = vld [vmem:[%s197 + $0x22] sm:$0xff]
    %v906 = vld [vmem:[%s197 + $0x32] sm:$0xff]
    %v907 = vld [vmem:[%s197 + $0x3a] sm:$0xff]
    %v908 = vld [vmem:[%s197 + $0x4a] sm:$0xff]
    %v909 = vld [vmem:[%s197 + $0x52] sm:$0xff]
    %v910 = vld [vmem:[%s197 + $0x62] sm:$0xff]
    %v911 = vld [vmem:[%s197 + $0x6a] sm:$0xff]
    %v912 = vld [vmem:[%s197 + $0x7a] sm:$0xff]
    %v913 = vld [vmem:[%s197 + $0x82] sm:$0xff]
    %v914 = vld [vmem:[%s197 + $0x92] sm:$0xff]
    %v915 = vld [vmem:[%s197 + $0x9a] sm:$0xff]
    %v916 = vld [vmem:[%s197 + $0xaa] sm:$0xff]
    %v917 = vld [vmem:[%s197 + $0xb2] sm:$0xff]
    %v918 = vld [vmem:[%s197 + $0xc2] sm:$0xff]
    %v919 = vld [vmem:[%s197 + $0xca] sm:$0xff]
    %v920 = vld [vmem:[%s197 + $0xda] sm:$0xff]
    %v921 = vld [vmem:[%s197 + $0xe2] sm:$0xff]
    %v922 = vld [vmem:[%s197 + $0xf2] sm:$0xff]
    %v923 = vld [vmem:[%s197 + $0xfa] sm:$0xff]
    %v924 = vld [vmem:[%s197 + $0x10a] sm:$0xff]
    %v925 = vld [vmem:[%s197 + $0x112] sm:$0xff]
    %v926 = vld [vmem:[%s197 + $0x122] sm:$0xff]
    %v927 = vld [vmem:[%s197 + $0x12a] sm:$0xff]
    %v928 = vld [vmem:[%s197 + $0x13a] sm:$0xff]
    %v929 = vld [vmem:[%s197 + $0x142] sm:$0xff]
    %v930 = vld [vmem:[%s197 + $0x152] sm:$0xff]
    %v931 = vld [vmem:[%s197 + $0x15a] sm:$0xff]
    %v932 = vld [vmem:[%s197 + $0x16a] sm:$0xff]
    %v933 = vld [vmem:[%s197 + $0x172] sm:$0xff]
    %v934 = vld [vmem:[%s197 + $0x1b2] sm:$0xff]
    %v935 = vld [vmem:[%s197 + $0x1ba] sm:$0xff]
    %v936 = vld [vmem:[%s197 + $0x1ca] sm:$0xff]
    %v937 = vld [vmem:[%s197 + $0x1d2] sm:$0xff]
    %v938 = vld [vmem:[%s197 + $0x1e2] sm:$0xff]
    %v939 = vld [vmem:[%s197 + $0x1ea] sm:$0xff]
    %v940 = vld [vmem:[%s197 + $0x1fa] sm:$0xff]
    %v941 = vld [vmem:[%s197 + $0x202] sm:$0xff]
    %v942 = vld [vmem:[%s197 + $0x212] sm:$0xff]
    %v943 = vld [vmem:[%s197 + $0x21a] sm:$0xff]
    %v944 = vld [vmem:[%s197 + $0x22a] sm:$0xff]
    %v945 = vld [vmem:[%s197 + $0x232] sm:$0xff]
    %v946 = vld [vmem:[%s197 + $0x242] sm:$0xff]
    %v947 = vld [vmem:[%s197 + $0x24a] sm:$0xff]
    %v948 = vld [vmem:[%s197 + $0x25a] sm:$0xff]
    %v949 = vld [vmem:[%s197 + $0x262] sm:$0xff]
    %v950 = vld [vmem:[%s197 + $0x272] sm:$0xff]
    %v951 = vld [vmem:[%s197 + $0x27a] sm:$0xff]
    %v952 = vld [vmem:[%s197 + $0x28a] sm:$0xff]
    %v953 = vld [vmem:[%s197 + $0x292] sm:$0xff]
    %v954 = vld [vmem:[%s197 + $0x2a2] sm:$0xff]
    %v955 = vld [vmem:[%s197 + $0x2aa] sm:$0xff]
    %v956 = vld [vmem:[%s197 + $0x2ba] sm:$0xff]
    %v957 = vld [vmem:[%s197 + $0x2c2] sm:$0xff]
    %v958 = vld [vmem:[%s197 + $0x2d2] sm:$0xff]
    %v959 = vld [vmem:[%s197 + $0x2da] sm:$0xff]
    %v960 = vld [vmem:[%s197 + $0x2ea] sm:$0xff]
    %v961 = vld [vmem:[%s197 + $0x2f2] sm:$0xff]
    %v962 = vld [vmem:[%s197 + $0x302] sm:$0xff]
    %v963 = vld [vmem:[%s197 + $0x30a] sm:$0xff]
    %v964 = vld [vmem:[%s197 + $0x31a] sm:$0xff]
    %v965 = vld [vmem:[%s197 + $0x322] sm:$0xff]
    %966 = vst [vmem:[#allocation3 + $0x28] sm:$0xff] %v902
    %967 = vst [vmem:[#allocation3 + $0x70] sm:$0xff] %v903
    %968 = vst [vmem:[#allocation3 + $0xb8] sm:$0xff] %v904
    %969 = vst [vmem:[#allocation3 + $0x100] sm:$0xff] %v905
    %970 = vst [vmem:[#allocation3 + $0x148] sm:$0xff] %v906
    %971 = vst [vmem:[#allocation3 + $0x190] sm:$0xff] %v907
    %972 = vst [vmem:[#allocation3 + $0x1d8] sm:$0xff] %v908
    %973 = vst [vmem:[#allocation3 + $0x220] sm:$0xff] %v909
    %974 = vst [vmem:[#allocation3 + $0x268] sm:$0xff] %v910
    %975 = vst [vmem:[#allocation3 + $0x2b0] sm:$0xff] %v911
    %976 = vst [vmem:[#allocation3 + $0x2f8] sm:$0xff] %v912
    %977 = vst [vmem:[#allocation3 + $0x340] sm:$0xff] %v913
    %978 = vst [vmem:[#allocation3 + $0x388] sm:$0xff] %v914
    %979 = vst [vmem:[#allocation3 + $0x3d0] sm:$0xff] %v915
    %980 = vst [vmem:[#allocation3 + $0x418] sm:$0xff] %v916
    %981 = vst [vmem:[#allocation3 + $0x460] sm:$0xff] %v917
    %982 = vst [vmem:[#allocation3 + $0x4a8] sm:$0xff] %v918
    %983 = vst [vmem:[#allocation3 + $0x4f0] sm:$0xff] %v919
    %984 = vst [vmem:[#allocation3 + $0x538] sm:$0xff] %v920
    %985 = vst [vmem:[#allocation3 + $0x580] sm:$0xff] %v921
    %986 = vst [vmem:[#allocation3 + $0x5c8] sm:$0xff] %v922
    %987 = vst [vmem:[#allocation3 + $0x610] sm:$0xff] %v923
    %988 = vst [vmem:[#allocation3 + $0x658] sm:$0xff] %v924
    %989 = vst [vmem:[#allocation3 + $0x6a0] sm:$0xff] %v925
    %990 = vst [vmem:[#allocation3 + $0x6e8] sm:$0xff] %v926
    %991 = vst [vmem:[#allocation3 + $0x730] sm:$0xff] %v927
    %992 = vst [vmem:[#allocation3 + $0x778] sm:$0xff] %v928
    %993 = vst [vmem:[#allocation3 + $0x7c0] sm:$0xff] %v929
    %994 = vst [vmem:[#allocation3 + $0x808] sm:$0xff] %v930
    %995 = vst [vmem:[#allocation3 + $0x850] sm:$0xff] %v931
    %996 = vst [vmem:[#allocation3 + $0x898] sm:$0xff] %v932
    %997 = vst [vmem:[#allocation3 + $0x8e0] sm:$0xff] %v933
    %998 = vst [vmem:[#allocation3 + $0x928] sm:$0xff] %v934
    %999 = vst [vmem:[#allocation3 + $0x970] sm:$0xff] %v935
    %1000 = vst [vmem:[#allocation3 + $0x9b8] sm:$0xff] %v936
    %1001 = vst [vmem:[#allocation3 + $0xa00] sm:$0xff] %v937
    %1002 = vst [vmem:[#allocation3 + $0xa48] sm:$0xff] %v938
    %1003 = vst [vmem:[#allocation3 + $0xa90] sm:$0xff] %v939
    %1004 = vst [vmem:[#allocation3 + $0xad8] sm:$0xff] %v940
    %1005 = vst [vmem:[#allocation3 + $0xb20] sm:$0xff] %v941
    %1006 = vst [vmem:[#allocation3 + $0xb68] sm:$0xff] %v942
    %1007 = vst [vmem:[#allocation3 + $0xbb0] sm:$0xff] %v943
    %1008 = vst [vmem:[#allocation3 + $0xbf8] sm:$0xff] %v944
    %1009 = vst [vmem:[#allocation3 + $0xc40] sm:$0xff] %v945
    %1010 = vst [vmem:[#allocation3 + $0xc88] sm:$0xff] %v946
    %1011 = vst [vmem:[#allocation3 + $0xcd0] sm:$0xff] %v947
    %1012 = vst [vmem:[#allocation3 + $0xd18] sm:$0xff] %v948
    %1013 = vst [vmem:[#allocation3 + $0xd60] sm:$0xff] %v949
    %1014 = vst [vmem:[#allocation3 + $0xda8] sm:$0xff] %v950
    %1015 = vst [vmem:[#allocation3 + $0xdf0] sm:$0xff] %v951
    %1016 = vst [vmem:[#allocation3 + $0xe38] sm:$0xff] %v952
    %1017 = vst [vmem:[#allocation3 + $0xe80] sm:$0xff] %v953
    %1018 = vst [vmem:[#allocation3 + $0xec8] sm:$0xff] %v954
    %1019 = vst [vmem:[#allocation3 + $0xf10] sm:$0xff] %v955
    %1020 = vst [vmem:[#allocation3 + $0xf58] sm:$0xff] %v956
    %1021 = vst [vmem:[#allocation3 + $0xfa0] sm:$0xff] %v957
    %1022 = vst [vmem:[#allocation3 + $0xfe8] sm:$0xff] %v958
    %1023 = vst [vmem:[#allocation3 + $0x1030] sm:$0xff] %v959
    %1024 = vst [vmem:[#allocation3 + $0x1078] sm:$0xff] %v960
    %1025 = vst [vmem:[#allocation3 + $0x10c0] sm:$0xff] %v961
    %1026 = vst [vmem:[#allocation3 + $0x1108] sm:$0xff] %v962
    %1027 = vst [vmem:[#allocation3 + $0x1150] sm:$0xff] %v963
    %1028 = vst [vmem:[#allocation3 + $0x1198] sm:$0xff] %v964
    %1029 = vst [vmem:[#allocation3 + $0x11e0] sm:$0xff] %v965
    %s1030 = scalar_lea.vmem [#allocation2], 48
    %v1031 = vld [vmem:[%s1030] sm:$0xff]
    %v1032 = vld [vmem:[%s1030 + $0x8] sm:$0xff]
    %v1033 = vld [vmem:[%s1030 + $0x18] sm:$0xff]
    %v1034 = vld [vmem:[%s1030 + $0x20] sm:$0xff]
    %v1035 = vld [vmem:[%s1030 + $0x30] sm:$0xff]
    %v1036 = vld [vmem:[%s1030 + $0x38] sm:$0xff]
    %v1037 = vld [vmem:[%s1030 + $0x48] sm:$0xff]
    %v1038 = vld [vmem:[%s1030 + $0x50] sm:$0xff]
    %v1039 = vld [vmem:[%s1030 + $0x60] sm:$0xff]
    %v1040 = vld [vmem:[%s1030 + $0x68] sm:$0xff]
    %v1041 = vld [vmem:[%s1030 + $0x78] sm:$0xff]
    %v1042 = vld [vmem:[%s1030 + $0x80] sm:$0xff]
    %v1043 = vld [vmem:[%s1030 + $0x90] sm:$0xff]
    %v1044 = vld [vmem:[%s1030 + $0x98] sm:$0xff]
    %v1045 = vld [vmem:[%s1030 + $0xa8] sm:$0xff]
    %v1046 = vld [vmem:[%s1030 + $0xb0] sm:$0xff]
    %v1047 = vld [vmem:[%s1030 + $0xc0] sm:$0xff]
    %v1048 = vld [vmem:[%s1030 + $0xc8] sm:$0xff]
    %v1049 = vld [vmem:[%s1030 + $0xd8] sm:$0xff]
    %v1050 = vld [vmem:[%s1030 + $0xe0] sm:$0xff]
    %v1051 = vld [vmem:[%s1030 + $0xf0] sm:$0xff]
    %v1052 = vld [vmem:[%s1030 + $0xf8] sm:$0xff]
    %v1053 = vld [vmem:[%s1030 + $0x108] sm:$0xff]
    %v1054 = vld [vmem:[%s1030 + $0x110] sm:$0xff]
    %v1055 = vld [vmem:[%s1030 + $0x120] sm:$0xff]
    %v1056 = vld [vmem:[%s1030 + $0x128] sm:$0xff]
    %v1057 = vld [vmem:[%s1030 + $0x138] sm:$0xff]
    %v1058 = vld [vmem:[%s1030 + $0x140] sm:$0xff]
    %v1059 = vld [vmem:[%s1030 + $0x150] sm:$0xff]
    %v1060 = vld [vmem:[%s1030 + $0x158] sm:$0xff]
    %v1061 = vld [vmem:[%s1030 + $0x168] sm:$0xff]
    %v1062 = vld [vmem:[%s1030 + $0x170] sm:$0xff]
    %v1063 = vld [vmem:[%s1030 + $0x1b0] sm:$0xff]
    %v1064 = vld [vmem:[%s1030 + $0x1b8] sm:$0xff]
    %v1065 = vld [vmem:[%s1030 + $0x1c8] sm:$0xff]
    %v1066 = vld [vmem:[%s1030 + $0x1d0] sm:$0xff]
    %v1067 = vld [vmem:[%s1030 + $0x1e0] sm:$0xff]
    %v1068 = vld [vmem:[%s1030 + $0x1e8] sm:$0xff]
    %v1069 = vld [vmem:[%s1030 + $0x1f8] sm:$0xff]
    %v1070 = vld [vmem:[%s1030 + $0x200] sm:$0xff]
    %v1071 = vld [vmem:[%s1030 + $0x210] sm:$0xff]
    %v1072 = vld [vmem:[%s1030 + $0x218] sm:$0xff]
    %v1073 = vld [vmem:[%s1030 + $0x228] sm:$0xff]
    %v1074 = vld [vmem:[%s1030 + $0x230] sm:$0xff]
    %v1075 = vld [vmem:[%s1030 + $0x240] sm:$0xff]
    %v1076 = vld [vmem:[%s1030 + $0x248] sm:$0xff]
    %v1077 = vld [vmem:[%s1030 + $0x258] sm:$0xff]
    %v1078 = vld [vmem:[%s1030 + $0x260] sm:$0xff]
    %v1079 = vld [vmem:[%s1030 + $0x270] sm:$0xff]
    %v1080 = vld [vmem:[%s1030 + $0x278] sm:$0xff]
    %v1081 = vld [vmem:[%s1030 + $0x288] sm:$0xff]
    %v1082 = vld [vmem:[%s1030 + $0x290] sm:$0xff]
    %v1083 = vld [vmem:[%s1030 + $0x2a0] sm:$0xff]
    %v1084 = vld [vmem:[%s1030 + $0x2a8] sm:$0xff]
    %v1085 = vld [vmem:[%s1030 + $0x2b8] sm:$0xff]
    %v1086 = vld [vmem:[%s1030 + $0x2c0] sm:$0xff]
    %v1087 = vld [vmem:[%s1030 + $0x2d0] sm:$0xff]
    %v1088 = vld [vmem:[%s1030 + $0x2d8] sm:$0xff]
    %v1089 = vld [vmem:[%s1030 + $0x2e8] sm:$0xff]
    %v1090 = vld [vmem:[%s1030 + $0x2f0] sm:$0xff]
    %v1091 = vld [vmem:[%s1030 + $0x300] sm:$0xff]
    %v1092 = vld [vmem:[%s1030 + $0x308] sm:$0xff]
    %v1093 = vld [vmem:[%s1030 + $0x318] sm:$0xff]
    %v1094 = vld [vmem:[%s1030 + $0x320] sm:$0xff]
    %1095 = vst [vmem:[#allocation3 + $0x30] sm:$0xff] %v1031
    %1096 = vst [vmem:[#allocation3 + $0x78] sm:$0xff] %v1032
    %1097 = vst [vmem:[#allocation3 + $0xc0] sm:$0xff] %v1033
    %1098 = vst [vmem:[#allocation3 + $0x108] sm:$0xff] %v1034
    %1099 = vst [vmem:[#allocation3 + $0x150] sm:$0xff] %v1035
    %1100 = vst [vmem:[#allocation3 + $0x198] sm:$0xff] %v1036
    %1101 = vst [vmem:[#allocation3 + $0x1e0] sm:$0xff] %v1037
    %1102 = vst [vmem:[#allocation3 + $0x228] sm:$0xff] %v1038
    %1103 = vst [vmem:[#allocation3 + $0x270] sm:$0xff] %v1039
    %1104 = vst [vmem:[#allocation3 + $0x2b8] sm:$0xff] %v1040
    %1105 = vst [vmem:[#allocation3 + $0x300] sm:$0xff] %v1041
    %1106 = vst [vmem:[#allocation3 + $0x348] sm:$0xff] %v1042
    %1107 = vst [vmem:[#allocation3 + $0x390] sm:$0xff] %v1043
    %1108 = vst [vmem:[#allocation3 + $0x3d8] sm:$0xff] %v1044
    %1109 = vst [vmem:[#allocation3 + $0x420] sm:$0xff] %v1045
    %1110 = vst [vmem:[#allocation3 + $0x468] sm:$0xff] %v1046
    %1111 = vst [vmem:[#allocation3 + $0x4b0] sm:$0xff] %v1047
    %1112 = vst [vmem:[#allocation3 + $0x4f8] sm:$0xff] %v1048
    %1113 = vst [vmem:[#allocation3 + $0x540] sm:$0xff] %v1049
    %1114 = vst [vmem:[#allocation3 + $0x588] sm:$0xff] %v1050
    %1115 = vst [vmem:[#allocation3 + $0x5d0] sm:$0xff] %v1051
    %1116 = vst [vmem:[#allocation3 + $0x618] sm:$0xff] %v1052
    %1117 = vst [vmem:[#allocation3 + $0x660] sm:$0xff] %v1053
    %1118 = vst [vmem:[#allocation3 + $0x6a8] sm:$0xff] %v1054
    %1119 = vst [vmem:[#allocation3 + $0x6f0] sm:$0xff] %v1055
    %1120 = vst [vmem:[#allocation3 + $0x738] sm:$0xff] %v1056
    %1121 = vst [vmem:[#allocation3 + $0x780] sm:$0xff] %v1057
    %1122 = vst [vmem:[#allocation3 + $0x7c8] sm:$0xff] %v1058
    %1123 = vst [vmem:[#allocation3 + $0x810] sm:$0xff] %v1059
    %1124 = vst [vmem:[#allocation3 + $0x858] sm:$0xff] %v1060
    %1125 = vst [vmem:[#allocation3 + $0x8a0] sm:$0xff] %v1061
    %1126 = vst [vmem:[#allocation3 + $0x8e8] sm:$0xff] %v1062
    %1127 = vst [vmem:[#allocation3 + $0x930] sm:$0xff] %v1063
    %1128 = vst [vmem:[#allocation3 + $0x978] sm:$0xff] %v1064
    %1129 = vst [vmem:[#allocation3 + $0x9c0] sm:$0xff] %v1065
    %1130 = vst [vmem:[#allocation3 + $0xa08] sm:$0xff] %v1066
    %1131 = vst [vmem:[#allocation3 + $0xa50] sm:$0xff] %v1067
    %1132 = vst [vmem:[#allocation3 + $0xa98] sm:$0xff] %v1068
    %1133 = vst [vmem:[#allocation3 + $0xae0] sm:$0xff] %v1069
    %1134 = vst [vmem:[#allocation3 + $0xb28] sm:$0xff] %v1070
    %1135 = vst [vmem:[#allocation3 + $0xb70] sm:$0xff] %v1071
    %1136 = vst [vmem:[#allocation3 + $0xbb8] sm:$0xff] %v1072
    %1137 = vst [vmem:[#allocation3 + $0xc00] sm:$0xff] %v1073
    %1138 = vst [vmem:[#allocation3 + $0xc48] sm:$0xff] %v1074
    %1139 = vst [vmem:[#allocation3 + $0xc90] sm:$0xff] %v1075
    %1140 = vst [vmem:[#allocation3 + $0xcd8] sm:$0xff] %v1076
    %1141 = vst [vmem:[#allocation3 + $0xd20] sm:$0xff] %v1077
    %1142 = vst [vmem:[#allocation3 + $0xd68] sm:$0xff] %v1078
    %1143 = vst [vmem:[#allocation3 + $0xdb0] sm:$0xff] %v1079
    %1144 = vst [vmem:[#allocation3 + $0xdf8] sm:$0xff] %v1080
    %1145 = vst [vmem:[#allocation3 + $0xe40] sm:$0xff] %v1081
    %1146 = vst [vmem:[#allocation3 + $0xe88] sm:$0xff] %v1082
    %1147 = vst [vmem:[#allocation3 + $0xed0] sm:$0xff] %v1083
    %1148 = vst [vmem:[#allocation3 + $0xf18] sm:$0xff] %v1084
    %1149 = vst [vmem:[#allocation3 + $0xf60] sm:$0xff] %v1085
    %1150 = vst [vmem:[#allocation3 + $0xfa8] sm:$0xff] %v1086
    %1151 = vst [vmem:[#allocation3 + $0xff0] sm:$0xff] %v1087
    %1152 = vst [vmem:[#allocation3 + $0x1038] sm:$0xff] %v1088
    %1153 = vst [vmem:[#allocation3 + $0x1080] sm:$0xff] %v1089
    %1154 = vst [vmem:[#allocation3 + $0x10c8] sm:$0xff] %v1090
    %1155 = vst [vmem:[#allocation3 + $0x1110] sm:$0xff] %v1091
    %1156 = vst [vmem:[#allocation3 + $0x1158] sm:$0xff] %v1092
    %1157 = vst [vmem:[#allocation3 + $0x11a0] sm:$0xff] %v1093
    %1158 = vst [vmem:[#allocation3 + $0x11e8] sm:$0xff] %v1094
    %v1159 = vld [vmem:[%s1030 + $0x1] sm:$0xff]
    %v1160 = vld [vmem:[%s1030 + $0x9] sm:$0xff]
    %v1161 = vld [vmem:[%s1030 + $0x19] sm:$0xff]
    %v1162 = vld [vmem:[%s1030 + $0x21] sm:$0xff]
    %v1163 = vld [vmem:[%s1030 + $0x31] sm:$0xff]
    %v1164 = vld [vmem:[%s1030 + $0x39] sm:$0xff]
    %v1165 = vld [vmem:[%s1030 + $0x49] sm:$0xff]
    %v1166 = vld [vmem:[%s1030 + $0x51] sm:$0xff]
    %v1167 = vld [vmem:[%s1030 + $0x61] sm:$0xff]
    %v1168 = vld [vmem:[%s1030 + $0x69] sm:$0xff]
    %v1169 = vld [vmem:[%s1030 + $0x79] sm:$0xff]
    %v1170 = vld [vmem:[%s1030 + $0x81] sm:$0xff]
    %v1171 = vld [vmem:[%s1030 + $0x91] sm:$0xff]
    %v1172 = vld [vmem:[%s1030 + $0x99] sm:$0xff]
    %v1173 = vld [vmem:[%s1030 + $0xa9] sm:$0xff]
    %v1174 = vld [vmem:[%s1030 + $0xb1] sm:$0xff]
    %v1175 = vld [vmem:[%s1030 + $0xc1] sm:$0xff]
    %v1176 = vld [vmem:[%s1030 + $0xc9] sm:$0xff]
    %v1177 = vld [vmem:[%s1030 + $0xd9] sm:$0xff]
    %v1178 = vld [vmem:[%s1030 + $0xe1] sm:$0xff]
    %v1179 = vld [vmem:[%s1030 + $0xf1] sm:$0xff]
    %v1180 = vld [vmem:[%s1030 + $0xf9] sm:$0xff]
    %v1181 = vld [vmem:[%s1030 + $0x109] sm:$0xff]
    %v1182 = vld [vmem:[%s1030 + $0x111] sm:$0xff]
    %v1183 = vld [vmem:[%s1030 + $0x121] sm:$0xff]
    %v1184 = vld [vmem:[%s1030 + $0x129] sm:$0xff]
    %v1185 = vld [vmem:[%s1030 + $0x139] sm:$0xff]
    %v1186 = vld [vmem:[%s1030 + $0x141] sm:$0xff]
    %v1187 = vld [vmem:[%s1030 + $0x151] sm:$0xff]
    %v1188 = vld [vmem:[%s1030 + $0x159] sm:$0xff]
    %v1189 = vld [vmem:[%s1030 + $0x169] sm:$0xff]
    %v1190 = vld [vmem:[%s1030 + $0x171] sm:$0xff]
    %v1191 = vld [vmem:[%s1030 + $0x1b1] sm:$0xff]
    %v1192 = vld [vmem:[%s1030 + $0x1b9] sm:$0xff]
    %v1193 = vld [vmem:[%s1030 + $0x1c9] sm:$0xff]
    %v1194 = vld [vmem:[%s1030 + $0x1d1] sm:$0xff]
    %v1195 = vld [vmem:[%s1030 + $0x1e1] sm:$0xff]
    %v1196 = vld [vmem:[%s1030 + $0x1e9] sm:$0xff]
    %v1197 = vld [vmem:[%s1030 + $0x1f9] sm:$0xff]
    %v1198 = vld [vmem:[%s1030 + $0x201] sm:$0xff]
    %v1199 = vld [vmem:[%s1030 + $0x211] sm:$0xff]
    %v1200 = vld [vmem:[%s1030 + $0x219] sm:$0xff]
    %v1201 = vld [vmem:[%s1030 + $0x229] sm:$0xff]
    %v1202 = vld [vmem:[%s1030 + $0x231] sm:$0xff]
    %v1203 = vld [vmem:[%s1030 + $0x241] sm:$0xff]
    %v1204 = vld [vmem:[%s1030 + $0x249] sm:$0xff]
    %v1205 = vld [vmem:[%s1030 + $0x259] sm:$0xff]
    %v1206 = vld [vmem:[%s1030 + $0x261] sm:$0xff]
    %v1207 = vld [vmem:[%s1030 + $0x271] sm:$0xff]
    %v1208 = vld [vmem:[%s1030 + $0x279] sm:$0xff]
    %v1209 = vld [vmem:[%s1030 + $0x289] sm:$0xff]
    %v1210 = vld [vmem:[%s1030 + $0x291] sm:$0xff]
    %v1211 = vld [vmem:[%s1030 + $0x2a1] sm:$0xff]
    %v1212 = vld [vmem:[%s1030 + $0x2a9] sm:$0xff]
    %v1213 = vld [vmem:[%s1030 + $0x2b9] sm:$0xff]
    %v1214 = vld [vmem:[%s1030 + $0x2c1] sm:$0xff]
    %v1215 = vld [vmem:[%s1030 + $0x2d1] sm:$0xff]
    %v1216 = vld [vmem:[%s1030 + $0x2d9] sm:$0xff]
    %v1217 = vld [vmem:[%s1030 + $0x2e9] sm:$0xff]
    %v1218 = vld [vmem:[%s1030 + $0x2f1] sm:$0xff]
    %v1219 = vld [vmem:[%s1030 + $0x301] sm:$0xff]
    %v1220 = vld [vmem:[%s1030 + $0x309] sm:$0xff]
    %v1221 = vld [vmem:[%s1030 + $0x319] sm:$0xff]
    %v1222 = vld [vmem:[%s1030 + $0x321] sm:$0xff]
    %1223 = vst [vmem:[#allocation3 + $0x38] sm:$0xff] %v1159
    %1224 = vst [vmem:[#allocation3 + $0x80] sm:$0xff] %v1160
    %1225 = vst [vmem:[#allocation3 + $0xc8] sm:$0xff] %v1161
    %1226 = vst [vmem:[#allocation3 + $0x110] sm:$0xff] %v1162
    %1227 = vst [vmem:[#allocation3 + $0x158] sm:$0xff] %v1163
    %1228 = vst [vmem:[#allocation3 + $0x1a0] sm:$0xff] %v1164
    %1229 = vst [vmem:[#allocation3 + $0x1e8] sm:$0xff] %v1165
    %1230 = vst [vmem:[#allocation3 + $0x230] sm:$0xff] %v1166
    %1231 = vst [vmem:[#allocation3 + $0x278] sm:$0xff] %v1167
    %1232 = vst [vmem:[#allocation3 + $0x2c0] sm:$0xff] %v1168
    %1233 = vst [vmem:[#allocation3 + $0x308] sm:$0xff] %v1169
    %1234 = vst [vmem:[#allocation3 + $0x350] sm:$0xff] %v1170
    %1235 = vst [vmem:[#allocation3 + $0x398] sm:$0xff] %v1171
    %1236 = vst [vmem:[#allocation3 + $0x3e0] sm:$0xff] %v1172
    %1237 = vst [vmem:[#allocation3 + $0x428] sm:$0xff] %v1173
    %1238 = vst [vmem:[#allocation3 + $0x470] sm:$0xff] %v1174
    %1239 = vst [vmem:[#allocation3 + $0x4b8] sm:$0xff] %v1175
    %1240 = vst [vmem:[#allocation3 + $0x500] sm:$0xff] %v1176
    %1241 = vst [vmem:[#allocation3 + $0x548] sm:$0xff] %v1177
    %1242 = vst [vmem:[#allocation3 + $0x590] sm:$0xff] %v1178
    %1243 = vst [vmem:[#allocation3 + $0x5d8] sm:$0xff] %v1179
    %1244 = vst [vmem:[#allocation3 + $0x620] sm:$0xff] %v1180
    %1245 = vst [vmem:[#allocation3 + $0x668] sm:$0xff] %v1181
    %1246 = vst [vmem:[#allocation3 + $0x6b0] sm:$0xff] %v1182
    %1247 = vst [vmem:[#allocation3 + $0x6f8] sm:$0xff] %v1183
    %1248 = vst [vmem:[#allocation3 + $0x740] sm:$0xff] %v1184
    %1249 = vst [vmem:[#allocation3 + $0x788] sm:$0xff] %v1185
    %1250 = vst [vmem:[#allocation3 + $0x7d0] sm:$0xff] %v1186
    %1251 = vst [vmem:[#allocation3 + $0x818] sm:$0xff] %v1187
    %1252 = vst [vmem:[#allocation3 + $0x860] sm:$0xff] %v1188
    %1253 = vst [vmem:[#allocation3 + $0x8a8] sm:$0xff] %v1189
    %1254 = vst [vmem:[#allocation3 + $0x8f0] sm:$0xff] %v1190
    %1255 = vst [vmem:[#allocation3 + $0x938] sm:$0xff] %v1191
    %1256 = vst [vmem:[#allocation3 + $0x980] sm:$0xff] %v1192
    %1257 = vst [vmem:[#allocation3 + $0x9c8] sm:$0xff] %v1193
    %1258 = vst [vmem:[#allocation3 + $0xa10] sm:$0xff] %v1194
    %1259 = vst [vmem:[#allocation3 + $0xa58] sm:$0xff] %v1195
    %1260 = vst [vmem:[#allocation3 + $0xaa0] sm:$0xff] %v1196
    %1261 = vst [vmem:[#allocation3 + $0xae8] sm:$0xff] %v1197
    %1262 = vst [vmem:[#allocation3 + $0xb30] sm:$0xff] %v1198
    %1263 = vst [vmem:[#allocation3 + $0xb78] sm:$0xff] %v1199
    %1264 = vst [vmem:[#allocation3 + $0xbc0] sm:$0xff] %v1200
    %1265 = vst [vmem:[#allocation3 + $0xc08] sm:$0xff] %v1201
    %1266 = vst [vmem:[#allocation3 + $0xc50] sm:$0xff] %v1202
    %1267 = vst [vmem:[#allocation3 + $0xc98] sm:$0xff] %v1203
    %1268 = vst [vmem:[#allocation3 + $0xce0] sm:$0xff] %v1204
    %1269 = vst [vmem:[#allocation3 + $0xd28] sm:$0xff] %v1205
    %1270 = vst [vmem:[#allocation3 + $0xd70] sm:$0xff] %v1206
    %1271 = vst [vmem:[#allocation3 + $0xdb8] sm:$0xff] %v1207
    %1272 = vst [vmem:[#allocation3 + $0xe00] sm:$0xff] %v1208
    %1273 = vst [vmem:[#allocation3 + $0xe48] sm:$0xff] %v1209
    %1274 = vst [vmem:[#allocation3 + $0xe90] sm:$0xff] %v1210
    %1275 = vst [vmem:[#allocation3 + $0xed8] sm:$0xff] %v1211
    %1276 = vst [vmem:[#allocation3 + $0xf20] sm:$0xff] %v1212
    %1277 = vst [vmem:[#allocation3 + $0xf68] sm:$0xff] %v1213
    %1278 = vst [vmem:[#allocation3 + $0xfb0] sm:$0xff] %v1214
    %1279 = vst [vmem:[#allocation3 + $0xff8] sm:$0xff] %v1215
    %1280 = vst [vmem:[#allocation3 + $0x1040] sm:$0xff] %v1216
    %1281 = vst [vmem:[#allocation3 + $0x1088] sm:$0xff] %v1217
    %1282 = vst [vmem:[#allocation3 + $0x10d0] sm:$0xff] %v1218
    %1283 = vst [vmem:[#allocation3 + $0x1118] sm:$0xff] %v1219
    %1284 = vst [vmem:[#allocation3 + $0x1160] sm:$0xff] %v1220
    %1285 = vst [vmem:[#allocation3 + $0x11a8] sm:$0xff] %v1221
    %1286 = vst [vmem:[#allocation3 + $0x11f0] sm:$0xff] %v1222
    %v1287 = vld [vmem:[%s1030 + $0x2] sm:$0xff]
    %v1288 = vld [vmem:[%s1030 + $0xa] sm:$0xff]
    %v1289 = vld [vmem:[%s1030 + $0x1a] sm:$0xff]
    %v1290 = vld [vmem:[%s1030 + $0x22] sm:$0xff]
    %v1291 = vld [vmem:[%s1030 + $0x32] sm:$0xff]
    %v1292 = vld [vmem:[%s1030 + $0x3a] sm:$0xff]
    %v1293 = vld [vmem:[%s1030 + $0x4a] sm:$0xff]
    %v1294 = vld [vmem:[%s1030 + $0x52] sm:$0xff]
    %v1295 = vld [vmem:[%s1030 + $0x62] sm:$0xff]
    %v1296 = vld [vmem:[%s1030 + $0x6a] sm:$0xff]
    %v1297 = vld [vmem:[%s1030 + $0x7a] sm:$0xff]
    %v1298 = vld [vmem:[%s1030 + $0x82] sm:$0xff]
    %v1299 = vld [vmem:[%s1030 + $0x92] sm:$0xff]
    %v1300 = vld [vmem:[%s1030 + $0x9a] sm:$0xff]
    %v1301 = vld [vmem:[%s1030 + $0xaa] sm:$0xff]
    %v1302 = vld [vmem:[%s1030 + $0xb2] sm:$0xff]
    %v1303 = vld [vmem:[%s1030 + $0xc2] sm:$0xff]
    %v1304 = vld [vmem:[%s1030 + $0xca] sm:$0xff]
    %v1305 = vld [vmem:[%s1030 + $0xda] sm:$0xff]
    %v1306 = vld [vmem:[%s1030 + $0xe2] sm:$0xff]
    %v1307 = vld [vmem:[%s1030 + $0xf2] sm:$0xff]
    %v1308 = vld [vmem:[%s1030 + $0xfa] sm:$0xff]
    %v1309 = vld [vmem:[%s1030 + $0x10a] sm:$0xff]
    %v1310 = vld [vmem:[%s1030 + $0x112] sm:$0xff]
    %v1311 = vld [vmem:[%s1030 + $0x122] sm:$0xff]
    %v1312 = vld [vmem:[%s1030 + $0x12a] sm:$0xff]
    %v1313 = vld [vmem:[%s1030 + $0x13a] sm:$0xff]
    %v1314 = vld [vmem:[%s1030 + $0x142] sm:$0xff]
    %v1315 = vld [vmem:[%s1030 + $0x152] sm:$0xff]
    %v1316 = vld [vmem:[%s1030 + $0x15a] sm:$0xff]
    %v1317 = vld [vmem:[%s1030 + $0x16a] sm:$0xff]
    %v1318 = vld [vmem:[%s1030 + $0x172] sm:$0xff]
    %v1319 = vld [vmem:[%s1030 + $0x1b2] sm:$0xff]
    %v1320 = vld [vmem:[%s1030 + $0x1ba] sm:$0xff]
    %v1321 = vld [vmem:[%s1030 + $0x1ca] sm:$0xff]
    %v1322 = vld [vmem:[%s1030 + $0x1d2] sm:$0xff]
    %v1323 = vld [vmem:[%s1030 + $0x1e2] sm:$0xff]
    %v1324 = vld [vmem:[%s1030 + $0x1ea] sm:$0xff]
    %v1325 = vld [vmem:[%s1030 + $0x1fa] sm:$0xff]
    %v1326 = vld [vmem:[%s1030 + $0x202] sm:$0xff]
    %v1327 = vld [vmem:[%s1030 + $0x212] sm:$0xff]
    %v1328 = vld [vmem:[%s1030 + $0x21a] sm:$0xff]
    %v1329 = vld [vmem:[%s1030 + $0x22a] sm:$0xff]
    %v1330 = vld [vmem:[%s1030 + $0x232] sm:$0xff]
    %v1331 = vld [vmem:[%s1030 + $0x242] sm:$0xff]
    %v1332 = vld [vmem:[%s1030 + $0x24a] sm:$0xff]
    %v1333 = vld [vmem:[%s1030 + $0x25a] sm:$0xff]
    %v1334 = vld [vmem:[%s1030 + $0x262] sm:$0xff]
    %v1335 = vld [vmem:[%s1030 + $0x272] sm:$0xff]
    %v1336 = vld [vmem:[%s1030 + $0x27a] sm:$0xff]
    %v1337 = vld [vmem:[%s1030 + $0x28a] sm:$0xff]
    %v1338 = vld [vmem:[%s1030 + $0x292] sm:$0xff]
    %v1339 = vld [vmem:[%s1030 + $0x2a2] sm:$0xff]
    %v1340 = vld [vmem:[%s1030 + $0x2aa] sm:$0xff]
    %v1341 = vld [vmem:[%s1030 + $0x2ba] sm:$0xff]
    %v1342 = vld [vmem:[%s1030 + $0x2c2] sm:$0xff]
    %v1343 = vld [vmem:[%s1030 + $0x2d2] sm:$0xff]
    %v1344 = vld [vmem:[%s1030 + $0x2da] sm:$0xff]
    %v1345 = vld [vmem:[%s1030 + $0x2ea] sm:$0xff]
    %v1346 = vld [vmem:[%s1030 + $0x2f2] sm:$0xff]
    %v1347 = vld [vmem:[%s1030 + $0x302] sm:$0xff]
    %v1348 = vld [vmem:[%s1030 + $0x30a] sm:$0xff]
    %v1349 = vld [vmem:[%s1030 + $0x31a] sm:$0xff]
    %v1350 = vld [vmem:[%s1030 + $0x322] sm:$0xff]
    %1351 = vst [vmem:[#allocation3 + $0x40] sm:$0xff] %v1287
    %1352 = vst [vmem:[#allocation3 + $0x88] sm:$0xff] %v1288
    %1353 = vst [vmem:[#allocation3 + $0xd0] sm:$0xff] %v1289
    %1354 = vst [vmem:[#allocation3 + $0x118] sm:$0xff] %v1290
    %1355 = vst [vmem:[#allocation3 + $0x160] sm:$0xff] %v1291
    %1356 = vst [vmem:[#allocation3 + $0x1a8] sm:$0xff] %v1292
    %1357 = vst [vmem:[#allocation3 + $0x1f0] sm:$0xff] %v1293
    %1358 = vst [vmem:[#allocation3 + $0x238] sm:$0xff] %v1294
    %1359 = vst [vmem:[#allocation3 + $0x280] sm:$0xff] %v1295
    %1360 = vst [vmem:[#allocation3 + $0x2c8] sm:$0xff] %v1296
    %1361 = vst [vmem:[#allocation3 + $0x310] sm:$0xff] %v1297
    %1362 = vst [vmem:[#allocation3 + $0x358] sm:$0xff] %v1298
    %1363 = vst [vmem:[#allocation3 + $0x3a0] sm:$0xff] %v1299
    %1364 = vst [vmem:[#allocation3 + $0x3e8] sm:$0xff] %v1300
    %1365 = vst [vmem:[#allocation3 + $0x430] sm:$0xff] %v1301
    %1366 = vst [vmem:[#allocation3 + $0x478] sm:$0xff] %v1302
    %1367 = vst [vmem:[#allocation3 + $0x4c0] sm:$0xff] %v1303
    %1368 = vst [vmem:[#allocation3 + $0x508] sm:$0xff] %v1304
    %1369 = vst [vmem:[#allocation3 + $0x550] sm:$0xff] %v1305
    %1370 = vst [vmem:[#allocation3 + $0x598] sm:$0xff] %v1306
    %1371 = vst [vmem:[#allocation3 + $0x5e0] sm:$0xff] %v1307
    %1372 = vst [vmem:[#allocation3 + $0x628] sm:$0xff] %v1308
    %1373 = vst [vmem:[#allocation3 + $0x670] sm:$0xff] %v1309
    %1374 = vst [vmem:[#allocation3 + $0x6b8] sm:$0xff] %v1310
    %1375 = vst [vmem:[#allocation3 + $0x700] sm:$0xff] %v1311
    %1376 = vst [vmem:[#allocation3 + $0x748] sm:$0xff] %v1312
    %1377 = vst [vmem:[#allocation3 + $0x790] sm:$0xff] %v1313
    %1378 = vst [vmem:[#allocation3 + $0x7d8] sm:$0xff] %v1314
    %1379 = vst [vmem:[#allocation3 + $0x820] sm:$0xff] %v1315
    %1380 = vst [vmem:[#allocation3 + $0x868] sm:$0xff] %v1316
    %1381 = vst [vmem:[#allocation3 + $0x8b0] sm:$0xff] %v1317
    %1382 = vst [vmem:[#allocation3 + $0x8f8] sm:$0xff] %v1318
    %1383 = vst [vmem:[#allocation3 + $0x940] sm:$0xff] %v1319
    %1384 = vst [vmem:[#allocation3 + $0x988] sm:$0xff] %v1320
    %1385 = vst [vmem:[#allocation3 + $0x9d0] sm:$0xff] %v1321
    %1386 = vst [vmem:[#allocation3 + $0xa18] sm:$0xff] %v1322
    %1387 = vst [vmem:[#allocation3 + $0xa60] sm:$0xff] %v1323
    %1388 = vst [vmem:[#allocation3 + $0xaa8] sm:$0xff] %v1324
    %1389 = vst [vmem:[#allocation3 + $0xaf0] sm:$0xff] %v1325
    %1390 = vst [vmem:[#allocation3 + $0xb38] sm:$0xff] %v1326
    %1391 = vst [vmem:[#allocation3 + $0xb80] sm:$0xff] %v1327
    %1392 = vst [vmem:[#allocation3 + $0xbc8] sm:$0xff] %v1328
    %1393 = vst [vmem:[#allocation3 + $0xc10] sm:$0xff] %v1329
    %1394 = vst [vmem:[#allocation3 + $0xc58] sm:$0xff] %v1330
    %1395 = vst [vmem:[#allocation3 + $0xca0] sm:$0xff] %v1331
    %1396 = vst [vmem:[#allocation3 + $0xce8] sm:$0xff] %v1332
    %1397 = vst [vmem:[#allocation3 + $0xd30] sm:$0xff] %v1333
    %1398 = vst [vmem:[#allocation3 + $0xd78] sm:$0xff] %v1334
    %1399 = vst [vmem:[#allocation3 + $0xdc0] sm:$0xff] %v1335
    %1400 = vst [vmem:[#allocation3 + $0xe08] sm:$0xff] %v1336
    %1401 = vst [vmem:[#allocation3 + $0xe50] sm:$0xff] %v1337
    %1402 = vst [vmem:[#allocation3 + $0xe98] sm:$0xff] %v1338
    %1403 = vst [vmem:[#allocation3 + $0xee0] sm:$0xff] %v1339
    %1404 = vst [vmem:[#allocation3 + $0xf28] sm:$0xff] %v1340
    %1405 = vst [vmem:[#allocation3 + $0xf70] sm:$0xff] %v1341
    %1406 = vst [vmem:[#allocation3 + $0xfb8] sm:$0xff] %v1342
    %1407 = vst [vmem:[#allocation3 + $0x1000] sm:$0xff] %v1343
    %1408 = vst [vmem:[#allocation3 + $0x1048] sm:$0xff] %v1344
    %1409 = vst [vmem:[#allocation3 + $0x1090] sm:$0xff] %v1345
    %1410 = vst [vmem:[#allocation3 + $0x10d8] sm:$0xff] %v1346
    %1411 = vst [vmem:[#allocation3 + $0x1120] sm:$0xff] %v1347
    %1412 = vst [vmem:[#allocation3 + $0x1168] sm:$0xff] %v1348
    %1413 = vst [vmem:[#allocation3 + $0x11b0] sm:$0xff] %v1349
    %1414 = vst [vmem:[#allocation3 + $0x11f8] sm:$0xff] %v1350
    %v1415 = vld [vmem:[#allocation3] sm:$0xff]
    %v1416 = vld [vmem:[#allocation3 + $0x8] sm:$0xff]
    %v1417 = vld [vmem:[#allocation3 + $0x10] sm:$0xff]
    %v1418 = vld [vmem:[#allocation3 + $0x18] sm:$0xff]
    %v1419 = vld [vmem:[#allocation3 + $0x20] sm:$0xff]
    %v1420 = vld [vmem:[#allocation3 + $0x28] sm:$0xff]
    %v1421 = vld [vmem:[#allocation3 + $0x30] sm:$0xff]
    %v1422 = vld [vmem:[#allocation3 + $0x38] sm:$0xff]
    %v1423 = vld [vmem:[#allocation3 + $0x40] sm:$0xff]
    %v1424 = vld [vmem:[#allocation3 + $0x48] sm:$0xff]
    %v1425 = vld [vmem:[#allocation3 + $0x50] sm:$0xff]
    %v1426 = vld [vmem:[#allocation3 + $0x58] sm:$0xff]
    %v1427 = vld [vmem:[#allocation3 + $0x60] sm:$0xff]
    %v1428 = vld [vmem:[#allocation3 + $0x68] sm:$0xff]
    %v1429 = vld [vmem:[#allocation3 + $0x70] sm:$0xff]
    %v1430 = vld [vmem:[#allocation3 + $0x78] sm:$0xff]
    %v1431 = vld [vmem:[#allocation3 + $0x80] sm:$0xff]
    %v1432 = vld [vmem:[#allocation3 + $0x88] sm:$0xff]
    %v1433 = vld [vmem:[#allocation3 + $0x90] sm:$0xff]
    %v1434 = vld [vmem:[#allocation3 + $0x98] sm:$0xff]
    %v1435 = vld [vmem:[#allocation3 + $0xa0] sm:$0xff]
    %v1436 = vld [vmem:[#allocation3 + $0xa8] sm:$0xff]
    %v1437 = vld [vmem:[#allocation3 + $0xb0] sm:$0xff]
    %v1438 = vld [vmem:[#allocation3 + $0xb8] sm:$0xff]
    %v1439 = vld [vmem:[#allocation3 + $0xc0] sm:$0xff]
    %v1440 = vld [vmem:[#allocation3 + $0xc8] sm:$0xff]
    %v1441 = vld [vmem:[#allocation3 + $0xd0] sm:$0xff]
    %v1442 = vld [vmem:[#allocation3 + $0xd8] sm:$0xff]
    %v1443 = vld [vmem:[#allocation3 + $0xe0] sm:$0xff]
    %v1444 = vld [vmem:[#allocation3 + $0xe8] sm:$0xff]
    %v1445 = vld [vmem:[#allocation3 + $0xf0] sm:$0xff]
    %v1446 = vld [vmem:[#allocation3 + $0xf8] sm:$0xff]
    %v1447 = vld [vmem:[#allocation3 + $0x100] sm:$0xff]
    %v1448 = vld [vmem:[#allocation3 + $0x108] sm:$0xff]
    %v1449 = vld [vmem:[#allocation3 + $0x110] sm:$0xff]
    %v1450 = vld [vmem:[#allocation3 + $0x118] sm:$0xff]
    %v1451 = vld [vmem:[#allocation3 + $0x120] sm:$0xff]
    %v1452 = vld [vmem:[#allocation3 + $0x128] sm:$0xff]
    %v1453 = vld [vmem:[#allocation3 + $0x130] sm:$0xff]
    %v1454 = vld [vmem:[#allocation3 + $0x138] sm:$0xff]
    %v1455 = vld [vmem:[#allocation3 + $0x140] sm:$0xff]
    %v1456 = vld [vmem:[#allocation3 + $0x148] sm:$0xff]
    %v1457 = vld [vmem:[#allocation3 + $0x150] sm:$0xff]
    %v1458 = vld [vmem:[#allocation3 + $0x158] sm:$0xff]
    %v1459 = vld [vmem:[#allocation3 + $0x160] sm:$0xff]
    %v1460 = vld [vmem:[#allocation3 + $0x168] sm:$0xff]
    %v1461 = vld [vmem:[#allocation3 + $0x170] sm:$0xff]
    %v1462 = vld [vmem:[#allocation3 + $0x178] sm:$0xff]
    %v1463 = vld [vmem:[#allocation3 + $0x180] sm:$0xff]
    %v1464 = vld [vmem:[#allocation3 + $0x188] sm:$0xff]
    %v1465 = vld [vmem:[#allocation3 + $0x190] sm:$0xff]
    %v1466 = vld [vmem:[#allocation3 + $0x198] sm:$0xff]
    %v1467 = vld [vmem:[#allocation3 + $0x1a0] sm:$0xff]
    %v1468 = vld [vmem:[#allocation3 + $0x1a8] sm:$0xff]
    %v1469 = vld [vmem:[#allocation3 + $0x1b0] sm:$0xff]
    %v1470 = vld [vmem:[#allocation3 + $0x1b8] sm:$0xff]
    %v1471 = vld [vmem:[#allocation3 + $0x1c0] sm:$0xff]
    %v1472 = vld [vmem:[#allocation3 + $0x1c8] sm:$0xff]
    %v1473 = vld [vmem:[#allocation3 + $0x1d0] sm:$0xff]
    %v1474 = vld [vmem:[#allocation3 + $0x1d8] sm:$0xff]
    %v1475 = vld [vmem:[#allocation3 + $0x1e0] sm:$0xff]
    %v1476 = vld [vmem:[#allocation3 + $0x1e8] sm:$0xff]
    %v1477 = vld [vmem:[#allocation3 + $0x1f0] sm:$0xff]
    %v1478 = vld [vmem:[#allocation3 + $0x1f8] sm:$0xff]
    %v1479 = vld [vmem:[#allocation3 + $0x200] sm:$0xff]
    %v1480 = vld [vmem:[#allocation3 + $0x208] sm:$0xff]
    %v1481 = vld [vmem:[#allocation3 + $0x210] sm:$0xff]
    %v1482 = vld [vmem:[#allocation3 + $0x218] sm:$0xff]
    %v1483 = vld [vmem:[#allocation3 + $0x220] sm:$0xff]
    %v1484 = vld [vmem:[#allocation3 + $0x228] sm:$0xff]
    %v1485 = vld [vmem:[#allocation3 + $0x230] sm:$0xff]
    %v1486 = vld [vmem:[#allocation3 + $0x238] sm:$0xff]
    %v1487 = vld [vmem:[#allocation3 + $0x240] sm:$0xff]
    %v1488 = vld [vmem:[#allocation3 + $0x248] sm:$0xff]
    %v1489 = vld [vmem:[#allocation3 + $0x250] sm:$0xff]
    %v1490 = vld [vmem:[#allocation3 + $0x258] sm:$0xff]
    %v1491 = vld [vmem:[#allocation3 + $0x260] sm:$0xff]
    %v1492 = vld [vmem:[#allocation3 + $0x268] sm:$0xff]
    %v1493 = vld [vmem:[#allocation3 + $0x270] sm:$0xff]
    %v1494 = vld [vmem:[#allocation3 + $0x278] sm:$0xff]
    %v1495 = vld [vmem:[#allocation3 + $0x280] sm:$0xff]
    %v1496 = vld [vmem:[#allocation3 + $0x288] sm:$0xff]
    %v1497 = vld [vmem:[#allocation3 + $0x290] sm:$0xff]
    %v1498 = vld [vmem:[#allocation3 + $0x298] sm:$0xff]
    %v1499 = vld [vmem:[#allocation3 + $0x2a0] sm:$0xff]
    %v1500 = vld [vmem:[#allocation3 + $0x2a8] sm:$0xff]
    %v1501 = vld [vmem:[#allocation3 + $0x2b0] sm:$0xff]
    %v1502 = vld [vmem:[#allocation3 + $0x2b8] sm:$0xff]
    %v1503 = vld [vmem:[#allocation3 + $0x2c0] sm:$0xff]
    %v1504 = vld [vmem:[#allocation3 + $0x2c8] sm:$0xff]
    %v1505 = vld [vmem:[#allocation3 + $0x2d0] sm:$0xff]
    %v1506 = vld [vmem:[#allocation3 + $0x2d8] sm:$0xff]
    %v1507 = vld [vmem:[#allocation3 + $0x2e0] sm:$0xff]
    %v1508 = vld [vmem:[#allocation3 + $0x2e8] sm:$0xff]
    %v1509 = vld [vmem:[#allocation3 + $0x2f0] sm:$0xff]
    %v1510 = vld [vmem:[#allocation3 + $0x2f8] sm:$0xff]
    %v1511 = vld [vmem:[#allocation3 + $0x300] sm:$0xff]
    %v1512 = vld [vmem:[#allocation3 + $0x308] sm:$0xff]
    %v1513 = vld [vmem:[#allocation3 + $0x310] sm:$0xff]
    %v1514 = vld [vmem:[#allocation3 + $0x318] sm:$0xff]
    %v1515 = vld [vmem:[#allocation3 + $0x320] sm:$0xff]
    %v1516 = vld [vmem:[#allocation3 + $0x328] sm:$0xff]
    %v1517 = vld [vmem:[#allocation3 + $0x330] sm:$0xff]
    %v1518 = vld [vmem:[#allocation3 + $0x338] sm:$0xff]
    %v1519 = vld [vmem:[#allocation3 + $0x340] sm:$0xff]
    %v1520 = vld [vmem:[#allocation3 + $0x348] sm:$0xff]
    %v1521 = vld [vmem:[#allocation3 + $0x350] sm:$0xff]
    %v1522 = vld [vmem:[#allocation3 + $0x358] sm:$0xff]
    %v1523 = vld [vmem:[#allocation3 + $0x360] sm:$0xff]
    %v1524 = vld [vmem:[#allocation3 + $0x368] sm:$0xff]
    %v1525 = vld [vmem:[#allocation3 + $0x370] sm:$0xff]
    %v1526 = vld [vmem:[#allocation3 + $0x378] sm:$0xff]
    %v1527 = vld [vmem:[#allocation3 + $0x380] sm:$0xff]
    %v1528 = vld [vmem:[#allocation3 + $0x388] sm:$0xff]
    %v1529 = vld [vmem:[#allocation3 + $0x390] sm:$0xff]
    %v1530 = vld [vmem:[#allocation3 + $0x398] sm:$0xff]
    %v1531 = vld [vmem:[#allocation3 + $0x3a0] sm:$0xff]
    %v1532 = vld [vmem:[#allocation3 + $0x3a8] sm:$0xff]
    %v1533 = vld [vmem:[#allocation3 + $0x3b0] sm:$0xff]
    %v1534 = vld [vmem:[#allocation3 + $0x3b8] sm:$0xff]
    %v1535 = vld [vmem:[#allocation3 + $0x3c0] sm:$0xff]
    %v1536 = vld [vmem:[#allocation3 + $0x3c8] sm:$0xff]
    %v1537 = vld [vmem:[#allocation3 + $0x3d0] sm:$0xff]
    %v1538 = vld [vmem:[#allocation3 + $0x3d8] sm:$0xff]
    %v1539 = vld [vmem:[#allocation3 + $0x3e0] sm:$0xff]
    %v1540 = vld [vmem:[#allocation3 + $0x3e8] sm:$0xff]
    %v1541 = vld [vmem:[#allocation3 + $0x3f0] sm:$0xff]
    %v1542 = vld [vmem:[#allocation3 + $0x3f8] sm:$0xff]
    %v1543 = vld [vmem:[#allocation3 + $0x400] sm:$0xff]
    %v1544 = vld [vmem:[#allocation3 + $0x408] sm:$0xff]
    %v1545 = vld [vmem:[#allocation3 + $0x410] sm:$0xff]
    %v1546 = vld [vmem:[#allocation3 + $0x418] sm:$0xff]
    %v1547 = vld [vmem:[#allocation3 + $0x420] sm:$0xff]
    %v1548 = vld [vmem:[#allocation3 + $0x428] sm:$0xff]
    %v1549 = vld [vmem:[#allocation3 + $0x430] sm:$0xff]
    %v1550 = vld [vmem:[#allocation3 + $0x438] sm:$0xff]
    %v1551 = vld [vmem:[#allocation3 + $0x440] sm:$0xff]
    %v1552 = vld [vmem:[#allocation3 + $0x448] sm:$0xff]
    %v1553 = vld [vmem:[#allocation3 + $0x450] sm:$0xff]
    %v1554 = vld [vmem:[#allocation3 + $0x458] sm:$0xff]
    %v1555 = vld [vmem:[#allocation3 + $0x460] sm:$0xff]
    %v1556 = vld [vmem:[#allocation3 + $0x468] sm:$0xff]
    %v1557 = vld [vmem:[#allocation3 + $0x470] sm:$0xff]
    %v1558 = vld [vmem:[#allocation3 + $0x478] sm:$0xff]
    %v1559 = vld [vmem:[#allocation3 + $0x480] sm:$0xff]
    %v1560 = vld [vmem:[#allocation3 + $0x488] sm:$0xff]
    %v1561 = vld [vmem:[#allocation3 + $0x490] sm:$0xff]
    %v1562 = vld [vmem:[#allocation3 + $0x498] sm:$0xff]
    %v1563 = vld [vmem:[#allocation3 + $0x4a0] sm:$0xff]
    %v1564 = vld [vmem:[#allocation3 + $0x4a8] sm:$0xff]
    %v1565 = vld [vmem:[#allocation3 + $0x4b0] sm:$0xff]
    %v1566 = vld [vmem:[#allocation3 + $0x4b8] sm:$0xff]
    %v1567 = vld [vmem:[#allocation3 + $0x4c0] sm:$0xff]
    %v1568 = vld [vmem:[#allocation3 + $0x4c8] sm:$0xff]
    %v1569 = vld [vmem:[#allocation3 + $0x4d0] sm:$0xff]
    %v1570 = vld [vmem:[#allocation3 + $0x4d8] sm:$0xff]
    %v1571 = vld [vmem:[#allocation3 + $0x4e0] sm:$0xff]
    %v1572 = vld [vmem:[#allocation3 + $0x4e8] sm:$0xff]
    %v1573 = vld [vmem:[#allocation3 + $0x4f0] sm:$0xff]
    %v1574 = vld [vmem:[#allocation3 + $0x4f8] sm:$0xff]
    %v1575 = vld [vmem:[#allocation3 + $0x500] sm:$0xff]
    %v1576 = vld [vmem:[#allocation3 + $0x508] sm:$0xff]
    %v1577 = vld [vmem:[#allocation3 + $0x510] sm:$0xff]
    %v1578 = vld [vmem:[#allocation3 + $0x518] sm:$0xff]
    %v1579 = vld [vmem:[#allocation3 + $0x520] sm:$0xff]
    %v1580 = vld [vmem:[#allocation3 + $0x528] sm:$0xff]
    %v1581 = vld [vmem:[#allocation3 + $0x530] sm:$0xff]
    %v1582 = vld [vmem:[#allocation3 + $0x538] sm:$0xff]
    %v1583 = vld [vmem:[#allocation3 + $0x540] sm:$0xff]
    %v1584 = vld [vmem:[#allocation3 + $0x548] sm:$0xff]
    %v1585 = vld [vmem:[#allocation3 + $0x550] sm:$0xff]
    %v1586 = vld [vmem:[#allocation3 + $0x558] sm:$0xff]
    %v1587 = vld [vmem:[#allocation3 + $0x560] sm:$0xff]
    %v1588 = vld [vmem:[#allocation3 + $0x568] sm:$0xff]
    %v1589 = vld [vmem:[#allocation3 + $0x570] sm:$0xff]
    %v1590 = vld [vmem:[#allocation3 + $0x578] sm:$0xff]
    %v1591 = vld [vmem:[#allocation3 + $0x580] sm:$0xff]
    %v1592 = vld [vmem:[#allocation3 + $0x588] sm:$0xff]
    %v1593 = vld [vmem:[#allocation3 + $0x590] sm:$0xff]
    %v1594 = vld [vmem:[#allocation3 + $0x598] sm:$0xff]
    %v1595 = vld [vmem:[#allocation3 + $0x5a0] sm:$0xff]
    %v1596 = vld [vmem:[#allocation3 + $0x5a8] sm:$0xff]
    %v1597 = vld [vmem:[#allocation3 + $0x5b0] sm:$0xff]
    %v1598 = vld [vmem:[#allocation3 + $0x5b8] sm:$0xff]
    %v1599 = vld [vmem:[#allocation3 + $0x5c0] sm:$0xff]
    %v1600 = vld [vmem:[#allocation3 + $0x5c8] sm:$0xff]
    %v1601 = vld [vmem:[#allocation3 + $0x5d0] sm:$0xff]
    %v1602 = vld [vmem:[#allocation3 + $0x5d8] sm:$0xff]
    %v1603 = vld [vmem:[#allocation3 + $0x5e0] sm:$0xff]
    %v1604 = vld [vmem:[#allocation3 + $0x5e8] sm:$0xff]
    %v1605 = vld [vmem:[#allocation3 + $0x5f0] sm:$0xff]
    %v1606 = vld [vmem:[#allocation3 + $0x5f8] sm:$0xff]
    %v1607 = vld [vmem:[#allocation3 + $0x600] sm:$0xff]
    %v1608 = vld [vmem:[#allocation3 + $0x608] sm:$0xff]
    %v1609 = vld [vmem:[#allocation3 + $0x610] sm:$0xff]
    %v1610 = vld [vmem:[#allocation3 + $0x618] sm:$0xff]
    %v1611 = vld [vmem:[#allocation3 + $0x620] sm:$0xff]
    %v1612 = vld [vmem:[#allocation3 + $0x628] sm:$0xff]
    %v1613 = vld [vmem:[#allocation3 + $0x630] sm:$0xff]
    %v1614 = vld [vmem:[#allocation3 + $0x638] sm:$0xff]
    %v1615 = vld [vmem:[#allocation3 + $0x640] sm:$0xff]
    %v1616 = vld [vmem:[#allocation3 + $0x648] sm:$0xff]
    %v1617 = vld [vmem:[#allocation3 + $0x650] sm:$0xff]
    %v1618 = vld [vmem:[#allocation3 + $0x658] sm:$0xff]
    %v1619 = vld [vmem:[#allocation3 + $0x660] sm:$0xff]
    %v1620 = vld [vmem:[#allocation3 + $0x668] sm:$0xff]
    %v1621 = vld [vmem:[#allocation3 + $0x670] sm:$0xff]
    %v1622 = vld [vmem:[#allocation3 + $0x678] sm:$0xff]
    %v1623 = vld [vmem:[#allocation3 + $0x680] sm:$0xff]
    %v1624 = vld [vmem:[#allocation3 + $0x688] sm:$0xff]
    %v1625 = vld [vmem:[#allocation3 + $0x690] sm:$0xff]
    %v1626 = vld [vmem:[#allocation3 + $0x698] sm:$0xff]
    %v1627 = vld [vmem:[#allocation3 + $0x6a0] sm:$0xff]
    %v1628 = vld [vmem:[#allocation3 + $0x6a8] sm:$0xff]
    %v1629 = vld [vmem:[#allocation3 + $0x6b0] sm:$0xff]
    %v1630 = vld [vmem:[#allocation3 + $0x6b8] sm:$0xff]
    %v1631 = vld [vmem:[#allocation3 + $0x6c0] sm:$0xff]
    %v1632 = vld [vmem:[#allocation3 + $0x6c8] sm:$0xff]
    %v1633 = vld [vmem:[#allocation3 + $0x6d0] sm:$0xff]
    %v1634 = vld [vmem:[#allocation3 + $0x6d8] sm:$0xff]
    %v1635 = vld [vmem:[#allocation3 + $0x6e0] sm:$0xff]
    %v1636 = vld [vmem:[#allocation3 + $0x6e8] sm:$0xff]
    %v1637 = vld [vmem:[#allocation3 + $0x6f0] sm:$0xff]
    %v1638 = vld [vmem:[#allocation3 + $0x6f8] sm:$0xff]
    %v1639 = vld [vmem:[#allocation3 + $0x700] sm:$0xff]
    %v1640 = vld [vmem:[#allocation3 + $0x708] sm:$0xff]
    %v1641 = vld [vmem:[#allocation3 + $0x710] sm:$0xff]
    %v1642 = vld [vmem:[#allocation3 + $0x718] sm:$0xff]
    %v1643 = vld [vmem:[#allocation3 + $0x720] sm:$0xff]
    %v1644 = vld [vmem:[#allocation3 + $0x728] sm:$0xff]
    %v1645 = vld [vmem:[#allocation3 + $0x730] sm:$0xff]
    %v1646 = vld [vmem:[#allocation3 + $0x738] sm:$0xff]
    %v1647 = vld [vmem:[#allocation3 + $0x740] sm:$0xff]
    %v1648 = vld [vmem:[#allocation3 + $0x748] sm:$0xff]
    %v1649 = vld [vmem:[#allocation3 + $0x750] sm:$0xff]
    %v1650 = vld [vmem:[#allocation3 + $0x758] sm:$0xff]
    %v1651 = vld [vmem:[#allocation3 + $0x760] sm:$0xff]
    %v1652 = vld [vmem:[#allocation3 + $0x768] sm:$0xff]
    %v1653 = vld [vmem:[#allocation3 + $0x770] sm:$0xff]
    %v1654 = vld [vmem:[#allocation3 + $0x778] sm:$0xff]
    %v1655 = vld [vmem:[#allocation3 + $0x780] sm:$0xff]
    %v1656 = vld [vmem:[#allocation3 + $0x788] sm:$0xff]
    %v1657 = vld [vmem:[#allocation3 + $0x790] sm:$0xff]
    %v1658 = vld [vmem:[#allocation3 + $0x798] sm:$0xff]
    %v1659 = vld [vmem:[#allocation3 + $0x7a0] sm:$0xff]
    %v1660 = vld [vmem:[#allocation3 + $0x7a8] sm:$0xff]
    %v1661 = vld [vmem:[#allocation3 + $0x7b0] sm:$0xff]
    %v1662 = vld [vmem:[#allocation3 + $0x7b8] sm:$0xff]
    %v1663 = vld [vmem:[#allocation3 + $0x7c0] sm:$0xff]
    %v1664 = vld [vmem:[#allocation3 + $0x7c8] sm:$0xff]
    %v1665 = vld [vmem:[#allocation3 + $0x7d0] sm:$0xff]
    %v1666 = vld [vmem:[#allocation3 + $0x7d8] sm:$0xff]
    %v1667 = vld [vmem:[#allocation3 + $0x7e0] sm:$0xff]
    %v1668 = vld [vmem:[#allocation3 + $0x7e8] sm:$0xff]
    %v1669 = vld [vmem:[#allocation3 + $0x7f0] sm:$0xff]
    %v1670 = vld [vmem:[#allocation3 + $0x7f8] sm:$0xff]
    %v1671 = vld [vmem:[#allocation3 + $0x800] sm:$0xff]
    %v1672 = vld [vmem:[#allocation3 + $0x808] sm:$0xff]
    %v1673 = vld [vmem:[#allocation3 + $0x810] sm:$0xff]
    %v1674 = vld [vmem:[#allocation3 + $0x818] sm:$0xff]
    %v1675 = vld [vmem:[#allocation3 + $0x820] sm:$0xff]
    %v1676 = vld [vmem:[#allocation3 + $0x828] sm:$0xff]
    %v1677 = vld [vmem:[#allocation3 + $0x830] sm:$0xff]
    %v1678 = vld [vmem:[#allocation3 + $0x838] sm:$0xff]
    %v1679 = vld [vmem:[#allocation3 + $0x840] sm:$0xff]
    %v1680 = vld [vmem:[#allocation3 + $0x848] sm:$0xff]
    %v1681 = vld [vmem:[#allocation3 + $0x850] sm:$0xff]
    %v1682 = vld [vmem:[#allocation3 + $0x858] sm:$0xff]
    %v1683 = vld [vmem:[#allocation3 + $0x860] sm:$0xff]
    %v1684 = vld [vmem:[#allocation3 + $0x868] sm:$0xff]
    %v1685 = vld [vmem:[#allocation3 + $0x870] sm:$0xff]
    %v1686 = vld [vmem:[#allocation3 + $0x878] sm:$0xff]
    %v1687 = vld [vmem:[#allocation3 + $0x880] sm:$0xff]
    %v1688 = vld [vmem:[#allocation3 + $0x888] sm:$0xff]
    %v1689 = vld [vmem:[#allocation3 + $0x890] sm:$0xff]
    %v1690 = vld [vmem:[#allocation3 + $0x898] sm:$0xff]
    %v1691 = vld [vmem:[#allocation3 + $0x8a0] sm:$0xff]
    %v1692 = vld [vmem:[#allocation3 + $0x8a8] sm:$0xff]
    %v1693 = vld [vmem:[#allocation3 + $0x8b0] sm:$0xff]
    %v1694 = vld [vmem:[#allocation3 + $0x8b8] sm:$0xff]
    %v1695 = vld [vmem:[#allocation3 + $0x8c0] sm:$0xff]
    %v1696 = vld [vmem:[#allocation3 + $0x8c8] sm:$0xff]
    %v1697 = vld [vmem:[#allocation3 + $0x8d0] sm:$0xff]
    %v1698 = vld [vmem:[#allocation3 + $0x8d8] sm:$0xff]
    %v1699 = vld [vmem:[#allocation3 + $0x8e0] sm:$0xff]
    %v1700 = vld [vmem:[#allocation3 + $0x8e8] sm:$0xff]
    %v1701 = vld [vmem:[#allocation3 + $0x8f0] sm:$0xff]
    %v1702 = vld [vmem:[#allocation3 + $0x8f8] sm:$0xff]
    %v1703 = vld [vmem:[#allocation3 + $0x900] sm:$0xff]
    %v1704 = vld [vmem:[#allocation3 + $0x908] sm:$0xff]
    %v1705 = vld [vmem:[#allocation3 + $0x910] sm:$0xff]
    %v1706 = vld [vmem:[#allocation3 + $0x918] sm:$0xff]
    %v1707 = vld [vmem:[#allocation3 + $0x920] sm:$0xff]
    %v1708 = vld [vmem:[#allocation3 + $0x928] sm:$0xff]
    %v1709 = vld [vmem:[#allocation3 + $0x930] sm:$0xff]
    %v1710 = vld [vmem:[#allocation3 + $0x938] sm:$0xff]
    %v1711 = vld [vmem:[#allocation3 + $0x940] sm:$0xff]
    %v1712 = vld [vmem:[#allocation3 + $0x948] sm:$0xff]
    %v1713 = vld [vmem:[#allocation3 + $0x950] sm:$0xff]
    %v1714 = vld [vmem:[#allocation3 + $0x958] sm:$0xff]
    %v1715 = vld [vmem:[#allocation3 + $0x960] sm:$0xff]
    %v1716 = vld [vmem:[#allocation3 + $0x968] sm:$0xff]
    %v1717 = vld [vmem:[#allocation3 + $0x970] sm:$0xff]
    %v1718 = vld [vmem:[#allocation3 + $0x978] sm:$0xff]
    %v1719 = vld [vmem:[#allocation3 + $0x980] sm:$0xff]
    %v1720 = vld [vmem:[#allocation3 + $0x988] sm:$0xff]
    %v1721 = vld [vmem:[#allocation3 + $0x990] sm:$0xff]
    %v1722 = vld [vmem:[#allocation3 + $0x998] sm:$0xff]
    %v1723 = vld [vmem:[#allocation3 + $0x9a0] sm:$0xff]
    %v1724 = vld [vmem:[#allocation3 + $0x9a8] sm:$0xff]
    %v1725 = vld [vmem:[#allocation3 + $0x9b0] sm:$0xff]
    %v1726 = vld [vmem:[#allocation3 + $0x9b8] sm:$0xff]
    %v1727 = vld [vmem:[#allocation3 + $0x9c0] sm:$0xff]
    %v1728 = vld [vmem:[#allocation3 + $0x9c8] sm:$0xff]
    %v1729 = vld [vmem:[#allocation3 + $0x9d0] sm:$0xff]
    %v1730 = vld [vmem:[#allocation3 + $0x9d8] sm:$0xff]
    %v1731 = vld [vmem:[#allocation3 + $0x9e0] sm:$0xff]
    %v1732 = vld [vmem:[#allocation3 + $0x9e8] sm:$0xff]
    %v1733 = vld [vmem:[#allocation3 + $0x9f0] sm:$0xff]
    %v1734 = vld [vmem:[#allocation3 + $0x9f8] sm:$0xff]
    %v1735 = vld [vmem:[#allocation3 + $0xa00] sm:$0xff]
    %v1736 = vld [vmem:[#allocation3 + $0xa08] sm:$0xff]
    %v1737 = vld [vmem:[#allocation3 + $0xa10] sm:$0xff]
    %v1738 = vld [vmem:[#allocation3 + $0xa18] sm:$0xff]
    %v1739 = vld [vmem:[#allocation3 + $0xa20] sm:$0xff]
    %v1740 = vld [vmem:[#allocation3 + $0xa28] sm:$0xff]
    %v1741 = vld [vmem:[#allocation3 + $0xa30] sm:$0xff]
    %v1742 = vld [vmem:[#allocation3 + $0xa38] sm:$0xff]
    %v1743 = vld [vmem:[#allocation3 + $0xa40] sm:$0xff]
    %v1744 = vld [vmem:[#allocation3 + $0xa48] sm:$0xff]
    %v1745 = vld [vmem:[#allocation3 + $0xa50] sm:$0xff]
    %v1746 = vld [vmem:[#allocation3 + $0xa58] sm:$0xff]
    %v1747 = vld [vmem:[#allocation3 + $0xa60] sm:$0xff]
    %v1748 = vld [vmem:[#allocation3 + $0xa68] sm:$0xff]
    %v1749 = vld [vmem:[#allocation3 + $0xa70] sm:$0xff]
    %v1750 = vld [vmem:[#allocation3 + $0xa78] sm:$0xff]
    %v1751 = vld [vmem:[#allocation3 + $0xa80] sm:$0xff]
    %v1752 = vld [vmem:[#allocation3 + $0xa88] sm:$0xff]
    %v1753 = vld [vmem:[#allocation3 + $0xa90] sm:$0xff]
    %v1754 = vld [vmem:[#allocation3 + $0xa98] sm:$0xff]
    %v1755 = vld [vmem:[#allocation3 + $0xaa0] sm:$0xff]
    %v1756 = vld [vmem:[#allocation3 + $0xaa8] sm:$0xff]
    %v1757 = vld [vmem:[#allocation3 + $0xab0] sm:$0xff]
    %v1758 = vld [vmem:[#allocation3 + $0xab8] sm:$0xff]
    %v1759 = vld [vmem:[#allocation3 + $0xac0] sm:$0xff]
    %v1760 = vld [vmem:[#allocation3 + $0xac8] sm:$0xff]
    %v1761 = vld [vmem:[#allocation3 + $0xad0] sm:$0xff]
    %v1762 = vld [vmem:[#allocation3 + $0xad8] sm:$0xff]
    %v1763 = vld [vmem:[#allocation3 + $0xae0] sm:$0xff]
    %v1764 = vld [vmem:[#allocation3 + $0xae8] sm:$0xff]
    %v1765 = vld [vmem:[#allocation3 + $0xaf0] sm:$0xff]
    %v1766 = vld [vmem:[#allocation3 + $0xaf8] sm:$0xff]
    %v1767 = vld [vmem:[#allocation3 + $0xb00] sm:$0xff]
    %v1768 = vld [vmem:[#allocation3 + $0xb08] sm:$0xff]
    %v1769 = vld [vmem:[#allocation3 + $0xb10] sm:$0xff]
    %v1770 = vld [vmem:[#allocation3 + $0xb18] sm:$0xff]
    %v1771 = vld [vmem:[#allocation3 + $0xb20] sm:$0xff]
    %v1772 = vld [vmem:[#allocation3 + $0xb28] sm:$0xff]
    %v1773 = vld [vmem:[#allocation3 + $0xb30] sm:$0xff]
    %v1774 = vld [vmem:[#allocation3 + $0xb38] sm:$0xff]
    %v1775 = vld [vmem:[#allocation3 + $0xb40] sm:$0xff]
    %v1776 = vld [vmem:[#allocation3 + $0xb48] sm:$0xff]
    %v1777 = vld [vmem:[#allocation3 + $0xb50] sm:$0xff]
    %v1778 = vld [vmem:[#allocation3 + $0xb58] sm:$0xff]
    %v1779 = vld [vmem:[#allocation3 + $0xb60] sm:$0xff]
    %v1780 = vld [vmem:[#allocation3 + $0xb68] sm:$0xff]
    %v1781 = vld [vmem:[#allocation3 + $0xb70] sm:$0xff]
    %v1782 = vld [vmem:[#allocation3 + $0xb78] sm:$0xff]
    %v1783 = vld [vmem:[#allocation3 + $0xb80] sm:$0xff]
    %v1784 = vld [vmem:[#allocation3 + $0xb88] sm:$0xff]
    %v1785 = vld [vmem:[#allocation3 + $0xb90] sm:$0xff]
    %v1786 = vld [vmem:[#allocation3 + $0xb98] sm:$0xff]
    %v1787 = vld [vmem:[#allocation3 + $0xba0] sm:$0xff]
    %v1788 = vld [vmem:[#allocation3 + $0xba8] sm:$0xff]
    %v1789 = vld [vmem:[#allocation3 + $0xbb0] sm:$0xff]
    %v1790 = vld [vmem:[#allocation3 + $0xbb8] sm:$0xff]
    %v1791 = vld [vmem:[#allocation3 + $0xbc0] sm:$0xff]
    %v1792 = vld [vmem:[#allocation3 + $0xbc8] sm:$0xff]
    %v1793 = vld [vmem:[#allocation3 + $0xbd0] sm:$0xff]
    %v1794 = vld [vmem:[#allocation3 + $0xbd8] sm:$0xff]
    %v1795 = vld [vmem:[#allocation3 + $0xbe0] sm:$0xff]
    %v1796 = vld [vmem:[#allocation3 + $0xbe8] sm:$0xff]
    %v1797 = vld [vmem:[#allocation3 + $0xbf0] sm:$0xff]
    %v1798 = vld [vmem:[#allocation3 + $0xbf8] sm:$0xff]
    %v1799 = vld [vmem:[#allocation3 + $0xc00] sm:$0xff]
    %v1800 = vld [vmem:[#allocation3 + $0xc08] sm:$0xff]
    %v1801 = vld [vmem:[#allocation3 + $0xc10] sm:$0xff]
    %v1802 = vld [vmem:[#allocation3 + $0xc18] sm:$0xff]
    %v1803 = vld [vmem:[#allocation3 + $0xc20] sm:$0xff]
    %v1804 = vld [vmem:[#allocation3 + $0xc28] sm:$0xff]
    %v1805 = vld [vmem:[#allocation3 + $0xc30] sm:$0xff]
    %v1806 = vld [vmem:[#allocation3 + $0xc38] sm:$0xff]
    %v1807 = vld [vmem:[#allocation3 + $0xc40] sm:$0xff]
    %v1808 = vld [vmem:[#allocation3 + $0xc48] sm:$0xff]
    %v1809 = vld [vmem:[#allocation3 + $0xc50] sm:$0xff]
    %v1810 = vld [vmem:[#allocation3 + $0xc58] sm:$0xff]
    %v1811 = vld [vmem:[#allocation3 + $0xc60] sm:$0xff]
    %v1812 = vld [vmem:[#allocation3 + $0xc68] sm:$0xff]
    %v1813 = vld [vmem:[#allocation3 + $0xc70] sm:$0xff]
    %v1814 = vld [vmem:[#allocation3 + $0xc78] sm:$0xff]
    %v1815 = vld [vmem:[#allocation3 + $0xc80] sm:$0xff]
    %v1816 = vld [vmem:[#allocation3 + $0xc88] sm:$0xff]
    %v1817 = vld [vmem:[#allocation3 + $0xc90] sm:$0xff]
    %v1818 = vld [vmem:[#allocation3 + $0xc98] sm:$0xff]
    %v1819 = vld [vmem:[#allocation3 + $0xca0] sm:$0xff]
    %v1820 = vld [vmem:[#allocation3 + $0xca8] sm:$0xff]
    %v1821 = vld [vmem:[#allocation3 + $0xcb0] sm:$0xff]
    %v1822 = vld [vmem:[#allocation3 + $0xcb8] sm:$0xff]
    %v1823 = vld [vmem:[#allocation3 + $0xcc0] sm:$0xff]
    %v1824 = vld [vmem:[#allocation3 + $0xcc8] sm:$0xff]
    %v1825 = vld [vmem:[#allocation3 + $0xcd0] sm:$0xff]
    %v1826 = vld [vmem:[#allocation3 + $0xcd8] sm:$0xff]
    %v1827 = vld [vmem:[#allocation3 + $0xce0] sm:$0xff]
    %v1828 = vld [vmem:[#allocation3 + $0xce8] sm:$0xff]
    %v1829 = vld [vmem:[#allocation3 + $0xcf0] sm:$0xff]
    %v1830 = vld [vmem:[#allocation3 + $0xcf8] sm:$0xff]
    %v1831 = vld [vmem:[#allocation3 + $0xd00] sm:$0xff]
    %v1832 = vld [vmem:[#allocation3 + $0xd08] sm:$0xff]
    %v1833 = vld [vmem:[#allocation3 + $0xd10] sm:$0xff]
    %v1834 = vld [vmem:[#allocation3 + $0xd18] sm:$0xff]
    %v1835 = vld [vmem:[#allocation3 + $0xd20] sm:$0xff]
    %v1836 = vld [vmem:[#allocation3 + $0xd28] sm:$0xff]
    %v1837 = vld [vmem:[#allocation3 + $0xd30] sm:$0xff]
    %v1838 = vld [vmem:[#allocation3 + $0xd38] sm:$0xff]
    %v1839 = vld [vmem:[#allocation3 + $0xd40] sm:$0xff]
    %v1840 = vld [vmem:[#allocation3 + $0xd48] sm:$0xff]
    %v1841 = vld [vmem:[#allocation3 + $0xd50] sm:$0xff]
    %v1842 = vld [vmem:[#allocation3 + $0xd58] sm:$0xff]
    %v1843 = vld [vmem:[#allocation3 + $0xd60] sm:$0xff]
    %v1844 = vld [vmem:[#allocation3 + $0xd68] sm:$0xff]
    %v1845 = vld [vmem:[#allocation3 + $0xd70] sm:$0xff]
    %v1846 = vld [vmem:[#allocation3 + $0xd78] sm:$0xff]
    %v1847 = vld [vmem:[#allocation3 + $0xd80] sm:$0xff]
    %v1848 = vld [vmem:[#allocation3 + $0xd88] sm:$0xff]
    %v1849 = vld [vmem:[#allocation3 + $0xd90] sm:$0xff]
    %v1850 = vld [vmem:[#allocation3 + $0xd98] sm:$0xff]
    %v1851 = vld [vmem:[#allocation3 + $0xda0] sm:$0xff]
    %v1852 = vld [vmem:[#allocation3 + $0xda8] sm:$0xff]
    %v1853 = vld [vmem:[#allocation3 + $0xdb0] sm:$0xff]
    %v1854 = vld [vmem:[#allocation3 + $0xdb8] sm:$0xff]
    %v1855 = vld [vmem:[#allocation3 + $0xdc0] sm:$0xff]
    %v1856 = vld [vmem:[#allocation3 + $0xdc8] sm:$0xff]
    %v1857 = vld [vmem:[#allocation3 + $0xdd0] sm:$0xff]
    %v1858 = vld [vmem:[#allocation3 + $0xdd8] sm:$0xff]
    %v1859 = vld [vmem:[#allocation3 + $0xde0] sm:$0xff]
    %v1860 = vld [vmem:[#allocation3 + $0xde8] sm:$0xff]
    %v1861 = vld [vmem:[#allocation3 + $0xdf0] sm:$0xff]
    %v1862 = vld [vmem:[#allocation3 + $0xdf8] sm:$0xff]
    %v1863 = vld [vmem:[#allocation3 + $0xe00] sm:$0xff]
    %v1864 = vld [vmem:[#allocation3 + $0xe08] sm:$0xff]
    %v1865 = vld [vmem:[#allocation3 + $0xe10] sm:$0xff]
    %v1866 = vld [vmem:[#allocation3 + $0xe18] sm:$0xff]
    %v1867 = vld [vmem:[#allocation3 + $0xe20] sm:$0xff]
    %v1868 = vld [vmem:[#allocation3 + $0xe28] sm:$0xff]
    %v1869 = vld [vmem:[#allocation3 + $0xe30] sm:$0xff]
    %v1870 = vld [vmem:[#allocation3 + $0xe38] sm:$0xff]
    %v1871 = vld [vmem:[#allocation3 + $0xe40] sm:$0xff]
    %v1872 = vld [vmem:[#allocation3 + $0xe48] sm:$0xff]
    %v1873 = vld [vmem:[#allocation3 + $0xe50] sm:$0xff]
    %v1874 = vld [vmem:[#allocation3 + $0xe58] sm:$0xff]
    %v1875 = vld [vmem:[#allocation3 + $0xe60] sm:$0xff]
    %v1876 = vld [vmem:[#allocation3 + $0xe68] sm:$0xff]
    %v1877 = vld [vmem:[#allocation3 + $0xe70] sm:$0xff]
    %v1878 = vld [vmem:[#allocation3 + $0xe78] sm:$0xff]
    %v1879 = vld [vmem:[#allocation3 + $0xe80] sm:$0xff]
    %v1880 = vld [vmem:[#allocation3 + $0xe88] sm:$0xff]
    %v1881 = vld [vmem:[#allocation3 + $0xe90] sm:$0xff]
    %v1882 = vld [vmem:[#allocation3 + $0xe98] sm:$0xff]
    %v1883 = vld [vmem:[#allocation3 + $0xea0] sm:$0xff]
    %v1884 = vld [vmem:[#allocation3 + $0xea8] sm:$0xff]
    %v1885 = vld [vmem:[#allocation3 + $0xeb0] sm:$0xff]
    %v1886 = vld [vmem:[#allocation3 + $0xeb8] sm:$0xff]
    %v1887 = vld [vmem:[#allocation3 + $0xec0] sm:$0xff]
    %v1888 = vld [vmem:[#allocation3 + $0xec8] sm:$0xff]
    %v1889 = vld [vmem:[#allocation3 + $0xed0] sm:$0xff]
    %v1890 = vld [vmem:[#allocation3 + $0xed8] sm:$0xff]
    %v1891 = vld [vmem:[#allocation3 + $0xee0] sm:$0xff]
    %v1892 = vld [vmem:[#allocation3 + $0xee8] sm:$0xff]
    %v1893 = vld [vmem:[#allocation3 + $0xef0] sm:$0xff]
    %v1894 = vld [vmem:[#allocation3 + $0xef8] sm:$0xff]
    %v1895 = vld [vmem:[#allocation3 + $0xf00] sm:$0xff]
    %v1896 = vld [vmem:[#allocation3 + $0xf08] sm:$0xff]
    %v1897 = vld [vmem:[#allocation3 + $0xf10] sm:$0xff]
    %v1898 = vld [vmem:[#allocation3 + $0xf18] sm:$0xff]
    %v1899 = vld [vmem:[#allocation3 + $0xf20] sm:$0xff]
    %v1900 = vld [vmem:[#allocation3 + $0xf28] sm:$0xff]
    %v1901 = vld [vmem:[#allocation3 + $0xf30] sm:$0xff]
    %v1902 = vld [vmem:[#allocation3 + $0xf38] sm:$0xff]
    %v1903 = vld [vmem:[#allocation3 + $0xf40] sm:$0xff]
    %v1904 = vld [vmem:[#allocation3 + $0xf48] sm:$0xff]
    %v1905 = vld [vmem:[#allocation3 + $0xf50] sm:$0xff]
    %v1906 = vld [vmem:[#allocation3 + $0xf58] sm:$0xff]
    %v1907 = vld [vmem:[#allocation3 + $0xf60] sm:$0xff]
    %v1908 = vld [vmem:[#allocation3 + $0xf68] sm:$0xff]
    %v1909 = vld [vmem:[#allocation3 + $0xf70] sm:$0xff]
    %v1910 = vld [vmem:[#allocation3 + $0xf78] sm:$0xff]
    %v1911 = vld [vmem:[#allocation3 + $0xf80] sm:$0xff]
    %v1912 = vld [vmem:[#allocation3 + $0xf88] sm:$0xff]
    %v1913 = vld [vmem:[#allocation3 + $0xf90] sm:$0xff]
    %v1914 = vld [vmem:[#allocation3 + $0xf98] sm:$0xff]
    %v1915 = vld [vmem:[#allocation3 + $0xfa0] sm:$0xff]
    %v1916 = vld [vmem:[#allocation3 + $0xfa8] sm:$0xff]
    %v1917 = vld [vmem:[#allocation3 + $0xfb0] sm:$0xff]
    %v1918 = vld [vmem:[#allocation3 + $0xfb8] sm:$0xff]
    %v1919 = vld [vmem:[#allocation3 + $0xfc0] sm:$0xff]
    %v1920 = vld [vmem:[#allocation3 + $0xfc8] sm:$0xff]
    %v1921 = vld [vmem:[#allocation3 + $0xfd0] sm:$0xff]
    %v1922 = vld [vmem:[#allocation3 + $0xfd8] sm:$0xff]
    %v1923 = vld [vmem:[#allocation3 + $0xfe0] sm:$0xff]
    %v1924 = vld [vmem:[#allocation3 + $0xfe8] sm:$0xff]
    %v1925 = vld [vmem:[#allocation3 + $0xff0] sm:$0xff]
    %v1926 = vld [vmem:[#allocation3 + $0xff8] sm:$0xff]
    %v1927 = vld [vmem:[#allocation3 + $0x1000] sm:$0xff]
    %v1928 = vld [vmem:[#allocation3 + $0x1008] sm:$0xff]
    %v1929 = vld [vmem:[#allocation3 + $0x1010] sm:$0xff]
    %v1930 = vld [vmem:[#allocation3 + $0x1018] sm:$0xff]
    %v1931 = vld [vmem:[#allocation3 + $0x1020] sm:$0xff]
    %v1932 = vld [vmem:[#allocation3 + $0x1028] sm:$0xff]
    %v1933 = vld [vmem:[#allocation3 + $0x1030] sm:$0xff]
    %v1934 = vld [vmem:[#allocation3 + $0x1038] sm:$0xff]
    %v1935 = vld [vmem:[#allocation3 + $0x1040] sm:$0xff]
    %v1936 = vld [vmem:[#allocation3 + $0x1048] sm:$0xff]
    %v1937 = vld [vmem:[#allocation3 + $0x1050] sm:$0xff]
    %v1938 = vld [vmem:[#allocation3 + $0x1058] sm:$0xff]
    %v1939 = vld [vmem:[#allocation3 + $0x1060] sm:$0xff]
    %v1940 = vld [vmem:[#allocation3 + $0x1068] sm:$0xff]
    %v1941 = vld [vmem:[#allocation3 + $0x1070] sm:$0xff]
    %v1942 = vld [vmem:[#allocation3 + $0x1078] sm:$0xff]
    %v1943 = vld [vmem:[#allocation3 + $0x1080] sm:$0xff]
    %v1944 = vld [vmem:[#allocation3 + $0x1088] sm:$0xff]
    %v1945 = vld [vmem:[#allocation3 + $0x1090] sm:$0xff]
    %v1946 = vld [vmem:[#allocation3 + $0x1098] sm:$0xff]
    %v1947 = vld [vmem:[#allocation3 + $0x10a0] sm:$0xff]
    %v1948 = vld [vmem:[#allocation3 + $0x10a8] sm:$0xff]
    %v1949 = vld [vmem:[#allocation3 + $0x10b0] sm:$0xff]
    %v1950 = vld [vmem:[#allocation3 + $0x10b8] sm:$0xff]
    %v1951 = vld [vmem:[#allocation3 + $0x10c0] sm:$0xff]
    %v1952 = vld [vmem:[#allocation3 + $0x10c8] sm:$0xff]
    %v1953 = vld [vmem:[#allocation3 + $0x10d0] sm:$0xff]
    %v1954 = vld [vmem:[#allocation3 + $0x10d8] sm:$0xff]
    %v1955 = vld [vmem:[#allocation3 + $0x10e0] sm:$0xff]
    %v1956 = vld [vmem:[#allocation3 + $0x10e8] sm:$0xff]
    %v1957 = vld [vmem:[#allocation3 + $0x10f0] sm:$0xff]
    %v1958 = vld [vmem:[#allocation3 + $0x10f8] sm:$0xff]
    %v1959 = vld [vmem:[#allocation3 + $0x1100] sm:$0xff]
    %v1960 = vld [vmem:[#allocation3 + $0x1108] sm:$0xff]
    %v1961 = vld [vmem:[#allocation3 + $0x1110] sm:$0xff]
    %v1962 = vld [vmem:[#allocation3 + $0x1118] sm:$0xff]
    %v1963 = vld [vmem:[#allocation3 + $0x1120] sm:$0xff]
    %v1964 = vld [vmem:[#allocation3 + $0x1128] sm:$0xff]
    %v1965 = vld [vmem:[#allocation3 + $0x1130] sm:$0xff]
    %v1966 = vld [vmem:[#allocation3 + $0x1138] sm:$0xff]
    %v1967 = vld [vmem:[#allocation3 + $0x1140] sm:$0xff]
    %v1968 = vld [vmem:[#allocation3 + $0x1148] sm:$0xff]
    %v1969 = vld [vmem:[#allocation3 + $0x1150] sm:$0xff]
    %v1970 = vld [vmem:[#allocation3 + $0x1158] sm:$0xff]
    %v1971 = vld [vmem:[#allocation3 + $0x1160] sm:$0xff]
    %v1972 = vld [vmem:[#allocation3 + $0x1168] sm:$0xff]
    %v1973 = vld [vmem:[#allocation3 + $0x1170] sm:$0xff]
    %v1974 = vld [vmem:[#allocation3 + $0x1178] sm:$0xff]
    %v1975 = vld [vmem:[#allocation3 + $0x1180] sm:$0xff]
    %v1976 = vld [vmem:[#allocation3 + $0x1188] sm:$0xff]
    %v1977 = vld [vmem:[#allocation3 + $0x1190] sm:$0xff]
    %v1978 = vld [vmem:[#allocation3 + $0x1198] sm:$0xff]
    %v1979 = vld [vmem:[#allocation3 + $0x11a0] sm:$0xff]
    %v1980 = vld [vmem:[#allocation3 + $0x11a8] sm:$0xff]
    %v1981 = vld [vmem:[#allocation3 + $0x11b0] sm:$0xff]
    %v1982 = vld [vmem:[#allocation3 + $0x11b8] sm:$0xff]
    %v1983 = vld [vmem:[#allocation3 + $0x11c0] sm:$0xff]
    %v1984 = vld [vmem:[#allocation3 + $0x11c8] sm:$0xff]
    %v1985 = vld [vmem:[#allocation3 + $0x11d0] sm:$0xff]
    %v1986 = vld [vmem:[#allocation3 + $0x11d8] sm:$0xff]
    %v1987 = vld [vmem:[#allocation3 + $0x11e0] sm:$0xff]
    %v1988 = vld [vmem:[#allocation3 + $0x11e8] sm:$0xff]
    %v1989 = vld [vmem:[#allocation3 + $0x11f0] sm:$0xff]
    %v1990 = vld [vmem:[#allocation3 + $0x11f8] sm:$0xff]
    %v1991 = vld [vmem:[#allocation7] sm:$0xff]
    %v1992 = vld [vmem:[#allocation7 + $0x8] sm:$0xff]
    %v1993 = vld [vmem:[#allocation7 + $0x10] sm:$0xff]
    %v1994 = vld [vmem:[#allocation7 + $0x18] sm:$0xff]
    %v1995 = vld [vmem:[#allocation7 + $0x20] sm:$0xff]
    %v1996 = vld [vmem:[#allocation7 + $0x28] sm:$0xff]
    %v1997 = vld [vmem:[#allocation7 + $0x30] sm:$0xff]
    %v1998 = vld [vmem:[#allocation7 + $0x38] sm:$0xff]
    %v1999 = vld [vmem:[#allocation7 + $0x40] sm:$0xff]
    %v2000 = vld [vmem:[#allocation7 + $0x48] sm:$0xff]
    %v2001 = vld [vmem:[#allocation7 + $0x50] sm:$0xff]
    %v2002 = vld [vmem:[#allocation7 + $0x58] sm:$0xff]
    %v2003 = vld [vmem:[#allocation7 + $0x60] sm:$0xff]
    %v2004 = vld [vmem:[#allocation7 + $0x68] sm:$0xff]
    %v2005 = vld [vmem:[#allocation7 + $0x70] sm:$0xff]
    %v2006 = vld [vmem:[#allocation7 + $0x78] sm:$0xff]
    %v2007 = vld [vmem:[#allocation7 + $0x80] sm:$0xff]
    %v2008 = vld [vmem:[#allocation7 + $0x88] sm:$0xff]
    %v2009 = vld [vmem:[#allocation7 + $0x90] sm:$0xff]
    %v2010 = vld [vmem:[#allocation7 + $0x98] sm:$0xff]
    %v2011 = vld [vmem:[#allocation7 + $0xa0] sm:$0xff]
    %v2012 = vld [vmem:[#allocation7 + $0xa8] sm:$0xff]
    %v2013 = vld [vmem:[#allocation7 + $0xb0] sm:$0xff]
    %v2014 = vld [vmem:[#allocation7 + $0xb8] sm:$0xff]
    %v2015 = vld [vmem:[#allocation7 + $0xc0] sm:$0xff]
    %v2016 = vld [vmem:[#allocation7 + $0xc8] sm:$0xff]
    %v2017 = vld [vmem:[#allocation7 + $0xd0] sm:$0xff]
    %v2018 = vld [vmem:[#allocation7 + $0xd8] sm:$0xff]
    %v2019 = vld [vmem:[#allocation7 + $0xe0] sm:$0xff]
    %v2020 = vld [vmem:[#allocation7 + $0xe8] sm:$0xff]
    %v2021 = vld [vmem:[#allocation7 + $0xf0] sm:$0xff]
    %v2022 = vld [vmem:[#allocation7 + $0xf8] sm:$0xff]
    %v2023 = vld [vmem:[#allocation7 + $0x100] sm:$0xff]
    %v2024 = vld [vmem:[#allocation7 + $0x108] sm:$0xff]
    %v2025 = vld [vmem:[#allocation7 + $0x110] sm:$0xff]
    %v2026 = vld [vmem:[#allocation7 + $0x118] sm:$0xff]
    %v2027 = vld [vmem:[#allocation7 + $0x120] sm:$0xff]
    %v2028 = vld [vmem:[#allocation7 + $0x128] sm:$0xff]
    %v2029 = vld [vmem:[#allocation7 + $0x130] sm:$0xff]
    %v2030 = vld [vmem:[#allocation7 + $0x138] sm:$0xff]
    %v2031 = vld [vmem:[#allocation7 + $0x140] sm:$0xff]
    %v2032 = vld [vmem:[#allocation7 + $0x148] sm:$0xff]
    %v2033 = vld [vmem:[#allocation7 + $0x150] sm:$0xff]
    %v2034 = vld [vmem:[#allocation7 + $0x158] sm:$0xff]
    %v2035 = vld [vmem:[#allocation7 + $0x160] sm:$0xff]
    %v2036 = vld [vmem:[#allocation7 + $0x168] sm:$0xff]
    %v2037 = vld [vmem:[#allocation7 + $0x170] sm:$0xff]
    %v2038 = vld [vmem:[#allocation7 + $0x178] sm:$0xff]
    %v2039 = vld [vmem:[#allocation7 + $0x180] sm:$0xff]
    %v2040 = vld [vmem:[#allocation7 + $0x188] sm:$0xff]
    %v2041 = vld [vmem:[#allocation7 + $0x190] sm:$0xff]
    %v2042 = vld [vmem:[#allocation7 + $0x198] sm:$0xff]
    %v2043 = vld [vmem:[#allocation7 + $0x1a0] sm:$0xff]
    %v2044 = vld [vmem:[#allocation7 + $0x1a8] sm:$0xff]
    %v2045 = vld [vmem:[#allocation7 + $0x1b0] sm:$0xff]
    %v2046 = vld [vmem:[#allocation7 + $0x1b8] sm:$0xff]
    %v2047 = vld [vmem:[#allocation7 + $0x1c0] sm:$0xff]
    %v2048 = vld [vmem:[#allocation7 + $0x1c8] sm:$0xff]
    %v2049 = vld [vmem:[#allocation7 + $0x1d0] sm:$0xff]
    %v2050 = vld [vmem:[#allocation7 + $0x1d8] sm:$0xff]
    %v2051 = vld [vmem:[#allocation7 + $0x1e0] sm:$0xff]
    %v2052 = vld [vmem:[#allocation7 + $0x1e8] sm:$0xff]
    %v2053 = vld [vmem:[#allocation7 + $0x1f0] sm:$0xff]
    %v2054 = vld [vmem:[#allocation7 + $0x1f8] sm:$0xff]
    %v2055 = vld [vmem:[#allocation7 + $0x200] sm:$0xff]
    %v2056 = vld [vmem:[#allocation7 + $0x208] sm:$0xff]
    %v2057 = vld [vmem:[#allocation7 + $0x210] sm:$0xff]
    %v2058 = vld [vmem:[#allocation7 + $0x218] sm:$0xff]
    %v2059 = vld [vmem:[#allocation7 + $0x220] sm:$0xff]
    %v2060 = vld [vmem:[#allocation7 + $0x228] sm:$0xff]
    %v2061 = vld [vmem:[#allocation7 + $0x230] sm:$0xff]
    %v2062 = vld [vmem:[#allocation7 + $0x238] sm:$0xff]
    %v2063 = vld [vmem:[#allocation7 + $0x240] sm:$0xff]
    %v2064 = vld [vmem:[#allocation7 + $0x248] sm:$0xff]
    %v2065 = vld [vmem:[#allocation7 + $0x250] sm:$0xff]
    %v2066 = vld [vmem:[#allocation7 + $0x258] sm:$0xff]
    %v2067 = vld [vmem:[#allocation7 + $0x260] sm:$0xff]
    %v2068 = vld [vmem:[#allocation7 + $0x268] sm:$0xff]
    %v2069 = vld [vmem:[#allocation7 + $0x270] sm:$0xff]
    %v2070 = vld [vmem:[#allocation7 + $0x278] sm:$0xff]
    %v2071 = vld [vmem:[#allocation7 + $0x280] sm:$0xff]
    %v2072 = vld [vmem:[#allocation7 + $0x288] sm:$0xff]
    %v2073 = vld [vmem:[#allocation7 + $0x290] sm:$0xff]
    %v2074 = vld [vmem:[#allocation7 + $0x298] sm:$0xff]
    %v2075 = vld [vmem:[#allocation7 + $0x2a0] sm:$0xff]
    %v2076 = vld [vmem:[#allocation7 + $0x2a8] sm:$0xff]
    %v2077 = vld [vmem:[#allocation7 + $0x2b0] sm:$0xff]
    %v2078 = vld [vmem:[#allocation7 + $0x2b8] sm:$0xff]
    %v2079 = vld [vmem:[#allocation7 + $0x2c0] sm:$0xff]
    %v2080 = vld [vmem:[#allocation7 + $0x2c8] sm:$0xff]
    %v2081 = vld [vmem:[#allocation7 + $0x2d0] sm:$0xff]
    %v2082 = vld [vmem:[#allocation7 + $0x2d8] sm:$0xff]
    %v2083 = vld [vmem:[#allocation7 + $0x2e0] sm:$0xff]
    %v2084 = vld [vmem:[#allocation7 + $0x2e8] sm:$0xff]
    %v2085 = vld [vmem:[#allocation7 + $0x2f0] sm:$0xff]
    %v2086 = vld [vmem:[#allocation7 + $0x2f8] sm:$0xff]
    %v2087 = vld [vmem:[#allocation7 + $0x300] sm:$0xff]
    %v2088 = vld [vmem:[#allocation7 + $0x308] sm:$0xff]
    %v2089 = vld [vmem:[#allocation7 + $0x310] sm:$0xff]
    %v2090 = vld [vmem:[#allocation7 + $0x318] sm:$0xff]
    %v2091 = vld [vmem:[#allocation7 + $0x320] sm:$0xff]
    %v2092 = vld [vmem:[#allocation7 + $0x328] sm:$0xff]
    %v2093 = vld [vmem:[#allocation7 + $0x330] sm:$0xff]
    %v2094 = vld [vmem:[#allocation7 + $0x338] sm:$0xff]
    %v2095 = vld [vmem:[#allocation7 + $0x340] sm:$0xff]
    %v2096 = vld [vmem:[#allocation7 + $0x348] sm:$0xff]
    %v2097 = vld [vmem:[#allocation7 + $0x350] sm:$0xff]
    %v2098 = vld [vmem:[#allocation7 + $0x358] sm:$0xff]
    %v2099 = vld [vmem:[#allocation7 + $0x360] sm:$0xff]
    %v2100 = vld [vmem:[#allocation7 + $0x368] sm:$0xff]
    %v2101 = vld [vmem:[#allocation7 + $0x370] sm:$0xff]
    %v2102 = vld [vmem:[#allocation7 + $0x378] sm:$0xff]
    %v2103 = vld [vmem:[#allocation7 + $0x380] sm:$0xff]
    %v2104 = vld [vmem:[#allocation7 + $0x388] sm:$0xff]
    %v2105 = vld [vmem:[#allocation7 + $0x390] sm:$0xff]
    %v2106 = vld [vmem:[#allocation7 + $0x398] sm:$0xff]
    %v2107 = vld [vmem:[#allocation7 + $0x3a0] sm:$0xff]
    %v2108 = vld [vmem:[#allocation7 + $0x3a8] sm:$0xff]
    %v2109 = vld [vmem:[#allocation7 + $0x3b0] sm:$0xff]
    %v2110 = vld [vmem:[#allocation7 + $0x3b8] sm:$0xff]
    %v2111 = vld [vmem:[#allocation7 + $0x3c0] sm:$0xff]
    %v2112 = vld [vmem:[#allocation7 + $0x3c8] sm:$0xff]
    %v2113 = vld [vmem:[#allocation7 + $0x3d0] sm:$0xff]
    %v2114 = vld [vmem:[#allocation7 + $0x3d8] sm:$0xff]
    %v2115 = vld [vmem:[#allocation7 + $0x3e0] sm:$0xff]
    %v2116 = vld [vmem:[#allocation7 + $0x3e8] sm:$0xff]
    %v2117 = vld [vmem:[#allocation7 + $0x3f0] sm:$0xff]
    %v2118 = vld [vmem:[#allocation7 + $0x3f8] sm:$0xff]
    %v2119 = vld [vmem:[#allocation7 + $0x400] sm:$0xff]
    %v2120 = vld [vmem:[#allocation7 + $0x408] sm:$0xff]
    %v2121 = vld [vmem:[#allocation7 + $0x410] sm:$0xff]
    %v2122 = vld [vmem:[#allocation7 + $0x418] sm:$0xff]
    %v2123 = vld [vmem:[#allocation7 + $0x420] sm:$0xff]
    %v2124 = vld [vmem:[#allocation7 + $0x428] sm:$0xff]
    %v2125 = vld [vmem:[#allocation7 + $0x430] sm:$0xff]
    %v2126 = vld [vmem:[#allocation7 + $0x438] sm:$0xff]
    %v2127 = vld [vmem:[#allocation7 + $0x440] sm:$0xff]
    %v2128 = vld [vmem:[#allocation7 + $0x448] sm:$0xff]
    %v2129 = vld [vmem:[#allocation7 + $0x450] sm:$0xff]
    %v2130 = vld [vmem:[#allocation7 + $0x458] sm:$0xff]
    %v2131 = vld [vmem:[#allocation7 + $0x460] sm:$0xff]
    %v2132 = vld [vmem:[#allocation7 + $0x468] sm:$0xff]
    %v2133 = vld [vmem:[#allocation7 + $0x470] sm:$0xff]
    %v2134 = vld [vmem:[#allocation7 + $0x478] sm:$0xff]
    %2135 = vmatpush.msra.mxu0 %v2006
    %2136 = vmatpush.msra.mxu0 %v2005
    %2137 = vmatpush.msra.mxu0 %v2004
    %2138 = vmatpush.msra.mxu0 %v2003
    %2139 = vmatpush.msra.mxu0 %v2002
    %2140 = vmatpush.msra.mxu0 %v2001
    %2141 = vmatpush.msra.mxu0 %v2000
    %2142 = vmatpush.msra.mxu0 %v1999
    %2143 = vmatpush.msra.mxu0 %v1998
    %2144 = vmatpush.msra.mxu0 %v1997
    %2145 = vmatpush.msra.mxu0 %v1996
    %2146 = vmatpush.msra.mxu0 %v1995
    %2147 = vmatpush.msra.mxu0 %v1994
    %2148 = vmatpush.msra.mxu0 %v1993
    %2149 = vmatpush.msra.mxu0 %v1992
    %2150 = vmatpush.msra.mxu0 %v1991
    %2151 = vmatmul.f32.gmra.mxu0 %v1415
    %v2152 = vpop.f32.mrf.mxu0
    %v2153 = vadd.f32 0.0, %v2152
    %2154 = vmatmul.f32.gmra.mxu0 %v1424
    %v2155 = vpop.f32.mrf.mxu0
    %v2156 = vadd.f32 0.0, %v2155
    %2157 = vmatmul.f32.gmra.mxu0 %v1433
    %v2158 = vpop.f32.mrf.mxu0
    %v2159 = vadd.f32 0.0, %v2158
    %2160 = vmatmul.f32.gmra.mxu0 %v1442
    %v2161 = vpop.f32.mrf.mxu0
    %v2162 = vadd.f32 0.0, %v2161
    %2163 = vmatmul.f32.gmra.mxu0 %v1451
    %v2164 = vpop.f32.mrf.mxu0
    %v2165 = vadd.f32 0.0, %v2164
    %2166 = vmatmul.f32.gmra.mxu0 %v1460
    %v2167 = vpop.f32.mrf.mxu0
    %v2168 = vadd.f32 0.0, %v2167
    %2169 = vmatmul.f32.gmra.mxu0 %v1469
    %v2170 = vpop.f32.mrf.mxu0
    %v2171 = vadd.f32 0.0, %v2170
    %2172 = vmatmul.f32.gmra.mxu0 %v1478
    %v2173 = vpop.f32.mrf.mxu0
    %v2174 = vadd.f32 0.0, %v2173
    %2175 = vmatmul.f32.gmra.mxu0 %v1487
    %v2176 = vpop.f32.mrf.mxu0
    %v2177 = vadd.f32 0.0, %v2176
    %2178 = vmatmul.f32.gmra.mxu0 %v1496
    %v2179 = vpop.f32.mrf.mxu0
    %v2180 = vadd.f32 0.0, %v2179
    %2181 = vmatmul.f32.gmra.mxu0 %v1505
    %v2182 = vpop.f32.mrf.mxu0
    %v2183 = vadd.f32 0.0, %v2182
    %2184 = vmatmul.f32.gmra.mxu0 %v1514
    %v2185 = vpop.f32.mrf.mxu0
    %v2186 = vadd.f32 0.0, %v2185
    %2187 = vmatmul.f32.gmra.mxu0 %v1523
    %v2188 = vpop.f32.mrf.mxu0
    %v2189 = vadd.f32 0.0, %v2188
    %2190 = vmatmul.f32.gmra.mxu0 %v1532
    %v2191 = vpop.f32.mrf.mxu0
    %v2192 = vadd.f32 0.0, %v2191
    %2193 = vmatmul.f32.gmra.mxu0 %v1541
    %v2194 = vpop.f32.mrf.mxu0
    %v2195 = vadd.f32 0.0, %v2194
    %2196 = vmatmul.f32.gmra.mxu0 %v1550
    %v2197 = vpop.f32.mrf.mxu0
    %v2198 = vadd.f32 0.0, %v2197
    %2199 = vmatmul.f32.gmra.mxu0 %v1559
    %v2200 = vpop.f32.mrf.mxu0
    %v2201 = vadd.f32 0.0, %v2200
    %2202 = vmatmul.f32.gmra.mxu0 %v1568
    %v2203 = vpop.f32.mrf.mxu0
    %v2204 = vadd.f32 0.0, %v2203
    %2205 = vmatmul.f32.gmra.mxu0 %v1577
    %v2206 = vpop.f32.mrf.mxu0
    %v2207 = vadd.f32 0.0, %v2206
    %2208 = vmatmul.f32.gmra.mxu0 %v1586
    %v2209 = vpop.f32.mrf.mxu0
    %v2210 = vadd.f32 0.0, %v2209
    %2211 = vmatmul.f32.gmra.mxu0 %v1595
    %v2212 = vpop.f32.mrf.mxu0
    %v2213 = vadd.f32 0.0, %v2212
    %2214 = vmatmul.f32.gmra.mxu0 %v1604
    %v2215 = vpop.f32.mrf.mxu0
    %v2216 = vadd.f32 0.0, %v2215
    %2217 = vmatmul.f32.gmra.mxu0 %v1613
    %v2218 = vpop.f32.mrf.mxu0
    %v2219 = vadd.f32 0.0, %v2218
    %2220 = vmatmul.f32.gmra.mxu0 %v1622
    %v2221 = vpop.f32.mrf.mxu0
    %v2222 = vadd.f32 0.0, %v2221
    %2223 = vmatmul.f32.gmra.mxu0 %v1631
    %v2224 = vpop.f32.mrf.mxu0
    %v2225 = vadd.f32 0.0, %v2224
    %2226 = vmatmul.f32.gmra.mxu0 %v1640
    %v2227 = vpop.f32.mrf.mxu0
    %v2228 = vadd.f32 0.0, %v2227
    %2229 = vmatmul.f32.gmra.mxu0 %v1649
    %v2230 = vpop.f32.mrf.mxu0
    %v2231 = vadd.f32 0.0, %v2230
    %2232 = vmatmul.f32.gmra.mxu0 %v1658
    %v2233 = vpop.f32.mrf.mxu0
    %v2234 = vadd.f32 0.0, %v2233
    %2235 = vmatmul.f32.gmra.mxu0 %v1667
    %v2236 = vpop.f32.mrf.mxu0
    %v2237 = vadd.f32 0.0, %v2236
    %2238 = vmatmul.f32.gmra.mxu0 %v1676
    %v2239 = vpop.f32.mrf.mxu0
    %v2240 = vadd.f32 0.0, %v2239
    %2241 = vmatmul.f32.gmra.mxu0 %v1685
    %v2242 = vpop.f32.mrf.mxu0
    %v2243 = vadd.f32 0.0, %v2242
    %2244 = vmatmul.f32.gmra.mxu0 %v1694
    %v2245 = vpop.f32.mrf.mxu0
    %v2246 = vadd.f32 0.0, %v2245
    %2247 = vmatmul.f32.gmra.mxu0 %v1703
    %v2248 = vpop.f32.mrf.mxu0
    %v2249 = vadd.f32 0.0, %v2248
    %2250 = vmatmul.f32.gmra.mxu0 %v1712
    %v2251 = vpop.f32.mrf.mxu0
    %v2252 = vadd.f32 0.0, %v2251
    %2253 = vmatmul.f32.gmra.mxu0 %v1721
    %v2254 = vpop.f32.mrf.mxu0
    %v2255 = vadd.f32 0.0, %v2254
    %2256 = vmatmul.f32.gmra.mxu0 %v1730
    %v2257 = vpop.f32.mrf.mxu0
    %v2258 = vadd.f32 0.0, %v2257
    %2259 = vmatmul.f32.gmra.mxu0 %v1739
    %v2260 = vpop.f32.mrf.mxu0
    %v2261 = vadd.f32 0.0, %v2260
    %2262 = vmatmul.f32.gmra.mxu0 %v1748
    %v2263 = vpop.f32.mrf.mxu0
    %v2264 = vadd.f32 0.0, %v2263
    %2265 = vmatmul.f32.gmra.mxu0 %v1757
    %v2266 = vpop.f32.mrf.mxu0
    %v2267 = vadd.f32 0.0, %v2266
    %2268 = vmatmul.f32.gmra.mxu0 %v1766
    %v2269 = vpop.f32.mrf.mxu0
    %v2270 = vadd.f32 0.0, %v2269
    %2271 = vmatmul.f32.gmra.mxu0 %v1775
    %v2272 = vpop.f32.mrf.mxu0
    %v2273 = vadd.f32 0.0, %v2272
    %2274 = vmatmul.f32.gmra.mxu0 %v1784
    %v2275 = vpop.f32.mrf.mxu0
    %v2276 = vadd.f32 0.0, %v2275
    %2277 = vmatmul.f32.gmra.mxu0 %v1793
    %v2278 = vpop.f32.mrf.mxu0
    %v2279 = vadd.f32 0.0, %v2278
    %2280 = vmatmul.f32.gmra.mxu0 %v1802
    %v2281 = vpop.f32.mrf.mxu0
    %v2282 = vadd.f32 0.0, %v2281
    %2283 = vmatmul.f32.gmra.mxu0 %v1811
    %v2284 = vpop.f32.mrf.mxu0
    %v2285 = vadd.f32 0.0, %v2284
    %2286 = vmatmul.f32.gmra.mxu0 %v1820
    %v2287 = vpop.f32.mrf.mxu0
    %v2288 = vadd.f32 0.0, %v2287
    %2289 = vmatmul.f32.gmra.mxu0 %v1829
    %v2290 = vpop.f32.mrf.mxu0
    %v2291 = vadd.f32 0.0, %v2290
    %2292 = vmatmul.f32.gmra.mxu0 %v1838
    %v2293 = vpop.f32.mrf.mxu0
    %v2294 = vadd.f32 0.0, %v2293
    %2295 = vmatmul.f32.gmra.mxu0 %v1847
    %v2296 = vpop.f32.mrf.mxu0
    %v2297 = vadd.f32 0.0, %v2296
    %2298 = vmatmul.f32.gmra.mxu0 %v1856
    %v2299 = vpop.f32.mrf.mxu0
    %v2300 = vadd.f32 0.0, %v2299
    %2301 = vmatmul.f32.gmra.mxu0 %v1865
    %v2302 = vpop.f32.mrf.mxu0
    %v2303 = vadd.f32 0.0, %v2302
    %2304 = vmatmul.f32.gmra.mxu0 %v1874
    %v2305 = vpop.f32.mrf.mxu0
    %v2306 = vadd.f32 0.0, %v2305
    %2307 = vmatmul.f32.gmra.mxu0 %v1883
    %v2308 = vpop.f32.mrf.mxu0
    %v2309 = vadd.f32 0.0, %v2308
    %2310 = vmatmul.f32.gmra.mxu0 %v1892
    %v2311 = vpop.f32.mrf.mxu0
    %v2312 = vadd.f32 0.0, %v2311
    %2313 = vmatmul.f32.gmra.mxu0 %v1901
    %v2314 = vpop.f32.mrf.mxu0
    %v2315 = vadd.f32 0.0, %v2314
    %2316 = vmatmul.f32.gmra.mxu0 %v1910
    %v2317 = vpop.f32.mrf.mxu0
    %v2318 = vadd.f32 0.0, %v2317
    %2319 = vmatmul.f32.gmra.mxu0 %v1919
    %v2320 = vpop.f32.mrf.mxu0
    %v2321 = vadd.f32 0.0, %v2320
    %2322 = vmatmul.f32.gmra.mxu0 %v1928
    %v2323 = vpop.f32.mrf.mxu0
    %v2324 = vadd.f32 0.0, %v2323
    %2325 = vmatmul.f32.gmra.mxu0 %v1937
    %v2326 = vpop.f32.mrf.mxu0
    %v2327 = vadd.f32 0.0, %v2326
    %2328 = vmatmul.f32.gmra.mxu0 %v1946
    %v2329 = vpop.f32.mrf.mxu0
    %v2330 = vadd.f32 0.0, %v2329
    %2331 = vmatmul.f32.gmra.mxu0 %v1955
    %v2332 = vpop.f32.mrf.mxu0
    %v2333 = vadd.f32 0.0, %v2332
    %2334 = vmatmul.f32.gmra.mxu0 %v1964
    %v2335 = vpop.f32.mrf.mxu0
    %v2336 = vadd.f32 0.0, %v2335
    %2337 = vmatmul.f32.gmra.mxu0 %v1973
    %v2338 = vpop.f32.mrf.mxu0
    %v2339 = vadd.f32 0.0, %v2338
    %2340 = vmatmul.f32.gmra.mxu0 %v1982
    %v2341 = vpop.f32.mrf.mxu0
    %v2342 = vadd.f32 0.0, %v2341
    %2343 = vdwg.mxu0
    %2344 = vmatpush.msra.mxu0 %v2022
    %2345 = vmatpush.msra.mxu0 %v2021
    %2346 = vmatpush.msra.mxu0 %v2020
    %2347 = vmatpush.msra.mxu0 %v2019
    %2348 = vmatpush.msra.mxu0 %v2018
    %2349 = vmatpush.msra.mxu0 %v2017
    %2350 = vmatpush.msra.mxu0 %v2016
    %2351 = vmatpush.msra.mxu0 %v2015
    %2352 = vmatpush.msra.mxu0 %v2014
    %2353 = vmatpush.msra.mxu0 %v2013
    %2354 = vmatpush.msra.mxu0 %v2012
    %2355 = vmatpush.msra.mxu0 %v2011
    %2356 = vmatpush.msra.mxu0 %v2010
    %2357 = vmatpush.msra.mxu0 %v2009
    %2358 = vmatpush.msra.mxu0 %v2008
    %2359 = vmatpush.msra.mxu0 %v2007
    %2360 = vmatmul.f32.gmra.mxu0 %v1416
    %v2361 = vpop.f32.mrf.mxu0
    %v2362 = vadd.f32 %v2153, %v2361
    %2363 = vmatmul.f32.gmra.mxu0 %v1425
    %v2364 = vpop.f32.mrf.mxu0
    %v2365 = vadd.f32 %v2156, %v2364
    %2366 = vmatmul.f32.gmra.mxu0 %v1434
    %v2367 = vpop.f32.mrf.mxu0
    %v2368 = vadd.f32 %v2159, %v2367
    %2369 = vmatmul.f32.gmra.mxu0 %v1443
    %v2370 = vpop.f32.mrf.mxu0
    %v2371 = vadd.f32 %v2162, %v2370
    %2372 = vmatmul.f32.gmra.mxu0 %v1452
    %v2373 = vpop.f32.mrf.mxu0
    %v2374 = vadd.f32 %v2165, %v2373
    %2375 = vmatmul.f32.gmra.mxu0 %v1461
    %v2376 = vpop.f32.mrf.mxu0
    %v2377 = vadd.f32 %v2168, %v2376
    %2378 = vmatmul.f32.gmra.mxu0 %v1470
    %v2379 = vpop.f32.mrf.mxu0
    %v2380 = vadd.f32 %v2171, %v2379
    %2381 = vmatmul.f32.gmra.mxu0 %v1479
    %v2382 = vpop.f32.mrf.mxu0
    %v2383 = vadd.f32 %v2174, %v2382
    %2384 = vmatmul.f32.gmra.mxu0 %v1488
    %v2385 = vpop.f32.mrf.mxu0
    %v2386 = vadd.f32 %v2177, %v2385
    %2387 = vmatmul.f32.gmra.mxu0 %v1497
    %v2388 = vpop.f32.mrf.mxu0
    %v2389 = vadd.f32 %v2180, %v2388
    %2390 = vmatmul.f32.gmra.mxu0 %v1506
    %v2391 = vpop.f32.mrf.mxu0
    %v2392 = vadd.f32 %v2183, %v2391
    %2393 = vmatmul.f32.gmra.mxu0 %v1515
    %v2394 = vpop.f32.mrf.mxu0
    %v2395 = vadd.f32 %v2186, %v2394
    %2396 = vmatmul.f32.gmra.mxu0 %v1524
    %v2397 = vpop.f32.mrf.mxu0
    %v2398 = vadd.f32 %v2189, %v2397
    %2399 = vmatmul.f32.gmra.mxu0 %v1533
    %v2400 = vpop.f32.mrf.mxu0
    %v2401 = vadd.f32 %v2192, %v2400
    %2402 = vmatmul.f32.gmra.mxu0 %v1542
    %v2403 = vpop.f32.mrf.mxu0
    %v2404 = vadd.f32 %v2195, %v2403
    %2405 = vmatmul.f32.gmra.mxu0 %v1551
    %v2406 = vpop.f32.mrf.mxu0
    %v2407 = vadd.f32 %v2198, %v2406
    %2408 = vmatmul.f32.gmra.mxu0 %v1560
    %v2409 = vpop.f32.mrf.mxu0
    %v2410 = vadd.f32 %v2201, %v2409
    %2411 = vmatmul.f32.gmra.mxu0 %v1569
    %v2412 = vpop.f32.mrf.mxu0
    %v2413 = vadd.f32 %v2204, %v2412
    %2414 = vmatmul.f32.gmra.mxu0 %v1578
    %v2415 = vpop.f32.mrf.mxu0
    %v2416 = vadd.f32 %v2207, %v2415
    %2417 = vmatmul.f32.gmra.mxu0 %v1587
    %v2418 = vpop.f32.mrf.mxu0
    %v2419 = vadd.f32 %v2210, %v2418
    %2420 = vmatmul.f32.gmra.mxu0 %v1596
    %v2421 = vpop.f32.mrf.mxu0
    %v2422 = vadd.f32 %v2213, %v2421
    %2423 = vmatmul.f32.gmra.mxu0 %v1605
    %v2424 = vpop.f32.mrf.mxu0
    %v2425 = vadd.f32 %v2216, %v2424
    %2426 = vmatmul.f32.gmra.mxu0 %v1614
    %v2427 = vpop.f32.mrf.mxu0
    %v2428 = vadd.f32 %v2219, %v2427
    %2429 = vmatmul.f32.gmra.mxu0 %v1623
    %v2430 = vpop.f32.mrf.mxu0
    %v2431 = vadd.f32 %v2222, %v2430
    %2432 = vmatmul.f32.gmra.mxu0 %v1632
    %v2433 = vpop.f32.mrf.mxu0
    %v2434 = vadd.f32 %v2225, %v2433
    %2435 = vmatmul.f32.gmra.mxu0 %v1641
    %v2436 = vpop.f32.mrf.mxu0
    %v2437 = vadd.f32 %v2228, %v2436
    %2438 = vmatmul.f32.gmra.mxu0 %v1650
    %v2439 = vpop.f32.mrf.mxu0
    %v2440 = vadd.f32 %v2231, %v2439
    %2441 = vmatmul.f32.gmra.mxu0 %v1659
    %v2442 = vpop.f32.mrf.mxu0
    %v2443 = vadd.f32 %v2234, %v2442
    %2444 = vmatmul.f32.gmra.mxu0 %v1668
    %v2445 = vpop.f32.mrf.mxu0
    %v2446 = vadd.f32 %v2237, %v2445
    %2447 = vmatmul.f32.gmra.mxu0 %v1677
    %v2448 = vpop.f32.mrf.mxu0
    %v2449 = vadd.f32 %v2240, %v2448
    %2450 = vmatmul.f32.gmra.mxu0 %v1686
    %v2451 = vpop.f32.mrf.mxu0
    %v2452 = vadd.f32 %v2243, %v2451
    %2453 = vmatmul.f32.gmra.mxu0 %v1695
    %v2454 = vpop.f32.mrf.mxu0
    %v2455 = vadd.f32 %v2246, %v2454
    %2456 = vmatmul.f32.gmra.mxu0 %v1704
    %v2457 = vpop.f32.mrf.mxu0
    %v2458 = vadd.f32 %v2249, %v2457
    %2459 = vmatmul.f32.gmra.mxu0 %v1713
    %v2460 = vpop.f32.mrf.mxu0
    %v2461 = vadd.f32 %v2252, %v2460
    %2462 = vmatmul.f32.gmra.mxu0 %v1722
    %v2463 = vpop.f32.mrf.mxu0
    %v2464 = vadd.f32 %v2255, %v2463
    %2465 = vmatmul.f32.gmra.mxu0 %v1731
    %v2466 = vpop.f32.mrf.mxu0
    %v2467 = vadd.f32 %v2258, %v2466
    %2468 = vmatmul.f32.gmra.mxu0 %v1740
    %v2469 = vpop.f32.mrf.mxu0
    %v2470 = vadd.f32 %v2261, %v2469
    %2471 = vmatmul.f32.gmra.mxu0 %v1749
    %v2472 = vpop.f32.mrf.mxu0
    %v2473 = vadd.f32 %v2264, %v2472
    %2474 = vmatmul.f32.gmra.mxu0 %v1758
    %v2475 = vpop.f32.mrf.mxu0
    %v2476 = vadd.f32 %v2267, %v2475
    %2477 = vmatmul.f32.gmra.mxu0 %v1767
    %v2478 = vpop.f32.mrf.mxu0
    %v2479 = vadd.f32 %v2270, %v2478
    %2480 = vmatmul.f32.gmra.mxu0 %v1776
    %v2481 = vpop.f32.mrf.mxu0
    %v2482 = vadd.f32 %v2273, %v2481
    %2483 = vmatmul.f32.gmra.mxu0 %v1785
    %v2484 = vpop.f32.mrf.mxu0
    %v2485 = vadd.f32 %v2276, %v2484
    %2486 = vmatmul.f32.gmra.mxu0 %v1794
    %v2487 = vpop.f32.mrf.mxu0
    %v2488 = vadd.f32 %v2279, %v2487
    %2489 = vmatmul.f32.gmra.mxu0 %v1803
    %v2490 = vpop.f32.mrf.mxu0
    %v2491 = vadd.f32 %v2282, %v2490
    %2492 = vmatmul.f32.gmra.mxu0 %v1812
    %v2493 = vpop.f32.mrf.mxu0
    %v2494 = vadd.f32 %v2285, %v2493
    %2495 = vmatmul.f32.gmra.mxu0 %v1821
    %v2496 = vpop.f32.mrf.mxu0
    %v2497 = vadd.f32 %v2288, %v2496
    %2498 = vmatmul.f32.gmra.mxu0 %v1830
    %v2499 = vpop.f32.mrf.mxu0
    %v2500 = vadd.f32 %v2291, %v2499
    %2501 = vmatmul.f32.gmra.mxu0 %v1839
    %v2502 = vpop.f32.mrf.mxu0
    %v2503 = vadd.f32 %v2294, %v2502
    %2504 = vmatmul.f32.gmra.mxu0 %v1848
    %v2505 = vpop.f32.mrf.mxu0
    %v2506 = vadd.f32 %v2297, %v2505
    %2507 = vmatmul.f32.gmra.mxu0 %v1857
    %v2508 = vpop.f32.mrf.mxu0
    %v2509 = vadd.f32 %v2300, %v2508
    %2510 = vmatmul.f32.gmra.mxu0 %v1866
    %v2511 = vpop.f32.mrf.mxu0
    %v2512 = vadd.f32 %v2303, %v2511
    %2513 = vmatmul.f32.gmra.mxu0 %v1875
    %v2514 = vpop.f32.mrf.mxu0
    %v2515 = vadd.f32 %v2306, %v2514
    %2516 = vmatmul.f32.gmra.mxu0 %v1884
    %v2517 = vpop.f32.mrf.mxu0
    %v2518 = vadd.f32 %v2309, %v2517
    %2519 = vmatmul.f32.gmra.mxu0 %v1893
    %v2520 = vpop.f32.mrf.mxu0
    %v2521 = vadd.f32 %v2312, %v2520
    %2522 = vmatmul.f32.gmra.mxu0 %v1902
    %v2523 = vpop.f32.mrf.mxu0
    %v2524 = vadd.f32 %v2315, %v2523
    %2525 = vmatmul.f32.gmra.mxu0 %v1911
    %v2526 = vpop.f32.mrf.mxu0
    %v2527 = vadd.f32 %v2318, %v2526
    %2528 = vmatmul.f32.gmra.mxu0 %v1920
    %v2529 = vpop.f32.mrf.mxu0
    %v2530 = vadd.f32 %v2321, %v2529
    %2531 = vmatmul.f32.gmra.mxu0 %v1929
    %v2532 = vpop.f32.mrf.mxu0
    %v2533 = vadd.f32 %v2324, %v2532
    %2534 = vmatmul.f32.gmra.mxu0 %v1938
    %v2535 = vpop.f32.mrf.mxu0
    %v2536 = vadd.f32 %v2327, %v2535
    %2537 = vmatmul.f32.gmra.mxu0 %v1947
    %v2538 = vpop.f32.mrf.mxu0
    %v2539 = vadd.f32 %v2330, %v2538
    %2540 = vmatmul.f32.gmra.mxu0 %v1956
    %v2541 = vpop.f32.mrf.mxu0
    %v2542 = vadd.f32 %v2333, %v2541
    %2543 = vmatmul.f32.gmra.mxu0 %v1965
    %v2544 = vpop.f32.mrf.mxu0
    %v2545 = vadd.f32 %v2336, %v2544
    %2546 = vmatmul.f32.gmra.mxu0 %v1974
    %v2547 = vpop.f32.mrf.mxu0
    %v2548 = vadd.f32 %v2339, %v2547
    %2549 = vmatmul.f32.gmra.mxu0 %v1983
    %v2550 = vpop.f32.mrf.mxu0
    %v2551 = vadd.f32 %v2342, %v2550
    %2552 = vdwg.mxu0
    %2553 = vmatpush.msra.mxu0 %v2038
    %2554 = vmatpush.msra.mxu0 %v2037
    %2555 = vmatpush.msra.mxu0 %v2036
    %2556 = vmatpush.msra.mxu0 %v2035
    %2557 = vmatpush.msra.mxu0 %v2034
    %2558 = vmatpush.msra.mxu0 %v2033
    %2559 = vmatpush.msra.mxu0 %v2032
    %2560 = vmatpush.msra.mxu0 %v2031
    %2561 = vmatpush.msra.mxu0 %v2030
    %2562 = vmatpush.msra.mxu0 %v2029
    %2563 = vmatpush.msra.mxu0 %v2028
    %2564 = vmatpush.msra.mxu0 %v2027
    %2565 = vmatpush.msra.mxu0 %v2026
    %2566 = vmatpush.msra.mxu0 %v2025
    %2567 = vmatpush.msra.mxu0 %v2024
    %2568 = vmatpush.msra.mxu0 %v2023
    %2569 = vmatmul.f32.gmra.mxu0 %v1417
    %v2570 = vpop.f32.mrf.mxu0
    %v2571 = vadd.f32 %v2362, %v2570
    %2572 = vmatmul.f32.gmra.mxu0 %v1426
    %v2573 = vpop.f32.mrf.mxu0
    %v2574 = vadd.f32 %v2365, %v2573
    %2575 = vmatmul.f32.gmra.mxu0 %v1435
    %v2576 = vpop.f32.mrf.mxu0
    %v2577 = vadd.f32 %v2368, %v2576
    %2578 = vmatmul.f32.gmra.mxu0 %v1444
    %v2579 = vpop.f32.mrf.mxu0
    %v2580 = vadd.f32 %v2371, %v2579
    %2581 = vmatmul.f32.gmra.mxu0 %v1453
    %v2582 = vpop.f32.mrf.mxu0
    %v2583 = vadd.f32 %v2374, %v2582
    %2584 = vmatmul.f32.gmra.mxu0 %v1462
    %v2585 = vpop.f32.mrf.mxu0
    %v2586 = vadd.f32 %v2377, %v2585
    %2587 = vmatmul.f32.gmra.mxu0 %v1471
    %v2588 = vpop.f32.mrf.mxu0
    %v2589 = vadd.f32 %v2380, %v2588
    %2590 = vmatmul.f32.gmra.mxu0 %v1480
    %v2591 = vpop.f32.mrf.mxu0
    %v2592 = vadd.f32 %v2383, %v2591
    %2593 = vmatmul.f32.gmra.mxu0 %v1489
    %v2594 = vpop.f32.mrf.mxu0
    %v2595 = vadd.f32 %v2386, %v2594
    %2596 = vmatmul.f32.gmra.mxu0 %v1498
    %v2597 = vpop.f32.mrf.mxu0
    %v2598 = vadd.f32 %v2389, %v2597
    %2599 = vmatmul.f32.gmra.mxu0 %v1507
    %v2600 = vpop.f32.mrf.mxu0
    %v2601 = vadd.f32 %v2392, %v2600
    %2602 = vmatmul.f32.gmra.mxu0 %v1516
    %v2603 = vpop.f32.mrf.mxu0
    %v2604 = vadd.f32 %v2395, %v2603
    %2605 = vmatmul.f32.gmra.mxu0 %v1525
    %v2606 = vpop.f32.mrf.mxu0
    %v2607 = vadd.f32 %v2398, %v2606
    %2608 = vmatmul.f32.gmra.mxu0 %v1534
    %v2609 = vpop.f32.mrf.mxu0
    %v2610 = vadd.f32 %v2401, %v2609
    %2611 = vmatmul.f32.gmra.mxu0 %v1543
    %v2612 = vpop.f32.mrf.mxu0
    %v2613 = vadd.f32 %v2404, %v2612
    %2614 = vmatmul.f32.gmra.mxu0 %v1552
    %v2615 = vpop.f32.mrf.mxu0
    %v2616 = vadd.f32 %v2407, %v2615
    %2617 = vmatmul.f32.gmra.mxu0 %v1561
    %v2618 = vpop.f32.mrf.mxu0
    %v2619 = vadd.f32 %v2410, %v2618
    %2620 = vmatmul.f32.gmra.mxu0 %v1570
    %v2621 = vpop.f32.mrf.mxu0
    %v2622 = vadd.f32 %v2413, %v2621
    %2623 = vmatmul.f32.gmra.mxu0 %v1579
    %v2624 = vpop.f32.mrf.mxu0
    %v2625 = vadd.f32 %v2416, %v2624
    %2626 = vmatmul.f32.gmra.mxu0 %v1588
    %v2627 = vpop.f32.mrf.mxu0
    %v2628 = vadd.f32 %v2419, %v2627
    %2629 = vmatmul.f32.gmra.mxu0 %v1597
    %v2630 = vpop.f32.mrf.mxu0
    %v2631 = vadd.f32 %v2422, %v2630
    %2632 = vmatmul.f32.gmra.mxu0 %v1606
    %v2633 = vpop.f32.mrf.mxu0
    %v2634 = vadd.f32 %v2425, %v2633
    %2635 = vmatmul.f32.gmra.mxu0 %v1615
    %v2636 = vpop.f32.mrf.mxu0
    %v2637 = vadd.f32 %v2428, %v2636
    %2638 = vmatmul.f32.gmra.mxu0 %v1624
    %v2639 = vpop.f32.mrf.mxu0
    %v2640 = vadd.f32 %v2431, %v2639
    %2641 = vmatmul.f32.gmra.mxu0 %v1633
    %v2642 = vpop.f32.mrf.mxu0
    %v2643 = vadd.f32 %v2434, %v2642
    %2644 = vmatmul.f32.gmra.mxu0 %v1642
    %v2645 = vpop.f32.mrf.mxu0
    %v2646 = vadd.f32 %v2437, %v2645
    %2647 = vmatmul.f32.gmra.mxu0 %v1651
    %v2648 = vpop.f32.mrf.mxu0
    %v2649 = vadd.f32 %v2440, %v2648
    %2650 = vmatmul.f32.gmra.mxu0 %v1660
    %v2651 = vpop.f32.mrf.mxu0
    %v2652 = vadd.f32 %v2443, %v2651
    %2653 = vmatmul.f32.gmra.mxu0 %v1669
    %v2654 = vpop.f32.mrf.mxu0
    %v2655 = vadd.f32 %v2446, %v2654
    %2656 = vmatmul.f32.gmra.mxu0 %v1678
    %v2657 = vpop.f32.mrf.mxu0
    %v2658 = vadd.f32 %v2449, %v2657
    %2659 = vmatmul.f32.gmra.mxu0 %v1687
    %v2660 = vpop.f32.mrf.mxu0
    %v2661 = vadd.f32 %v2452, %v2660
    %2662 = vmatmul.f32.gmra.mxu0 %v1696
    %v2663 = vpop.f32.mrf.mxu0
    %v2664 = vadd.f32 %v2455, %v2663
    %2665 = vmatmul.f32.gmra.mxu0 %v1705
    %v2666 = vpop.f32.mrf.mxu0
    %v2667 = vadd.f32 %v2458, %v2666
    %2668 = vmatmul.f32.gmra.mxu0 %v1714
    %v2669 = vpop.f32.mrf.mxu0
    %v2670 = vadd.f32 %v2461, %v2669
    %2671 = vmatmul.f32.gmra.mxu0 %v1723
    %v2672 = vpop.f32.mrf.mxu0
    %v2673 = vadd.f32 %v2464, %v2672
    %2674 = vmatmul.f32.gmra.mxu0 %v1732
    %v2675 = vpop.f32.mrf.mxu0
    %v2676 = vadd.f32 %v2467, %v2675
    %2677 = vmatmul.f32.gmra.mxu0 %v1741
    %v2678 = vpop.f32.mrf.mxu0
    %v2679 = vadd.f32 %v2470, %v2678
    %2680 = vmatmul.f32.gmra.mxu0 %v1750
    %v2681 = vpop.f32.mrf.mxu0
    %v2682 = vadd.f32 %v2473, %v2681
    %2683 = vmatmul.f32.gmra.mxu0 %v1759
    %v2684 = vpop.f32.mrf.mxu0
    %v2685 = vadd.f32 %v2476, %v2684
    %2686 = vmatmul.f32.gmra.mxu0 %v1768
    %v2687 = vpop.f32.mrf.mxu0
    %v2688 = vadd.f32 %v2479, %v2687
    %2689 = vmatmul.f32.gmra.mxu0 %v1777
    %v2690 = vpop.f32.mrf.mxu0
    %v2691 = vadd.f32 %v2482, %v2690
    %2692 = vmatmul.f32.gmra.mxu0 %v1786
    %v2693 = vpop.f32.mrf.mxu0
    %v2694 = vadd.f32 %v2485, %v2693
    %2695 = vmatmul.f32.gmra.mxu0 %v1795
    %v2696 = vpop.f32.mrf.mxu0
    %v2697 = vadd.f32 %v2488, %v2696
    %2698 = vmatmul.f32.gmra.mxu0 %v1804
    %v2699 = vpop.f32.mrf.mxu0
    %v2700 = vadd.f32 %v2491, %v2699
    %2701 = vmatmul.f32.gmra.mxu0 %v1813
    %v2702 = vpop.f32.mrf.mxu0
    %v2703 = vadd.f32 %v2494, %v2702
    %2704 = vmatmul.f32.gmra.mxu0 %v1822
    %v2705 = vpop.f32.mrf.mxu0
    %v2706 = vadd.f32 %v2497, %v2705
    %2707 = vmatmul.f32.gmra.mxu0 %v1831
    %v2708 = vpop.f32.mrf.mxu0
    %v2709 = vadd.f32 %v2500, %v2708
    %2710 = vmatmul.f32.gmra.mxu0 %v1840
    %v2711 = vpop.f32.mrf.mxu0
    %v2712 = vadd.f32 %v2503, %v2711
    %2713 = vmatmul.f32.gmra.mxu0 %v1849
    %v2714 = vpop.f32.mrf.mxu0
    %v2715 = vadd.f32 %v2506, %v2714
    %2716 = vmatmul.f32.gmra.mxu0 %v1858
    %v2717 = vpop.f32.mrf.mxu0
    %v2718 = vadd.f32 %v2509, %v2717
    %2719 = vmatmul.f32.gmra.mxu0 %v1867
    %v2720 = vpop.f32.mrf.mxu0
    %v2721 = vadd.f32 %v2512, %v2720
    %2722 = vmatmul.f32.gmra.mxu0 %v1876
    %v2723 = vpop.f32.mrf.mxu0
    %v2724 = vadd.f32 %v2515, %v2723
    %2725 = vmatmul.f32.gmra.mxu0 %v1885
    %v2726 = vpop.f32.mrf.mxu0
    %v2727 = vadd.f32 %v2518, %v2726
    %2728 = vmatmul.f32.gmra.mxu0 %v1894
    %v2729 = vpop.f32.mrf.mxu0
    %v2730 = vadd.f32 %v2521, %v2729
    %2731 = vmatmul.f32.gmra.mxu0 %v1903
    %v2732 = vpop.f32.mrf.mxu0
    %v2733 = vadd.f32 %v2524, %v2732
    %2734 = vmatmul.f32.gmra.mxu0 %v1912
    %v2735 = vpop.f32.mrf.mxu0
    %v2736 = vadd.f32 %v2527, %v2735
    %2737 = vmatmul.f32.gmra.mxu0 %v1921
    %v2738 = vpop.f32.mrf.mxu0
    %v2739 = vadd.f32 %v2530, %v2738
    %2740 = vmatmul.f32.gmra.mxu0 %v1930
    %v2741 = vpop.f32.mrf.mxu0
    %v2742 = vadd.f32 %v2533, %v2741
    %2743 = vmatmul.f32.gmra.mxu0 %v1939
    %v2744 = vpop.f32.mrf.mxu0
    %v2745 = vadd.f32 %v2536, %v2744
    %2746 = vmatmul.f32.gmra.mxu0 %v1948
    %v2747 = vpop.f32.mrf.mxu0
    %v2748 = vadd.f32 %v2539, %v2747
    %2749 = vmatmul.f32.gmra.mxu0 %v1957
    %v2750 = vpop.f32.mrf.mxu0
    %v2751 = vadd.f32 %v2542, %v2750
    %2752 = vmatmul.f32.gmra.mxu0 %v1966
    %v2753 = vpop.f32.mrf.mxu0
    %v2754 = vadd.f32 %v2545, %v2753
    %2755 = vmatmul.f32.gmra.mxu0 %v1975
    %v2756 = vpop.f32.mrf.mxu0
    %v2757 = vadd.f32 %v2548, %v2756
    %2758 = vmatmul.f32.gmra.mxu0 %v1984
    %v2759 = vpop.f32.mrf.mxu0
    %v2760 = vadd.f32 %v2551, %v2759
    %2761 = vdwg.mxu0
    %2762 = vmatpush.msra.mxu0 %v2054
    %2763 = vmatpush.msra.mxu0 %v2053
    %2764 = vmatpush.msra.mxu0 %v2052
    %2765 = vmatpush.msra.mxu0 %v2051
    %2766 = vmatpush.msra.mxu0 %v2050
    %2767 = vmatpush.msra.mxu0 %v2049
    %2768 = vmatpush.msra.mxu0 %v2048
    %2769 = vmatpush.msra.mxu0 %v2047
    %2770 = vmatpush.msra.mxu0 %v2046
    %2771 = vmatpush.msra.mxu0 %v2045
    %2772 = vmatpush.msra.mxu0 %v2044
    %2773 = vmatpush.msra.mxu0 %v2043
    %2774 = vmatpush.msra.mxu0 %v2042
    %2775 = vmatpush.msra.mxu0 %v2041
    %2776 = vmatpush.msra.mxu0 %v2040
    %2777 = vmatpush.msra.mxu0 %v2039
    %2778 = vmatmul.f32.gmra.mxu0 %v1418
    %v2779 = vpop.f32.mrf.mxu0
    %v2780 = vadd.f32 %v2571, %v2779
    %2781 = vmatmul.f32.gmra.mxu0 %v1427
    %v2782 = vpop.f32.mrf.mxu0
    %v2783 = vadd.f32 %v2574, %v2782
    %2784 = vmatmul.f32.gmra.mxu0 %v1436
    %v2785 = vpop.f32.mrf.mxu0
    %v2786 = vadd.f32 %v2577, %v2785
    %2787 = vmatmul.f32.gmra.mxu0 %v1445
    %v2788 = vpop.f32.mrf.mxu0
    %v2789 = vadd.f32 %v2580, %v2788
    %2790 = vmatmul.f32.gmra.mxu0 %v1454
    %v2791 = vpop.f32.mrf.mxu0
    %v2792 = vadd.f32 %v2583, %v2791
    %2793 = vmatmul.f32.gmra.mxu0 %v1463
    %v2794 = vpop.f32.mrf.mxu0
    %v2795 = vadd.f32 %v2586, %v2794
    %2796 = vmatmul.f32.gmra.mxu0 %v1472
    %v2797 = vpop.f32.mrf.mxu0
    %v2798 = vadd.f32 %v2589, %v2797
    %2799 = vmatmul.f32.gmra.mxu0 %v1481
    %v2800 = vpop.f32.mrf.mxu0
    %v2801 = vadd.f32 %v2592, %v2800
    %2802 = vmatmul.f32.gmra.mxu0 %v1490
    %v2803 = vpop.f32.mrf.mxu0
    %v2804 = vadd.f32 %v2595, %v2803
    %2805 = vmatmul.f32.gmra.mxu0 %v1499
    %v2806 = vpop.f32.mrf.mxu0
    %v2807 = vadd.f32 %v2598, %v2806
    %2808 = vmatmul.f32.gmra.mxu0 %v1508
    %v2809 = vpop.f32.mrf.mxu0
    %v2810 = vadd.f32 %v2601, %v2809
    %2811 = vmatmul.f32.gmra.mxu0 %v1517
    %v2812 = vpop.f32.mrf.mxu0
    %v2813 = vadd.f32 %v2604, %v2812
    %2814 = vmatmul.f32.gmra.mxu0 %v1526
    %v2815 = vpop.f32.mrf.mxu0
    %v2816 = vadd.f32 %v2607, %v2815
    %2817 = vmatmul.f32.gmra.mxu0 %v1535
    %v2818 = vpop.f32.mrf.mxu0
    %v2819 = vadd.f32 %v2610, %v2818
    %2820 = vmatmul.f32.gmra.mxu0 %v1544
    %v2821 = vpop.f32.mrf.mxu0
    %v2822 = vadd.f32 %v2613, %v2821
    %2823 = vmatmul.f32.gmra.mxu0 %v1553
    %v2824 = vpop.f32.mrf.mxu0
    %v2825 = vadd.f32 %v2616, %v2824
    %2826 = vmatmul.f32.gmra.mxu0 %v1562
    %v2827 = vpop.f32.mrf.mxu0
    %v2828 = vadd.f32 %v2619, %v2827
    %2829 = vmatmul.f32.gmra.mxu0 %v1571
    %v2830 = vpop.f32.mrf.mxu0
    %v2831 = vadd.f32 %v2622, %v2830
    %2832 = vmatmul.f32.gmra.mxu0 %v1580
    %v2833 = vpop.f32.mrf.mxu0
    %v2834 = vadd.f32 %v2625, %v2833
    %2835 = vmatmul.f32.gmra.mxu0 %v1589
    %v2836 = vpop.f32.mrf.mxu0
    %v2837 = vadd.f32 %v2628, %v2836
    %2838 = vmatmul.f32.gmra.mxu0 %v1598
    %v2839 = vpop.f32.mrf.mxu0
    %v2840 = vadd.f32 %v2631, %v2839
    %2841 = vmatmul.f32.gmra.mxu0 %v1607
    %v2842 = vpop.f32.mrf.mxu0
    %v2843 = vadd.f32 %v2634, %v2842
    %2844 = vmatmul.f32.gmra.mxu0 %v1616
    %v2845 = vpop.f32.mrf.mxu0
    %v2846 = vadd.f32 %v2637, %v2845
    %2847 = vmatmul.f32.gmra.mxu0 %v1625
    %v2848 = vpop.f32.mrf.mxu0
    %v2849 = vadd.f32 %v2640, %v2848
    %2850 = vmatmul.f32.gmra.mxu0 %v1634
    %v2851 = vpop.f32.mrf.mxu0
    %v2852 = vadd.f32 %v2643, %v2851
    %2853 = vmatmul.f32.gmra.mxu0 %v1643
    %v2854 = vpop.f32.mrf.mxu0
    %v2855 = vadd.f32 %v2646, %v2854
    %2856 = vmatmul.f32.gmra.mxu0 %v1652
    %v2857 = vpop.f32.mrf.mxu0
    %v2858 = vadd.f32 %v2649, %v2857
    %2859 = vmatmul.f32.gmra.mxu0 %v1661
    %v2860 = vpop.f32.mrf.mxu0
    %v2861 = vadd.f32 %v2652, %v2860
    %2862 = vmatmul.f32.gmra.mxu0 %v1670
    %v2863 = vpop.f32.mrf.mxu0
    %v2864 = vadd.f32 %v2655, %v2863
    %2865 = vmatmul.f32.gmra.mxu0 %v1679
    %v2866 = vpop.f32.mrf.mxu0
    %v2867 = vadd.f32 %v2658, %v2866
    %2868 = vmatmul.f32.gmra.mxu0 %v1688
    %v2869 = vpop.f32.mrf.mxu0
    %v2870 = vadd.f32 %v2661, %v2869
    %2871 = vmatmul.f32.gmra.mxu0 %v1697
    %v2872 = vpop.f32.mrf.mxu0
    %v2873 = vadd.f32 %v2664, %v2872
    %2874 = vmatmul.f32.gmra.mxu0 %v1706
    %v2875 = vpop.f32.mrf.mxu0
    %v2876 = vadd.f32 %v2667, %v2875
    %2877 = vmatmul.f32.gmra.mxu0 %v1715
    %v2878 = vpop.f32.mrf.mxu0
    %v2879 = vadd.f32 %v2670, %v2878
    %2880 = vmatmul.f32.gmra.mxu0 %v1724
    %v2881 = vpop.f32.mrf.mxu0
    %v2882 = vadd.f32 %v2673, %v2881
    %2883 = vmatmul.f32.gmra.mxu0 %v1733
    %v2884 = vpop.f32.mrf.mxu0
    %v2885 = vadd.f32 %v2676, %v2884
    %2886 = vmatmul.f32.gmra.mxu0 %v1742
    %v2887 = vpop.f32.mrf.mxu0
    %v2888 = vadd.f32 %v2679, %v2887
    %2889 = vmatmul.f32.gmra.mxu0 %v1751
    %v2890 = vpop.f32.mrf.mxu0
    %v2891 = vadd.f32 %v2682, %v2890
    %2892 = vmatmul.f32.gmra.mxu0 %v1760
    %v2893 = vpop.f32.mrf.mxu0
    %v2894 = vadd.f32 %v2685, %v2893
    %2895 = vmatmul.f32.gmra.mxu0 %v1769
    %v2896 = vpop.f32.mrf.mxu0
    %v2897 = vadd.f32 %v2688, %v2896
    %2898 = vmatmul.f32.gmra.mxu0 %v1778
    %v2899 = vpop.f32.mrf.mxu0
    %v2900 = vadd.f32 %v2691, %v2899
    %2901 = vmatmul.f32.gmra.mxu0 %v1787
    %v2902 = vpop.f32.mrf.mxu0
    %v2903 = vadd.f32 %v2694, %v2902
    %2904 = vmatmul.f32.gmra.mxu0 %v1796
    %v2905 = vpop.f32.mrf.mxu0
    %v2906 = vadd.f32 %v2697, %v2905
    %2907 = vmatmul.f32.gmra.mxu0 %v1805
    %v2908 = vpop.f32.mrf.mxu0
    %v2909 = vadd.f32 %v2700, %v2908
    %2910 = vmatmul.f32.gmra.mxu0 %v1814
    %v2911 = vpop.f32.mrf.mxu0
    %v2912 = vadd.f32 %v2703, %v2911
    %2913 = vmatmul.f32.gmra.mxu0 %v1823
    %v2914 = vpop.f32.mrf.mxu0
    %v2915 = vadd.f32 %v2706, %v2914
    %2916 = vmatmul.f32.gmra.mxu0 %v1832
    %v2917 = vpop.f32.mrf.mxu0
    %v2918 = vadd.f32 %v2709, %v2917
    %2919 = vmatmul.f32.gmra.mxu0 %v1841
    %v2920 = vpop.f32.mrf.mxu0
    %v2921 = vadd.f32 %v2712, %v2920
    %2922 = vmatmul.f32.gmra.mxu0 %v1850
    %v2923 = vpop.f32.mrf.mxu0
    %v2924 = vadd.f32 %v2715, %v2923
    %2925 = vmatmul.f32.gmra.mxu0 %v1859
    %v2926 = vpop.f32.mrf.mxu0
    %v2927 = vadd.f32 %v2718, %v2926
    %2928 = vmatmul.f32.gmra.mxu0 %v1868
    %v2929 = vpop.f32.mrf.mxu0
    %v2930 = vadd.f32 %v2721, %v2929
    %2931 = vmatmul.f32.gmra.mxu0 %v1877
    %v2932 = vpop.f32.mrf.mxu0
    %v2933 = vadd.f32 %v2724, %v2932
    %2934 = vmatmul.f32.gmra.mxu0 %v1886
    %v2935 = vpop.f32.mrf.mxu0
    %v2936 = vadd.f32 %v2727, %v2935
    %2937 = vmatmul.f32.gmra.mxu0 %v1895
    %v2938 = vpop.f32.mrf.mxu0
    %v2939 = vadd.f32 %v2730, %v2938
    %2940 = vmatmul.f32.gmra.mxu0 %v1904
    %v2941 = vpop.f32.mrf.mxu0
    %v2942 = vadd.f32 %v2733, %v2941
    %2943 = vmatmul.f32.gmra.mxu0 %v1913
    %v2944 = vpop.f32.mrf.mxu0
    %v2945 = vadd.f32 %v2736, %v2944
    %2946 = vmatmul.f32.gmra.mxu0 %v1922
    %v2947 = vpop.f32.mrf.mxu0
    %v2948 = vadd.f32 %v2739, %v2947
    %2949 = vmatmul.f32.gmra.mxu0 %v1931
    %v2950 = vpop.f32.mrf.mxu0
    %v2951 = vadd.f32 %v2742, %v2950
    %2952 = vmatmul.f32.gmra.mxu0 %v1940
    %v2953 = vpop.f32.mrf.mxu0
    %v2954 = vadd.f32 %v2745, %v2953
    %2955 = vmatmul.f32.gmra.mxu0 %v1949
    %v2956 = vpop.f32.mrf.mxu0
    %v2957 = vadd.f32 %v2748, %v2956
    %2958 = vmatmul.f32.gmra.mxu0 %v1958
    %v2959 = vpop.f32.mrf.mxu0
    %v2960 = vadd.f32 %v2751, %v2959
    %2961 = vmatmul.f32.gmra.mxu0 %v1967
    %v2962 = vpop.f32.mrf.mxu0
    %v2963 = vadd.f32 %v2754, %v2962
    %2964 = vmatmul.f32.gmra.mxu0 %v1976
    %v2965 = vpop.f32.mrf.mxu0
    %v2966 = vadd.f32 %v2757, %v2965
    %2967 = vmatmul.f32.gmra.mxu0 %v1985
    %v2968 = vpop.f32.mrf.mxu0
    %v2969 = vadd.f32 %v2760, %v2968
    %2970 = vdwg.mxu0
    %2971 = vmatpush.msra.mxu0 %v2070
    %2972 = vmatpush.msra.mxu0 %v2069
    %2973 = vmatpush.msra.mxu0 %v2068
    %2974 = vmatpush.msra.mxu0 %v2067
    %2975 = vmatpush.msra.mxu0 %v2066
    %2976 = vmatpush.msra.mxu0 %v2065
    %2977 = vmatpush.msra.mxu0 %v2064
    %2978 = vmatpush.msra.mxu0 %v2063
    %2979 = vmatpush.msra.mxu0 %v2062
    %2980 = vmatpush.msra.mxu0 %v2061
    %2981 = vmatpush.msra.mxu0 %v2060
    %2982 = vmatpush.msra.mxu0 %v2059
    %2983 = vmatpush.msra.mxu0 %v2058
    %2984 = vmatpush.msra.mxu0 %v2057
    %2985 = vmatpush.msra.mxu0 %v2056
    %2986 = vmatpush.msra.mxu0 %v2055
    %2987 = vmatmul.f32.gmra.mxu0 %v1419
    %v2988 = vpop.f32.mrf.mxu0
    %v2989 = vadd.f32 %v2780, %v2988
    %2990 = vmatmul.f32.gmra.mxu0 %v1428
    %v2991 = vpop.f32.mrf.mxu0
    %v2992 = vadd.f32 %v2783, %v2991
    %2993 = vmatmul.f32.gmra.mxu0 %v1437
    %v2994 = vpop.f32.mrf.mxu0
    %v2995 = vadd.f32 %v2786, %v2994
    %2996 = vmatmul.f32.gmra.mxu0 %v1446
    %v2997 = vpop.f32.mrf.mxu0
    %v2998 = vadd.f32 %v2789, %v2997
    %2999 = vmatmul.f32.gmra.mxu0 %v1455
    %v3000 = vpop.f32.mrf.mxu0
    %v3001 = vadd.f32 %v2792, %v3000
    %3002 = vmatmul.f32.gmra.mxu0 %v1464
    %v3003 = vpop.f32.mrf.mxu0
    %v3004 = vadd.f32 %v2795, %v3003
    %3005 = vmatmul.f32.gmra.mxu0 %v1473
    %v3006 = vpop.f32.mrf.mxu0
    %v3007 = vadd.f32 %v2798, %v3006
    %3008 = vmatmul.f32.gmra.mxu0 %v1482
    %v3009 = vpop.f32.mrf.mxu0
    %v3010 = vadd.f32 %v2801, %v3009
    %3011 = vmatmul.f32.gmra.mxu0 %v1491
    %v3012 = vpop.f32.mrf.mxu0
    %v3013 = vadd.f32 %v2804, %v3012
    %3014 = vmatmul.f32.gmra.mxu0 %v1500
    %v3015 = vpop.f32.mrf.mxu0
    %v3016 = vadd.f32 %v2807, %v3015
    %3017 = vmatmul.f32.gmra.mxu0 %v1509
    %v3018 = vpop.f32.mrf.mxu0
    %v3019 = vadd.f32 %v2810, %v3018
    %3020 = vmatmul.f32.gmra.mxu0 %v1518
    %v3021 = vpop.f32.mrf.mxu0
    %v3022 = vadd.f32 %v2813, %v3021
    %3023 = vmatmul.f32.gmra.mxu0 %v1527
    %v3024 = vpop.f32.mrf.mxu0
    %v3025 = vadd.f32 %v2816, %v3024
    %3026 = vmatmul.f32.gmra.mxu0 %v1536
    %v3027 = vpop.f32.mrf.mxu0
    %v3028 = vadd.f32 %v2819, %v3027
    %3029 = vmatmul.f32.gmra.mxu0 %v1545
    %v3030 = vpop.f32.mrf.mxu0
    %v3031 = vadd.f32 %v2822, %v3030
    %3032 = vmatmul.f32.gmra.mxu0 %v1554
    %v3033 = vpop.f32.mrf.mxu0
    %v3034 = vadd.f32 %v2825, %v3033
    %3035 = vmatmul.f32.gmra.mxu0 %v1563
    %v3036 = vpop.f32.mrf.mxu0
    %v3037 = vadd.f32 %v2828, %v3036
    %3038 = vmatmul.f32.gmra.mxu0 %v1572
    %v3039 = vpop.f32.mrf.mxu0
    %v3040 = vadd.f32 %v2831, %v3039
    %3041 = vmatmul.f32.gmra.mxu0 %v1581
    %v3042 = vpop.f32.mrf.mxu0
    %v3043 = vadd.f32 %v2834, %v3042
    %3044 = vmatmul.f32.gmra.mxu0 %v1590
    %v3045 = vpop.f32.mrf.mxu0
    %v3046 = vadd.f32 %v2837, %v3045
    %3047 = vmatmul.f32.gmra.mxu0 %v1599
    %v3048 = vpop.f32.mrf.mxu0
    %v3049 = vadd.f32 %v2840, %v3048
    %3050 = vmatmul.f32.gmra.mxu0 %v1608
    %v3051 = vpop.f32.mrf.mxu0
    %v3052 = vadd.f32 %v2843, %v3051
    %3053 = vmatmul.f32.gmra.mxu0 %v1617
    %v3054 = vpop.f32.mrf.mxu0
    %v3055 = vadd.f32 %v2846, %v3054
    %3056 = vmatmul.f32.gmra.mxu0 %v1626
    %v3057 = vpop.f32.mrf.mxu0
    %v3058 = vadd.f32 %v2849, %v3057
    %3059 = vmatmul.f32.gmra.mxu0 %v1635
    %v3060 = vpop.f32.mrf.mxu0
    %v3061 = vadd.f32 %v2852, %v3060
    %3062 = vmatmul.f32.gmra.mxu0 %v1644
    %v3063 = vpop.f32.mrf.mxu0
    %v3064 = vadd.f32 %v2855, %v3063
    %3065 = vmatmul.f32.gmra.mxu0 %v1653
    %v3066 = vpop.f32.mrf.mxu0
    %v3067 = vadd.f32 %v2858, %v3066
    %3068 = vmatmul.f32.gmra.mxu0 %v1662
    %v3069 = vpop.f32.mrf.mxu0
    %v3070 = vadd.f32 %v2861, %v3069
    %3071 = vmatmul.f32.gmra.mxu0 %v1671
    %v3072 = vpop.f32.mrf.mxu0
    %v3073 = vadd.f32 %v2864, %v3072
    %3074 = vmatmul.f32.gmra.mxu0 %v1680
    %v3075 = vpop.f32.mrf.mxu0
    %v3076 = vadd.f32 %v2867, %v3075
    %3077 = vmatmul.f32.gmra.mxu0 %v1689
    %v3078 = vpop.f32.mrf.mxu0
    %v3079 = vadd.f32 %v2870, %v3078
    %3080 = vmatmul.f32.gmra.mxu0 %v1698
    %v3081 = vpop.f32.mrf.mxu0
    %v3082 = vadd.f32 %v2873, %v3081
    %3083 = vmatmul.f32.gmra.mxu0 %v1707
    %v3084 = vpop.f32.mrf.mxu0
    %v3085 = vadd.f32 %v2876, %v3084
    %3086 = vmatmul.f32.gmra.mxu0 %v1716
    %v3087 = vpop.f32.mrf.mxu0
    %v3088 = vadd.f32 %v2879, %v3087
    %3089 = vmatmul.f32.gmra.mxu0 %v1725
    %v3090 = vpop.f32.mrf.mxu0
    %v3091 = vadd.f32 %v2882, %v3090
    %3092 = vmatmul.f32.gmra.mxu0 %v1734
    %v3093 = vpop.f32.mrf.mxu0
    %v3094 = vadd.f32 %v2885, %v3093
    %3095 = vmatmul.f32.gmra.mxu0 %v1743
    %v3096 = vpop.f32.mrf.mxu0
    %v3097 = vadd.f32 %v2888, %v3096
    %3098 = vmatmul.f32.gmra.mxu0 %v1752
    %v3099 = vpop.f32.mrf.mxu0
    %v3100 = vadd.f32 %v2891, %v3099
    %3101 = vmatmul.f32.gmra.mxu0 %v1761
    %v3102 = vpop.f32.mrf.mxu0
    %v3103 = vadd.f32 %v2894, %v3102
    %3104 = vmatmul.f32.gmra.mxu0 %v1770
    %v3105 = vpop.f32.mrf.mxu0
    %v3106 = vadd.f32 %v2897, %v3105
    %3107 = vmatmul.f32.gmra.mxu0 %v1779
    %v3108 = vpop.f32.mrf.mxu0
    %v3109 = vadd.f32 %v2900, %v3108
    %3110 = vmatmul.f32.gmra.mxu0 %v1788
    %v3111 = vpop.f32.mrf.mxu0
    %v3112 = vadd.f32 %v2903, %v3111
    %3113 = vmatmul.f32.gmra.mxu0 %v1797
    %v3114 = vpop.f32.mrf.mxu0
    %v3115 = vadd.f32 %v2906, %v3114
    %3116 = vmatmul.f32.gmra.mxu0 %v1806
    %v3117 = vpop.f32.mrf.mxu0
    %v3118 = vadd.f32 %v2909, %v3117
    %3119 = vmatmul.f32.gmra.mxu0 %v1815
    %v3120 = vpop.f32.mrf.mxu0
    %v3121 = vadd.f32 %v2912, %v3120
    %3122 = vmatmul.f32.gmra.mxu0 %v1824
    %v3123 = vpop.f32.mrf.mxu0
    %v3124 = vadd.f32 %v2915, %v3123
    %3125 = vmatmul.f32.gmra.mxu0 %v1833
    %v3126 = vpop.f32.mrf.mxu0
    %v3127 = vadd.f32 %v2918, %v3126
    %3128 = vmatmul.f32.gmra.mxu0 %v1842
    %v3129 = vpop.f32.mrf.mxu0
    %v3130 = vadd.f32 %v2921, %v3129
    %3131 = vmatmul.f32.gmra.mxu0 %v1851
    %v3132 = vpop.f32.mrf.mxu0
    %v3133 = vadd.f32 %v2924, %v3132
    %3134 = vmatmul.f32.gmra.mxu0 %v1860
    %v3135 = vpop.f32.mrf.mxu0
    %v3136 = vadd.f32 %v2927, %v3135
    %3137 = vmatmul.f32.gmra.mxu0 %v1869
    %v3138 = vpop.f32.mrf.mxu0
    %v3139 = vadd.f32 %v2930, %v3138
    %3140 = vmatmul.f32.gmra.mxu0 %v1878
    %v3141 = vpop.f32.mrf.mxu0
    %v3142 = vadd.f32 %v2933, %v3141
    %3143 = vmatmul.f32.gmra.mxu0 %v1887
    %v3144 = vpop.f32.mrf.mxu0
    %v3145 = vadd.f32 %v2936, %v3144
    %3146 = vmatmul.f32.gmra.mxu0 %v1896
    %v3147 = vpop.f32.mrf.mxu0
    %v3148 = vadd.f32 %v2939, %v3147
    %3149 = vmatmul.f32.gmra.mxu0 %v1905
    %v3150 = vpop.f32.mrf.mxu0
    %v3151 = vadd.f32 %v2942, %v3150
    %3152 = vmatmul.f32.gmra.mxu0 %v1914
    %v3153 = vpop.f32.mrf.mxu0
    %v3154 = vadd.f32 %v2945, %v3153
    %3155 = vmatmul.f32.gmra.mxu0 %v1923
    %v3156 = vpop.f32.mrf.mxu0
    %v3157 = vadd.f32 %v2948, %v3156
    %3158 = vmatmul.f32.gmra.mxu0 %v1932
    %v3159 = vpop.f32.mrf.mxu0
    %v3160 = vadd.f32 %v2951, %v3159
    %3161 = vmatmul.f32.gmra.mxu0 %v1941
    %v3162 = vpop.f32.mrf.mxu0
    %v3163 = vadd.f32 %v2954, %v3162
    %3164 = vmatmul.f32.gmra.mxu0 %v1950
    %v3165 = vpop.f32.mrf.mxu0
    %v3166 = vadd.f32 %v2957, %v3165
    %3167 = vmatmul.f32.gmra.mxu0 %v1959
    %v3168 = vpop.f32.mrf.mxu0
    %v3169 = vadd.f32 %v2960, %v3168
    %3170 = vmatmul.f32.gmra.mxu0 %v1968
    %v3171 = vpop.f32.mrf.mxu0
    %v3172 = vadd.f32 %v2963, %v3171
    %3173 = vmatmul.f32.gmra.mxu0 %v1977
    %v3174 = vpop.f32.mrf.mxu0
    %v3175 = vadd.f32 %v2966, %v3174
    %3176 = vmatmul.f32.gmra.mxu0 %v1986
    %v3177 = vpop.f32.mrf.mxu0
    %v3178 = vadd.f32 %v2969, %v3177
    %3179 = vdwg.mxu0
    %3180 = vmatpush.msra.mxu0 %v2086
    %3181 = vmatpush.msra.mxu0 %v2085
    %3182 = vmatpush.msra.mxu0 %v2084
    %3183 = vmatpush.msra.mxu0 %v2083
    %3184 = vmatpush.msra.mxu0 %v2082
    %3185 = vmatpush.msra.mxu0 %v2081
    %3186 = vmatpush.msra.mxu0 %v2080
    %3187 = vmatpush.msra.mxu0 %v2079
    %3188 = vmatpush.msra.mxu0 %v2078
    %3189 = vmatpush.msra.mxu0 %v2077
    %3190 = vmatpush.msra.mxu0 %v2076
    %3191 = vmatpush.msra.mxu0 %v2075
    %3192 = vmatpush.msra.mxu0 %v2074
    %3193 = vmatpush.msra.mxu0 %v2073
    %3194 = vmatpush.msra.mxu0 %v2072
    %3195 = vmatpush.msra.mxu0 %v2071
    %3196 = vmatmul.f32.gmra.mxu0 %v1420
    %v3197 = vpop.f32.mrf.mxu0
    %v3198 = vadd.f32 %v2989, %v3197
    %3199 = vmatmul.f32.gmra.mxu0 %v1429
    %v3200 = vpop.f32.mrf.mxu0
    %v3201 = vadd.f32 %v2992, %v3200
    %3202 = vmatmul.f32.gmra.mxu0 %v1438
    %v3203 = vpop.f32.mrf.mxu0
    %v3204 = vadd.f32 %v2995, %v3203
    %3205 = vmatmul.f32.gmra.mxu0 %v1447
    %v3206 = vpop.f32.mrf.mxu0
    %v3207 = vadd.f32 %v2998, %v3206
    %3208 = vmatmul.f32.gmra.mxu0 %v1456
    %v3209 = vpop.f32.mrf.mxu0
    %v3210 = vadd.f32 %v3001, %v3209
    %3211 = vmatmul.f32.gmra.mxu0 %v1465
    %v3212 = vpop.f32.mrf.mxu0
    %v3213 = vadd.f32 %v3004, %v3212
    %3214 = vmatmul.f32.gmra.mxu0 %v1474
    %v3215 = vpop.f32.mrf.mxu0
    %v3216 = vadd.f32 %v3007, %v3215
    %3217 = vmatmul.f32.gmra.mxu0 %v1483
    %v3218 = vpop.f32.mrf.mxu0
    %v3219 = vadd.f32 %v3010, %v3218
    %3220 = vmatmul.f32.gmra.mxu0 %v1492
    %v3221 = vpop.f32.mrf.mxu0
    %v3222 = vadd.f32 %v3013, %v3221
    %3223 = vmatmul.f32.gmra.mxu0 %v1501
    %v3224 = vpop.f32.mrf.mxu0
    %v3225 = vadd.f32 %v3016, %v3224
    %3226 = vmatmul.f32.gmra.mxu0 %v1510
    %v3227 = vpop.f32.mrf.mxu0
    %v3228 = vadd.f32 %v3019, %v3227
    %3229 = vmatmul.f32.gmra.mxu0 %v1519
    %v3230 = vpop.f32.mrf.mxu0
    %v3231 = vadd.f32 %v3022, %v3230
    %3232 = vmatmul.f32.gmra.mxu0 %v1528
    %v3233 = vpop.f32.mrf.mxu0
    %v3234 = vadd.f32 %v3025, %v3233
    %3235 = vmatmul.f32.gmra.mxu0 %v1537
    %v3236 = vpop.f32.mrf.mxu0
    %v3237 = vadd.f32 %v3028, %v3236
    %3238 = vmatmul.f32.gmra.mxu0 %v1546
    %v3239 = vpop.f32.mrf.mxu0
    %v3240 = vadd.f32 %v3031, %v3239
    %3241 = vmatmul.f32.gmra.mxu0 %v1555
    %v3242 = vpop.f32.mrf.mxu0
    %v3243 = vadd.f32 %v3034, %v3242
    %3244 = vmatmul.f32.gmra.mxu0 %v1564
    %v3245 = vpop.f32.mrf.mxu0
    %v3246 = vadd.f32 %v3037, %v3245
    %3247 = vmatmul.f32.gmra.mxu0 %v1573
    %v3248 = vpop.f32.mrf.mxu0
    %v3249 = vadd.f32 %v3040, %v3248
    %3250 = vmatmul.f32.gmra.mxu0 %v1582
    %v3251 = vpop.f32.mrf.mxu0
    %v3252 = vadd.f32 %v3043, %v3251
    %3253 = vmatmul.f32.gmra.mxu0 %v1591
    %v3254 = vpop.f32.mrf.mxu0
    %v3255 = vadd.f32 %v3046, %v3254
    %3256 = vmatmul.f32.gmra.mxu0 %v1600
    %v3257 = vpop.f32.mrf.mxu0
    %v3258 = vadd.f32 %v3049, %v3257
    %3259 = vmatmul.f32.gmra.mxu0 %v1609
    %v3260 = vpop.f32.mrf.mxu0
    %v3261 = vadd.f32 %v3052, %v3260
    %3262 = vmatmul.f32.gmra.mxu0 %v1618
    %v3263 = vpop.f32.mrf.mxu0
    %v3264 = vadd.f32 %v3055, %v3263
    %3265 = vmatmul.f32.gmra.mxu0 %v1627
    %v3266 = vpop.f32.mrf.mxu0
    %v3267 = vadd.f32 %v3058, %v3266
    %3268 = vmatmul.f32.gmra.mxu0 %v1636
    %v3269 = vpop.f32.mrf.mxu0
    %v3270 = vadd.f32 %v3061, %v3269
    %3271 = vmatmul.f32.gmra.mxu0 %v1645
    %v3272 = vpop.f32.mrf.mxu0
    %v3273 = vadd.f32 %v3064, %v3272
    %3274 = vmatmul.f32.gmra.mxu0 %v1654
    %v3275 = vpop.f32.mrf.mxu0
    %v3276 = vadd.f32 %v3067, %v3275
    %3277 = vmatmul.f32.gmra.mxu0 %v1663
    %v3278 = vpop.f32.mrf.mxu0
    %v3279 = vadd.f32 %v3070, %v3278
    %3280 = vmatmul.f32.gmra.mxu0 %v1672
    %v3281 = vpop.f32.mrf.mxu0
    %v3282 = vadd.f32 %v3073, %v3281
    %3283 = vmatmul.f32.gmra.mxu0 %v1681
    %v3284 = vpop.f32.mrf.mxu0
    %v3285 = vadd.f32 %v3076, %v3284
    %3286 = vmatmul.f32.gmra.mxu0 %v1690
    %v3287 = vpop.f32.mrf.mxu0
    %v3288 = vadd.f32 %v3079, %v3287
    %3289 = vmatmul.f32.gmra.mxu0 %v1699
    %v3290 = vpop.f32.mrf.mxu0
    %v3291 = vadd.f32 %v3082, %v3290
    %3292 = vmatmul.f32.gmra.mxu0 %v1708
    %v3293 = vpop.f32.mrf.mxu0
    %v3294 = vadd.f32 %v3085, %v3293
    %3295 = vmatmul.f32.gmra.mxu0 %v1717
    %v3296 = vpop.f32.mrf.mxu0
    %v3297 = vadd.f32 %v3088, %v3296
    %3298 = vmatmul.f32.gmra.mxu0 %v1726
    %v3299 = vpop.f32.mrf.mxu0
    %v3300 = vadd.f32 %v3091, %v3299
    %3301 = vmatmul.f32.gmra.mxu0 %v1735
    %v3302 = vpop.f32.mrf.mxu0
    %v3303 = vadd.f32 %v3094, %v3302
    %3304 = vmatmul.f32.gmra.mxu0 %v1744
    %v3305 = vpop.f32.mrf.mxu0
    %v3306 = vadd.f32 %v3097, %v3305
    %3307 = vmatmul.f32.gmra.mxu0 %v1753
    %v3308 = vpop.f32.mrf.mxu0
    %v3309 = vadd.f32 %v3100, %v3308
    %3310 = vmatmul.f32.gmra.mxu0 %v1762
    %v3311 = vpop.f32.mrf.mxu0
    %v3312 = vadd.f32 %v3103, %v3311
    %3313 = vmatmul.f32.gmra.mxu0 %v1771
    %v3314 = vpop.f32.mrf.mxu0
    %v3315 = vadd.f32 %v3106, %v3314
    %3316 = vmatmul.f32.gmra.mxu0 %v1780
    %v3317 = vpop.f32.mrf.mxu0
    %v3318 = vadd.f32 %v3109, %v3317
    %3319 = vmatmul.f32.gmra.mxu0 %v1789
    %v3320 = vpop.f32.mrf.mxu0
    %v3321 = vadd.f32 %v3112, %v3320
    %3322 = vmatmul.f32.gmra.mxu0 %v1798
    %v3323 = vpop.f32.mrf.mxu0
    %v3324 = vadd.f32 %v3115, %v3323
    %3325 = vmatmul.f32.gmra.mxu0 %v1807
    %v3326 = vpop.f32.mrf.mxu0
    %v3327 = vadd.f32 %v3118, %v3326
    %3328 = vmatmul.f32.gmra.mxu0 %v1816
    %v3329 = vpop.f32.mrf.mxu0
    %v3330 = vadd.f32 %v3121, %v3329
    %3331 = vmatmul.f32.gmra.mxu0 %v1825
    %v3332 = vpop.f32.mrf.mxu0
    %v3333 = vadd.f32 %v3124, %v3332
    %3334 = vmatmul.f32.gmra.mxu0 %v1834
    %v3335 = vpop.f32.mrf.mxu0
    %v3336 = vadd.f32 %v3127, %v3335
    %3337 = vmatmul.f32.gmra.mxu0 %v1843
    %v3338 = vpop.f32.mrf.mxu0
    %v3339 = vadd.f32 %v3130, %v3338
    %3340 = vmatmul.f32.gmra.mxu0 %v1852
    %v3341 = vpop.f32.mrf.mxu0
    %v3342 = vadd.f32 %v3133, %v3341
    %3343 = vmatmul.f32.gmra.mxu0 %v1861
    %v3344 = vpop.f32.mrf.mxu0
    %v3345 = vadd.f32 %v3136, %v3344
    %3346 = vmatmul.f32.gmra.mxu0 %v1870
    %v3347 = vpop.f32.mrf.mxu0
    %v3348 = vadd.f32 %v3139, %v3347
    %3349 = vmatmul.f32.gmra.mxu0 %v1879
    %v3350 = vpop.f32.mrf.mxu0
    %v3351 = vadd.f32 %v3142, %v3350
    %3352 = vmatmul.f32.gmra.mxu0 %v1888
    %v3353 = vpop.f32.mrf.mxu0
    %v3354 = vadd.f32 %v3145, %v3353
    %3355 = vmatmul.f32.gmra.mxu0 %v1897
    %v3356 = vpop.f32.mrf.mxu0
    %v3357 = vadd.f32 %v3148, %v3356
    %3358 = vmatmul.f32.gmra.mxu0 %v1906
    %v3359 = vpop.f32.mrf.mxu0
    %v3360 = vadd.f32 %v3151, %v3359
    %3361 = vmatmul.f32.gmra.mxu0 %v1915
    %v3362 = vpop.f32.mrf.mxu0
    %v3363 = vadd.f32 %v3154, %v3362
    %3364 = vmatmul.f32.gmra.mxu0 %v1924
    %v3365 = vpop.f32.mrf.mxu0
    %v3366 = vadd.f32 %v3157, %v3365
    %3367 = vmatmul.f32.gmra.mxu0 %v1933
    %v3368 = vpop.f32.mrf.mxu0
    %v3369 = vadd.f32 %v3160, %v3368
    %3370 = vmatmul.f32.gmra.mxu0 %v1942
    %v3371 = vpop.f32.mrf.mxu0
    %v3372 = vadd.f32 %v3163, %v3371
    %3373 = vmatmul.f32.gmra.mxu0 %v1951
    %v3374 = vpop.f32.mrf.mxu0
    %v3375 = vadd.f32 %v3166, %v3374
    %3376 = vmatmul.f32.gmra.mxu0 %v1960
    %v3377 = vpop.f32.mrf.mxu0
    %v3378 = vadd.f32 %v3169, %v3377
    %3379 = vmatmul.f32.gmra.mxu0 %v1969
    %v3380 = vpop.f32.mrf.mxu0
    %v3381 = vadd.f32 %v3172, %v3380
    %3382 = vmatmul.f32.gmra.mxu0 %v1978
    %v3383 = vpop.f32.mrf.mxu0
    %v3384 = vadd.f32 %v3175, %v3383
    %3385 = vmatmul.f32.gmra.mxu0 %v1987
    %v3386 = vpop.f32.mrf.mxu0
    %v3387 = vadd.f32 %v3178, %v3386
    %3388 = vdwg.mxu0
    %3389 = vmatpush.msra.mxu0 %v2102
    %3390 = vmatpush.msra.mxu0 %v2101
    %3391 = vmatpush.msra.mxu0 %v2100
    %3392 = vmatpush.msra.mxu0 %v2099
    %3393 = vmatpush.msra.mxu0 %v2098
    %3394 = vmatpush.msra.mxu0 %v2097
    %3395 = vmatpush.msra.mxu0 %v2096
    %3396 = vmatpush.msra.mxu0 %v2095
    %3397 = vmatpush.msra.mxu0 %v2094
    %3398 = vmatpush.msra.mxu0 %v2093
    %3399 = vmatpush.msra.mxu0 %v2092
    %3400 = vmatpush.msra.mxu0 %v2091
    %3401 = vmatpush.msra.mxu0 %v2090
    %3402 = vmatpush.msra.mxu0 %v2089
    %3403 = vmatpush.msra.mxu0 %v2088
    %3404 = vmatpush.msra.mxu0 %v2087
    %3405 = vmatmul.f32.gmra.mxu0 %v1421
    %v3406 = vpop.f32.mrf.mxu0
    %v3407 = vadd.f32 %v3198, %v3406
    %3408 = vmatmul.f32.gmra.mxu0 %v1430
    %v3409 = vpop.f32.mrf.mxu0
    %v3410 = vadd.f32 %v3201, %v3409
    %3411 = vmatmul.f32.gmra.mxu0 %v1439
    %v3412 = vpop.f32.mrf.mxu0
    %v3413 = vadd.f32 %v3204, %v3412
    %3414 = vmatmul.f32.gmra.mxu0 %v1448
    %v3415 = vpop.f32.mrf.mxu0
    %v3416 = vadd.f32 %v3207, %v3415
    %3417 = vmatmul.f32.gmra.mxu0 %v1457
    %v3418 = vpop.f32.mrf.mxu0
    %v3419 = vadd.f32 %v3210, %v3418
    %3420 = vmatmul.f32.gmra.mxu0 %v1466
    %v3421 = vpop.f32.mrf.mxu0
    %v3422 = vadd.f32 %v3213, %v3421
    %3423 = vmatmul.f32.gmra.mxu0 %v1475
    %v3424 = vpop.f32.mrf.mxu0
    %v3425 = vadd.f32 %v3216, %v3424
    %3426 = vmatmul.f32.gmra.mxu0 %v1484
    %v3427 = vpop.f32.mrf.mxu0
    %v3428 = vadd.f32 %v3219, %v3427
    %3429 = vmatmul.f32.gmra.mxu0 %v1493
    %v3430 = vpop.f32.mrf.mxu0
    %v3431 = vadd.f32 %v3222, %v3430
    %3432 = vmatmul.f32.gmra.mxu0 %v1502
    %v3433 = vpop.f32.mrf.mxu0
    %v3434 = vadd.f32 %v3225, %v3433
    %3435 = vmatmul.f32.gmra.mxu0 %v1511
    %v3436 = vpop.f32.mrf.mxu0
    %v3437 = vadd.f32 %v3228, %v3436
    %3438 = vmatmul.f32.gmra.mxu0 %v1520
    %v3439 = vpop.f32.mrf.mxu0
    %v3440 = vadd.f32 %v3231, %v3439
    %3441 = vmatmul.f32.gmra.mxu0 %v1529
    %v3442 = vpop.f32.mrf.mxu0
    %v3443 = vadd.f32 %v3234, %v3442
    %3444 = vmatmul.f32.gmra.mxu0 %v1538
    %v3445 = vpop.f32.mrf.mxu0
    %v3446 = vadd.f32 %v3237, %v3445
    %3447 = vmatmul.f32.gmra.mxu0 %v1547
    %v3448 = vpop.f32.mrf.mxu0
    %v3449 = vadd.f32 %v3240, %v3448
    %3450 = vmatmul.f32.gmra.mxu0 %v1556
    %v3451 = vpop.f32.mrf.mxu0
    %v3452 = vadd.f32 %v3243, %v3451
    %3453 = vmatmul.f32.gmra.mxu0 %v1565
    %v3454 = vpop.f32.mrf.mxu0
    %v3455 = vadd.f32 %v3246, %v3454
    %3456 = vmatmul.f32.gmra.mxu0 %v1574
    %v3457 = vpop.f32.mrf.mxu0
    %v3458 = vadd.f32 %v3249, %v3457
    %3459 = vmatmul.f32.gmra.mxu0 %v1583
    %v3460 = vpop.f32.mrf.mxu0
    %v3461 = vadd.f32 %v3252, %v3460
    %3462 = vmatmul.f32.gmra.mxu0 %v1592
    %v3463 = vpop.f32.mrf.mxu0
    %v3464 = vadd.f32 %v3255, %v3463
    %3465 = vmatmul.f32.gmra.mxu0 %v1601
    %v3466 = vpop.f32.mrf.mxu0
    %v3467 = vadd.f32 %v3258, %v3466
    %3468 = vmatmul.f32.gmra.mxu0 %v1610
    %v3469 = vpop.f32.mrf.mxu0
    %v3470 = vadd.f32 %v3261, %v3469
    %3471 = vmatmul.f32.gmra.mxu0 %v1619
    %v3472 = vpop.f32.mrf.mxu0
    %v3473 = vadd.f32 %v3264, %v3472
    %3474 = vmatmul.f32.gmra.mxu0 %v1628
    %v3475 = vpop.f32.mrf.mxu0
    %v3476 = vadd.f32 %v3267, %v3475
    %3477 = vmatmul.f32.gmra.mxu0 %v1637
    %v3478 = vpop.f32.mrf.mxu0
    %v3479 = vadd.f32 %v3270, %v3478
    %3480 = vmatmul.f32.gmra.mxu0 %v1646
    %v3481 = vpop.f32.mrf.mxu0
    %v3482 = vadd.f32 %v3273, %v3481
    %3483 = vmatmul.f32.gmra.mxu0 %v1655
    %v3484 = vpop.f32.mrf.mxu0
    %v3485 = vadd.f32 %v3276, %v3484
    %3486 = vmatmul.f32.gmra.mxu0 %v1664
    %v3487 = vpop.f32.mrf.mxu0
    %v3488 = vadd.f32 %v3279, %v3487
    %3489 = vmatmul.f32.gmra.mxu0 %v1673
    %v3490 = vpop.f32.mrf.mxu0
    %v3491 = vadd.f32 %v3282, %v3490
    %3492 = vmatmul.f32.gmra.mxu0 %v1682
    %v3493 = vpop.f32.mrf.mxu0
    %v3494 = vadd.f32 %v3285, %v3493
    %3495 = vmatmul.f32.gmra.mxu0 %v1691
    %v3496 = vpop.f32.mrf.mxu0
    %v3497 = vadd.f32 %v3288, %v3496
    %3498 = vmatmul.f32.gmra.mxu0 %v1700
    %v3499 = vpop.f32.mrf.mxu0
    %v3500 = vadd.f32 %v3291, %v3499
    %3501 = vmatmul.f32.gmra.mxu0 %v1709
    %v3502 = vpop.f32.mrf.mxu0
    %v3503 = vadd.f32 %v3294, %v3502
    %3504 = vmatmul.f32.gmra.mxu0 %v1718
    %v3505 = vpop.f32.mrf.mxu0
    %v3506 = vadd.f32 %v3297, %v3505
    %3507 = vmatmul.f32.gmra.mxu0 %v1727
    %v3508 = vpop.f32.mrf.mxu0
    %v3509 = vadd.f32 %v3300, %v3508
    %3510 = vmatmul.f32.gmra.mxu0 %v1736
    %v3511 = vpop.f32.mrf.mxu0
    %v3512 = vadd.f32 %v3303, %v3511
    %3513 = vmatmul.f32.gmra.mxu0 %v1745
    %v3514 = vpop.f32.mrf.mxu0
    %v3515 = vadd.f32 %v3306, %v3514
    %3516 = vmatmul.f32.gmra.mxu0 %v1754
    %v3517 = vpop.f32.mrf.mxu0
    %v3518 = vadd.f32 %v3309, %v3517
    %3519 = vmatmul.f32.gmra.mxu0 %v1763
    %v3520 = vpop.f32.mrf.mxu0
    %v3521 = vadd.f32 %v3312, %v3520
    %3522 = vmatmul.f32.gmra.mxu0 %v1772
    %v3523 = vpop.f32.mrf.mxu0
    %v3524 = vadd.f32 %v3315, %v3523
    %3525 = vmatmul.f32.gmra.mxu0 %v1781
    %v3526 = vpop.f32.mrf.mxu0
    %v3527 = vadd.f32 %v3318, %v3526
    %3528 = vmatmul.f32.gmra.mxu0 %v1790
    %v3529 = vpop.f32.mrf.mxu0
    %v3530 = vadd.f32 %v3321, %v3529
    %3531 = vmatmul.f32.gmra.mxu0 %v1799
    %v3532 = vpop.f32.mrf.mxu0
    %v3533 = vadd.f32 %v3324, %v3532
    %3534 = vmatmul.f32.gmra.mxu0 %v1808
    %v3535 = vpop.f32.mrf.mxu0
    %v3536 = vadd.f32 %v3327, %v3535
    %3537 = vmatmul.f32.gmra.mxu0 %v1817
    %v3538 = vpop.f32.mrf.mxu0
    %v3539 = vadd.f32 %v3330, %v3538
    %3540 = vmatmul.f32.gmra.mxu0 %v1826
    %v3541 = vpop.f32.mrf.mxu0
    %v3542 = vadd.f32 %v3333, %v3541
    %3543 = vmatmul.f32.gmra.mxu0 %v1835
    %v3544 = vpop.f32.mrf.mxu0
    %v3545 = vadd.f32 %v3336, %v3544
    %3546 = vmatmul.f32.gmra.mxu0 %v1844
    %v3547 = vpop.f32.mrf.mxu0
    %v3548 = vadd.f32 %v3339, %v3547
    %3549 = vmatmul.f32.gmra.mxu0 %v1853
    %v3550 = vpop.f32.mrf.mxu0
    %v3551 = vadd.f32 %v3342, %v3550
    %3552 = vmatmul.f32.gmra.mxu0 %v1862
    %v3553 = vpop.f32.mrf.mxu0
    %v3554 = vadd.f32 %v3345, %v3553
    %3555 = vmatmul.f32.gmra.mxu0 %v1871
    %v3556 = vpop.f32.mrf.mxu0
    %v3557 = vadd.f32 %v3348, %v3556
    %3558 = vmatmul.f32.gmra.mxu0 %v1880
    %v3559 = vpop.f32.mrf.mxu0
    %v3560 = vadd.f32 %v3351, %v3559
    %3561 = vmatmul.f32.gmra.mxu0 %v1889
    %v3562 = vpop.f32.mrf.mxu0
    %v3563 = vadd.f32 %v3354, %v3562
    %3564 = vmatmul.f32.gmra.mxu0 %v1898
    %v3565 = vpop.f32.mrf.mxu0
    %v3566 = vadd.f32 %v3357, %v3565
    %3567 = vmatmul.f32.gmra.mxu0 %v1907
    %v3568 = vpop.f32.mrf.mxu0
    %v3569 = vadd.f32 %v3360, %v3568
    %3570 = vmatmul.f32.gmra.mxu0 %v1916
    %v3571 = vpop.f32.mrf.mxu0
    %v3572 = vadd.f32 %v3363, %v3571
    %3573 = vmatmul.f32.gmra.mxu0 %v1925
    %v3574 = vpop.f32.mrf.mxu0
    %v3575 = vadd.f32 %v3366, %v3574
    %3576 = vmatmul.f32.gmra.mxu0 %v1934
    %v3577 = vpop.f32.mrf.mxu0
    %v3578 = vadd.f32 %v3369, %v3577
    %3579 = vmatmul.f32.gmra.mxu0 %v1943
    %v3580 = vpop.f32.mrf.mxu0
    %v3581 = vadd.f32 %v3372, %v3580
    %3582 = vmatmul.f32.gmra.mxu0 %v1952
    %v3583 = vpop.f32.mrf.mxu0
    %v3584 = vadd.f32 %v3375, %v3583
    %3585 = vmatmul.f32.gmra.mxu0 %v1961
    %v3586 = vpop.f32.mrf.mxu0
    %v3587 = vadd.f32 %v3378, %v3586
    %3588 = vmatmul.f32.gmra.mxu0 %v1970
    %v3589 = vpop.f32.mrf.mxu0
    %v3590 = vadd.f32 %v3381, %v3589
    %3591 = vmatmul.f32.gmra.mxu0 %v1979
    %v3592 = vpop.f32.mrf.mxu0
    %v3593 = vadd.f32 %v3384, %v3592
    %3594 = vmatmul.f32.gmra.mxu0 %v1988
    %v3595 = vpop.f32.mrf.mxu0
    %v3596 = vadd.f32 %v3387, %v3595
    %3597 = vdwg.mxu0
    %3598 = vmatpush.msra.mxu0 %v2118
    %3599 = vmatpush.msra.mxu0 %v2117
    %3600 = vmatpush.msra.mxu0 %v2116
    %3601 = vmatpush.msra.mxu0 %v2115
    %3602 = vmatpush.msra.mxu0 %v2114
    %3603 = vmatpush.msra.mxu0 %v2113
    %3604 = vmatpush.msra.mxu0 %v2112
    %3605 = vmatpush.msra.mxu0 %v2111
    %3606 = vmatpush.msra.mxu0 %v2110
    %3607 = vmatpush.msra.mxu0 %v2109
    %3608 = vmatpush.msra.mxu0 %v2108
    %3609 = vmatpush.msra.mxu0 %v2107
    %3610 = vmatpush.msra.mxu0 %v2106
    %3611 = vmatpush.msra.mxu0 %v2105
    %3612 = vmatpush.msra.mxu0 %v2104
    %3613 = vmatpush.msra.mxu0 %v2103
    %3614 = vmatmul.f32.gmra.mxu0 %v1422
    %v3615 = vpop.f32.mrf.mxu0
    %v3616 = vadd.f32 %v3407, %v3615
    %3617 = vmatmul.f32.gmra.mxu0 %v1431
    %v3618 = vpop.f32.mrf.mxu0
    %v3619 = vadd.f32 %v3410, %v3618
    %3620 = vmatmul.f32.gmra.mxu0 %v1440
    %v3621 = vpop.f32.mrf.mxu0
    %v3622 = vadd.f32 %v3413, %v3621
    %3623 = vmatmul.f32.gmra.mxu0 %v1449
    %v3624 = vpop.f32.mrf.mxu0
    %v3625 = vadd.f32 %v3416, %v3624
    %3626 = vmatmul.f32.gmra.mxu0 %v1458
    %v3627 = vpop.f32.mrf.mxu0
    %v3628 = vadd.f32 %v3419, %v3627
    %3629 = vmatmul.f32.gmra.mxu0 %v1467
    %v3630 = vpop.f32.mrf.mxu0
    %v3631 = vadd.f32 %v3422, %v3630
    %3632 = vmatmul.f32.gmra.mxu0 %v1476
    %v3633 = vpop.f32.mrf.mxu0
    %v3634 = vadd.f32 %v3425, %v3633
    %3635 = vmatmul.f32.gmra.mxu0 %v1485
    %v3636 = vpop.f32.mrf.mxu0
    %v3637 = vadd.f32 %v3428, %v3636
    %3638 = vmatmul.f32.gmra.mxu0 %v1494
    %v3639 = vpop.f32.mrf.mxu0
    %v3640 = vadd.f32 %v3431, %v3639
    %3641 = vmatmul.f32.gmra.mxu0 %v1503
    %v3642 = vpop.f32.mrf.mxu0
    %v3643 = vadd.f32 %v3434, %v3642
    %3644 = vmatmul.f32.gmra.mxu0 %v1512
    %v3645 = vpop.f32.mrf.mxu0
    %v3646 = vadd.f32 %v3437, %v3645
    %3647 = vmatmul.f32.gmra.mxu0 %v1521
    %v3648 = vpop.f32.mrf.mxu0
    %v3649 = vadd.f32 %v3440, %v3648
    %3650 = vmatmul.f32.gmra.mxu0 %v1530
    %v3651 = vpop.f32.mrf.mxu0
    %v3652 = vadd.f32 %v3443, %v3651
    %3653 = vmatmul.f32.gmra.mxu0 %v1539
    %v3654 = vpop.f32.mrf.mxu0
    %v3655 = vadd.f32 %v3446, %v3654
    %3656 = vmatmul.f32.gmra.mxu0 %v1548
    %v3657 = vpop.f32.mrf.mxu0
    %v3658 = vadd.f32 %v3449, %v3657
    %3659 = vmatmul.f32.gmra.mxu0 %v1557
    %v3660 = vpop.f32.mrf.mxu0
    %v3661 = vadd.f32 %v3452, %v3660
    %3662 = vmatmul.f32.gmra.mxu0 %v1566
    %v3663 = vpop.f32.mrf.mxu0
    %v3664 = vadd.f32 %v3455, %v3663
    %3665 = vmatmul.f32.gmra.mxu0 %v1575
    %v3666 = vpop.f32.mrf.mxu0
    %v3667 = vadd.f32 %v3458, %v3666
    %3668 = vmatmul.f32.gmra.mxu0 %v1584
    %v3669 = vpop.f32.mrf.mxu0
    %v3670 = vadd.f32 %v3461, %v3669
    %3671 = vmatmul.f32.gmra.mxu0 %v1593
    %v3672 = vpop.f32.mrf.mxu0
    %v3673 = vadd.f32 %v3464, %v3672
    %3674 = vmatmul.f32.gmra.mxu0 %v1602
    %v3675 = vpop.f32.mrf.mxu0
    %v3676 = vadd.f32 %v3467, %v3675
    %3677 = vmatmul.f32.gmra.mxu0 %v1611
    %v3678 = vpop.f32.mrf.mxu0
    %v3679 = vadd.f32 %v3470, %v3678
    %3680 = vmatmul.f32.gmra.mxu0 %v1620
    %v3681 = vpop.f32.mrf.mxu0
    %v3682 = vadd.f32 %v3473, %v3681
    %3683 = vmatmul.f32.gmra.mxu0 %v1629
    %v3684 = vpop.f32.mrf.mxu0
    %v3685 = vadd.f32 %v3476, %v3684
    %3686 = vmatmul.f32.gmra.mxu0 %v1638
    %v3687 = vpop.f32.mrf.mxu0
    %v3688 = vadd.f32 %v3479, %v3687
    %3689 = vmatmul.f32.gmra.mxu0 %v1647
    %v3690 = vpop.f32.mrf.mxu0
    %v3691 = vadd.f32 %v3482, %v3690
    %3692 = vmatmul.f32.gmra.mxu0 %v1656
    %v3693 = vpop.f32.mrf.mxu0
    %v3694 = vadd.f32 %v3485, %v3693
    %3695 = vmatmul.f32.gmra.mxu0 %v1665
    %v3696 = vpop.f32.mrf.mxu0
    %v3697 = vadd.f32 %v3488, %v3696
    %3698 = vmatmul.f32.gmra.mxu0 %v1674
    %v3699 = vpop.f32.mrf.mxu0
    %v3700 = vadd.f32 %v3491, %v3699
    %3701 = vmatmul.f32.gmra.mxu0 %v1683
    %v3702 = vpop.f32.mrf.mxu0
    %v3703 = vadd.f32 %v3494, %v3702
    %3704 = vmatmul.f32.gmra.mxu0 %v1692
    %v3705 = vpop.f32.mrf.mxu0
    %v3706 = vadd.f32 %v3497, %v3705
    %3707 = vmatmul.f32.gmra.mxu0 %v1701
    %v3708 = vpop.f32.mrf.mxu0
    %v3709 = vadd.f32 %v3500, %v3708
    %3710 = vmatmul.f32.gmra.mxu0 %v1710
    %v3711 = vpop.f32.mrf.mxu0
    %v3712 = vadd.f32 %v3503, %v3711
    %3713 = vmatmul.f32.gmra.mxu0 %v1719
    %v3714 = vpop.f32.mrf.mxu0
    %v3715 = vadd.f32 %v3506, %v3714
    %3716 = vmatmul.f32.gmra.mxu0 %v1728
    %v3717 = vpop.f32.mrf.mxu0
    %v3718 = vadd.f32 %v3509, %v3717
    %3719 = vmatmul.f32.gmra.mxu0 %v1737
    %v3720 = vpop.f32.mrf.mxu0
    %v3721 = vadd.f32 %v3512, %v3720
    %3722 = vmatmul.f32.gmra.mxu0 %v1746
    %v3723 = vpop.f32.mrf.mxu0
    %v3724 = vadd.f32 %v3515, %v3723
    %3725 = vmatmul.f32.gmra.mxu0 %v1755
    %v3726 = vpop.f32.mrf.mxu0
    %v3727 = vadd.f32 %v3518, %v3726
    %3728 = vmatmul.f32.gmra.mxu0 %v1764
    %v3729 = vpop.f32.mrf.mxu0
    %v3730 = vadd.f32 %v3521, %v3729
    %3731 = vmatmul.f32.gmra.mxu0 %v1773
    %v3732 = vpop.f32.mrf.mxu0
    %v3733 = vadd.f32 %v3524, %v3732
    %3734 = vmatmul.f32.gmra.mxu0 %v1782
    %v3735 = vpop.f32.mrf.mxu0
    %v3736 = vadd.f32 %v3527, %v3735
    %3737 = vmatmul.f32.gmra.mxu0 %v1791
    %v3738 = vpop.f32.mrf.mxu0
    %v3739 = vadd.f32 %v3530, %v3738
    %3740 = vmatmul.f32.gmra.mxu0 %v1800
    %v3741 = vpop.f32.mrf.mxu0
    %v3742 = vadd.f32 %v3533, %v3741
    %3743 = vmatmul.f32.gmra.mxu0 %v1809
    %v3744 = vpop.f32.mrf.mxu0
    %v3745 = vadd.f32 %v3536, %v3744
    %3746 = vmatmul.f32.gmra.mxu0 %v1818
    %v3747 = vpop.f32.mrf.mxu0
    %v3748 = vadd.f32 %v3539, %v3747
    %3749 = vmatmul.f32.gmra.mxu0 %v1827
    %v3750 = vpop.f32.mrf.mxu0
    %v3751 = vadd.f32 %v3542, %v3750
    %3752 = vmatmul.f32.gmra.mxu0 %v1836
    %v3753 = vpop.f32.mrf.mxu0
    %v3754 = vadd.f32 %v3545, %v3753
    %3755 = vmatmul.f32.gmra.mxu0 %v1845
    %v3756 = vpop.f32.mrf.mxu0
    %v3757 = vadd.f32 %v3548, %v3756
    %3758 = vmatmul.f32.gmra.mxu0 %v1854
    %v3759 = vpop.f32.mrf.mxu0
    %v3760 = vadd.f32 %v3551, %v3759
    %3761 = vmatmul.f32.gmra.mxu0 %v1863
    %v3762 = vpop.f32.mrf.mxu0
    %v3763 = vadd.f32 %v3554, %v3762
    %3764 = vmatmul.f32.gmra.mxu0 %v1872
    %v3765 = vpop.f32.mrf.mxu0
    %v3766 = vadd.f32 %v3557, %v3765
    %3767 = vmatmul.f32.gmra.mxu0 %v1881
    %v3768 = vpop.f32.mrf.mxu0
    %v3769 = vadd.f32 %v3560, %v3768
    %3770 = vmatmul.f32.gmra.mxu0 %v1890
    %v3771 = vpop.f32.mrf.mxu0
    %v3772 = vadd.f32 %v3563, %v3771
    %3773 = vmatmul.f32.gmra.mxu0 %v1899
    %v3774 = vpop.f32.mrf.mxu0
    %v3775 = vadd.f32 %v3566, %v3774
    %3776 = vmatmul.f32.gmra.mxu0 %v1908
    %v3777 = vpop.f32.mrf.mxu0
    %v3778 = vadd.f32 %v3569, %v3777
    %3779 = vmatmul.f32.gmra.mxu0 %v1917
    %v3780 = vpop.f32.mrf.mxu0
    %v3781 = vadd.f32 %v3572, %v3780
    %3782 = vmatmul.f32.gmra.mxu0 %v1926
    %v3783 = vpop.f32.mrf.mxu0
    %v3784 = vadd.f32 %v3575, %v3783
    %3785 = vmatmul.f32.gmra.mxu0 %v1935
    %v3786 = vpop.f32.mrf.mxu0
    %v3787 = vadd.f32 %v3578, %v3786
    %3788 = vmatmul.f32.gmra.mxu0 %v1944
    %v3789 = vpop.f32.mrf.mxu0
    %v3790 = vadd.f32 %v3581, %v3789
    %3791 = vmatmul.f32.gmra.mxu0 %v1953
    %v3792 = vpop.f32.mrf.mxu0
    %v3793 = vadd.f32 %v3584, %v3792
    %3794 = vmatmul.f32.gmra.mxu0 %v1962
    %v3795 = vpop.f32.mrf.mxu0
    %v3796 = vadd.f32 %v3587, %v3795
    %3797 = vmatmul.f32.gmra.mxu0 %v1971
    %v3798 = vpop.f32.mrf.mxu0
    %v3799 = vadd.f32 %v3590, %v3798
    %3800 = vmatmul.f32.gmra.mxu0 %v1980
    %v3801 = vpop.f32.mrf.mxu0
    %v3802 = vadd.f32 %v3593, %v3801
    %3803 = vmatmul.f32.gmra.mxu0 %v1989
    %v3804 = vpop.f32.mrf.mxu0
    %v3805 = vadd.f32 %v3596, %v3804
    %3806 = vdwg.mxu0
    %3807 = vmatpush.msra.mxu0 %v2134
    %3808 = vmatpush.msra.mxu0 %v2133
    %3809 = vmatpush.msra.mxu0 %v2132
    %3810 = vmatpush.msra.mxu0 %v2131
    %3811 = vmatpush.msra.mxu0 %v2130
    %3812 = vmatpush.msra.mxu0 %v2129
    %3813 = vmatpush.msra.mxu0 %v2128
    %3814 = vmatpush.msra.mxu0 %v2127
    %3815 = vmatpush.msra.mxu0 %v2126
    %3816 = vmatpush.msra.mxu0 %v2125
    %3817 = vmatpush.msra.mxu0 %v2124
    %3818 = vmatpush.msra.mxu0 %v2123
    %3819 = vmatpush.msra.mxu0 %v2122
    %3820 = vmatpush.msra.mxu0 %v2121
    %3821 = vmatpush.msra.mxu0 %v2120
    %3822 = vmatpush.msra.mxu0 %v2119
    %3823 = vmatmul.f32.gmra.mxu0 %v1423
    %v3824 = vpop.f32.mrf.mxu0
    %v3825 = vadd.f32 %v3616, %v3824
    %3826 = vmatmul.f32.gmra.mxu0 %v1432
    %v3827 = vpop.f32.mrf.mxu0
    %v3828 = vadd.f32 %v3619, %v3827
    %3829 = vmatmul.f32.gmra.mxu0 %v1441
    %v3830 = vpop.f32.mrf.mxu0
    %v3831 = vadd.f32 %v3622, %v3830
    %3832 = vmatmul.f32.gmra.mxu0 %v1450
    %v3833 = vpop.f32.mrf.mxu0
    %v3834 = vadd.f32 %v3625, %v3833
    %3835 = vmatmul.f32.gmra.mxu0 %v1459
    %v3836 = vpop.f32.mrf.mxu0
    %v3837 = vadd.f32 %v3628, %v3836
    %3838 = vmatmul.f32.gmra.mxu0 %v1468
    %v3839 = vpop.f32.mrf.mxu0
    %v3840 = vadd.f32 %v3631, %v3839
    %3841 = vmatmul.f32.gmra.mxu0 %v1477
    %v3842 = vpop.f32.mrf.mxu0
    %v3843 = vadd.f32 %v3634, %v3842
    %3844 = vmatmul.f32.gmra.mxu0 %v1486
    %v3845 = vpop.f32.mrf.mxu0
    %v3846 = vadd.f32 %v3637, %v3845
    %3847 = vmatmul.f32.gmra.mxu0 %v1495
    %v3848 = vpop.f32.mrf.mxu0
    %v3849 = vadd.f32 %v3640, %v3848
    %3850 = vmatmul.f32.gmra.mxu0 %v1504
    %v3851 = vpop.f32.mrf.mxu0
    %v3852 = vadd.f32 %v3643, %v3851
    %3853 = vmatmul.f32.gmra.mxu0 %v1513
    %v3854 = vpop.f32.mrf.mxu0
    %v3855 = vadd.f32 %v3646, %v3854
    %3856 = vmatmul.f32.gmra.mxu0 %v1522
    %v3857 = vpop.f32.mrf.mxu0
    %v3858 = vadd.f32 %v3649, %v3857
    %3859 = vmatmul.f32.gmra.mxu0 %v1531
    %v3860 = vpop.f32.mrf.mxu0
    %v3861 = vadd.f32 %v3652, %v3860
    %3862 = vmatmul.f32.gmra.mxu0 %v1540
    %v3863 = vpop.f32.mrf.mxu0
    %v3864 = vadd.f32 %v3655, %v3863
    %3865 = vmatmul.f32.gmra.mxu0 %v1549
    %v3866 = vpop.f32.mrf.mxu0
    %v3867 = vadd.f32 %v3658, %v3866
    %3868 = vmatmul.f32.gmra.mxu0 %v1558
    %v3869 = vpop.f32.mrf.mxu0
    %v3870 = vadd.f32 %v3661, %v3869
    %3871 = vmatmul.f32.gmra.mxu0 %v1567
    %v3872 = vpop.f32.mrf.mxu0
    %v3873 = vadd.f32 %v3664, %v3872
    %3874 = vmatmul.f32.gmra.mxu0 %v1576
    %v3875 = vpop.f32.mrf.mxu0
    %v3876 = vadd.f32 %v3667, %v3875
    %3877 = vmatmul.f32.gmra.mxu0 %v1585
    %v3878 = vpop.f32.mrf.mxu0
    %v3879 = vadd.f32 %v3670, %v3878
    %3880 = vmatmul.f32.gmra.mxu0 %v1594
    %v3881 = vpop.f32.mrf.mxu0
    %v3882 = vadd.f32 %v3673, %v3881
    %3883 = vmatmul.f32.gmra.mxu0 %v1603
    %v3884 = vpop.f32.mrf.mxu0
    %v3885 = vadd.f32 %v3676, %v3884
    %3886 = vmatmul.f32.gmra.mxu0 %v1612
    %v3887 = vpop.f32.mrf.mxu0
    %v3888 = vadd.f32 %v3679, %v3887
    %3889 = vmatmul.f32.gmra.mxu0 %v1621
    %v3890 = vpop.f32.mrf.mxu0
    %v3891 = vadd.f32 %v3682, %v3890
    %3892 = vmatmul.f32.gmra.mxu0 %v1630
    %v3893 = vpop.f32.mrf.mxu0
    %v3894 = vadd.f32 %v3685, %v3893
    %3895 = vmatmul.f32.gmra.mxu0 %v1639
    %v3896 = vpop.f32.mrf.mxu0
    %v3897 = vadd.f32 %v3688, %v3896
    %3898 = vmatmul.f32.gmra.mxu0 %v1648
    %v3899 = vpop.f32.mrf.mxu0
    %v3900 = vadd.f32 %v3691, %v3899
    %3901 = vmatmul.f32.gmra.mxu0 %v1657
    %v3902 = vpop.f32.mrf.mxu0
    %v3903 = vadd.f32 %v3694, %v3902
    %3904 = vmatmul.f32.gmra.mxu0 %v1666
    %v3905 = vpop.f32.mrf.mxu0
    %v3906 = vadd.f32 %v3697, %v3905
    %3907 = vmatmul.f32.gmra.mxu0 %v1675
    %v3908 = vpop.f32.mrf.mxu0
    %v3909 = vadd.f32 %v3700, %v3908
    %3910 = vmatmul.f32.gmra.mxu0 %v1684
    %v3911 = vpop.f32.mrf.mxu0
    %v3912 = vadd.f32 %v3703, %v3911
    %3913 = vmatmul.f32.gmra.mxu0 %v1693
    %v3914 = vpop.f32.mrf.mxu0
    %v3915 = vadd.f32 %v3706, %v3914
    %3916 = vmatmul.f32.gmra.mxu0 %v1702
    %v3917 = vpop.f32.mrf.mxu0
    %v3918 = vadd.f32 %v3709, %v3917
    %3919 = vmatmul.f32.gmra.mxu0 %v1711
    %v3920 = vpop.f32.mrf.mxu0
    %v3921 = vadd.f32 %v3712, %v3920
    %3922 = vmatmul.f32.gmra.mxu0 %v1720
    %v3923 = vpop.f32.mrf.mxu0
    %v3924 = vadd.f32 %v3715, %v3923
    %3925 = vmatmul.f32.gmra.mxu0 %v1729
    %v3926 = vpop.f32.mrf.mxu0
    %v3927 = vadd.f32 %v3718, %v3926
    %3928 = vmatmul.f32.gmra.mxu0 %v1738
    %v3929 = vpop.f32.mrf.mxu0
    %v3930 = vadd.f32 %v3721, %v3929
    %3931 = vmatmul.f32.gmra.mxu0 %v1747
    %v3932 = vpop.f32.mrf.mxu0
    %v3933 = vadd.f32 %v3724, %v3932
    %3934 = vmatmul.f32.gmra.mxu0 %v1756
    %v3935 = vpop.f32.mrf.mxu0
    %v3936 = vadd.f32 %v3727, %v3935
    %3937 = vmatmul.f32.gmra.mxu0 %v1765
    %v3938 = vpop.f32.mrf.mxu0
    %v3939 = vadd.f32 %v3730, %v3938
    %3940 = vmatmul.f32.gmra.mxu0 %v1774
    %v3941 = vpop.f32.mrf.mxu0
    %v3942 = vadd.f32 %v3733, %v3941
    %3943 = vmatmul.f32.gmra.mxu0 %v1783
    %v3944 = vpop.f32.mrf.mxu0
    %v3945 = vadd.f32 %v3736, %v3944
    %3946 = vmatmul.f32.gmra.mxu0 %v1792
    %v3947 = vpop.f32.mrf.mxu0
    %v3948 = vadd.f32 %v3739, %v3947
    %3949 = vmatmul.f32.gmra.mxu0 %v1801
    %v3950 = vpop.f32.mrf.mxu0
    %v3951 = vadd.f32 %v3742, %v3950
    %3952 = vmatmul.f32.gmra.mxu0 %v1810
    %v3953 = vpop.f32.mrf.mxu0
    %v3954 = vadd.f32 %v3745, %v3953
    %3955 = vmatmul.f32.gmra.mxu0 %v1819
    %v3956 = vpop.f32.mrf.mxu0
    %v3957 = vadd.f32 %v3748, %v3956
    %3958 = vmatmul.f32.gmra.mxu0 %v1828
    %v3959 = vpop.f32.mrf.mxu0
    %v3960 = vadd.f32 %v3751, %v3959
    %3961 = vmatmul.f32.gmra.mxu0 %v1837
    %v3962 = vpop.f32.mrf.mxu0
    %v3963 = vadd.f32 %v3754, %v3962
    %3964 = vmatmul.f32.gmra.mxu0 %v1846
    %v3965 = vpop.f32.mrf.mxu0
    %v3966 = vadd.f32 %v3757, %v3965
    %3967 = vmatmul.f32.gmra.mxu0 %v1855
    %v3968 = vpop.f32.mrf.mxu0
    %v3969 = vadd.f32 %v3760, %v3968
    %3970 = vmatmul.f32.gmra.mxu0 %v1864
    %v3971 = vpop.f32.mrf.mxu0
    %v3972 = vadd.f32 %v3763, %v3971
    %3973 = vmatmul.f32.gmra.mxu0 %v1873
    %v3974 = vpop.f32.mrf.mxu0
    %v3975 = vadd.f32 %v3766, %v3974
    %3976 = vmatmul.f32.gmra.mxu0 %v1882
    %v3977 = vpop.f32.mrf.mxu0
    %v3978 = vadd.f32 %v3769, %v3977
    %3979 = vmatmul.f32.gmra.mxu0 %v1891
    %v3980 = vpop.f32.mrf.mxu0
    %v3981 = vadd.f32 %v3772, %v3980
    %3982 = vmatmul.f32.gmra.mxu0 %v1900
    %v3983 = vpop.f32.mrf.mxu0
    %v3984 = vadd.f32 %v3775, %v3983
    %3985 = vmatmul.f32.gmra.mxu0 %v1909
    %v3986 = vpop.f32.mrf.mxu0
    %v3987 = vadd.f32 %v3778, %v3986
    %3988 = vmatmul.f32.gmra.mxu0 %v1918
    %v3989 = vpop.f32.mrf.mxu0
    %v3990 = vadd.f32 %v3781, %v3989
    %3991 = vmatmul.f32.gmra.mxu0 %v1927
    %v3992 = vpop.f32.mrf.mxu0
    %v3993 = vadd.f32 %v3784, %v3992
    %3994 = vmatmul.f32.gmra.mxu0 %v1936
    %v3995 = vpop.f32.mrf.mxu0
    %v3996 = vadd.f32 %v3787, %v3995
    %3997 = vmatmul.f32.gmra.mxu0 %v1945
    %v3998 = vpop.f32.mrf.mxu0
    %v3999 = vadd.f32 %v3790, %v3998
    %4000 = vmatmul.f32.gmra.mxu0 %v1954
    %v4001 = vpop.f32.mrf.mxu0
    %v4002 = vadd.f32 %v3793, %v4001
    %4003 = vmatmul.f32.gmra.mxu0 %v1963
    %v4004 = vpop.f32.mrf.mxu0
    %v4005 = vadd.f32 %v3796, %v4004
    %4006 = vmatmul.f32.gmra.mxu0 %v1972
    %v4007 = vpop.f32.mrf.mxu0
    %v4008 = vadd.f32 %v3799, %v4007
    %4009 = vmatmul.f32.gmra.mxu0 %v1981
    %v4010 = vpop.f32.mrf.mxu0
    %v4011 = vadd.f32 %v3802, %v4010
    %4012 = vmatmul.f32.gmra.mxu0 %v1990
    %v4013 = vpop.f32.mrf.mxu0
    %v4014 = vadd.f32 %v3805, %v4013
    %4015 = vdwg.mxu0
    %4016 = vst [vmem:[%s197 + $0x1] sm:$0xff] %v3825
    %4017 = vst [vmem:[%s197 + $0x9] sm:$0xff] %v3828
    %4018 = vst [vmem:[%s197 + $0x19] sm:$0xff] %v3831
    %4019 = vst [vmem:[%s197 + $0x21] sm:$0xff] %v3834
    %4020 = vst [vmem:[%s197 + $0x31] sm:$0xff] %v3837
    %4021 = vst [vmem:[%s197 + $0x39] sm:$0xff] %v3840
    %4022 = vst [vmem:[%s197 + $0x49] sm:$0xff] %v3843
    %4023 = vst [vmem:[%s197 + $0x51] sm:$0xff] %v3846
    %4024 = vst [vmem:[%s197 + $0x61] sm:$0xff] %v3849
    %4025 = vst [vmem:[%s197 + $0x69] sm:$0xff] %v3852
    %4026 = vst [vmem:[%s197 + $0x79] sm:$0xff] %v3855
    %4027 = vst [vmem:[%s197 + $0x81] sm:$0xff] %v3858
    %4028 = vst [vmem:[%s197 + $0x91] sm:$0xff] %v3861
    %4029 = vst [vmem:[%s197 + $0x99] sm:$0xff] %v3864
    %4030 = vst [vmem:[%s197 + $0xa9] sm:$0xff] %v3867
    %4031 = vst [vmem:[%s197 + $0xb1] sm:$0xff] %v3870
    %4032 = vst [vmem:[%s197 + $0xc1] sm:$0xff] %v3873
    %4033 = vst [vmem:[%s197 + $0xc9] sm:$0xff] %v3876
    %4034 = vst [vmem:[%s197 + $0xd9] sm:$0xff] %v3879
    %4035 = vst [vmem:[%s197 + $0xe1] sm:$0xff] %v3882
    %4036 = vst [vmem:[%s197 + $0xf1] sm:$0xff] %v3885
    %4037 = vst [vmem:[%s197 + $0xf9] sm:$0xff] %v3888
    %4038 = vst [vmem:[%s197 + $0x109] sm:$0xff] %v3891
    %4039 = vst [vmem:[%s197 + $0x111] sm:$0xff] %v3894
    %4040 = vst [vmem:[%s197 + $0x121] sm:$0xff] %v3897
    %4041 = vst [vmem:[%s197 + $0x129] sm:$0xff] %v3900
    %4042 = vst [vmem:[%s197 + $0x139] sm:$0xff] %v3903
    %4043 = vst [vmem:[%s197 + $0x141] sm:$0xff] %v3906
    %4044 = vst [vmem:[%s197 + $0x151] sm:$0xff] %v3909
    %4045 = vst [vmem:[%s197 + $0x159] sm:$0xff] %v3912
    %4046 = vst [vmem:[%s197 + $0x169] sm:$0xff] %v3915
    %4047 = vst [vmem:[%s197 + $0x171] sm:$0xff] %v3918
    %4048 = vst [vmem:[%s197 + $0x1b1] sm:$0xff] %v3921
    %4049 = vst [vmem:[%s197 + $0x1b9] sm:$0xff] %v3924
    %4050 = vst [vmem:[%s197 + $0x1c9] sm:$0xff] %v3927
    %4051 = vst [vmem:[%s197 + $0x1d1] sm:$0xff] %v3930
    %4052 = vst [vmem:[%s197 + $0x1e1] sm:$0xff] %v3933
    %4053 = vst [vmem:[%s197 + $0x1e9] sm:$0xff] %v3936
    %4054 = vst [vmem:[%s197 + $0x1f9] sm:$0xff] %v3939
    %4055 = vst [vmem:[%s197 + $0x201] sm:$0xff] %v3942
    %4056 = vst [vmem:[%s197 + $0x211] sm:$0xff] %v3945
    %4057 = vst [vmem:[%s197 + $0x219] sm:$0xff] %v3948
    %4058 = vst [vmem:[%s197 + $0x229] sm:$0xff] %v3951
    %4059 = vst [vmem:[%s197 + $0x231] sm:$0xff] %v3954
    %4060 = vst [vmem:[%s197 + $0x241] sm:$0xff] %v3957
    %4061 = vst [vmem:[%s197 + $0x249] sm:$0xff] %v3960
    %4062 = vst [vmem:[%s197 + $0x259] sm:$0xff] %v3963
    %4063 = vst [vmem:[%s197 + $0x261] sm:$0xff] %v3966
    %4064 = vst [vmem:[%s197 + $0x271] sm:$0xff] %v3969
    %4065 = vst [vmem:[%s197 + $0x279] sm:$0xff] %v3972
    %4066 = vst [vmem:[%s197 + $0x289] sm:$0xff] %v3975
    %4067 = vst [vmem:[%s197 + $0x291] sm:$0xff] %v3978
    %4068 = vst [vmem:[%s197 + $0x2a1] sm:$0xff] %v3981
    %4069 = vst [vmem:[%s197 + $0x2a9] sm:$0xff] %v3984
    %4070 = vst [vmem:[%s197 + $0x2b9] sm:$0xff] %v3987
    %4071 = vst [vmem:[%s197 + $0x2c1] sm:$0xff] %v3990
    %4072 = vst [vmem:[%s197 + $0x2d1] sm:$0xff] %v3993
    %4073 = vst [vmem:[%s197 + $0x2d9] sm:$0xff] %v3996
    %4074 = vst [vmem:[%s197 + $0x2e9] sm:$0xff] %v3999
    %4075 = vst [vmem:[%s197 + $0x2f1] sm:$0xff] %v4002
    %4076 = vst [vmem:[%s197 + $0x301] sm:$0xff] %v4005
    %4077 = vst [vmem:[%s197 + $0x309] sm:$0xff] %v4008
    %4078 = vst [vmem:[%s197 + $0x319] sm:$0xff] %v4011
    %4079 = vst [vmem:[%s197 + $0x321] sm:$0xff] %v4014
    %v4080 = vld [vmem:[#allocation2] sm:$0xff]
    %v4081 = vld [vmem:[#allocation2 + $0x8] sm:$0xff]
    %v4082 = vld [vmem:[#allocation2 + $0x18] sm:$0xff]
    %v4083 = vld [vmem:[#allocation2 + $0x20] sm:$0xff]
    %v4084 = vld [vmem:[#allocation2 + $0x30] sm:$0xff]
    %v4085 = vld [vmem:[#allocation2 + $0x38] sm:$0xff]
    %v4086 = vld [vmem:[#allocation2 + $0x48] sm:$0xff]
    %v4087 = vld [vmem:[#allocation2 + $0x50] sm:$0xff]
    %v4088 = vld [vmem:[#allocation2 + $0x60] sm:$0xff]
    %v4089 = vld [vmem:[#allocation2 + $0x68] sm:$0xff]
    %v4090 = vld [vmem:[#allocation2 + $0x78] sm:$0xff]
    %v4091 = vld [vmem:[#allocation2 + $0x80] sm:$0xff]
    %v4092 = vld [vmem:[#allocation2 + $0x90] sm:$0xff]
    %v4093 = vld [vmem:[#allocation2 + $0x98] sm:$0xff]
    %v4094 = vld [vmem:[#allocation2 + $0xa8] sm:$0xff]
    %v4095 = vld [vmem:[#allocation2 + $0xb0] sm:$0xff]
    %v4096 = vld [vmem:[#allocation2 + $0xc0] sm:$0xff]
    %v4097 = vld [vmem:[#allocation2 + $0xc8] sm:$0xff]
    %v4098 = vld [vmem:[#allocation2 + $0xd8] sm:$0xff]
    %v4099 = vld [vmem:[#allocation2 + $0xe0] sm:$0xff]
    %v4100 = vld [vmem:[#allocation2 + $0xf0] sm:$0xff]
    %v4101 = vld [vmem:[#allocation2 + $0xf8] sm:$0xff]
    %v4102 = vld [vmem:[#allocation2 + $0x108] sm:$0xff]
    %v4103 = vld [vmem:[#allocation2 + $0x110] sm:$0xff]
    %v4104 = vld [vmem:[#allocation2 + $0x120] sm:$0xff]
    %v4105 = vld [vmem:[#allocation2 + $0x128] sm:$0xff]
    %v4106 = vld [vmem:[#allocation2 + $0x138] sm:$0xff]
    %v4107 = vld [vmem:[#allocation2 + $0x140] sm:$0xff]
    %v4108 = vld [vmem:[#allocation2 + $0x150] sm:$0xff]
    %v4109 = vld [vmem:[#allocation2 + $0x158] sm:$0xff]
    %v4110 = vld [vmem:[#allocation2 + $0x168] sm:$0xff]
    %v4111 = vld [vmem:[#allocation2 + $0x170] sm:$0xff]
    %v4112 = vld [vmem:[#allocation2 + $0x1b0] sm:$0xff]
    %v4113 = vld [vmem:[#allocation2 + $0x1b8] sm:$0xff]
    %v4114 = vld [vmem:[#allocation2 + $0x1c8] sm:$0xff]
    %v4115 = vld [vmem:[#allocation2 + $0x1d0] sm:$0xff]
    %v4116 = vld [vmem:[#allocation2 + $0x1e0] sm:$0xff]
    %v4117 = vld [vmem:[#allocation2 + $0x1e8] sm:$0xff]
    %v4118 = vld [vmem:[#allocation2 + $0x1f8] sm:$0xff]
    %v4119 = vld [vmem:[#allocation2 + $0x200] sm:$0xff]
    %v4120 = vld [vmem:[#allocation2 + $0x210] sm:$0xff]
    %v4121 = vld [vmem:[#allocation2 + $0x218] sm:$0xff]
    %v4122 = vld [vmem:[#allocation2 + $0x228] sm:$0xff]
    %v4123 = vld [vmem:[#allocation2 + $0x230] sm:$0xff]
    %v4124 = vld [vmem:[#allocation2 + $0x240] sm:$0xff]
    %v4125 = vld [vmem:[#allocation2 + $0x248] sm:$0xff]
    %v4126 = vld [vmem:[#allocation2 + $0x258] sm:$0xff]
    %v4127 = vld [vmem:[#allocation2 + $0x260] sm:$0xff]
    %v4128 = vld [vmem:[#allocation2 + $0x270] sm:$0xff]
    %v4129 = vld [vmem:[#allocation2 + $0x278] sm:$0xff]
    %v4130 = vld [vmem:[#allocation2 + $0x288] sm:$0xff]
    %v4131 = vld [vmem:[#allocation2 + $0x290] sm:$0xff]
    %v4132 = vld [vmem:[#allocation2 + $0x2a0] sm:$0xff]
    %v4133 = vld [vmem:[#allocation2 + $0x2a8] sm:$0xff]
    %v4134 = vld [vmem:[#allocation2 + $0x2b8] sm:$0xff]
    %v4135 = vld [vmem:[#allocation2 + $0x2c0] sm:$0xff]
    %v4136 = vld [vmem:[#allocation2 + $0x2d0] sm:$0xff]
    %v4137 = vld [vmem:[#allocation2 + $0x2d8] sm:$0xff]
    %v4138 = vld [vmem:[#allocation2 + $0x2e8] sm:$0xff]
    %v4139 = vld [vmem:[#allocation2 + $0x2f0] sm:$0xff]
    %v4140 = vld [vmem:[#allocation2 + $0x300] sm:$0xff]
    %v4141 = vld [vmem:[#allocation2 + $0x308] sm:$0xff]
    %v4142 = vld [vmem:[#allocation2 + $0x318] sm:$0xff]
    %v4143 = vld [vmem:[#allocation2 + $0x320] sm:$0xff]
    %4144 = vst [vmem:[#allocation3] sm:$0xff] %v4080
    %4145 = vst [vmem:[#allocation3 + $0x48] sm:$0xff] %v4081
    %4146 = vst [vmem:[#allocation3 + $0x90] sm:$0xff] %v4082
    %4147 = vst [vmem:[#allocation3 + $0xd8] sm:$0xff] %v4083
    %4148 = vst [vmem:[#allocation3 + $0x120] sm:$0xff] %v4084
    %4149 = vst [vmem:[#allocation3 + $0x168] sm:$0xff] %v4085
    %4150 = vst [vmem:[#allocation3 + $0x1b0] sm:$0xff] %v4086
    %4151 = vst [vmem:[#allocation3 + $0x1f8] sm:$0xff] %v4087
    %4152 = vst [vmem:[#allocation3 + $0x240] sm:$0xff] %v4088
    %4153 = vst [vmem:[#allocation3 + $0x288] sm:$0xff] %v4089
    %4154 = vst [vmem:[#allocation3 + $0x2d0] sm:$0xff] %v4090
    %4155 = vst [vmem:[#allocation3 + $0x318] sm:$0xff] %v4091
    %4156 = vst [vmem:[#allocation3 + $0x360] sm:$0xff] %v4092
    %4157 = vst [vmem:[#allocation3 + $0x3a8] sm:$0xff] %v4093
    %4158 = vst [vmem:[#allocation3 + $0x3f0] sm:$0xff] %v4094
    %4159 = vst [vmem:[#allocation3 + $0x438] sm:$0xff] %v4095
    %4160 = vst [vmem:[#allocation3 + $0x480] sm:$0xff] %v4096
    %4161 = vst [vmem:[#allocation3 + $0x4c8] sm:$0xff] %v4097
    %4162 = vst [vmem:[#allocation3 + $0x510] sm:$0xff] %v4098
    %4163 = vst [vmem:[#allocation3 + $0x558] sm:$0xff] %v4099
    %4164 = vst [vmem:[#allocation3 + $0x5a0] sm:$0xff] %v4100
    %4165 = vst [vmem:[#allocation3 + $0x5e8] sm:$0xff] %v4101
    %4166 = vst [vmem:[#allocation3 + $0x630] sm:$0xff] %v4102
    %4167 = vst [vmem:[#allocation3 + $0x678] sm:$0xff] %v4103
    %4168 = vst [vmem:[#allocation3 + $0x6c0] sm:$0xff] %v4104
    %4169 = vst [vmem:[#allocation3 + $0x708] sm:$0xff] %v4105
    %4170 = vst [vmem:[#allocation3 + $0x750] sm:$0xff] %v4106
    %4171 = vst [vmem:[#allocation3 + $0x798] sm:$0xff] %v4107
    %4172 = vst [vmem:[#allocation3 + $0x7e0] sm:$0xff] %v4108
    %4173 = vst [vmem:[#allocation3 + $0x828] sm:$0xff] %v4109
    %4174 = vst [vmem:[#allocation3 + $0x870] sm:$0xff] %v4110
    %4175 = vst [vmem:[#allocation3 + $0x8b8] sm:$0xff] %v4111
    %4176 = vst [vmem:[#allocation3 + $0x900] sm:$0xff] %v4112
    %4177 = vst [vmem:[#allocation3 + $0x948] sm:$0xff] %v4113
    %4178 = vst [vmem:[#allocation3 + $0x990] sm:$0xff] %v4114
    %4179 = vst [vmem:[#allocation3 + $0x9d8] sm:$0xff] %v4115
    %4180 = vst [vmem:[#allocation3 + $0xa20] sm:$0xff] %v4116
    %4181 = vst [vmem:[#allocation3 + $0xa68] sm:$0xff] %v4117
    %4182 = vst [vmem:[#allocation3 + $0xab0] sm:$0xff] %v4118
    %4183 = vst [vmem:[#allocation3 + $0xaf8] sm:$0xff] %v4119
    %4184 = vst [vmem:[#allocation3 + $0xb40] sm:$0xff] %v4120
    %4185 = vst [vmem:[#allocation3 + $0xb88] sm:$0xff] %v4121
    %4186 = vst [vmem:[#allocation3 + $0xbd0] sm:$0xff] %v4122
    %4187 = vst [vmem:[#allocation3 + $0xc18] sm:$0xff] %v4123
    %4188 = vst [vmem:[#allocation3 + $0xc60] sm:$0xff] %v4124
    %4189 = vst [vmem:[#allocation3 + $0xca8] sm:$0xff] %v4125
    %4190 = vst [vmem:[#allocation3 + $0xcf0] sm:$0xff] %v4126
    %4191 = vst [vmem:[#allocation3 + $0xd38] sm:$0xff] %v4127
    %4192 = vst [vmem:[#allocation3 + $0xd80] sm:$0xff] %v4128
    %4193 = vst [vmem:[#allocation3 + $0xdc8] sm:$0xff] %v4129
    %4194 = vst [vmem:[#allocation3 + $0xe10] sm:$0xff] %v4130
    %4195 = vst [vmem:[#allocation3 + $0xe58] sm:$0xff] %v4131
    %4196 = vst [vmem:[#allocation3 + $0xea0] sm:$0xff] %v4132
    %4197 = vst [vmem:[#allocation3 + $0xee8] sm:$0xff] %v4133
    %4198 = vst [vmem:[#allocation3 + $0xf30] sm:$0xff] %v4134
    %4199 = vst [vmem:[#allocation3 + $0xf78] sm:$0xff] %v4135
    %4200 = vst [vmem:[#allocation3 + $0xfc0] sm:$0xff] %v4136
    %4201 = vst [vmem:[#allocation3 + $0x1008] sm:$0xff] %v4137
    %4202 = vst [vmem:[#allocation3 + $0x1050] sm:$0xff] %v4138
    %4203 = vst [vmem:[#allocation3 + $0x1098] sm:$0xff] %v4139
    %4204 = vst [vmem:[#allocation3 + $0x10e0] sm:$0xff] %v4140
    %4205 = vst [vmem:[#allocation3 + $0x1128] sm:$0xff] %v4141
    %4206 = vst [vmem:[#allocation3 + $0x1170] sm:$0xff] %v4142
    %4207 = vst [vmem:[#allocation3 + $0x11b8] sm:$0xff] %v4143
    %v4208 = vld [vmem:[#allocation2 + $0x1] sm:$0xff]
    %v4209 = vld [vmem:[#allocation2 + $0x9] sm:$0xff]
    %v4210 = vld [vmem:[#allocation2 + $0x19] sm:$0xff]
    %v4211 = vld [vmem:[#allocation2 + $0x21] sm:$0xff]
    %v4212 = vld [vmem:[#allocation2 + $0x31] sm:$0xff]
    %v4213 = vld [vmem:[#allocation2 + $0x39] sm:$0xff]
    %v4214 = vld [vmem:[#allocation2 + $0x49] sm:$0xff]
    %v4215 = vld [vmem:[#allocation2 + $0x51] sm:$0xff]
    %v4216 = vld [vmem:[#allocation2 + $0x61] sm:$0xff]
    %v4217 = vld [vmem:[#allocation2 + $0x69] sm:$0xff]
    %v4218 = vld [vmem:[#allocation2 + $0x79] sm:$0xff]
    %v4219 = vld [vmem:[#allocation2 + $0x81] sm:$0xff]
    %v4220 = vld [vmem:[#allocation2 + $0x91] sm:$0xff]
    %v4221 = vld [vmem:[#allocation2 + $0x99] sm:$0xff]
    %v4222 = vld [vmem:[#allocation2 + $0xa9] sm:$0xff]
    %v4223 = vld [vmem:[#allocation2 + $0xb1] sm:$0xff]
    %v4224 = vld [vmem:[#allocation2 + $0xc1] sm:$0xff]
    %v4225 = vld [vmem:[#allocation2 + $0xc9] sm:$0xff]
    %v4226 = vld [vmem:[#allocation2 + $0xd9] sm:$0xff]
    %v4227 = vld [vmem:[#allocation2 + $0xe1] sm:$0xff]
    %v4228 = vld [vmem:[#allocation2 + $0xf1] sm:$0xff]
    %v4229 = vld [vmem:[#allocation2 + $0xf9] sm:$0xff]
    %v4230 = vld [vmem:[#allocation2 + $0x109] sm:$0xff]
    %v4231 = vld [vmem:[#allocation2 + $0x111] sm:$0xff]
    %v4232 = vld [vmem:[#allocation2 + $0x121] sm:$0xff]
    %v4233 = vld [vmem:[#allocation2 + $0x129] sm:$0xff]
    %v4234 = vld [vmem:[#allocation2 + $0x139] sm:$0xff]
    %v4235 = vld [vmem:[#allocation2 + $0x141] sm:$0xff]
    %v4236 = vld [vmem:[#allocation2 + $0x151] sm:$0xff]
    %v4237 = vld [vmem:[#allocation2 + $0x159] sm:$0xff]
    %v4238 = vld [vmem:[#allocation2 + $0x169] sm:$0xff]
    %v4239 = vld [vmem:[#allocation2 + $0x171] sm:$0xff]
    %v4240 = vld [vmem:[#allocation2 + $0x1b1] sm:$0xff]
    %v4241 = vld [vmem:[#allocation2 + $0x1b9] sm:$0xff]
    %v4242 = vld [vmem:[#allocation2 + $0x1c9] sm:$0xff]
    %v4243 = vld [vmem:[#allocation2 + $0x1d1] sm:$0xff]
    %v4244 = vld [vmem:[#allocation2 + $0x1e1] sm:$0xff]
    %v4245 = vld [vmem:[#allocation2 + $0x1e9] sm:$0xff]
    %v4246 = vld [vmem:[#allocation2 + $0x1f9] sm:$0xff]
    %v4247 = vld [vmem:[#allocation2 + $0x201] sm:$0xff]
    %v4248 = vld [vmem:[#allocation2 + $0x211] sm:$0xff]
    %v4249 = vld [vmem:[#allocation2 + $0x219] sm:$0xff]
    %v4250 = vld [vmem:[#allocation2 + $0x229] sm:$0xff]
    %v4251 = vld [vmem:[#allocation2 + $0x231] sm:$0xff]
    %v4252 = vld [vmem:[#allocation2 + $0x241] sm:$0xff]
    %v4253 = vld [vmem:[#allocation2 + $0x249] sm:$0xff]
    %v4254 = vld [vmem:[#allocation2 + $0x259] sm:$0xff]
    %v4255 = vld [vmem:[#allocation2 + $0x261] sm:$0xff]
    %v4256 = vld [vmem:[#allocation2 + $0x271] sm:$0xff]
    %v4257 = vld [vmem:[#allocation2 + $0x279] sm:$0xff]
    %v4258 = vld [vmem:[#allocation2 + $0x289] sm:$0xff]
    %v4259 = vld [vmem:[#allocation2 + $0x291] sm:$0xff]
    %v4260 = vld [vmem:[#allocation2 + $0x2a1] sm:$0xff]
    %v4261 = vld [vmem:[#allocation2 + $0x2a9] sm:$0xff]
    %v4262 = vld [vmem:[#allocation2 + $0x2b9] sm:$0xff]
    %v4263 = vld [vmem:[#allocation2 + $0x2c1] sm:$0xff]
    %v4264 = vld [vmem:[#allocation2 + $0x2d1] sm:$0xff]
    %v4265 = vld [vmem:[#allocation2 + $0x2d9] sm:$0xff]
    %v4266 = vld [vmem:[#allocation2 + $0x2e9] sm:$0xff]
    %v4267 = vld [vmem:[#allocation2 + $0x2f1] sm:$0xff]
    %v4268 = vld [vmem:[#allocation2 + $0x301] sm:$0xff]
    %v4269 = vld [vmem:[#allocation2 + $0x309] sm:$0xff]
    %v4270 = vld [vmem:[#allocation2 + $0x319] sm:$0xff]
    %v4271 = vld [vmem:[#allocation2 + $0x321] sm:$0xff]
    %4272 = vst [vmem:[#allocation3 + $0x8] sm:$0xff] %v4208
    %4273 = vst [vmem:[#allocation3 + $0x50] sm:$0xff] %v4209
    %4274 = vst [vmem:[#allocation3 + $0x98] sm:$0xff] %v4210
    %4275 = vst [vmem:[#allocation3 + $0xe0] sm:$0xff] %v4211
    %4276 = vst [vmem:[#allocation3 + $0x128] sm:$0xff] %v4212
    %4277 = vst [vmem:[#allocation3 + $0x170] sm:$0xff] %v4213
    %4278 = vst [vmem:[#allocation3 + $0x1b8] sm:$0xff] %v4214
    %4279 = vst [vmem:[#allocation3 + $0x200] sm:$0xff] %v4215
    %4280 = vst [vmem:[#allocation3 + $0x248] sm:$0xff] %v4216
    %4281 = vst [vmem:[#allocation3 + $0x290] sm:$0xff] %v4217
    %4282 = vst [vmem:[#allocation3 + $0x2d8] sm:$0xff] %v4218
    %4283 = vst [vmem:[#allocation3 + $0x320] sm:$0xff] %v4219
    %4284 = vst [vmem:[#allocation3 + $0x368] sm:$0xff] %v4220
    %4285 = vst [vmem:[#allocation3 + $0x3b0] sm:$0xff] %v4221
    %4286 = vst [vmem:[#allocation3 + $0x3f8] sm:$0xff] %v4222
    %4287 = vst [vmem:[#allocation3 + $0x440] sm:$0xff] %v4223
    %4288 = vst [vmem:[#allocation3 + $0x488] sm:$0xff] %v4224
    %4289 = vst [vmem:[#allocation3 + $0x4d0] sm:$0xff] %v4225
    %4290 = vst [vmem:[#allocation3 + $0x518] sm:$0xff] %v4226
    %4291 = vst [vmem:[#allocation3 + $0x560] sm:$0xff] %v4227
    %4292 = vst [vmem:[#allocation3 + $0x5a8] sm:$0xff] %v4228
    %4293 = vst [vmem:[#allocation3 + $0x5f0] sm:$0xff] %v4229
    %4294 = vst [vmem:[#allocation3 + $0x638] sm:$0xff] %v4230
    %4295 = vst [vmem:[#allocation3 + $0x680] sm:$0xff] %v4231
    %4296 = vst [vmem:[#allocation3 + $0x6c8] sm:$0xff] %v4232
    %4297 = vst [vmem:[#allocation3 + $0x710] sm:$0xff] %v4233
    %4298 = vst [vmem:[#allocation3 + $0x758] sm:$0xff] %v4234
    %4299 = vst [vmem:[#allocation3 + $0x7a0] sm:$0xff] %v4235
    %4300 = vst [vmem:[#allocation3 + $0x7e8] sm:$0xff] %v4236
    %4301 = vst [vmem:[#allocation3 + $0x830] sm:$0xff] %v4237
    %4302 = vst [vmem:[#allocation3 + $0x878] sm:$0xff] %v4238
    %4303 = vst [vmem:[#allocation3 + $0x8c0] sm:$0xff] %v4239
    %4304 = vst [vmem:[#allocation3 + $0x908] sm:$0xff] %v4240
    %4305 = vst [vmem:[#allocation3 + $0x950] sm:$0xff] %v4241
    %4306 = vst [vmem:[#allocation3 + $0x998] sm:$0xff] %v4242
    %4307 = vst [vmem:[#allocation3 + $0x9e0] sm:$0xff] %v4243
    %4308 = vst [vmem:[#allocation3 + $0xa28] sm:$0xff] %v4244
    %4309 = vst [vmem:[#allocation3 + $0xa70] sm:$0xff] %v4245
    %4310 = vst [vmem:[#allocation3 + $0xab8] sm:$0xff] %v4246
    %4311 = vst [vmem:[#allocation3 + $0xb00] sm:$0xff] %v4247
    %4312 = vst [vmem:[#allocation3 + $0xb48] sm:$0xff] %v4248
    %4313 = vst [vmem:[#allocation3 + $0xb90] sm:$0xff] %v4249
    %4314 = vst [vmem:[#allocation3 + $0xbd8] sm:$0xff] %v4250
    %4315 = vst [vmem:[#allocation3 + $0xc20] sm:$0xff] %v4251
    %4316 = vst [vmem:[#allocation3 + $0xc68] sm:$0xff] %v4252
    %4317 = vst [vmem:[#allocation3 + $0xcb0] sm:$0xff] %v4253
    %4318 = vst [vmem:[#allocation3 + $0xcf8] sm:$0xff] %v4254
    %4319 = vst [vmem:[#allocation3 + $0xd40] sm:$0xff] %v4255
    %4320 = vst [vmem:[#allocation3 + $0xd88] sm:$0xff] %v4256
    %4321 = vst [vmem:[#allocation3 + $0xdd0] sm:$0xff] %v4257
    %4322 = vst [vmem:[#allocation3 + $0xe18] sm:$0xff] %v4258
    %4323 = vst [vmem:[#allocation3 + $0xe60] sm:$0xff] %v4259
    %4324 = vst [vmem:[#allocation3 + $0xea8] sm:$0xff] %v4260
    %4325 = vst [vmem:[#allocation3 + $0xef0] sm:$0xff] %v4261
    %4326 = vst [vmem:[#allocation3 + $0xf38] sm:$0xff] %v4262
    %4327 = vst [vmem:[#allocation3 + $0xf80] sm:$0xff] %v4263
    %4328 = vst [vmem:[#allocation3 + $0xfc8] sm:$0xff] %v4264
    %4329 = vst [vmem:[#allocation3 + $0x1010] sm:$0xff] %v4265
    %4330 = vst [vmem:[#allocation3 + $0x1058] sm:$0xff] %v4266
    %4331 = vst [vmem:[#allocation3 + $0x10a0] sm:$0xff] %v4267
    %4332 = vst [vmem:[#allocation3 + $0x10e8] sm:$0xff] %v4268
    %4333 = vst [vmem:[#allocation3 + $0x1130] sm:$0xff] %v4269
    %4334 = vst [vmem:[#allocation3 + $0x1178] sm:$0xff] %v4270
    %4335 = vst [vmem:[#allocation3 + $0x11c0] sm:$0xff] %v4271
    %v4336 = vld [vmem:[#allocation2 + $0x2] sm:$0xff]
    %v4337 = vld [vmem:[#allocation2 + $0xa] sm:$0xff]
    %v4338 = vld [vmem:[#allocation2 + $0x1a] sm:$0xff]
    %v4339 = vld [vmem:[#allocation2 + $0x22] sm:$0xff]
    %v4340 = vld [vmem:[#allocation2 + $0x32] sm:$0xff]
    %v4341 = vld [vmem:[#allocation2 + $0x3a] sm:$0xff]
    %v4342 = vld [vmem:[#allocation2 + $0x4a] sm:$0xff]
    %v4343 = vld [vmem:[#allocation2 + $0x52] sm:$0xff]
    %v4344 = vld [vmem:[#allocation2 + $0x62] sm:$0xff]
    %v4345 = vld [vmem:[#allocation2 + $0x6a] sm:$0xff]
    %v4346 = vld [vmem:[#allocation2 + $0x7a] sm:$0xff]
    %v4347 = vld [vmem:[#allocation2 + $0x82] sm:$0xff]
    %v4348 = vld [vmem:[#allocation2 + $0x92] sm:$0xff]
    %v4349 = vld [vmem:[#allocation2 + $0x9a] sm:$0xff]
    %v4350 = vld [vmem:[#allocation2 + $0xaa] sm:$0xff]
    %v4351 = vld [vmem:[#allocation2 + $0xb2] sm:$0xff]
    %v4352 = vld [vmem:[#allocation2 + $0xc2] sm:$0xff]
    %v4353 = vld [vmem:[#allocation2 + $0xca] sm:$0xff]
    %v4354 = vld [vmem:[#allocation2 + $0xda] sm:$0xff]
    %v4355 = vld [vmem:[#allocation2 + $0xe2] sm:$0xff]
    %v4356 = vld [vmem:[#allocation2 + $0xf2] sm:$0xff]
    %v4357 = vld [vmem:[#allocation2 + $0xfa] sm:$0xff]
    %v4358 = vld [vmem:[#allocation2 + $0x10a] sm:$0xff]
    %v4359 = vld [vmem:[#allocation2 + $0x112] sm:$0xff]
    %v4360 = vld [vmem:[#allocation2 + $0x122] sm:$0xff]
    %v4361 = vld [vmem:[#allocation2 + $0x12a] sm:$0xff]
    %v4362 = vld [vmem:[#allocation2 + $0x13a] sm:$0xff]
    %v4363 = vld [vmem:[#allocation2 + $0x142] sm:$0xff]
    %v4364 = vld [vmem:[#allocation2 + $0x152] sm:$0xff]
    %v4365 = vld [vmem:[#allocation2 + $0x15a] sm:$0xff]
    %v4366 = vld [vmem:[#allocation2 + $0x16a] sm:$0xff]
    %v4367 = vld [vmem:[#allocation2 + $0x172] sm:$0xff]
    %v4368 = vld [vmem:[#allocation2 + $0x1b2] sm:$0xff]
    %v4369 = vld [vmem:[#allocation2 + $0x1ba] sm:$0xff]
    %v4370 = vld [vmem:[#allocation2 + $0x1ca] sm:$0xff]
    %v4371 = vld [vmem:[#allocation2 + $0x1d2] sm:$0xff]
    %v4372 = vld [vmem:[#allocation2 + $0x1e2] sm:$0xff]
    %v4373 = vld [vmem:[#allocation2 + $0x1ea] sm:$0xff]
    %v4374 = vld [vmem:[#allocation2 + $0x1fa] sm:$0xff]
    %v4375 = vld [vmem:[#allocation2 + $0x202] sm:$0xff]
    %v4376 = vld [vmem:[#allocation2 + $0x212] sm:$0xff]
    %v4377 = vld [vmem:[#allocation2 + $0x21a] sm:$0xff]
    %v4378 = vld [vmem:[#allocation2 + $0x22a] sm:$0xff]
    %v4379 = vld [vmem:[#allocation2 + $0x232] sm:$0xff]
    %v4380 = vld [vmem:[#allocation2 + $0x242] sm:$0xff]
    %v4381 = vld [vmem:[#allocation2 + $0x24a] sm:$0xff]
    %v4382 = vld [vmem:[#allocation2 + $0x25a] sm:$0xff]
    %v4383 = vld [vmem:[#allocation2 + $0x262] sm:$0xff]
    %v4384 = vld [vmem:[#allocation2 + $0x272] sm:$0xff]
    %v4385 = vld [vmem:[#allocation2 + $0x27a] sm:$0xff]
    %v4386 = vld [vmem:[#allocation2 + $0x28a] sm:$0xff]
    %v4387 = vld [vmem:[#allocation2 + $0x292] sm:$0xff]
    %v4388 = vld [vmem:[#allocation2 + $0x2a2] sm:$0xff]
    %v4389 = vld [vmem:[#allocation2 + $0x2aa] sm:$0xff]
    %v4390 = vld [vmem:[#allocation2 + $0x2ba] sm:$0xff]
    %v4391 = vld [vmem:[#allocation2 + $0x2c2] sm:$0xff]
    %v4392 = vld [vmem:[#allocation2 + $0x2d2] sm:$0xff]
    %v4393 = vld [vmem:[#allocation2 + $0x2da] sm:$0xff]
    %v4394 = vld [vmem:[#allocation2 + $0x2ea] sm:$0xff]
    %v4395 = vld [vmem:[#allocation2 + $0x2f2] sm:$0xff]
    %v4396 = vld [vmem:[#allocation2 + $0x302] sm:$0xff]
    %v4397 = vld [vmem:[#allocation2 + $0x30a] sm:$0xff]
    %v4398 = vld [vmem:[#allocation2 + $0x31a] sm:$0xff]
    %v4399 = vld [vmem:[#allocation2 + $0x322] sm:$0xff]
    %4400 = vst [vmem:[#allocation3 + $0x10] sm:$0xff] %v4336
    %4401 = vst [vmem:[#allocation3 + $0x58] sm:$0xff] %v4337
    %4402 = vst [vmem:[#allocation3 + $0xa0] sm:$0xff] %v4338
    %4403 = vst [vmem:[#allocation3 + $0xe8] sm:$0xff] %v4339
    %4404 = vst [vmem:[#allocation3 + $0x130] sm:$0xff] %v4340
    %4405 = vst [vmem:[#allocation3 + $0x178] sm:$0xff] %v4341
    %4406 = vst [vmem:[#allocation3 + $0x1c0] sm:$0xff] %v4342
    %4407 = vst [vmem:[#allocation3 + $0x208] sm:$0xff] %v4343
    %4408 = vst [vmem:[#allocation3 + $0x250] sm:$0xff] %v4344
    %4409 = vst [vmem:[#allocation3 + $0x298] sm:$0xff] %v4345
    %4410 = vst [vmem:[#allocation3 + $0x2e0] sm:$0xff] %v4346
    %4411 = vst [vmem:[#allocation3 + $0x328] sm:$0xff] %v4347
    %4412 = vst [vmem:[#allocation3 + $0x370] sm:$0xff] %v4348
    %4413 = vst [vmem:[#allocation3 + $0x3b8] sm:$0xff] %v4349
    %4414 = vst [vmem:[#allocation3 + $0x400] sm:$0xff] %v4350
    %4415 = vst [vmem:[#allocation3 + $0x448] sm:$0xff] %v4351
    %4416 = vst [vmem:[#allocation3 + $0x490] sm:$0xff] %v4352
    %4417 = vst [vmem:[#allocation3 + $0x4d8] sm:$0xff] %v4353
    %4418 = vst [vmem:[#allocation3 + $0x520] sm:$0xff] %v4354
    %4419 = vst [vmem:[#allocation3 + $0x568] sm:$0xff] %v4355
    %4420 = vst [vmem:[#allocation3 + $0x5b0] sm:$0xff] %v4356
    %4421 = vst [vmem:[#allocation3 + $0x5f8] sm:$0xff] %v4357
    %4422 = vst [vmem:[#allocation3 + $0x640] sm:$0xff] %v4358
    %4423 = vst [vmem:[#allocation3 + $0x688] sm:$0xff] %v4359
    %4424 = vst [vmem:[#allocation3 + $0x6d0] sm:$0xff] %v4360
    %4425 = vst [vmem:[#allocation3 + $0x718] sm:$0xff] %v4361
    %4426 = vst [vmem:[#allocation3 + $0x760] sm:$0xff] %v4362
    %4427 = vst [vmem:[#allocation3 + $0x7a8] sm:$0xff] %v4363
    %4428 = vst [vmem:[#allocation3 + $0x7f0] sm:$0xff] %v4364
    %4429 = vst [vmem:[#allocation3 + $0x838] sm:$0xff] %v4365
    %4430 = vst [vmem:[#allocation3 + $0x880] sm:$0xff] %v4366
    %4431 = vst [vmem:[#allocation3 + $0x8c8] sm:$0xff] %v4367
    %4432 = vst [vmem:[#allocation3 + $0x910] sm:$0xff] %v4368
    %4433 = vst [vmem:[#allocation3 + $0x958] sm:$0xff] %v4369
    %4434 = vst [vmem:[#allocation3 + $0x9a0] sm:$0xff] %v4370
    %4435 = vst [vmem:[#allocation3 + $0x9e8] sm:$0xff] %v4371
    %4436 = vst [vmem:[#allocation3 + $0xa30] sm:$0xff] %v4372
    %4437 = vst [vmem:[#allocation3 + $0xa78] sm:$0xff] %v4373
    %4438 = vst [vmem:[#allocation3 + $0xac0] sm:$0xff] %v4374
    %4439 = vst [vmem:[#allocation3 + $0xb08] sm:$0xff] %v4375
    %4440 = vst [vmem:[#allocation3 + $0xb50] sm:$0xff] %v4376
    %4441 = vst [vmem:[#allocation3 + $0xb98] sm:$0xff] %v4377
    %4442 = vst [vmem:[#allocation3 + $0xbe0] sm:$0xff] %v4378
    %4443 = vst [vmem:[#allocation3 + $0xc28] sm:$0xff] %v4379
    %4444 = vst [vmem:[#allocation3 + $0xc70] sm:$0xff] %v4380
    %4445 = vst [vmem:[#allocation3 + $0xcb8] sm:$0xff] %v4381
    %4446 = vst [vmem:[#allocation3 + $0xd00] sm:$0xff] %v4382
    %4447 = vst [vmem:[#allocation3 + $0xd48] sm:$0xff] %v4383
    %4448 = vst [vmem:[#allocation3 + $0xd90] sm:$0xff] %v4384
    %4449 = vst [vmem:[#allocation3 + $0xdd8] sm:$0xff] %v4385
    %4450 = vst [vmem:[#allocation3 + $0xe20] sm:$0xff] %v4386
    %4451 = vst [vmem:[#allocation3 + $0xe68] sm:$0xff] %v4387
    %4452 = vst [vmem:[#allocation3 + $0xeb0] sm:$0xff] %v4388
    %4453 = vst [vmem:[#allocation3 + $0xef8] sm:$0xff] %v4389
    %4454 = vst [vmem:[#allocation3 + $0xf40] sm:$0xff] %v4390
    %4455 = vst [vmem:[#allocation3 + $0xf88] sm:$0xff] %v4391
    %4456 = vst [vmem:[#allocation3 + $0xfd0] sm:$0xff] %v4392
    %4457 = vst [vmem:[#allocation3 + $0x1018] sm:$0xff] %v4393
    %4458 = vst [vmem:[#allocation3 + $0x1060] sm:$0xff] %v4394
    %4459 = vst [vmem:[#allocation3 + $0x10a8] sm:$0xff] %v4395
    %4460 = vst [vmem:[#allocation3 + $0x10f0] sm:$0xff] %v4396
    %4461 = vst [vmem:[#allocation3 + $0x1138] sm:$0xff] %v4397
    %4462 = vst [vmem:[#allocation3 + $0x1180] sm:$0xff] %v4398
    %4463 = vst [vmem:[#allocation3 + $0x11c8] sm:$0xff] %v4399
    %v4464 = vld [vmem:[%s197] sm:$0xff]
    %v4465 = vld [vmem:[%s197 + $0x8] sm:$0xff]
    %v4466 = vld [vmem:[%s197 + $0x18] sm:$0xff]
    %v4467 = vld [vmem:[%s197 + $0x20] sm:$0xff]
    %v4468 = vld [vmem:[%s197 + $0x30] sm:$0xff]
    %v4469 = vld [vmem:[%s197 + $0x38] sm:$0xff]
    %v4470 = vld [vmem:[%s197 + $0x48] sm:$0xff]
    %v4471 = vld [vmem:[%s197 + $0x50] sm:$0xff]
    %v4472 = vld [vmem:[%s197 + $0x60] sm:$0xff]
    %v4473 = vld [vmem:[%s197 + $0x68] sm:$0xff]
    %v4474 = vld [vmem:[%s197 + $0x78] sm:$0xff]
    %v4475 = vld [vmem:[%s197 + $0x80] sm:$0xff]
    %v4476 = vld [vmem:[%s197 + $0x90] sm:$0xff]
    %v4477 = vld [vmem:[%s197 + $0x98] sm:$0xff]
    %v4478 = vld [vmem:[%s197 + $0xa8] sm:$0xff]
    %v4479 = vld [vmem:[%s197 + $0xb0] sm:$0xff]
    %v4480 = vld [vmem:[%s197 + $0xc0] sm:$0xff]
    %v4481 = vld [vmem:[%s197 + $0xc8] sm:$0xff]
    %v4482 = vld [vmem:[%s197 + $0xd8] sm:$0xff]
    %v4483 = vld [vmem:[%s197 + $0xe0] sm:$0xff]
    %v4484 = vld [vmem:[%s197 + $0xf0] sm:$0xff]
    %v4485 = vld [vmem:[%s197 + $0xf8] sm:$0xff]
    %v4486 = vld [vmem:[%s197 + $0x108] sm:$0xff]
    %v4487 = vld [vmem:[%s197 + $0x110] sm:$0xff]
    %v4488 = vld [vmem:[%s197 + $0x120] sm:$0xff]
    %v4489 = vld [vmem:[%s197 + $0x128] sm:$0xff]
    %v4490 = vld [vmem:[%s197 + $0x138] sm:$0xff]
    %v4491 = vld [vmem:[%s197 + $0x140] sm:$0xff]
    %v4492 = vld [vmem:[%s197 + $0x150] sm:$0xff]
    %v4493 = vld [vmem:[%s197 + $0x158] sm:$0xff]
    %v4494 = vld [vmem:[%s197 + $0x168] sm:$0xff]
    %v4495 = vld [vmem:[%s197 + $0x170] sm:$0xff]
    %v4496 = vld [vmem:[%s197 + $0x1b0] sm:$0xff]
    %v4497 = vld [vmem:[%s197 + $0x1b8] sm:$0xff]
    %v4498 = vld [vmem:[%s197 + $0x1c8] sm:$0xff]
    %v4499 = vld [vmem:[%s197 + $0x1d0] sm:$0xff]
    %v4500 = vld [vmem:[%s197 + $0x1e0] sm:$0xff]
    %v4501 = vld [vmem:[%s197 + $0x1e8] sm:$0xff]
    %v4502 = vld [vmem:[%s197 + $0x1f8] sm:$0xff]
    %v4503 = vld [vmem:[%s197 + $0x200] sm:$0xff]
    %v4504 = vld [vmem:[%s197 + $0x210] sm:$0xff]
    %v4505 = vld [vmem:[%s197 + $0x218] sm:$0xff]
    %v4506 = vld [vmem:[%s197 + $0x228] sm:$0xff]
    %v4507 = vld [vmem:[%s197 + $0x230] sm:$0xff]
    %v4508 = vld [vmem:[%s197 + $0x240] sm:$0xff]
    %v4509 = vld [vmem:[%s197 + $0x248] sm:$0xff]
    %v4510 = vld [vmem:[%s197 + $0x258] sm:$0xff]
    %v4511 = vld [vmem:[%s197 + $0x260] sm:$0xff]
    %v4512 = vld [vmem:[%s197 + $0x270] sm:$0xff]
    %v4513 = vld [vmem:[%s197 + $0x278] sm:$0xff]
    %v4514 = vld [vmem:[%s197 + $0x288] sm:$0xff]
    %v4515 = vld [vmem:[%s197 + $0x290] sm:$0xff]
    %v4516 = vld [vmem:[%s197 + $0x2a0] sm:$0xff]
    %v4517 = vld [vmem:[%s197 + $0x2a8] sm:$0xff]
    %v4518 = vld [vmem:[%s197 + $0x2b8] sm:$0xff]
    %v4519 = vld [vmem:[%s197 + $0x2c0] sm:$0xff]
    %v4520 = vld [vmem:[%s197 + $0x2d0] sm:$0xff]
    %v4521 = vld [vmem:[%s197 + $0x2d8] sm:$0xff]
    %v4522 = vld [vmem:[%s197 + $0x2e8] sm:$0xff]
    %v4523 = vld [vmem:[%s197 + $0x2f0] sm:$0xff]
    %v4524 = vld [vmem:[%s197 + $0x300] sm:$0xff]
    %v4525 = vld [vmem:[%s197 + $0x308] sm:$0xff]
    %v4526 = vld [vmem:[%s197 + $0x318] sm:$0xff]
    %v4527 = vld [vmem:[%s197 + $0x320] sm:$0xff]
    %4528 = vst [vmem:[#allocation3 + $0x18] sm:$0xff] %v4464
    %4529 = vst [vmem:[#allocation3 + $0x60] sm:$0xff] %v4465
    %4530 = vst [vmem:[#allocation3 + $0xa8] sm:$0xff] %v4466
    %4531 = vst [vmem:[#allocation3 + $0xf0] sm:$0xff] %v4467
    %4532 = vst [vmem:[#allocation3 + $0x138] sm:$0xff] %v4468
    %4533 = vst [vmem:[#allocation3 + $0x180] sm:$0xff] %v4469
    %4534 = vst [vmem:[#allocation3 + $0x1c8] sm:$0xff] %v4470
    %4535 = vst [vmem:[#allocation3 + $0x210] sm:$0xff] %v4471
    %4536 = vst [vmem:[#allocation3 + $0x258] sm:$0xff] %v4472
    %4537 = vst [vmem:[#allocation3 + $0x2a0] sm:$0xff] %v4473
    %4538 = vst [vmem:[#allocation3 + $0x2e8] sm:$0xff] %v4474
    %4539 = vst [vmem:[#allocation3 + $0x330] sm:$0xff] %v4475
    %4540 = vst [vmem:[#allocation3 + $0x378] sm:$0xff] %v4476
    %4541 = vst [vmem:[#allocation3 + $0x3c0] sm:$0xff] %v4477
    %4542 = vst [vmem:[#allocation3 + $0x408] sm:$0xff] %v4478
    %4543 = vst [vmem:[#allocation3 + $0x450] sm:$0xff] %v4479
    %4544 = vst [vmem:[#allocation3 + $0x498] sm:$0xff] %v4480
    %4545 = vst [vmem:[#allocation3 + $0x4e0] sm:$0xff] %v4481
    %4546 = vst [vmem:[#allocation3 + $0x528] sm:$0xff] %v4482
    %4547 = vst [vmem:[#allocation3 + $0x570] sm:$0xff] %v4483
    %4548 = vst [vmem:[#allocation3 + $0x5b8] sm:$0xff] %v4484
    %4549 = vst [vmem:[#allocation3 + $0x600] sm:$0xff] %v4485
    %4550 = vst [vmem:[#allocation3 + $0x648] sm:$0xff] %v4486
    %4551 = vst [vmem:[#allocation3 + $0x690] sm:$0xff] %v4487
    %4552 = vst [vmem:[#allocation3 + $0x6d8] sm:$0xff] %v4488
    %4553 = vst [vmem:[#allocation3 + $0x720] sm:$0xff] %v4489
    %4554 = vst [vmem:[#allocation3 + $0x768] sm:$0xff] %v4490
    %4555 = vst [vmem:[#allocation3 + $0x7b0] sm:$0xff] %v4491
    %4556 = vst [vmem:[#allocation3 + $0x7f8] sm:$0xff] %v4492
    %4557 = vst [vmem:[#allocation3 + $0x840] sm:$0xff] %v4493
    %4558 = vst [vmem:[#allocation3 + $0x888] sm:$0xff] %v4494
    %4559 = vst [vmem:[#allocation3 + $0x8d0] sm:$0xff] %v4495
    %4560 = vst [vmem:[#allocation3 + $0x918] sm:$0xff] %v4496
    %4561 = vst [vmem:[#allocation3 + $0x960] sm:$0xff] %v4497
    %4562 = vst [vmem:[#allocation3 + $0x9a8] sm:$0xff] %v4498
    %4563 = vst [vmem:[#allocation3 + $0x9f0] sm:$0xff] %v4499
    %4564 = vst [vmem:[#allocation3 + $0xa38] sm:$0xff] %v4500
    %4565 = vst [vmem:[#allocation3 + $0xa80] sm:$0xff] %v4501
    %4566 = vst [vmem:[#allocation3 + $0xac8] sm:$0xff] %v4502
    %4567 = vst [vmem:[#allocation3 + $0xb10] sm:$0xff] %v4503
    %4568 = vst [vmem:[#allocation3 + $0xb58] sm:$0xff] %v4504
    %4569 = vst [vmem:[#allocation3 + $0xba0] sm:$0xff] %v4505
    %4570 = vst [vmem:[#allocation3 + $0xbe8] sm:$0xff] %v4506
    %4571 = vst [vmem:[#allocation3 + $0xc30] sm:$0xff] %v4507
    %4572 = vst [vmem:[#allocation3 + $0xc78] sm:$0xff] %v4508
    %4573 = vst [vmem:[#allocation3 + $0xcc0] sm:$0xff] %v4509
    %4574 = vst [vmem:[#allocation3 + $0xd08] sm:$0xff] %v4510
    %4575 = vst [vmem:[#allocation3 + $0xd50] sm:$0xff] %v4511
    %4576 = vst [vmem:[#allocation3 + $0xd98] sm:$0xff] %v4512
    %4577 = vst [vmem:[#allocation3 + $0xde0] sm:$0xff] %v4513
    %4578 = vst [vmem:[#allocation3 + $0xe28] sm:$0xff] %v4514
    %4579 = vst [vmem:[#allocation3 + $0xe70] sm:$0xff] %v4515
    %4580 = vst [vmem:[#allocation3 + $0xeb8] sm:$0xff] %v4516
    %4581 = vst [vmem:[#allocation3 + $0xf00] sm:$0xff] %v4517
    %4582 = vst [vmem:[#allocation3 + $0xf48] sm:$0xff] %v4518
    %4583 = vst [vmem:[#allocation3 + $0xf90] sm:$0xff] %v4519
    %4584 = vst [vmem:[#allocation3 + $0xfd8] sm:$0xff] %v4520
    %4585 = vst [vmem:[#allocation3 + $0x1020] sm:$0xff] %v4521
    %4586 = vst [vmem:[#allocation3 + $0x1068] sm:$0xff] %v4522
    %4587 = vst [vmem:[#allocation3 + $0x10b0] sm:$0xff] %v4523
    %4588 = vst [vmem:[#allocation3 + $0x10f8] sm:$0xff] %v4524
    %4589 = vst [vmem:[#allocation3 + $0x1140] sm:$0xff] %v4525
    %4590 = vst [vmem:[#allocation3 + $0x1188] sm:$0xff] %v4526
    %4591 = vst [vmem:[#allocation3 + $0x11d0] sm:$0xff] %v4527
    %v4592 = vld [vmem:[%s197 + $0x1] sm:$0xff]
    %v4593 = vld [vmem:[%s197 + $0x9] sm:$0xff]
    %v4594 = vld [vmem:[%s197 + $0x19] sm:$0xff]
    %v4595 = vld [vmem:[%s197 + $0x21] sm:$0xff]
    %v4596 = vld [vmem:[%s197 + $0x31] sm:$0xff]
    %v4597 = vld [vmem:[%s197 + $0x39] sm:$0xff]
    %v4598 = vld [vmem:[%s197 + $0x49] sm:$0xff]
    %v4599 = vld [vmem:[%s197 + $0x51] sm:$0xff]
    %v4600 = vld [vmem:[%s197 + $0x61] sm:$0xff]
    %v4601 = vld [vmem:[%s197 + $0x69] sm:$0xff]
    %v4602 = vld [vmem:[%s197 + $0x79] sm:$0xff]
    %v4603 = vld [vmem:[%s197 + $0x81] sm:$0xff]
    %v4604 = vld [vmem:[%s197 + $0x91] sm:$0xff]
    %v4605 = vld [vmem:[%s197 + $0x99] sm:$0xff]
    %v4606 = vld [vmem:[%s197 + $0xa9] sm:$0xff]
    %v4607 = vld [vmem:[%s197 + $0xb1] sm:$0xff]
    %v4608 = vld [vmem:[%s197 + $0xc1] sm:$0xff]
    %v4609 = vld [vmem:[%s197 + $0xc9] sm:$0xff]
    %v4610 = vld [vmem:[%s197 + $0xd9] sm:$0xff]
    %v4611 = vld [vmem:[%s197 + $0xe1] sm:$0xff]
    %v4612 = vld [vmem:[%s197 + $0xf1] sm:$0xff]
    %v4613 = vld [vmem:[%s197 + $0xf9] sm:$0xff]
    %v4614 = vld [vmem:[%s197 + $0x109] sm:$0xff]
    %v4615 = vld [vmem:[%s197 + $0x111] sm:$0xff]
    %v4616 = vld [vmem:[%s197 + $0x121] sm:$0xff]
    %v4617 = vld [vmem:[%s197 + $0x129] sm:$0xff]
    %v4618 = vld [vmem:[%s197 + $0x139] sm:$0xff]
    %v4619 = vld [vmem:[%s197 + $0x141] sm:$0xff]
    %v4620 = vld [vmem:[%s197 + $0x151] sm:$0xff]
    %v4621 = vld [vmem:[%s197 + $0x159] sm:$0xff]
    %v4622 = vld [vmem:[%s197 + $0x169] sm:$0xff]
    %v4623 = vld [vmem:[%s197 + $0x171] sm:$0xff]
    %v4624 = vld [vmem:[%s197 + $0x1b1] sm:$0xff]
    %v4625 = vld [vmem:[%s197 + $0x1b9] sm:$0xff]
    %v4626 = vld [vmem:[%s197 + $0x1c9] sm:$0xff]
    %v4627 = vld [vmem:[%s197 + $0x1d1] sm:$0xff]
    %v4628 = vld [vmem:[%s197 + $0x1e1] sm:$0xff]
    %v4629 = vld [vmem:[%s197 + $0x1e9] sm:$0xff]
    %v4630 = vld [vmem:[%s197 + $0x1f9] sm:$0xff]
    %v4631 = vld [vmem:[%s197 + $0x201] sm:$0xff]
    %v4632 = vld [vmem:[%s197 + $0x211] sm:$0xff]
    %v4633 = vld [vmem:[%s197 + $0x219] sm:$0xff]
    %v4634 = vld [vmem:[%s197 + $0x229] sm:$0xff]
    %v4635 = vld [vmem:[%s197 + $0x231] sm:$0xff]
    %v4636 = vld [vmem:[%s197 + $0x241] sm:$0xff]
    %v4637 = vld [vmem:[%s197 + $0x249] sm:$0xff]
    %v4638 = vld [vmem:[%s197 + $0x259] sm:$0xff]
    %v4639 = vld [vmem:[%s197 + $0x261] sm:$0xff]
    %v4640 = vld [vmem:[%s197 + $0x271] sm:$0xff]
    %v4641 = vld [vmem:[%s197 + $0x279] sm:$0xff]
    %v4642 = vld [vmem:[%s197 + $0x289] sm:$0xff]
    %v4643 = vld [vmem:[%s197 + $0x291] sm:$0xff]
    %v4644 = vld [vmem:[%s197 + $0x2a1] sm:$0xff]
    %v4645 = vld [vmem:[%s197 + $0x2a9] sm:$0xff]
    %v4646 = vld [vmem:[%s197 + $0x2b9] sm:$0xff]
    %v4647 = vld [vmem:[%s197 + $0x2c1] sm:$0xff]
    %v4648 = vld [vmem:[%s197 + $0x2d1] sm:$0xff]
    %v4649 = vld [vmem:[%s197 + $0x2d9] sm:$0xff]
    %v4650 = vld [vmem:[%s197 + $0x2e9] sm:$0xff]
    %v4651 = vld [vmem:[%s197 + $0x2f1] sm:$0xff]
    %v4652 = vld [vmem:[%s197 + $0x301] sm:$0xff]
    %v4653 = vld [vmem:[%s197 + $0x309] sm:$0xff]
    %v4654 = vld [vmem:[%s197 + $0x319] sm:$0xff]
    %v4655 = vld [vmem:[%s197 + $0x321] sm:$0xff]
    %4656 = vst [vmem:[#allocation3 + $0x20] sm:$0xff] %v4592
    %4657 = vst [vmem:[#allocation3 + $0x68] sm:$0xff] %v4593
    %4658 = vst [vmem:[#allocation3 + $0xb0] sm:$0xff] %v4594
    %4659 = vst [vmem:[#allocation3 + $0xf8] sm:$0xff] %v4595
    %4660 = vst [vmem:[#allocation3 + $0x140] sm:$0xff] %v4596
    %4661 = vst [vmem:[#allocation3 + $0x188] sm:$0xff] %v4597
    %4662 = vst [vmem:[#allocation3 + $0x1d0] sm:$0xff] %v4598
    %4663 = vst [vmem:[#allocation3 + $0x218] sm:$0xff] %v4599
    %4664 = vst [vmem:[#allocation3 + $0x260] sm:$0xff] %v4600
    %4665 = vst [vmem:[#allocation3 + $0x2a8] sm:$0xff] %v4601
    %4666 = vst [vmem:[#allocation3 + $0x2f0] sm:$0xff] %v4602
    %4667 = vst [vmem:[#allocation3 + $0x338] sm:$0xff] %v4603
    %4668 = vst [vmem:[#allocation3 + $0x380] sm:$0xff] %v4604
    %4669 = vst [vmem:[#allocation3 + $0x3c8] sm:$0xff] %v4605
    %4670 = vst [vmem:[#allocation3 + $0x410] sm:$0xff] %v4606
    %4671 = vst [vmem:[#allocation3 + $0x458] sm:$0xff] %v4607
    %4672 = vst [vmem:[#allocation3 + $0x4a0] sm:$0xff] %v4608
    %4673 = vst [vmem:[#allocation3 + $0x4e8] sm:$0xff] %v4609
    %4674 = vst [vmem:[#allocation3 + $0x530] sm:$0xff] %v4610
    %4675 = vst [vmem:[#allocation3 + $0x578] sm:$0xff] %v4611
    %4676 = vst [vmem:[#allocation3 + $0x5c0] sm:$0xff] %v4612
    %4677 = vst [vmem:[#allocation3 + $0x608] sm:$0xff] %v4613
    %4678 = vst [vmem:[#allocation3 + $0x650] sm:$0xff] %v4614
    %4679 = vst [vmem:[#allocation3 + $0x698] sm:$0xff] %v4615
    %4680 = vst [vmem:[#allocation3 + $0x6e0] sm:$0xff] %v4616
    %4681 = vst [vmem:[#allocation3 + $0x728] sm:$0xff] %v4617
    %4682 = vst [vmem:[#allocation3 + $0x770] sm:$0xff] %v4618
    %4683 = vst [vmem:[#allocation3 + $0x7b8] sm:$0xff] %v4619
    %4684 = vst [vmem:[#allocation3 + $0x800] sm:$0xff] %v4620
    %4685 = vst [vmem:[#allocation3 + $0x848] sm:$0xff] %v4621
    %4686 = vst [vmem:[#allocation3 + $0x890] sm:$0xff] %v4622
    %4687 = vst [vmem:[#allocation3 + $0x8d8] sm:$0xff] %v4623
    %4688 = vst [vmem:[#allocation3 + $0x920] sm:$0xff] %v4624
    %4689 = vst [vmem:[#allocation3 + $0x968] sm:$0xff] %v4625
    %4690 = vst [vmem:[#allocation3 + $0x9b0] sm:$0xff] %v4626
    %4691 = vst [vmem:[#allocation3 + $0x9f8] sm:$0xff] %v4627
    %4692 = vst [vmem:[#allocation3 + $0xa40] sm:$0xff] %v4628
    %4693 = vst [vmem:[#allocation3 + $0xa88] sm:$0xff] %v4629
    %4694 = vst [vmem:[#allocation3 + $0xad0] sm:$0xff] %v4630
    %4695 = vst [vmem:[#allocation3 + $0xb18] sm:$0xff] %v4631
    %4696 = vst [vmem:[#allocation3 + $0xb60] sm:$0xff] %v4632
    %4697 = vst [vmem:[#allocation3 + $0xba8] sm:$0xff] %v4633
    %4698 = vst [vmem:[#allocation3 + $0xbf0] sm:$0xff] %v4634
    %4699 = vst [vmem:[#allocation3 + $0xc38] sm:$0xff] %v4635
    %4700 = vst [vmem:[#allocation3 + $0xc80] sm:$0xff] %v4636
    %4701 = vst [vmem:[#allocation3 + $0xcc8] sm:$0xff] %v4637
    %4702 = vst [vmem:[#allocation3 + $0xd10] sm:$0xff] %v4638
    %4703 = vst [vmem:[#allocation3 + $0xd58] sm:$0xff] %v4639
    %4704 = vst [vmem:[#allocation3 + $0xda0] sm:$0xff] %v4640
    %4705 = vst [vmem:[#allocation3 + $0xde8] sm:$0xff] %v4641
    %4706 = vst [vmem:[#allocation3 + $0xe30] sm:$0xff] %v4642
    %4707 = vst [vmem:[#allocation3 + $0xe78] sm:$0xff] %v4643
    %4708 = vst [vmem:[#allocation3 + $0xec0] sm:$0xff] %v4644
    %4709 = vst [vmem:[#allocation3 + $0xf08] sm:$0xff] %v4645
    %4710 = vst [vmem:[#allocation3 + $0xf50] sm:$0xff] %v4646
    %4711 = vst [vmem:[#allocation3 + $0xf98] sm:$0xff] %v4647
    %4712 = vst [vmem:[#allocation3 + $0xfe0] sm:$0xff] %v4648
    %4713 = vst [vmem:[#allocation3 + $0x1028] sm:$0xff] %v4649
    %4714 = vst [vmem:[#allocation3 + $0x1070] sm:$0xff] %v4650
    %4715 = vst [vmem:[#allocation3 + $0x10b8] sm:$0xff] %v4651
    %4716 = vst [vmem:[#allocation3 + $0x1100] sm:$0xff] %v4652
    %4717 = vst [vmem:[#allocation3 + $0x1148] sm:$0xff] %v4653
    %4718 = vst [vmem:[#allocation3 + $0x1190] sm:$0xff] %v4654
    %4719 = vst [vmem:[#allocation3 + $0x11d8] sm:$0xff] %v4655
    %v4720 = vld [vmem:[%s197 + $0x2] sm:$0xff]
    %v4721 = vld [vmem:[%s197 + $0xa] sm:$0xff]
    %v4722 = vld [vmem:[%s197 + $0x1a] sm:$0xff]
    %v4723 = vld [vmem:[%s197 + $0x22] sm:$0xff]
    %v4724 = vld [vmem:[%s197 + $0x32] sm:$0xff]
    %v4725 = vld [vmem:[%s197 + $0x3a] sm:$0xff]
    %v4726 = vld [vmem:[%s197 + $0x4a] sm:$0xff]
    %v4727 = vld [vmem:[%s197 + $0x52] sm:$0xff]
    %v4728 = vld [vmem:[%s197 + $0x62] sm:$0xff]
    %v4729 = vld [vmem:[%s197 + $0x6a] sm:$0xff]
    %v4730 = vld [vmem:[%s197 + $0x7a] sm:$0xff]
    %v4731 = vld [vmem:[%s197 + $0x82] sm:$0xff]
    %v4732 = vld [vmem:[%s197 + $0x92] sm:$0xff]
    %v4733 = vld [vmem:[%s197 + $0x9a] sm:$0xff]
    %v4734 = vld [vmem:[%s197 + $0xaa] sm:$0xff]
    %v4735 = vld [vmem:[%s197 + $0xb2] sm:$0xff]
    %v4736 = vld [vmem:[%s197 + $0xc2] sm:$0xff]
    %v4737 = vld [vmem:[%s197 + $0xca] sm:$0xff]
    %v4738 = vld [vmem:[%s197 + $0xda] sm:$0xff]
    %v4739 = vld [vmem:[%s197 + $0xe2] sm:$0xff]
    %v4740 = vld [vmem:[%s197 + $0xf2] sm:$0xff]
    %v4741 = vld [vmem:[%s197 + $0xfa] sm:$0xff]
    %v4742 = vld [vmem:[%s197 + $0x10a] sm:$0xff]
    %v4743 = vld [vmem:[%s197 + $0x112] sm:$0xff]
    %v4744 = vld [vmem:[%s197 + $0x122] sm:$0xff]
    %v4745 = vld [vmem:[%s197 + $0x12a] sm:$0xff]
    %v4746 = vld [vmem:[%s197 + $0x13a] sm:$0xff]
    %v4747 = vld [vmem:[%s197 + $0x142] sm:$0xff]
    %v4748 = vld [vmem:[%s197 + $0x152] sm:$0xff]
    %v4749 = vld [vmem:[%s197 + $0x15a] sm:$0xff]
    %v4750 = vld [vmem:[%s197 + $0x16a] sm:$0xff]
    %v4751 = vld [vmem:[%s197 + $0x172] sm:$0xff]
    %v4752 = vld [vmem:[%s197 + $0x1b2] sm:$0xff]
    %v4753 = vld [vmem:[%s197 + $0x1ba] sm:$0xff]
    %v4754 = vld [vmem:[%s197 + $0x1ca] sm:$0xff]
    %v4755 = vld [vmem:[%s197 + $0x1d2] sm:$0xff]
    %v4756 = vld [vmem:[%s197 + $0x1e2] sm:$0xff]
    %v4757 = vld [vmem:[%s197 + $0x1ea] sm:$0xff]
    %v4758 = vld [vmem:[%s197 + $0x1fa] sm:$0xff]
    %v4759 = vld [vmem:[%s197 + $0x202] sm:$0xff]
    %v4760 = vld [vmem:[%s197 + $0x212] sm:$0xff]
    %v4761 = vld [vmem:[%s197 + $0x21a] sm:$0xff]
    %v4762 = vld [vmem:[%s197 + $0x22a] sm:$0xff]
    %v4763 = vld [vmem:[%s197 + $0x232] sm:$0xff]
    %v4764 = vld [vmem:[%s197 + $0x242] sm:$0xff]
    %v4765 = vld [vmem:[%s197 + $0x24a] sm:$0xff]
    %v4766 = vld [vmem:[%s197 + $0x25a] sm:$0xff]
    %v4767 = vld [vmem:[%s197 + $0x262] sm:$0xff]
    %v4768 = vld [vmem:[%s197 + $0x272] sm:$0xff]
    %v4769 = vld [vmem:[%s197 + $0x27a] sm:$0xff]
    %v4770 = vld [vmem:[%s197 + $0x28a] sm:$0xff]
    %v4771 = vld [vmem:[%s197 + $0x292] sm:$0xff]
    %v4772 = vld [vmem:[%s197 + $0x2a2] sm:$0xff]
    %v4773 = vld [vmem:[%s197 + $0x2aa] sm:$0xff]
    %v4774 = vld [vmem:[%s197 + $0x2ba] sm:$0xff]
    %v4775 = vld [vmem:[%s197 + $0x2c2] sm:$0xff]
    %v4776 = vld [vmem:[%s197 + $0x2d2] sm:$0xff]
    %v4777 = vld [vmem:[%s197 + $0x2da] sm:$0xff]
    %v4778 = vld [vmem:[%s197 + $0x2ea] sm:$0xff]
    %v4779 = vld [vmem:[%s197 + $0x2f2] sm:$0xff]
    %v4780 = vld [vmem:[%s197 + $0x302] sm:$0xff]
    %v4781 = vld [vmem:[%s197 + $0x30a] sm:$0xff]
    %v4782 = vld [vmem:[%s197 + $0x31a] sm:$0xff]
    %v4783 = vld [vmem:[%s197 + $0x322] sm:$0xff]
    %4784 = vst [vmem:[#allocation3 + $0x28] sm:$0xff] %v4720
    %4785 = vst [vmem:[#allocation3 + $0x70] sm:$0xff] %v4721
    %4786 = vst [vmem:[#allocation3 + $0xb8] sm:$0xff] %v4722
    %4787 = vst [vmem:[#allocation3 + $0x100] sm:$0xff] %v4723
    %4788 = vst [vmem:[#allocation3 + $0x148] sm:$0xff] %v4724
    %4789 = vst [vmem:[#allocation3 + $0x190] sm:$0xff] %v4725
    %4790 = vst [vmem:[#allocation3 + $0x1d8] sm:$0xff] %v4726
    %4791 = vst [vmem:[#allocation3 + $0x220] sm:$0xff] %v4727
    %4792 = vst [vmem:[#allocation3 + $0x268] sm:$0xff] %v4728
    %4793 = vst [vmem:[#allocation3 + $0x2b0] sm:$0xff] %v4729
    %4794 = vst [vmem:[#allocation3 + $0x2f8] sm:$0xff] %v4730
    %4795 = vst [vmem:[#allocation3 + $0x340] sm:$0xff] %v4731
    %4796 = vst [vmem:[#allocation3 + $0x388] sm:$0xff] %v4732
    %4797 = vst [vmem:[#allocation3 + $0x3d0] sm:$0xff] %v4733
    %4798 = vst [vmem:[#allocation3 + $0x418] sm:$0xff] %v4734
    %4799 = vst [vmem:[#allocation3 + $0x460] sm:$0xff] %v4735
    %4800 = vst [vmem:[#allocation3 + $0x4a8] sm:$0xff] %v4736
    %4801 = vst [vmem:[#allocation3 + $0x4f0] sm:$0xff] %v4737
    %4802 = vst [vmem:[#allocation3 + $0x538] sm:$0xff] %v4738
    %4803 = vst [vmem:[#allocation3 + $0x580] sm:$0xff] %v4739
    %4804 = vst [vmem:[#allocation3 + $0x5c8] sm:$0xff] %v4740
    %4805 = vst [vmem:[#allocation3 + $0x610] sm:$0xff] %v4741
    %4806 = vst [vmem:[#allocation3 + $0x658] sm:$0xff] %v4742
    %4807 = vst [vmem:[#allocation3 + $0x6a0] sm:$0xff] %v4743
    %4808 = vst [vmem:[#allocation3 + $0x6e8] sm:$0xff] %v4744
    %4809 = vst [vmem:[#allocation3 + $0x730] sm:$0xff] %v4745
    %4810 = vst [vmem:[#allocation3 + $0x778] sm:$0xff] %v4746
    %4811 = vst [vmem:[#allocation3 + $0x7c0] sm:$0xff] %v4747
    %4812 = vst [vmem:[#allocation3 + $0x808] sm:$0xff] %v4748
    %4813 = vst [vmem:[#allocation3 + $0x850] sm:$0xff] %v4749
    %4814 = vst [vmem:[#allocation3 + $0x898] sm:$0xff] %v4750
    %4815 = vst [vmem:[#allocation3 + $0x8e0] sm:$0xff] %v4751
    %4816 = vst [vmem:[#allocation3 + $0x928] sm:$0xff] %v4752
    %4817 = vst [vmem:[#allocation3 + $0x970] sm:$0xff] %v4753
    %4818 = vst [vmem:[#allocation3 + $0x9b8] sm:$0xff] %v4754
    %4819 = vst [vmem:[#allocation3 + $0xa00] sm:$0xff] %v4755
    %4820 = vst [vmem:[#allocation3 + $0xa48] sm:$0xff] %v4756
    %4821 = vst [vmem:[#allocation3 + $0xa90] sm:$0xff] %v4757
    %4822 = vst [vmem:[#allocation3 + $0xad8] sm:$0xff] %v4758
    %4823 = vst [vmem:[#allocation3 + $0xb20] sm:$0xff] %v4759
    %4824 = vst [vmem:[#allocation3 + $0xb68] sm:$0xff] %v4760
    %4825 = vst [vmem:[#allocation3 + $0xbb0] sm:$0xff] %v4761
    %4826 = vst [vmem:[#allocation3 + $0xbf8] sm:$0xff] %v4762
    %4827 = vst [vmem:[#allocation3 + $0xc40] sm:$0xff] %v4763
    %4828 = vst [vmem:[#allocation3 + $0xc88] sm:$0xff] %v4764
    %4829 = vst [vmem:[#allocation3 + $0xcd0] sm:$0xff] %v4765
    %4830 = vst [vmem:[#allocation3 + $0xd18] sm:$0xff] %v4766
    %4831 = vst [vmem:[#allocation3 + $0xd60] sm:$0xff] %v4767
    %4832 = vst [vmem:[#allocation3 + $0xda8] sm:$0xff] %v4768
    %4833 = vst [vmem:[#allocation3 + $0xdf0] sm:$0xff] %v4769
    %4834 = vst [vmem:[#allocation3 + $0xe38] sm:$0xff] %v4770
    %4835 = vst [vmem:[#allocation3 + $0xe80] sm:$0xff] %v4771
    %4836 = vst [vmem:[#allocation3 + $0xec8] sm:$0xff] %v4772
    %4837 = vst [vmem:[#allocation3 + $0xf10] sm:$0xff] %v4773
    %4838 = vst [vmem:[#allocation3 + $0xf58] sm:$0xff] %v4774
    %4839 = vst [vmem:[#allocation3 + $0xfa0] sm:$0xff] %v4775
    %4840 = vst [vmem:[#allocation3 + $0xfe8] sm:$0xff] %v4776
    %4841 = vst [vmem:[#allocation3 + $0x1030] sm:$0xff] %v4777
    %4842 = vst [vmem:[#allocation3 + $0x1078] sm:$0xff] %v4778
    %4843 = vst [vmem:[#allocation3 + $0x10c0] sm:$0xff] %v4779
    %4844 = vst [vmem:[#allocation3 + $0x1108] sm:$0xff] %v4780
    %4845 = vst [vmem:[#allocation3 + $0x1150] sm:$0xff] %v4781
    %4846 = vst [vmem:[#allocation3 + $0x1198] sm:$0xff] %v4782
    %4847 = vst [vmem:[#allocation3 + $0x11e0] sm:$0xff] %v4783
    %v4848 = vld [vmem:[%s1030] sm:$0xff]
    %v4849 = vld [vmem:[%s1030 + $0x8] sm:$0xff]
    %v4850 = vld [vmem:[%s1030 + $0x18] sm:$0xff]
    %v4851 = vld [vmem:[%s1030 + $0x20] sm:$0xff]
    %v4852 = vld [vmem:[%s1030 + $0x30] sm:$0xff]
    %v4853 = vld [vmem:[%s1030 + $0x38] sm:$0xff]
    %v4854 = vld [vmem:[%s1030 + $0x48] sm:$0xff]
    %v4855 = vld [vmem:[%s1030 + $0x50] sm:$0xff]
    %v4856 = vld [vmem:[%s1030 + $0x60] sm:$0xff]
    %v4857 = vld [vmem:[%s1030 + $0x68] sm:$0xff]
    %v4858 = vld [vmem:[%s1030 + $0x78] sm:$0xff]
    %v4859 = vld [vmem:[%s1030 + $0x80] sm:$0xff]
    %v4860 = vld [vmem:[%s1030 + $0x90] sm:$0xff]
    %v4861 = vld [vmem:[%s1030 + $0x98] sm:$0xff]
    %v4862 = vld [vmem:[%s1030 + $0xa8] sm:$0xff]
    %v4863 = vld [vmem:[%s1030 + $0xb0] sm:$0xff]
    %v4864 = vld [vmem:[%s1030 + $0xc0] sm:$0xff]
    %v4865 = vld [vmem:[%s1030 + $0xc8] sm:$0xff]
    %v4866 = vld [vmem:[%s1030 + $0xd8] sm:$0xff]
    %v4867 = vld [vmem:[%s1030 + $0xe0] sm:$0xff]
    %v4868 = vld [vmem:[%s1030 + $0xf0] sm:$0xff]
    %v4869 = vld [vmem:[%s1030 + $0xf8] sm:$0xff]
    %v4870 = vld [vmem:[%s1030 + $0x108] sm:$0xff]
    %v4871 = vld [vmem:[%s1030 + $0x110] sm:$0xff]
    %v4872 = vld [vmem:[%s1030 + $0x120] sm:$0xff]
    %v4873 = vld [vmem:[%s1030 + $0x128] sm:$0xff]
    %v4874 = vld [vmem:[%s1030 + $0x138] sm:$0xff]
    %v4875 = vld [vmem:[%s1030 + $0x140] sm:$0xff]
    %v4876 = vld [vmem:[%s1030 + $0x150] sm:$0xff]
    %v4877 = vld [vmem:[%s1030 + $0x158] sm:$0xff]
    %v4878 = vld [vmem:[%s1030 + $0x168] sm:$0xff]
    %v4879 = vld [vmem:[%s1030 + $0x170] sm:$0xff]
    %v4880 = vld [vmem:[%s1030 + $0x1b0] sm:$0xff]
    %v4881 = vld [vmem:[%s1030 + $0x1b8] sm:$0xff]
    %v4882 = vld [vmem:[%s1030 + $0x1c8] sm:$0xff]
    %v4883 = vld [vmem:[%s1030 + $0x1d0] sm:$0xff]
    %v4884 = vld [vmem:[%s1030 + $0x1e0] sm:$0xff]
    %v4885 = vld [vmem:[%s1030 + $0x1e8] sm:$0xff]
    %v4886 = vld [vmem:[%s1030 + $0x1f8] sm:$0xff]
    %v4887 = vld [vmem:[%s1030 + $0x200] sm:$0xff]
    %v4888 = vld [vmem:[%s1030 + $0x210] sm:$0xff]
    %v4889 = vld [vmem:[%s1030 + $0x218] sm:$0xff]
    %v4890 = vld [vmem:[%s1030 + $0x228] sm:$0xff]
    %v4891 = vld [vmem:[%s1030 + $0x230] sm:$0xff]
    %v4892 = vld [vmem:[%s1030 + $0x240] sm:$0xff]
    %v4893 = vld [vmem:[%s1030 + $0x248] sm:$0xff]
    %v4894 = vld [vmem:[%s1030 + $0x258] sm:$0xff]
    %v4895 = vld [vmem:[%s1030 + $0x260] sm:$0xff]
    %v4896 = vld [vmem:[%s1030 + $0x270] sm:$0xff]
    %v4897 = vld [vmem:[%s1030 + $0x278] sm:$0xff]
    %v4898 = vld [vmem:[%s1030 + $0x288] sm:$0xff]
    %v4899 = vld [vmem:[%s1030 + $0x290] sm:$0xff]
    %v4900 = vld [vmem:[%s1030 + $0x2a0] sm:$0xff]
    %v4901 = vld [vmem:[%s1030 + $0x2a8] sm:$0xff]
    %v4902 = vld [vmem:[%s1030 + $0x2b8] sm:$0xff]
    %v4903 = vld [vmem:[%s1030 + $0x2c0] sm:$0xff]
    %v4904 = vld [vmem:[%s1030 + $0x2d0] sm:$0xff]
    %v4905 = vld [vmem:[%s1030 + $0x2d8] sm:$0xff]
    %v4906 = vld [vmem:[%s1030 + $0x2e8] sm:$0xff]
    %v4907 = vld [vmem:[%s1030 + $0x2f0] sm:$0xff]
    %v4908 = vld [vmem:[%s1030 + $0x300] sm:$0xff]
    %v4909 = vld [vmem:[%s1030 + $0x308] sm:$0xff]
    %v4910 = vld [vmem:[%s1030 + $0x318] sm:$0xff]
    %v4911 = vld [vmem:[%s1030 + $0x320] sm:$0xff]
    %4912 = vst [vmem:[#allocation3 + $0x30] sm:$0xff] %v4848
    %4913 = vst [vmem:[#allocation3 + $0x78] sm:$0xff] %v4849
    %4914 = vst [vmem:[#allocation3 + $0xc0] sm:$0xff] %v4850
    %4915 = vst [vmem:[#allocation3 + $0x108] sm:$0xff] %v4851
    %4916 = vst [vmem:[#allocation3 + $0x150] sm:$0xff] %v4852
    %4917 = vst [vmem:[#allocation3 + $0x198] sm:$0xff] %v4853
    %4918 = vst [vmem:[#allocation3 + $0x1e0] sm:$0xff] %v4854
    %4919 = vst [vmem:[#allocation3 + $0x228] sm:$0xff] %v4855
    %4920 = vst [vmem:[#allocation3 + $0x270] sm:$0xff] %v4856
    %4921 = vst [vmem:[#allocation3 + $0x2b8] sm:$0xff] %v4857
    %4922 = vst [vmem:[#allocation3 + $0x300] sm:$0xff] %v4858
    %4923 = vst [vmem:[#allocation3 + $0x348] sm:$0xff] %v4859
    %4924 = vst [vmem:[#allocation3 + $0x390] sm:$0xff] %v4860
    %4925 = vst [vmem:[#allocation3 + $0x3d8] sm:$0xff] %v4861
    %4926 = vst [vmem:[#allocation3 + $0x420] sm:$0xff] %v4862
    %4927 = vst [vmem:[#allocation3 + $0x468] sm:$0xff] %v4863
    %4928 = vst [vmem:[#allocation3 + $0x4b0] sm:$0xff] %v4864
    %4929 = vst [vmem:[#allocation3 + $0x4f8] sm:$0xff] %v4865
    %4930 = vst [vmem:[#allocation3 + $0x540] sm:$0xff] %v4866
    %4931 = vst [vmem:[#allocation3 + $0x588] sm:$0xff] %v4867
    %4932 = vst [vmem:[#allocation3 + $0x5d0] sm:$0xff] %v4868
    %4933 = vst [vmem:[#allocation3 + $0x618] sm:$0xff] %v4869
    %4934 = vst [vmem:[#allocation3 + $0x660] sm:$0xff] %v4870
    %4935 = vst [vmem:[#allocation3 + $0x6a8] sm:$0xff] %v4871
    %4936 = vst [vmem:[#allocation3 + $0x6f0] sm:$0xff] %v4872
    %4937 = vst [vmem:[#allocation3 + $0x738] sm:$0xff] %v4873
    %4938 = vst [vmem:[#allocation3 + $0x780] sm:$0xff] %v4874
    %4939 = vst [vmem:[#allocation3 + $0x7c8] sm:$0xff] %v4875
    %4940 = vst [vmem:[#allocation3 + $0x810] sm:$0xff] %v4876
    %4941 = vst [vmem:[#allocation3 + $0x858] sm:$0xff] %v4877
    %4942 = vst [vmem:[#allocation3 + $0x8a0] sm:$0xff] %v4878
    %4943 = vst [vmem:[#allocation3 + $0x8e8] sm:$0xff] %v4879
    %4944 = vst [vmem:[#allocation3 + $0x930] sm:$0xff] %v4880
    %4945 = vst [vmem:[#allocation3 + $0x978] sm:$0xff] %v4881
    %4946 = vst [vmem:[#allocation3 + $0x9c0] sm:$0xff] %v4882
    %4947 = vst [vmem:[#allocation3 + $0xa08] sm:$0xff] %v4883
    %4948 = vst [vmem:[#allocation3 + $0xa50] sm:$0xff] %v4884
    %4949 = vst [vmem:[#allocation3 + $0xa98] sm:$0xff] %v4885
    %4950 = vst [vmem:[#allocation3 + $0xae0] sm:$0xff] %v4886
    %4951 = vst [vmem:[#allocation3 + $0xb28] sm:$0xff] %v4887
    %4952 = vst [vmem:[#allocation3 + $0xb70] sm:$0xff] %v4888
    %4953 = vst [vmem:[#allocation3 + $0xbb8] sm:$0xff] %v4889
    %4954 = vst [vmem:[#allocation3 + $0xc00] sm:$0xff] %v4890
    %4955 = vst [vmem:[#allocation3 + $0xc48] sm:$0xff] %v4891
    %4956 = vst [vmem:[#allocation3 + $0xc90] sm:$0xff] %v4892
    %4957 = vst [vmem:[#allocation3 + $0xcd8] sm:$0xff] %v4893
    %4958 = vst [vmem:[#allocation3 + $0xd20] sm:$0xff] %v4894
    %4959 = vst [vmem:[#allocation3 + $0xd68] sm:$0xff] %v4895
    %4960 = vst [vmem:[#allocation3 + $0xdb0] sm:$0xff] %v4896
    %4961 = vst [vmem:[#allocation3 + $0xdf8] sm:$0xff] %v4897
    %4962 = vst [vmem:[#allocation3 + $0xe40] sm:$0xff] %v4898
    %4963 = vst [vmem:[#allocation3 + $0xe88] sm:$0xff] %v4899
    %4964 = vst [vmem:[#allocation3 + $0xed0] sm:$0xff] %v4900
    %4965 = vst [vmem:[#allocation3 + $0xf18] sm:$0xff] %v4901
    %4966 = vst [vmem:[#allocation3 + $0xf60] sm:$0xff] %v4902
    %4967 = vst [vmem:[#allocation3 + $0xfa8] sm:$0xff] %v4903
    %4968 = vst [vmem:[#allocation3 + $0xff0] sm:$0xff] %v4904
    %4969 = vst [vmem:[#allocation3 + $0x1038] sm:$0xff] %v4905
    %4970 = vst [vmem:[#allocation3 + $0x1080] sm:$0xff] %v4906
    %4971 = vst [vmem:[#allocation3 + $0x10c8] sm:$0xff] %v4907
    %4972 = vst [vmem:[#allocation3 + $0x1110] sm:$0xff] %v4908
    %4973 = vst [vmem:[#allocation3 + $0x1158] sm:$0xff] %v4909
    %4974 = vst [vmem:[#allocation3 + $0x11a0] sm:$0xff] %v4910
    %4975 = vst [vmem:[#allocation3 + $0x11e8] sm:$0xff] %v4911
    %v4976 = vld [vmem:[%s1030 + $0x1] sm:$0xff]
    %v4977 = vld [vmem:[%s1030 + $0x9] sm:$0xff]
    %v4978 = vld [vmem:[%s1030 + $0x19] sm:$0xff]
    %v4979 = vld [vmem:[%s1030 + $0x21] sm:$0xff]
    %v4980 = vld [vmem:[%s1030 + $0x31] sm:$0xff]
    %v4981 = vld [vmem:[%s1030 + $0x39] sm:$0xff]
    %v4982 = vld [vmem:[%s1030 + $0x49] sm:$0xff]
    %v4983 = vld [vmem:[%s1030 + $0x51] sm:$0xff]
    %v4984 = vld [vmem:[%s1030 + $0x61] sm:$0xff]
    %v4985 = vld [vmem:[%s1030 + $0x69] sm:$0xff]
    %v4986 = vld [vmem:[%s1030 + $0x79] sm:$0xff]
    %v4987 = vld [vmem:[%s1030 + $0x81] sm:$0xff]
    %v4988 = vld [vmem:[%s1030 + $0x91] sm:$0xff]
    %v4989 = vld [vmem:[%s1030 + $0x99] sm:$0xff]
    %v4990 = vld [vmem:[%s1030 + $0xa9] sm:$0xff]
    %v4991 = vld [vmem:[%s1030 + $0xb1] sm:$0xff]
    %v4992 = vld [vmem:[%s1030 + $0xc1] sm:$0xff]
    %v4993 = vld [vmem:[%s1030 + $0xc9] sm:$0xff]
    %v4994 = vld [vmem:[%s1030 + $0xd9] sm:$0xff]
    %v4995 = vld [vmem:[%s1030 + $0xe1] sm:$0xff]
    %v4996 = vld [vmem:[%s1030 + $0xf1] sm:$0xff]
    %v4997 = vld [vmem:[%s1030 + $0xf9] sm:$0xff]
    %v4998 = vld [vmem:[%s1030 + $0x109] sm:$0xff]
    %v4999 = vld [vmem:[%s1030 + $0x111] sm:$0xff]
    %v5000 = vld [vmem:[%s1030 + $0x121] sm:$0xff]
    %v5001 = vld [vmem:[%s1030 + $0x129] sm:$0xff]
    %v5002 = vld [vmem:[%s1030 + $0x139] sm:$0xff]
    %v5003 = vld [vmem:[%s1030 + $0x141] sm:$0xff]
    %v5004 = vld [vmem:[%s1030 + $0x151] sm:$0xff]
    %v5005 = vld [vmem:[%s1030 + $0x159] sm:$0xff]
    %v5006 = vld [vmem:[%s1030 + $0x169] sm:$0xff]
    %v5007 = vld [vmem:[%s1030 + $0x171] sm:$0xff]
    %v5008 = vld [vmem:[%s1030 + $0x1b1] sm:$0xff]
    %v5009 = vld [vmem:[%s1030 + $0x1b9] sm:$0xff]
    %v5010 = vld [vmem:[%s1030 + $0x1c9] sm:$0xff]
    %v5011 = vld [vmem:[%s1030 + $0x1d1] sm:$0xff]
    %v5012 = vld [vmem:[%s1030 + $0x1e1] sm:$0xff]
    %v5013 = vld [vmem:[%s1030 + $0x1e9] sm:$0xff]
    %v5014 = vld [vmem:[%s1030 + $0x1f9] sm:$0xff]
    %v5015 = vld [vmem:[%s1030 + $0x201] sm:$0xff]
    %v5016 = vld [vmem:[%s1030 + $0x211] sm:$0xff]
    %v5017 = vld [vmem:[%s1030 + $0x219] sm:$0xff]
    %v5018 = vld [vmem:[%s1030 + $0x229] sm:$0xff]
    %v5019 = vld [vmem:[%s1030 + $0x231] sm:$0xff]
    %v5020 = vld [vmem:[%s1030 + $0x241] sm:$0xff]
    %v5021 = vld [vmem:[%s1030 + $0x249] sm:$0xff]
    %v5022 = vld [vmem:[%s1030 + $0x259] sm:$0xff]
    %v5023 = vld [vmem:[%s1030 + $0x261] sm:$0xff]
    %v5024 = vld [vmem:[%s1030 + $0x271] sm:$0xff]
    %v5025 = vld [vmem:[%s1030 + $0x279] sm:$0xff]
    %v5026 = vld [vmem:[%s1030 + $0x289] sm:$0xff]
    %v5027 = vld [vmem:[%s1030 + $0x291] sm:$0xff]
    %v5028 = vld [vmem:[%s1030 + $0x2a1] sm:$0xff]
    %v5029 = vld [vmem:[%s1030 + $0x2a9] sm:$0xff]
    %v5030 = vld [vmem:[%s1030 + $0x2b9] sm:$0xff]
    %v5031 = vld [vmem:[%s1030 + $0x2c1] sm:$0xff]
    %v5032 = vld [vmem:[%s1030 + $0x2d1] sm:$0xff]
    %v5033 = vld [vmem:[%s1030 + $0x2d9] sm:$0xff]
    %v5034 = vld [vmem:[%s1030 + $0x2e9] sm:$0xff]
    %v5035 = vld [vmem:[%s1030 + $0x2f1] sm:$0xff]
    %v5036 = vld [vmem:[%s1030 + $0x301] sm:$0xff]
    %v5037 = vld [vmem:[%s1030 + $0x309] sm:$0xff]
    %v5038 = vld [vmem:[%s1030 + $0x319] sm:$0xff]
    %v5039 = vld [vmem:[%s1030 + $0x321] sm:$0xff]
    %5040 = vst [vmem:[#allocation3 + $0x38] sm:$0xff] %v4976
    %5041 = vst [vmem:[#allocation3 + $0x80] sm:$0xff] %v4977
    %5042 = vst [vmem:[#allocation3 + $0xc8] sm:$0xff] %v4978
    %5043 = vst [vmem:[#allocation3 + $0x110] sm:$0xff] %v4979
    %5044 = vst [vmem:[#allocation3 + $0x158] sm:$0xff] %v4980
    %5045 = vst [vmem:[#allocation3 + $0x1a0] sm:$0xff] %v4981
    %5046 = vst [vmem:[#allocation3 + $0x1e8] sm:$0xff] %v4982
    %5047 = vst [vmem:[#allocation3 + $0x230] sm:$0xff] %v4983
    %5048 = vst [vmem:[#allocation3 + $0x278] sm:$0xff] %v4984
    %5049 = vst [vmem:[#allocation3 + $0x2c0] sm:$0xff] %v4985
    %5050 = vst [vmem:[#allocation3 + $0x308] sm:$0xff] %v4986
    %5051 = vst [vmem:[#allocation3 + $0x350] sm:$0xff] %v4987
    %5052 = vst [vmem:[#allocation3 + $0x398] sm:$0xff] %v4988
    %5053 = vst [vmem:[#allocation3 + $0x3e0] sm:$0xff] %v4989
    %5054 = vst [vmem:[#allocation3 + $0x428] sm:$0xff] %v4990
    %5055 = vst [vmem:[#allocation3 + $0x470] sm:$0xff] %v4991
    %5056 = vst [vmem:[#allocation3 + $0x4b8] sm:$0xff] %v4992
    %5057 = vst [vmem:[#allocation3 + $0x500] sm:$0xff] %v4993
    %5058 = vst [vmem:[#allocation3 + $0x548] sm:$0xff] %v4994
    %5059 = vst [vmem:[#allocation3 + $0x590] sm:$0xff] %v4995
    %5060 = vst [vmem:[#allocation3 + $0x5d8] sm:$0xff] %v4996
    %5061 = vst [vmem:[#allocation3 + $0x620] sm:$0xff] %v4997
    %5062 = vst [vmem:[#allocation3 + $0x668] sm:$0xff] %v4998
    %5063 = vst [vmem:[#allocation3 + $0x6b0] sm:$0xff] %v4999
    %5064 = vst [vmem:[#allocation3 + $0x6f8] sm:$0xff] %v5000
    %5065 = vst [vmem:[#allocation3 + $0x740] sm:$0xff] %v5001
    %5066 = vst [vmem:[#allocation3 + $0x788] sm:$0xff] %v5002
    %5067 = vst [vmem:[#allocation3 + $0x7d0] sm:$0xff] %v5003
    %5068 = vst [vmem:[#allocation3 + $0x818] sm:$0xff] %v5004
    %5069 = vst [vmem:[#allocation3 + $0x860] sm:$0xff] %v5005
    %5070 = vst [vmem:[#allocation3 + $0x8a8] sm:$0xff] %v5006
    %5071 = vst [vmem:[#allocation3 + $0x8f0] sm:$0xff] %v5007
    %5072 = vst [vmem:[#allocation3 + $0x938] sm:$0xff] %v5008
    %5073 = vst [vmem:[#allocation3 + $0x980] sm:$0xff] %v5009
    %5074 = vst [vmem:[#allocation3 + $0x9c8] sm:$0xff] %v5010
    %5075 = vst [vmem:[#allocation3 + $0xa10] sm:$0xff] %v5011
    %5076 = vst [vmem:[#allocation3 + $0xa58] sm:$0xff] %v5012
    %5077 = vst [vmem:[#allocation3 + $0xaa0] sm:$0xff] %v5013
    %5078 = vst [vmem:[#allocation3 + $0xae8] sm:$0xff] %v5014
    %5079 = vst [vmem:[#allocation3 + $0xb30] sm:$0xff] %v5015
    %5080 = vst [vmem:[#allocation3 + $0xb78] sm:$0xff] %v5016
    %5081 = vst [vmem:[#allocation3 + $0xbc0] sm:$0xff] %v5017
    %5082 = vst [vmem:[#allocation3 + $0xc08] sm:$0xff] %v5018
    %5083 = vst [vmem:[#allocation3 + $0xc50] sm:$0xff] %v5019
    %5084 = vst [vmem:[#allocation3 + $0xc98] sm:$0xff] %v5020
    %5085 = vst [vmem:[#allocation3 + $0xce0] sm:$0xff] %v5021
    %5086 = vst [vmem:[#allocation3 + $0xd28] sm:$0xff] %v5022
    %5087 = vst [vmem:[#allocation3 + $0xd70] sm:$0xff] %v5023
    %5088 = vst [vmem:[#allocation3 + $0xdb8] sm:$0xff] %v5024
    %5089 = vst [vmem:[#allocation3 + $0xe00] sm:$0xff] %v5025
    %5090 = vst [vmem:[#allocation3 + $0xe48] sm:$0xff] %v5026
    %5091 = vst [vmem:[#allocation3 + $0xe90] sm:$0xff] %v5027
    %5092 = vst [vmem:[#allocation3 + $0xed8] sm:$0xff] %v5028
    %5093 = vst [vmem:[#allocation3 + $0xf20] sm:$0xff] %v5029
    %5094 = vst [vmem:[#allocation3 + $0xf68] sm:$0xff] %v5030
    %5095 = vst [vmem:[#allocation3 + $0xfb0] sm:$0xff] %v5031
    %5096 = vst [vmem:[#allocation3 + $0xff8] sm:$0xff] %v5032
    %5097 = vst [vmem:[#allocation3 + $0x1040] sm:$0xff] %v5033
    %5098 = vst [vmem:[#allocation3 + $0x1088] sm:$0xff] %v5034
    %5099 = vst [vmem:[#allocation3 + $0x10d0] sm:$0xff] %v5035
    %5100 = vst [vmem:[#allocation3 + $0x1118] sm:$0xff] %v5036
    %5101 = vst [vmem:[#allocation3 + $0x1160] sm:$0xff] %v5037
    %5102 = vst [vmem:[#allocation3 + $0x11a8] sm:$0xff] %v5038
    %5103 = vst [vmem:[#allocation3 + $0x11f0] sm:$0xff] %v5039
    %v5104 = vld [vmem:[%s1030 + $0x2] sm:$0xff]
    %v5105 = vld [vmem:[%s1030 + $0xa] sm:$0xff]
    %v5106 = vld [vmem:[%s1030 + $0x1a] sm:$0xff]
    %v5107 = vld [vmem:[%s1030 + $0x22] sm:$0xff]
    %v5108 = vld [vmem:[%s1030 + $0x32] sm:$0xff]
    %v5109 = vld [vmem:[%s1030 + $0x3a] sm:$0xff]
    %v5110 = vld [vmem:[%s1030 + $0x4a] sm:$0xff]
    %v5111 = vld [vmem:[%s1030 + $0x52] sm:$0xff]
    %v5112 = vld [vmem:[%s1030 + $0x62] sm:$0xff]
    %v5113 = vld [vmem:[%s1030 + $0x6a] sm:$0xff]
    %v5114 = vld [vmem:[%s1030 + $0x7a] sm:$0xff]
    %v5115 = vld [vmem:[%s1030 + $0x82] sm:$0xff]
    %v5116 = vld [vmem:[%s1030 + $0x92] sm:$0xff]
    %v5117 = vld [vmem:[%s1030 + $0x9a] sm:$0xff]
    %v5118 = vld [vmem:[%s1030 + $0xaa] sm:$0xff]
    %v5119 = vld [vmem:[%s1030 + $0xb2] sm:$0xff]
    %v5120 = vld [vmem:[%s1030 + $0xc2] sm:$0xff]
    %v5121 = vld [vmem:[%s1030 + $0xca] sm:$0xff]
    %v5122 = vld [vmem:[%s1030 + $0xda] sm:$0xff]
    %v5123 = vld [vmem:[%s1030 + $0xe2] sm:$0xff]
    %v5124 = vld [vmem:[%s1030 + $0xf2] sm:$0xff]
    %v5125 = vld [vmem:[%s1030 + $0xfa] sm:$0xff]
    %v5126 = vld [vmem:[%s1030 + $0x10a] sm:$0xff]
    %v5127 = vld [vmem:[%s1030 + $0x112] sm:$0xff]
    %v5128 = vld [vmem:[%s1030 + $0x122] sm:$0xff]
    %v5129 = vld [vmem:[%s1030 + $0x12a] sm:$0xff]
    %v5130 = vld [vmem:[%s1030 + $0x13a] sm:$0xff]
    %v5131 = vld [vmem:[%s1030 + $0x142] sm:$0xff]
    %v5132 = vld [vmem:[%s1030 + $0x152] sm:$0xff]
    %v5133 = vld [vmem:[%s1030 + $0x15a] sm:$0xff]
    %v5134 = vld [vmem:[%s1030 + $0x16a] sm:$0xff]
    %v5135 = vld [vmem:[%s1030 + $0x172] sm:$0xff]
    %v5136 = vld [vmem:[%s1030 + $0x1b2] sm:$0xff]
    %v5137 = vld [vmem:[%s1030 + $0x1ba] sm:$0xff]
    %v5138 = vld [vmem:[%s1030 + $0x1ca] sm:$0xff]
    %v5139 = vld [vmem:[%s1030 + $0x1d2] sm:$0xff]
    %v5140 = vld [vmem:[%s1030 + $0x1e2] sm:$0xff]
    %v5141 = vld [vmem:[%s1030 + $0x1ea] sm:$0xff]
    %v5142 = vld [vmem:[%s1030 + $0x1fa] sm:$0xff]
    %v5143 = vld [vmem:[%s1030 + $0x202] sm:$0xff]
    %v5144 = vld [vmem:[%s1030 + $0x212] sm:$0xff]
    %v5145 = vld [vmem:[%s1030 + $0x21a] sm:$0xff]
    %v5146 = vld [vmem:[%s1030 + $0x22a] sm:$0xff]
    %v5147 = vld [vmem:[%s1030 + $0x232] sm:$0xff]
    %v5148 = vld [vmem:[%s1030 + $0x242] sm:$0xff]
    %v5149 = vld [vmem:[%s1030 + $0x24a] sm:$0xff]
    %v5150 = vld [vmem:[%s1030 + $0x25a] sm:$0xff]
    %v5151 = vld [vmem:[%s1030 + $0x262] sm:$0xff]
    %v5152 = vld [vmem:[%s1030 + $0x272] sm:$0xff]
    %v5153 = vld [vmem:[%s1030 + $0x27a] sm:$0xff]
    %v5154 = vld [vmem:[%s1030 + $0x28a] sm:$0xff]
    %v5155 = vld [vmem:[%s1030 + $0x292] sm:$0xff]
    %v5156 = vld [vmem:[%s1030 + $0x2a2] sm:$0xff]
    %v5157 = vld [vmem:[%s1030 + $0x2aa] sm:$0xff]
    %v5158 = vld [vmem:[%s1030 + $0x2ba] sm:$0xff]
    %v5159 = vld [vmem:[%s1030 + $0x2c2] sm:$0xff]
    %v5160 = vld [vmem:[%s1030 + $0x2d2] sm:$0xff]
    %v5161 = vld [vmem:[%s1030 + $0x2da] sm:$0xff]
    %v5162 = vld [vmem:[%s1030 + $0x2ea] sm:$0xff]
    %v5163 = vld [vmem:[%s1030 + $0x2f2] sm:$0xff]
    %v5164 = vld [vmem:[%s1030 + $0x302] sm:$0xff]
    %v5165 = vld [vmem:[%s1030 + $0x30a] sm:$0xff]
    %v5166 = vld [vmem:[%s1030 + $0x31a] sm:$0xff]
    %v5167 = vld [vmem:[%s1030 + $0x322] sm:$0xff]
    %5168 = vst [vmem:[#allocation3 + $0x40] sm:$0xff] %v5104
    %5169 = vst [vmem:[#allocation3 + $0x88] sm:$0xff] %v5105
    %5170 = vst [vmem:[#allocation3 + $0xd0] sm:$0xff] %v5106
    %5171 = vst [vmem:[#allocation3 + $0x118] sm:$0xff] %v5107
    %5172 = vst [vmem:[#allocation3 + $0x160] sm:$0xff] %v5108
    %5173 = vst [vmem:[#allocation3 + $0x1a8] sm:$0xff] %v5109
    %5174 = vst [vmem:[#allocation3 + $0x1f0] sm:$0xff] %v5110
    %5175 = vst [vmem:[#allocation3 + $0x238] sm:$0xff] %v5111
    %5176 = vst [vmem:[#allocation3 + $0x280] sm:$0xff] %v5112
    %5177 = vst [vmem:[#allocation3 + $0x2c8] sm:$0xff] %v5113
    %5178 = vst [vmem:[#allocation3 + $0x310] sm:$0xff] %v5114
    %5179 = vst [vmem:[#allocation3 + $0x358] sm:$0xff] %v5115
    %5180 = vst [vmem:[#allocation3 + $0x3a0] sm:$0xff] %v5116
    %5181 = vst [vmem:[#allocation3 + $0x3e8] sm:$0xff] %v5117
    %5182 = vst [vmem:[#allocation3 + $0x430] sm:$0xff] %v5118
    %5183 = vst [vmem:[#allocation3 + $0x478] sm:$0xff] %v5119
    %5184 = vst [vmem:[#allocation3 + $0x4c0] sm:$0xff] %v5120
    %5185 = vst [vmem:[#allocation3 + $0x508] sm:$0xff] %v5121
    %5186 = vst [vmem:[#allocation3 + $0x550] sm:$0xff] %v5122
    %5187 = vst [vmem:[#allocation3 + $0x598] sm:$0xff] %v5123
    %5188 = vst [vmem:[#allocation3 + $0x5e0] sm:$0xff] %v5124
    %5189 = vst [vmem:[#allocation3 + $0x628] sm:$0xff] %v5125
    %5190 = vst [vmem:[#allocation3 + $0x670] sm:$0xff] %v5126
    %5191 = vst [vmem:[#allocation3 + $0x6b8] sm:$0xff] %v5127
    %5192 = vst [vmem:[#allocation3 + $0x700] sm:$0xff] %v5128
    %5193 = vst [vmem:[#allocation3 + $0x748] sm:$0xff] %v5129
    %5194 = vst [vmem:[#allocation3 + $0x790] sm:$0xff] %v5130
    %5195 = vst [vmem:[#allocation3 + $0x7d8] sm:$0xff] %v5131
    %5196 = vst [vmem:[#allocation3 + $0x820] sm:$0xff] %v5132
    %5197 = vst [vmem:[#allocation3 + $0x868] sm:$0xff] %v5133
    %5198 = vst [vmem:[#allocation3 + $0x8b0] sm:$0xff] %v5134
    %5199 = vst [vmem:[#allocation3 + $0x8f8] sm:$0xff] %v5135
    %5200 = vst [vmem:[#allocation3 + $0x940] sm:$0xff] %v5136
    %5201 = vst [vmem:[#allocation3 + $0x988] sm:$0xff] %v5137
    %5202 = vst [vmem:[#allocation3 + $0x9d0] sm:$0xff] %v5138
    %5203 = vst [vmem:[#allocation3 + $0xa18] sm:$0xff] %v5139
    %5204 = vst [vmem:[#allocation3 + $0xa60] sm:$0xff] %v5140
    %5205 = vst [vmem:[#allocation3 + $0xaa8] sm:$0xff] %v5141
    %5206 = vst [vmem:[#allocation3 + $0xaf0] sm:$0xff] %v5142
    %5207 = vst [vmem:[#allocation3 + $0xb38] sm:$0xff] %v5143
    %5208 = vst [vmem:[#allocation3 + $0xb80] sm:$0xff] %v5144
    %5209 = vst [vmem:[#allocation3 + $0xbc8] sm:$0xff] %v5145
    %5210 = vst [vmem:[#allocation3 + $0xc10] sm:$0xff] %v5146
    %5211 = vst [vmem:[#allocation3 + $0xc58] sm:$0xff] %v5147
    %5212 = vst [vmem:[#allocation3 + $0xca0] sm:$0xff] %v5148
    %5213 = vst [vmem:[#allocation3 + $0xce8] sm:$0xff] %v5149
    %5214 = vst [vmem:[#allocation3 + $0xd30] sm:$0xff] %v5150
    %5215 = vst [vmem:[#allocation3 + $0xd78] sm:$0xff] %v5151
    %5216 = vst [vmem:[#allocation3 + $0xdc0] sm:$0xff] %v5152
    %5217 = vst [vmem:[#allocation3 + $0xe08] sm:$0xff] %v5153
    %5218 = vst [vmem:[#allocation3 + $0xe50] sm:$0xff] %v5154
    %5219 = vst [vmem:[#allocation3 + $0xe98] sm:$0xff] %v5155
    %5220 = vst [vmem:[#allocation3 + $0xee0] sm:$0xff] %v5156
    %5221 = vst [vmem:[#allocation3 + $0xf28] sm:$0xff] %v5157
    %5222 = vst [vmem:[#allocation3 + $0xf70] sm:$0xff] %v5158
    %5223 = vst [vmem:[#allocation3 + $0xfb8] sm:$0xff] %v5159
    %5224 = vst [vmem:[#allocation3 + $0x1000] sm:$0xff] %v5160
    %5225 = vst [vmem:[#allocation3 + $0x1048] sm:$0xff] %v5161
    %5226 = vst [vmem:[#allocation3 + $0x1090] sm:$0xff] %v5162
    %5227 = vst [vmem:[#allocation3 + $0x10d8] sm:$0xff] %v5163
    %5228 = vst [vmem:[#allocation3 + $0x1120] sm:$0xff] %v5164
    %5229 = vst [vmem:[#allocation3 + $0x1168] sm:$0xff] %v5165
    %5230 = vst [vmem:[#allocation3 + $0x11b0] sm:$0xff] %v5166
    %5231 = vst [vmem:[#allocation3 + $0x11f8] sm:$0xff] %v5167
    %v5232 = vld [vmem:[#allocation3] sm:$0xff]
    %v5233 = vld [vmem:[#allocation3 + $0x8] sm:$0xff]
    %v5234 = vld [vmem:[#allocation3 + $0x10] sm:$0xff]
    %v5235 = vld [vmem:[#allocation3 + $0x18] sm:$0xff]
    %v5236 = vld [vmem:[#allocation3 + $0x20] sm:$0xff]
    %v5237 = vld [vmem:[#allocation3 + $0x28] sm:$0xff]
    %v5238 = vld [vmem:[#allocation3 + $0x30] sm:$0xff]
    %v5239 = vld [vmem:[#allocation3 + $0x38] sm:$0xff]
    %v5240 = vld [vmem:[#allocation3 + $0x40] sm:$0xff]
    %v5241 = vld [vmem:[#allocation3 + $0x48] sm:$0xff]
    %v5242 = vld [vmem:[#allocation3 + $0x50] sm:$0xff]
    %v5243 = vld [vmem:[#allocation3 + $0x58] sm:$0xff]
    %v5244 = vld [vmem:[#allocation3 + $0x60] sm:$0xff]
    %v5245 = vld [vmem:[#allocation3 + $0x68] sm:$0xff]
    %v5246 = vld [vmem:[#allocation3 + $0x70] sm:$0xff]
    %v5247 = vld [vmem:[#allocation3 + $0x78] sm:$0xff]
    %v5248 = vld [vmem:[#allocation3 + $0x80] sm:$0xff]
    %v5249 = vld [vmem:[#allocation3 + $0x88] sm:$0xff]
    %v5250 = vld [vmem:[#allocation3 + $0x90] sm:$0xff]
    %v5251 = vld [vmem:[#allocation3 + $0x98] sm:$0xff]
    %v5252 = vld [vmem:[#allocation3 + $0xa0] sm:$0xff]
    %v5253 = vld [vmem:[#allocation3 + $0xa8] sm:$0xff]
    %v5254 = vld [vmem:[#allocation3 + $0xb0] sm:$0xff]
    %v5255 = vld [vmem:[#allocation3 + $0xb8] sm:$0xff]
    %v5256 = vld [vmem:[#allocation3 + $0xc0] sm:$0xff]
    %v5257 = vld [vmem:[#allocation3 + $0xc8] sm:$0xff]
    %v5258 = vld [vmem:[#allocation3 + $0xd0] sm:$0xff]
    %v5259 = vld [vmem:[#allocation3 + $0xd8] sm:$0xff]
    %v5260 = vld [vmem:[#allocation3 + $0xe0] sm:$0xff]
    %v5261 = vld [vmem:[#allocation3 + $0xe8] sm:$0xff]
    %v5262 = vld [vmem:[#allocation3 + $0xf0] sm:$0xff]
    %v5263 = vld [vmem:[#allocation3 + $0xf8] sm:$0xff]
    %v5264 = vld [vmem:[#allocation3 + $0x100] sm:$0xff]
    %v5265 = vld [vmem:[#allocation3 + $0x108] sm:$0xff]
    %v5266 = vld [vmem:[#allocation3 + $0x110] sm:$0xff]
    %v5267 = vld [vmem:[#allocation3 + $0x118] sm:$0xff]
    %v5268 = vld [vmem:[#allocation3 + $0x120] sm:$0xff]
    %v5269 = vld [vmem:[#allocation3 + $0x128] sm:$0xff]
    %v5270 = vld [vmem:[#allocation3 + $0x130] sm:$0xff]
    %v5271 = vld [vmem:[#allocation3 + $0x138] sm:$0xff]
    %v5272 = vld [vmem:[#allocation3 + $0x140] sm:$0xff]
    %v5273 = vld [vmem:[#allocation3 + $0x148] sm:$0xff]
    %v5274 = vld [vmem:[#allocation3 + $0x150] sm:$0xff]
    %v5275 = vld [vmem:[#allocation3 + $0x158] sm:$0xff]
    %v5276 = vld [vmem:[#allocation3 + $0x160] sm:$0xff]
    %v5277 = vld [vmem:[#allocation3 + $0x168] sm:$0xff]
    %v5278 = vld [vmem:[#allocation3 + $0x170] sm:$0xff]
    %v5279 = vld [vmem:[#allocation3 + $0x178] sm:$0xff]
    %v5280 = vld [vmem:[#allocation3 + $0x180] sm:$0xff]
    %v5281 = vld [vmem:[#allocation3 + $0x188] sm:$0xff]
    %v5282 = vld [vmem:[#allocation3 + $0x190] sm:$0xff]
    %v5283 = vld [vmem:[#allocation3 + $0x198] sm:$0xff]
    %v5284 = vld [vmem:[#allocation3 + $0x1a0] sm:$0xff]
    %v5285 = vld [vmem:[#allocation3 + $0x1a8] sm:$0xff]
    %v5286 = vld [vmem:[#allocation3 + $0x1b0] sm:$0xff]
    %v5287 = vld [vmem:[#allocation3 + $0x1b8] sm:$0xff]
    %v5288 = vld [vmem:[#allocation3 + $0x1c0] sm:$0xff]
    %v5289 = vld [vmem:[#allocation3 + $0x1c8] sm:$0xff]
    %v5290 = vld [vmem:[#allocation3 + $0x1d0] sm:$0xff]
    %v5291 = vld [vmem:[#allocation3 + $0x1d8] sm:$0xff]
    %v5292 = vld [vmem:[#allocation3 + $0x1e0] sm:$0xff]
    %v5293 = vld [vmem:[#allocation3 + $0x1e8] sm:$0xff]
    %v5294 = vld [vmem:[#allocation3 + $0x1f0] sm:$0xff]
    %v5295 = vld [vmem:[#allocation3 + $0x1f8] sm:$0xff]
    %v5296 = vld [vmem:[#allocation3 + $0x200] sm:$0xff]
    %v5297 = vld [vmem:[#allocation3 + $0x208] sm:$0xff]
    %v5298 = vld [vmem:[#allocation3 + $0x210] sm:$0xff]
    %v5299 = vld [vmem:[#allocation3 + $0x218] sm:$0xff]
    %v5300 = vld [vmem:[#allocation3 + $0x220] sm:$0xff]
    %v5301 = vld [vmem:[#allocation3 + $0x228] sm:$0xff]
    %v5302 = vld [vmem:[#allocation3 + $0x230] sm:$0xff]
    %v5303 = vld [vmem:[#allocation3 + $0x238] sm:$0xff]
    %v5304 = vld [vmem:[#allocation3 + $0x240] sm:$0xff]
    %v5305 = vld [vmem:[#allocation3 + $0x248] sm:$0xff]
    %v5306 = vld [vmem:[#allocation3 + $0x250] sm:$0xff]
    %v5307 = vld [vmem:[#allocation3 + $0x258] sm:$0xff]
    %v5308 = vld [vmem:[#allocation3 + $0x260] sm:$0xff]
    %v5309 = vld [vmem:[#allocation3 + $0x268] sm:$0xff]
    %v5310 = vld [vmem:[#allocation3 + $0x270] sm:$0xff]
    %v5311 = vld [vmem:[#allocation3 + $0x278] sm:$0xff]
    %v5312 = vld [vmem:[#allocation3 + $0x280] sm:$0xff]
    %v5313 = vld [vmem:[#allocation3 + $0x288] sm:$0xff]
    %v5314 = vld [vmem:[#allocation3 + $0x290] sm:$0xff]
    %v5315 = vld [vmem:[#allocation3 + $0x298] sm:$0xff]
    %v5316 = vld [vmem:[#allocation3 + $0x2a0] sm:$0xff]
    %v5317 = vld [vmem:[#allocation3 + $0x2a8] sm:$0xff]
    %v5318 = vld [vmem:[#allocation3 + $0x2b0] sm:$0xff]
    %v5319 = vld [vmem:[#allocation3 + $0x2b8] sm:$0xff]
    %v5320 = vld [vmem:[#allocation3 + $0x2c0] sm:$0xff]
    %v5321 = vld [vmem:[#allocation3 + $0x2c8] sm:$0xff]
    %v5322 = vld [vmem:[#allocation3 + $0x2d0] sm:$0xff]
    %v5323 = vld [vmem:[#allocation3 + $0x2d8] sm:$0xff]
    %v5324 = vld [vmem:[#allocation3 + $0x2e0] sm:$0xff]
    %v5325 = vld [vmem:[#allocation3 + $0x2e8] sm:$0xff]
    %v5326 = vld [vmem:[#allocation3 + $0x2f0] sm:$0xff]
    %v5327 = vld [vmem:[#allocation3 + $0x2f8] sm:$0xff]
    %v5328 = vld [vmem:[#allocation3 + $0x300] sm:$0xff]
    %v5329 = vld [vmem:[#allocation3 + $0x308] sm:$0xff]
    %v5330 = vld [vmem:[#allocation3 + $0x310] sm:$0xff]
    %v5331 = vld [vmem:[#allocation3 + $0x318] sm:$0xff]
    %v5332 = vld [vmem:[#allocation3 + $0x320] sm:$0xff]
    %v5333 = vld [vmem:[#allocation3 + $0x328] sm:$0xff]
    %v5334 = vld [vmem:[#allocation3 + $0x330] sm:$0xff]
    %v5335 = vld [vmem:[#allocation3 + $0x338] sm:$0xff]
    %v5336 = vld [vmem:[#allocation3 + $0x340] sm:$0xff]
    %v5337 = vld [vmem:[#allocation3 + $0x348] sm:$0xff]
    %v5338 = vld [vmem:[#allocation3 + $0x350] sm:$0xff]
    %v5339 = vld [vmem:[#allocation3 + $0x358] sm:$0xff]
    %v5340 = vld [vmem:[#allocation3 + $0x360] sm:$0xff]
    %v5341 = vld [vmem:[#allocation3 + $0x368] sm:$0xff]
    %v5342 = vld [vmem:[#allocation3 + $0x370] sm:$0xff]
    %v5343 = vld [vmem:[#allocation3 + $0x378] sm:$0xff]
    %v5344 = vld [vmem:[#allocation3 + $0x380] sm:$0xff]
    %v5345 = vld [vmem:[#allocation3 + $0x388] sm:$0xff]
    %v5346 = vld [vmem:[#allocation3 + $0x390] sm:$0xff]
    %v5347 = vld [vmem:[#allocation3 + $0x398] sm:$0xff]
    %v5348 = vld [vmem:[#allocation3 + $0x3a0] sm:$0xff]
    %v5349 = vld [vmem:[#allocation3 + $0x3a8] sm:$0xff]
    %v5350 = vld [vmem:[#allocation3 + $0x3b0] sm:$0xff]
    %v5351 = vld [vmem:[#allocation3 + $0x3b8] sm:$0xff]
    %v5352 = vld [vmem:[#allocation3 + $0x3c0] sm:$0xff]
    %v5353 = vld [vmem:[#allocation3 + $0x3c8] sm:$0xff]
    %v5354 = vld [vmem:[#allocation3 + $0x3d0] sm:$0xff]
    %v5355 = vld [vmem:[#allocation3 + $0x3d8] sm:$0xff]
    %v5356 = vld [vmem:[#allocation3 + $0x3e0] sm:$0xff]
    %v5357 = vld [vmem:[#allocation3 + $0x3e8] sm:$0xff]
    %v5358 = vld [vmem:[#allocation3 + $0x3f0] sm:$0xff]
    %v5359 = vld [vmem:[#allocation3 + $0x3f8] sm:$0xff]
    %v5360 = vld [vmem:[#allocation3 + $0x400] sm:$0xff]
    %v5361 = vld [vmem:[#allocation3 + $0x408] sm:$0xff]
    %v5362 = vld [vmem:[#allocation3 + $0x410] sm:$0xff]
    %v5363 = vld [vmem:[#allocation3 + $0x418] sm:$0xff]
    %v5364 = vld [vmem:[#allocation3 + $0x420] sm:$0xff]
    %v5365 = vld [vmem:[#allocation3 + $0x428] sm:$0xff]
    %v5366 = vld [vmem:[#allocation3 + $0x430] sm:$0xff]
    %v5367 = vld [vmem:[#allocation3 + $0x438] sm:$0xff]
    %v5368 = vld [vmem:[#allocation3 + $0x440] sm:$0xff]
    %v5369 = vld [vmem:[#allocation3 + $0x448] sm:$0xff]
    %v5370 = vld [vmem:[#allocation3 + $0x450] sm:$0xff]
    %v5371 = vld [vmem:[#allocation3 + $0x458] sm:$0xff]
    %v5372 = vld [vmem:[#allocation3 + $0x460] sm:$0xff]
    %v5373 = vld [vmem:[#allocation3 + $0x468] sm:$0xff]
    %v5374 = vld [vmem:[#allocation3 + $0x470] sm:$0xff]
    %v5375 = vld [vmem:[#allocation3 + $0x478] sm:$0xff]
    %v5376 = vld [vmem:[#allocation3 + $0x480] sm:$0xff]
    %v5377 = vld [vmem:[#allocation3 + $0x488] sm:$0xff]
    %v5378 = vld [vmem:[#allocation3 + $0x490] sm:$0xff]
    %v5379 = vld [vmem:[#allocation3 + $0x498] sm:$0xff]
    %v5380 = vld [vmem:[#allocation3 + $0x4a0] sm:$0xff]
    %v5381 = vld [vmem:[#allocation3 + $0x4a8] sm:$0xff]
    %v5382 = vld [vmem:[#allocation3 + $0x4b0] sm:$0xff]
    %v5383 = vld [vmem:[#allocation3 + $0x4b8] sm:$0xff]
    %v5384 = vld [vmem:[#allocation3 + $0x4c0] sm:$0xff]
    %v5385 = vld [vmem:[#allocation3 + $0x4c8] sm:$0xff]
    %v5386 = vld [vmem:[#allocation3 + $0x4d0] sm:$0xff]
    %v5387 = vld [vmem:[#allocation3 + $0x4d8] sm:$0xff]
    %v5388 = vld [vmem:[#allocation3 + $0x4e0] sm:$0xff]
    %v5389 = vld [vmem:[#allocation3 + $0x4e8] sm:$0xff]
    %v5390 = vld [vmem:[#allocation3 + $0x4f0] sm:$0xff]
    %v5391 = vld [vmem:[#allocation3 + $0x4f8] sm:$0xff]
    %v5392 = vld [vmem:[#allocation3 + $0x500] sm:$0xff]
    %v5393 = vld [vmem:[#allocation3 + $0x508] sm:$0xff]
    %v5394 = vld [vmem:[#allocation3 + $0x510] sm:$0xff]
    %v5395 = vld [vmem:[#allocation3 + $0x518] sm:$0xff]
    %v5396 = vld [vmem:[#allocation3 + $0x520] sm:$0xff]
    %v5397 = vld [vmem:[#allocation3 + $0x528] sm:$0xff]
    %v5398 = vld [vmem:[#allocation3 + $0x530] sm:$0xff]
    %v5399 = vld [vmem:[#allocation3 + $0x538] sm:$0xff]
    %v5400 = vld [vmem:[#allocation3 + $0x540] sm:$0xff]
    %v5401 = vld [vmem:[#allocation3 + $0x548] sm:$0xff]
    %v5402 = vld [vmem:[#allocation3 + $0x550] sm:$0xff]
    %v5403 = vld [vmem:[#allocation3 + $0x558] sm:$0xff]
    %v5404 = vld [vmem:[#allocation3 + $0x560] sm:$0xff]
    %v5405 = vld [vmem:[#allocation3 + $0x568] sm:$0xff]
    %v5406 = vld [vmem:[#allocation3 + $0x570] sm:$0xff]
    %v5407 = vld [vmem:[#allocation3 + $0x578] sm:$0xff]
    %v5408 = vld [vmem:[#allocation3 + $0x580] sm:$0xff]
    %v5409 = vld [vmem:[#allocation3 + $0x588] sm:$0xff]
    %v5410 = vld [vmem:[#allocation3 + $0x590] sm:$0xff]
    %v5411 = vld [vmem:[#allocation3 + $0x598] sm:$0xff]
    %v5412 = vld [vmem:[#allocation3 + $0x5a0] sm:$0xff]
    %v5413 = vld [vmem:[#allocation3 + $0x5a8] sm:$0xff]
    %v5414 = vld [vmem:[#allocation3 + $0x5b0] sm:$0xff]
    %v5415 = vld [vmem:[#allocation3 + $0x5b8] sm:$0xff]
    %v5416 = vld [vmem:[#allocation3 + $0x5c0] sm:$0xff]
    %v5417 = vld [vmem:[#allocation3 + $0x5c8] sm:$0xff]
    %v5418 = vld [vmem:[#allocation3 + $0x5d0] sm:$0xff]
    %v5419 = vld [vmem:[#allocation3 + $0x5d8] sm:$0xff]
    %v5420 = vld [vmem:[#allocation3 + $0x5e0] sm:$0xff]
    %v5421 = vld [vmem:[#allocation3 + $0x5e8] sm:$0xff]
    %v5422 = vld [vmem:[#allocation3 + $0x5f0] sm:$0xff]
    %v5423 = vld [vmem:[#allocation3 + $0x5f8] sm:$0xff]
    %v5424 = vld [vmem:[#allocation3 + $0x600] sm:$0xff]
    %v5425 = vld [vmem:[#allocation3 + $0x608] sm:$0xff]
    %v5426 = vld [vmem:[#allocation3 + $0x610] sm:$0xff]
    %v5427 = vld [vmem:[#allocation3 + $0x618] sm:$0xff]
    %v5428 = vld [vmem:[#allocation3 + $0x620] sm:$0xff]
    %v5429 = vld [vmem:[#allocation3 + $0x628] sm:$0xff]
    %v5430 = vld [vmem:[#allocation3 + $0x630] sm:$0xff]
    %v5431 = vld [vmem:[#allocation3 + $0x638] sm:$0xff]
    %v5432 = vld [vmem:[#allocation3 + $0x640] sm:$0xff]
    %v5433 = vld [vmem:[#allocation3 + $0x648] sm:$0xff]
    %v5434 = vld [vmem:[#allocation3 + $0x650] sm:$0xff]
    %v5435 = vld [vmem:[#allocation3 + $0x658] sm:$0xff]
    %v5436 = vld [vmem:[#allocation3 + $0x660] sm:$0xff]
    %v5437 = vld [vmem:[#allocation3 + $0x668] sm:$0xff]
    %v5438 = vld [vmem:[#allocation3 + $0x670] sm:$0xff]
    %v5439 = vld [vmem:[#allocation3 + $0x678] sm:$0xff]
    %v5440 = vld [vmem:[#allocation3 + $0x680] sm:$0xff]
    %v5441 = vld [vmem:[#allocation3 + $0x688] sm:$0xff]
    %v5442 = vld [vmem:[#allocation3 + $0x690] sm:$0xff]
    %v5443 = vld [vmem:[#allocation3 + $0x698] sm:$0xff]
    %v5444 = vld [vmem:[#allocation3 + $0x6a0] sm:$0xff]
    %v5445 = vld [vmem:[#allocation3 + $0x6a8] sm:$0xff]
    %v5446 = vld [vmem:[#allocation3 + $0x6b0] sm:$0xff]
    %v5447 = vld [vmem:[#allocation3 + $0x6b8] sm:$0xff]
    %v5448 = vld [vmem:[#allocation3 + $0x6c0] sm:$0xff]
    %v5449 = vld [vmem:[#allocation3 + $0x6c8] sm:$0xff]
    %v5450 = vld [vmem:[#allocation3 + $0x6d0] sm:$0xff]
    %v5451 = vld [vmem:[#allocation3 + $0x6d8] sm:$0xff]
    %v5452 = vld [vmem:[#allocation3 + $0x6e0] sm:$0xff]
    %v5453 = vld [vmem:[#allocation3 + $0x6e8] sm:$0xff]
    %v5454 = vld [vmem:[#allocation3 + $0x6f0] sm:$0xff]
    %v5455 = vld [vmem:[#allocation3 + $0x6f8] sm:$0xff]
    %v5456 = vld [vmem:[#allocation3 + $0x700] sm:$0xff]
    %v5457 = vld [vmem:[#allocation3 + $0x708] sm:$0xff]
    %v5458 = vld [vmem:[#allocation3 + $0x710] sm:$0xff]
    %v5459 = vld [vmem:[#allocation3 + $0x718] sm:$0xff]
    %v5460 = vld [vmem:[#allocation3 + $0x720] sm:$0xff]
    %v5461 = vld [vmem:[#allocation3 + $0x728] sm:$0xff]
    %v5462 = vld [vmem:[#allocation3 + $0x730] sm:$0xff]
    %v5463 = vld [vmem:[#allocation3 + $0x738] sm:$0xff]
    %v5464 = vld [vmem:[#allocation3 + $0x740] sm:$0xff]
    %v5465 = vld [vmem:[#allocation3 + $0x748] sm:$0xff]
    %v5466 = vld [vmem:[#allocation3 + $0x750] sm:$0xff]
    %v5467 = vld [vmem:[#allocation3 + $0x758] sm:$0xff]
    %v5468 = vld [vmem:[#allocation3 + $0x760] sm:$0xff]
    %v5469 = vld [vmem:[#allocation3 + $0x768] sm:$0xff]
    %v5470 = vld [vmem:[#allocation3 + $0x770] sm:$0xff]
    %v5471 = vld [vmem:[#allocation3 + $0x778] sm:$0xff]
    %v5472 = vld [vmem:[#allocation3 + $0x780] sm:$0xff]
    %v5473 = vld [vmem:[#allocation3 + $0x788] sm:$0xff]
    %v5474 = vld [vmem:[#allocation3 + $0x790] sm:$0xff]
    %v5475 = vld [vmem:[#allocation3 + $0x798] sm:$0xff]
    %v5476 = vld [vmem:[#allocation3 + $0x7a0] sm:$0xff]
    %v5477 = vld [vmem:[#allocation3 + $0x7a8] sm:$0xff]
    %v5478 = vld [vmem:[#allocation3 + $0x7b0] sm:$0xff]
    %v5479 = vld [vmem:[#allocation3 + $0x7b8] sm:$0xff]
    %v5480 = vld [vmem:[#allocation3 + $0x7c0] sm:$0xff]
    %v5481 = vld [vmem:[#allocation3 + $0x7c8] sm:$0xff]
    %v5482 = vld [vmem:[#allocation3 + $0x7d0] sm:$0xff]
    %v5483 = vld [vmem:[#allocation3 + $0x7d8] sm:$0xff]
    %v5484 = vld [vmem:[#allocation3 + $0x7e0] sm:$0xff]
    %v5485 = vld [vmem:[#allocation3 + $0x7e8] sm:$0xff]
    %v5486 = vld [vmem:[#allocation3 + $0x7f0] sm:$0xff]
    %v5487 = vld [vmem:[#allocation3 + $0x7f8] sm:$0xff]
    %v5488 = vld [vmem:[#allocation3 + $0x800] sm:$0xff]
    %v5489 = vld [vmem:[#allocation3 + $0x808] sm:$0xff]
    %v5490 = vld [vmem:[#allocation3 + $0x810] sm:$0xff]
    %v5491 = vld [vmem:[#allocation3 + $0x818] sm:$0xff]
    %v5492 = vld [vmem:[#allocation3 + $0x820] sm:$0xff]
    %v5493 = vld [vmem:[#allocation3 + $0x828] sm:$0xff]
    %v5494 = vld [vmem:[#allocation3 + $0x830] sm:$0xff]
    %v5495 = vld [vmem:[#allocation3 + $0x838] sm:$0xff]
    %v5496 = vld [vmem:[#allocation3 + $0x840] sm:$0xff]
    %v5497 = vld [vmem:[#allocation3 + $0x848] sm:$0xff]
    %v5498 = vld [vmem:[#allocation3 + $0x850] sm:$0xff]
    %v5499 = vld [vmem:[#allocation3 + $0x858] sm:$0xff]
    %v5500 = vld [vmem:[#allocation3 + $0x860] sm:$0xff]
    %v5501 = vld [vmem:[#allocation3 + $0x868] sm:$0xff]
    %v5502 = vld [vmem:[#allocation3 + $0x870] sm:$0xff]
    %v5503 = vld [vmem:[#allocation3 + $0x878] sm:$0xff]
    %v5504 = vld [vmem:[#allocation3 + $0x880] sm:$0xff]
    %v5505 = vld [vmem:[#allocation3 + $0x888] sm:$0xff]
    %v5506 = vld [vmem:[#allocation3 + $0x890] sm:$0xff]
    %v5507 = vld [vmem:[#allocation3 + $0x898] sm:$0xff]
    %v5508 = vld [vmem:[#allocation3 + $0x8a0] sm:$0xff]
    %v5509 = vld [vmem:[#allocation3 + $0x8a8] sm:$0xff]
    %v5510 = vld [vmem:[#allocation3 + $0x8b0] sm:$0xff]
    %v5511 = vld [vmem:[#allocation3 + $0x8b8] sm:$0xff]
    %v5512 = vld [vmem:[#allocation3 + $0x8c0] sm:$0xff]
    %v5513 = vld [vmem:[#allocation3 + $0x8c8] sm:$0xff]
    %v5514 = vld [vmem:[#allocation3 + $0x8d0] sm:$0xff]
    %v5515 = vld [vmem:[#allocation3 + $0x8d8] sm:$0xff]
    %v5516 = vld [vmem:[#allocation3 + $0x8e0] sm:$0xff]
    %v5517 = vld [vmem:[#allocation3 + $0x8e8] sm:$0xff]
    %v5518 = vld [vmem:[#allocation3 + $0x8f0] sm:$0xff]
    %v5519 = vld [vmem:[#allocation3 + $0x8f8] sm:$0xff]
    %v5520 = vld [vmem:[#allocation3 + $0x900] sm:$0xff]
    %v5521 = vld [vmem:[#allocation3 + $0x908] sm:$0xff]
    %v5522 = vld [vmem:[#allocation3 + $0x910] sm:$0xff]
    %v5523 = vld [vmem:[#allocation3 + $0x918] sm:$0xff]
    %v5524 = vld [vmem:[#allocation3 + $0x920] sm:$0xff]
    %v5525 = vld [vmem:[#allocation3 + $0x928] sm:$0xff]
    %v5526 = vld [vmem:[#allocation3 + $0x930] sm:$0xff]
    %v5527 = vld [vmem:[#allocation3 + $0x938] sm:$0xff]
    %v5528 = vld [vmem:[#allocation3 + $0x940] sm:$0xff]
    %v5529 = vld [vmem:[#allocation3 + $0x948] sm:$0xff]
    %v5530 = vld [vmem:[#allocation3 + $0x950] sm:$0xff]
    %v5531 = vld [vmem:[#allocation3 + $0x958] sm:$0xff]
    %v5532 = vld [vmem:[#allocation3 + $0x960] sm:$0xff]
    %v5533 = vld [vmem:[#allocation3 + $0x968] sm:$0xff]
    %v5534 = vld [vmem:[#allocation3 + $0x970] sm:$0xff]
    %v5535 = vld [vmem:[#allocation3 + $0x978] sm:$0xff]
    %v5536 = vld [vmem:[#allocation3 + $0x980] sm:$0xff]
    %v5537 = vld [vmem:[#allocation3 + $0x988] sm:$0xff]
    %v5538 = vld [vmem:[#allocation3 + $0x990] sm:$0xff]
    %v5539 = vld [vmem:[#allocation3 + $0x998] sm:$0xff]
    %v5540 = vld [vmem:[#allocation3 + $0x9a0] sm:$0xff]
    %v5541 = vld [vmem:[#allocation3 + $0x9a8] sm:$0xff]
    %v5542 = vld [vmem:[#allocation3 + $0x9b0] sm:$0xff]
    %v5543 = vld [vmem:[#allocation3 + $0x9b8] sm:$0xff]
    %v5544 = vld [vmem:[#allocation3 + $0x9c0] sm:$0xff]
    %v5545 = vld [vmem:[#allocation3 + $0x9c8] sm:$0xff]
    %v5546 = vld [vmem:[#allocation3 + $0x9d0] sm:$0xff]
    %v5547 = vld [vmem:[#allocation3 + $0x9d8] sm:$0xff]
    %v5548 = vld [vmem:[#allocation3 + $0x9e0] sm:$0xff]
    %v5549 = vld [vmem:[#allocation3 + $0x9e8] sm:$0xff]
    %v5550 = vld [vmem:[#allocation3 + $0x9f0] sm:$0xff]
    %v5551 = vld [vmem:[#allocation3 + $0x9f8] sm:$0xff]
    %v5552 = vld [vmem:[#allocation3 + $0xa00] sm:$0xff]
    %v5553 = vld [vmem:[#allocation3 + $0xa08] sm:$0xff]
    %v5554 = vld [vmem:[#allocation3 + $0xa10] sm:$0xff]
    %v5555 = vld [vmem:[#allocation3 + $0xa18] sm:$0xff]
    %v5556 = vld [vmem:[#allocation3 + $0xa20] sm:$0xff]
    %v5557 = vld [vmem:[#allocation3 + $0xa28] sm:$0xff]
    %v5558 = vld [vmem:[#allocation3 + $0xa30] sm:$0xff]
    %v5559 = vld [vmem:[#allocation3 + $0xa38] sm:$0xff]
    %v5560 = vld [vmem:[#allocation3 + $0xa40] sm:$0xff]
    %v5561 = vld [vmem:[#allocation3 + $0xa48] sm:$0xff]
    %v5562 = vld [vmem:[#allocation3 + $0xa50] sm:$0xff]
    %v5563 = vld [vmem:[#allocation3 + $0xa58] sm:$0xff]
    %v5564 = vld [vmem:[#allocation3 + $0xa60] sm:$0xff]
    %v5565 = vld [vmem:[#allocation3 + $0xa68] sm:$0xff]
    %v5566 = vld [vmem:[#allocation3 + $0xa70] sm:$0xff]
    %v5567 = vld [vmem:[#allocation3 + $0xa78] sm:$0xff]
    %v5568 = vld [vmem:[#allocation3 + $0xa80] sm:$0xff]
    %v5569 = vld [vmem:[#allocation3 + $0xa88] sm:$0xff]
    %v5570 = vld [vmem:[#allocation3 + $0xa90] sm:$0xff]
    %v5571 = vld [vmem:[#allocation3 + $0xa98] sm:$0xff]
    %v5572 = vld [vmem:[#allocation3 + $0xaa0] sm:$0xff]
    %v5573 = vld [vmem:[#allocation3 + $0xaa8] sm:$0xff]
    %v5574 = vld [vmem:[#allocation3 + $0xab0] sm:$0xff]
    %v5575 = vld [vmem:[#allocation3 + $0xab8] sm:$0xff]
    %v5576 = vld [vmem:[#allocation3 + $0xac0] sm:$0xff]
    %v5577 = vld [vmem:[#allocation3 + $0xac8] sm:$0xff]
    %v5578 = vld [vmem:[#allocation3 + $0xad0] sm:$0xff]
    %v5579 = vld [vmem:[#allocation3 + $0xad8] sm:$0xff]
    %v5580 = vld [vmem:[#allocation3 + $0xae0] sm:$0xff]
    %v5581 = vld [vmem:[#allocation3 + $0xae8] sm:$0xff]
    %v5582 = vld [vmem:[#allocation3 + $0xaf0] sm:$0xff]
    %v5583 = vld [vmem:[#allocation3 + $0xaf8] sm:$0xff]
    %v5584 = vld [vmem:[#allocation3 + $0xb00] sm:$0xff]
    %v5585 = vld [vmem:[#allocation3 + $0xb08] sm:$0xff]
    %v5586 = vld [vmem:[#allocation3 + $0xb10] sm:$0xff]
    %v5587 = vld [vmem:[#allocation3 + $0xb18] sm:$0xff]
    %v5588 = vld [vmem:[#allocation3 + $0xb20] sm:$0xff]
    %v5589 = vld [vmem:[#allocation3 + $0xb28] sm:$0xff]
    %v5590 = vld [vmem:[#allocation3 + $0xb30] sm:$0xff]
    %v5591 = vld [vmem:[#allocation3 + $0xb38] sm:$0xff]
    %v5592 = vld [vmem:[#allocation3 + $0xb40] sm:$0xff]
    %v5593 = vld [vmem:[#allocation3 + $0xb48] sm:$0xff]
    %v5594 = vld [vmem:[#allocation3 + $0xb50] sm:$0xff]
    %v5595 = vld [vmem:[#allocation3 + $0xb58] sm:$0xff]
    %v5596 = vld [vmem:[#allocation3 + $0xb60] sm:$0xff]
    %v5597 = vld [vmem:[#allocation3 + $0xb68] sm:$0xff]
    %v5598 = vld [vmem:[#allocation3 + $0xb70] sm:$0xff]
    %v5599 = vld [vmem:[#allocation3 + $0xb78] sm:$0xff]
    %v5600 = vld [vmem:[#allocation3 + $0xb80] sm:$0xff]
    %v5601 = vld [vmem:[#allocation3 + $0xb88] sm:$0xff]
    %v5602 = vld [vmem:[#allocation3 + $0xb90] sm:$0xff]
    %v5603 = vld [vmem:[#allocation3 + $0xb98] sm:$0xff]
    %v5604 = vld [vmem:[#allocation3 + $0xba0] sm:$0xff]
    %v5605 = vld [vmem:[#allocation3 + $0xba8] sm:$0xff]
    %v5606 = vld [vmem:[#allocation3 + $0xbb0] sm:$0xff]
    %v5607 = vld [vmem:[#allocation3 + $0xbb8] sm:$0xff]
    %v5608 = vld [vmem:[#allocation3 + $0xbc0] sm:$0xff]
    %v5609 = vld [vmem:[#allocation3 + $0xbc8] sm:$0xff]
    %v5610 = vld [vmem:[#allocation3 + $0xbd0] sm:$0xff]
    %v5611 = vld [vmem:[#allocation3 + $0xbd8] sm:$0xff]
    %v5612 = vld [vmem:[#allocation3 + $0xbe0] sm:$0xff]
    %v5613 = vld [vmem:[#allocation3 + $0xbe8] sm:$0xff]
    %v5614 = vld [vmem:[#allocation3 + $0xbf0] sm:$0xff]
    %v5615 = vld [vmem:[#allocation3 + $0xbf8] sm:$0xff]
    %v5616 = vld [vmem:[#allocation3 + $0xc00] sm:$0xff]
    %v5617 = vld [vmem:[#allocation3 + $0xc08] sm:$0xff]
    %v5618 = vld [vmem:[#allocation3 + $0xc10] sm:$0xff]
    %v5619 = vld [vmem:[#allocation3 + $0xc18] sm:$0xff]
    %v5620 = vld [vmem:[#allocation3 + $0xc20] sm:$0xff]
    %v5621 = vld [vmem:[#allocation3 + $0xc28] sm:$0xff]
    %v5622 = vld [vmem:[#allocation3 + $0xc30] sm:$0xff]
    %v5623 = vld [vmem:[#allocation3 + $0xc38] sm:$0xff]
    %v5624 = vld [vmem:[#allocation3 + $0xc40] sm:$0xff]
    %v5625 = vld [vmem:[#allocation3 + $0xc48] sm:$0xff]
    %v5626 = vld [vmem:[#allocation3 + $0xc50] sm:$0xff]
    %v5627 = vld [vmem:[#allocation3 + $0xc58] sm:$0xff]
    %v5628 = vld [vmem:[#allocation3 + $0xc60] sm:$0xff]
    %v5629 = vld [vmem:[#allocation3 + $0xc68] sm:$0xff]
    %v5630 = vld [vmem:[#allocation3 + $0xc70] sm:$0xff]
    %v5631 = vld [vmem:[#allocation3 + $0xc78] sm:$0xff]
    %v5632 = vld [vmem:[#allocation3 + $0xc80] sm:$0xff]
    %v5633 = vld [vmem:[#allocation3 + $0xc88] sm:$0xff]
    %v5634 = vld [vmem:[#allocation3 + $0xc90] sm:$0xff]
    %v5635 = vld [vmem:[#allocation3 + $0xc98] sm:$0xff]
    %v5636 = vld [vmem:[#allocation3 + $0xca0] sm:$0xff]
    %v5637 = vld [vmem:[#allocation3 + $0xca8] sm:$0xff]
    %v5638 = vld [vmem:[#allocation3 + $0xcb0] sm:$0xff]
    %v5639 = vld [vmem:[#allocation3 + $0xcb8] sm:$0xff]
    %v5640 = vld [vmem:[#allocation3 + $0xcc0] sm:$0xff]
    %v5641 = vld [vmem:[#allocation3 + $0xcc8] sm:$0xff]
    %v5642 = vld [vmem:[#allocation3 + $0xcd0] sm:$0xff]
    %v5643 = vld [vmem:[#allocation3 + $0xcd8] sm:$0xff]
    %v5644 = vld [vmem:[#allocation3 + $0xce0] sm:$0xff]
    %v5645 = vld [vmem:[#allocation3 + $0xce8] sm:$0xff]
    %v5646 = vld [vmem:[#allocation3 + $0xcf0] sm:$0xff]
    %v5647 = vld [vmem:[#allocation3 + $0xcf8] sm:$0xff]
    %v5648 = vld [vmem:[#allocation3 + $0xd00] sm:$0xff]
    %v5649 = vld [vmem:[#allocation3 + $0xd08] sm:$0xff]
    %v5650 = vld [vmem:[#allocation3 + $0xd10] sm:$0xff]
    %v5651 = vld [vmem:[#allocation3 + $0xd18] sm:$0xff]
    %v5652 = vld [vmem:[#allocation3 + $0xd20] sm:$0xff]
    %v5653 = vld [vmem:[#allocation3 + $0xd28] sm:$0xff]
    %v5654 = vld [vmem:[#allocation3 + $0xd30] sm:$0xff]
    %v5655 = vld [vmem:[#allocation3 + $0xd38] sm:$0xff]
    %v5656 = vld [vmem:[#allocation3 + $0xd40] sm:$0xff]
    %v5657 = vld [vmem:[#allocation3 + $0xd48] sm:$0xff]
    %v5658 = vld [vmem:[#allocation3 + $0xd50] sm:$0xff]
    %v5659 = vld [vmem:[#allocation3 + $0xd58] sm:$0xff]
    %v5660 = vld [vmem:[#allocation3 + $0xd60] sm:$0xff]
    %v5661 = vld [vmem:[#allocation3 + $0xd68] sm:$0xff]
    %v5662 = vld [vmem:[#allocation3 + $0xd70] sm:$0xff]
    %v5663 = vld [vmem:[#allocation3 + $0xd78] sm:$0xff]
    %v5664 = vld [vmem:[#allocation3 + $0xd80] sm:$0xff]
    %v5665 = vld [vmem:[#allocation3 + $0xd88] sm:$0xff]
    %v5666 = vld [vmem:[#allocation3 + $0xd90] sm:$0xff]
    %v5667 = vld [vmem:[#allocation3 + $0xd98] sm:$0xff]
    %v5668 = vld [vmem:[#allocation3 + $0xda0] sm:$0xff]
    %v5669 = vld [vmem:[#allocation3 + $0xda8] sm:$0xff]
    %v5670 = vld [vmem:[#allocation3 + $0xdb0] sm:$0xff]
    %v5671 = vld [vmem:[#allocation3 + $0xdb8] sm:$0xff]
    %v5672 = vld [vmem:[#allocation3 + $0xdc0] sm:$0xff]
    %v5673 = vld [vmem:[#allocation3 + $0xdc8] sm:$0xff]
    %v5674 = vld [vmem:[#allocation3 + $0xdd0] sm:$0xff]
    %v5675 = vld [vmem:[#allocation3 + $0xdd8] sm:$0xff]
    %v5676 = vld [vmem:[#allocation3 + $0xde0] sm:$0xff]
    %v5677 = vld [vmem:[#allocation3 + $0xde8] sm:$0xff]
    %v5678 = vld [vmem:[#allocation3 + $0xdf0] sm:$0xff]
    %v5679 = vld [vmem:[#allocation3 + $0xdf8] sm:$0xff]
    %v5680 = vld [vmem:[#allocation3 + $0xe00] sm:$0xff]
    %v5681 = vld [vmem:[#allocation3 + $0xe08] sm:$0xff]
    %v5682 = vld [vmem:[#allocation3 + $0xe10] sm:$0xff]
    %v5683 = vld [vmem:[#allocation3 + $0xe18] sm:$0xff]
    %v5684 = vld [vmem:[#allocation3 + $0xe20] sm:$0xff]
    %v5685 = vld [vmem:[#allocation3 + $0xe28] sm:$0xff]
    %v5686 = vld [vmem:[#allocation3 + $0xe30] sm:$0xff]
    %v5687 = vld [vmem:[#allocation3 + $0xe38] sm:$0xff]
    %v5688 = vld [vmem:[#allocation3 + $0xe40] sm:$0xff]
    %v5689 = vld [vmem:[#allocation3 + $0xe48] sm:$0xff]
    %v5690 = vld [vmem:[#allocation3 + $0xe50] sm:$0xff]
    %v5691 = vld [vmem:[#allocation3 + $0xe58] sm:$0xff]
    %v5692 = vld [vmem:[#allocation3 + $0xe60] sm:$0xff]
    %v5693 = vld [vmem:[#allocation3 + $0xe68] sm:$0xff]
    %v5694 = vld [vmem:[#allocation3 + $0xe70] sm:$0xff]
    %v5695 = vld [vmem:[#allocation3 + $0xe78] sm:$0xff]
    %v5696 = vld [vmem:[#allocation3 + $0xe80] sm:$0xff]
    %v5697 = vld [vmem:[#allocation3 + $0xe88] sm:$0xff]
    %v5698 = vld [vmem:[#allocation3 + $0xe90] sm:$0xff]
    %v5699 = vld [vmem:[#allocation3 + $0xe98] sm:$0xff]
    %v5700 = vld [vmem:[#allocation3 + $0xea0] sm:$0xff]
    %v5701 = vld [vmem:[#allocation3 + $0xea8] sm:$0xff]
    %v5702 = vld [vmem:[#allocation3 + $0xeb0] sm:$0xff]
    %v5703 = vld [vmem:[#allocation3 + $0xeb8] sm:$0xff]
    %v5704 = vld [vmem:[#allocation3 + $0xec0] sm:$0xff]
    %v5705 = vld [vmem:[#allocation3 + $0xec8] sm:$0xff]
    %v5706 = vld [vmem:[#allocation3 + $0xed0] sm:$0xff]
    %v5707 = vld [vmem:[#allocation3 + $0xed8] sm:$0xff]
    %v5708 = vld [vmem:[#allocation3 + $0xee0] sm:$0xff]
    %v5709 = vld [vmem:[#allocation3 + $0xee8] sm:$0xff]
    %v5710 = vld [vmem:[#allocation3 + $0xef0] sm:$0xff]
    %v5711 = vld [vmem:[#allocation3 + $0xef8] sm:$0xff]
    %v5712 = vld [vmem:[#allocation3 + $0xf00] sm:$0xff]
    %v5713 = vld [vmem:[#allocation3 + $0xf08] sm:$0xff]
    %v5714 = vld [vmem:[#allocation3 + $0xf10] sm:$0xff]
    %v5715 = vld [vmem:[#allocation3 + $0xf18] sm:$0xff]
    %v5716 = vld [vmem:[#allocation3 + $0xf20] sm:$0xff]
    %v5717 = vld [vmem:[#allocation3 + $0xf28] sm:$0xff]
    %v5718 = vld [vmem:[#allocation3 + $0xf30] sm:$0xff]
    %v5719 = vld [vmem:[#allocation3 + $0xf38] sm:$0xff]
    %v5720 = vld [vmem:[#allocation3 + $0xf40] sm:$0xff]
    %v5721 = vld [vmem:[#allocation3 + $0xf48] sm:$0xff]
    %v5722 = vld [vmem:[#allocation3 + $0xf50] sm:$0xff]
    %v5723 = vld [vmem:[#allocation3 + $0xf58] sm:$0xff]
    %v5724 = vld [vmem:[#allocation3 + $0xf60] sm:$0xff]
    %v5725 = vld [vmem:[#allocation3 + $0xf68] sm:$0xff]
    %v5726 = vld [vmem:[#allocation3 + $0xf70] sm:$0xff]
    %v5727 = vld [vmem:[#allocation3 + $0xf78] sm:$0xff]
    %v5728 = vld [vmem:[#allocation3 + $0xf80] sm:$0xff]
    %v5729 = vld [vmem:[#allocation3 + $0xf88] sm:$0xff]
    %v5730 = vld [vmem:[#allocation3 + $0xf90] sm:$0xff]
    %v5731 = vld [vmem:[#allocation3 + $0xf98] sm:$0xff]
    %v5732 = vld [vmem:[#allocation3 + $0xfa0] sm:$0xff]
    %v5733 = vld [vmem:[#allocation3 + $0xfa8] sm:$0xff]
    %v5734 = vld [vmem:[#allocation3 + $0xfb0] sm:$0xff]
    %v5735 = vld [vmem:[#allocation3 + $0xfb8] sm:$0xff]
    %v5736 = vld [vmem:[#allocation3 + $0xfc0] sm:$0xff]
    %v5737 = vld [vmem:[#allocation3 + $0xfc8] sm:$0xff]
    %v5738 = vld [vmem:[#allocation3 + $0xfd0] sm:$0xff]
    %v5739 = vld [vmem:[#allocation3 + $0xfd8] sm:$0xff]
    %v5740 = vld [vmem:[#allocation3 + $0xfe0] sm:$0xff]
    %v5741 = vld [vmem:[#allocation3 + $0xfe8] sm:$0xff]
    %v5742 = vld [vmem:[#allocation3 + $0xff0] sm:$0xff]
    %v5743 = vld [vmem:[#allocation3 + $0xff8] sm:$0xff]
    %v5744 = vld [vmem:[#allocation3 + $0x1000] sm:$0xff]
    %v5745 = vld [vmem:[#allocation3 + $0x1008] sm:$0xff]
    %v5746 = vld [vmem:[#allocation3 + $0x1010] sm:$0xff]
    %v5747 = vld [vmem:[#allocation3 + $0x1018] sm:$0xff]
    %v5748 = vld [vmem:[#allocation3 + $0x1020] sm:$0xff]
    %v5749 = vld [vmem:[#allocation3 + $0x1028] sm:$0xff]
    %v5750 = vld [vmem:[#allocation3 + $0x1030] sm:$0xff]
    %v5751 = vld [vmem:[#allocation3 + $0x1038] sm:$0xff]
    %v5752 = vld [vmem:[#allocation3 + $0x1040] sm:$0xff]
    %v5753 = vld [vmem:[#allocation3 + $0x1048] sm:$0xff]
    %v5754 = vld [vmem:[#allocation3 + $0x1050] sm:$0xff]
    %v5755 = vld [vmem:[#allocation3 + $0x1058] sm:$0xff]
    %v5756 = vld [vmem:[#allocation3 + $0x1060] sm:$0xff]
    %v5757 = vld [vmem:[#allocation3 + $0x1068] sm:$0xff]
    %v5758 = vld [vmem:[#allocation3 + $0x1070] sm:$0xff]
    %v5759 = vld [vmem:[#allocation3 + $0x1078] sm:$0xff]
    %v5760 = vld [vmem:[#allocation3 + $0x1080] sm:$0xff]
    %v5761 = vld [vmem:[#allocation3 + $0x1088] sm:$0xff]
    %v5762 = vld [vmem:[#allocation3 + $0x1090] sm:$0xff]
    %v5763 = vld [vmem:[#allocation3 + $0x1098] sm:$0xff]
    %v5764 = vld [vmem:[#allocation3 + $0x10a0] sm:$0xff]
    %v5765 = vld [vmem:[#allocation3 + $0x10a8] sm:$0xff]
    %v5766 = vld [vmem:[#allocation3 + $0x10b0] sm:$0xff]
    %v5767 = vld [vmem:[#allocation3 + $0x10b8] sm:$0xff]
    %v5768 = vld [vmem:[#allocation3 + $0x10c0] sm:$0xff]
    %v5769 = vld [vmem:[#allocation3 + $0x10c8] sm:$0xff]
    %v5770 = vld [vmem:[#allocation3 + $0x10d0] sm:$0xff]
    %v5771 = vld [vmem:[#allocation3 + $0x10d8] sm:$0xff]
    %v5772 = vld [vmem:[#allocation3 + $0x10e0] sm:$0xff]
    %v5773 = vld [vmem:[#allocation3 + $0x10e8] sm:$0xff]
    %v5774 = vld [vmem:[#allocation3 + $0x10f0] sm:$0xff]
    %v5775 = vld [vmem:[#allocation3 + $0x10f8] sm:$0xff]
    %v5776 = vld [vmem:[#allocation3 + $0x1100] sm:$0xff]
    %v5777 = vld [vmem:[#allocation3 + $0x1108] sm:$0xff]
    %v5778 = vld [vmem:[#allocation3 + $0x1110] sm:$0xff]
    %v5779 = vld [vmem:[#allocation3 + $0x1118] sm:$0xff]
    %v5780 = vld [vmem:[#allocation3 + $0x1120] sm:$0xff]
    %v5781 = vld [vmem:[#allocation3 + $0x1128] sm:$0xff]
    %v5782 = vld [vmem:[#allocation3 + $0x1130] sm:$0xff]
    %v5783 = vld [vmem:[#allocation3 + $0x1138] sm:$0xff]
    %v5784 = vld [vmem:[#allocation3 + $0x1140] sm:$0xff]
    %v5785 = vld [vmem:[#allocation3 + $0x1148] sm:$0xff]
    %v5786 = vld [vmem:[#allocation3 + $0x1150] sm:$0xff]
    %v5787 = vld [vmem:[#allocation3 + $0x1158] sm:$0xff]
    %v5788 = vld [vmem:[#allocation3 + $0x1160] sm:$0xff]
    %v5789 = vld [vmem:[#allocation3 + $0x1168] sm:$0xff]
    %v5790 = vld [vmem:[#allocation3 + $0x1170] sm:$0xff]
    %v5791 = vld [vmem:[#allocation3 + $0x1178] sm:$0xff]
    %v5792 = vld [vmem:[#allocation3 + $0x1180] sm:$0xff]
    %v5793 = vld [vmem:[#allocation3 + $0x1188] sm:$0xff]
    %v5794 = vld [vmem:[#allocation3 + $0x1190] sm:$0xff]
    %v5795 = vld [vmem:[#allocation3 + $0x1198] sm:$0xff]
    %v5796 = vld [vmem:[#allocation3 + $0x11a0] sm:$0xff]
    %v5797 = vld [vmem:[#allocation3 + $0x11a8] sm:$0xff]
    %v5798 = vld [vmem:[#allocation3 + $0x11b0] sm:$0xff]
    %v5799 = vld [vmem:[#allocation3 + $0x11b8] sm:$0xff]
    %v5800 = vld [vmem:[#allocation3 + $0x11c0] sm:$0xff]
    %v5801 = vld [vmem:[#allocation3 + $0x11c8] sm:$0xff]
    %v5802 = vld [vmem:[#allocation3 + $0x11d0] sm:$0xff]
    %v5803 = vld [vmem:[#allocation3 + $0x11d8] sm:$0xff]
    %v5804 = vld [vmem:[#allocation3 + $0x11e0] sm:$0xff]
    %v5805 = vld [vmem:[#allocation3 + $0x11e8] sm:$0xff]
    %v5806 = vld [vmem:[#allocation3 + $0x11f0] sm:$0xff]
    %v5807 = vld [vmem:[#allocation3 + $0x11f8] sm:$0xff]
    %v5808 = vld [vmem:[#allocation7] sm:$0xff]
    %v5809 = vld [vmem:[#allocation7 + $0x8] sm:$0xff]
    %v5810 = vld [vmem:[#allocation7 + $0x10] sm:$0xff]
    %v5811 = vld [vmem:[#allocation7 + $0x18] sm:$0xff]
    %v5812 = vld [vmem:[#allocation7 + $0x20] sm:$0xff]
    %v5813 = vld [vmem:[#allocation7 + $0x28] sm:$0xff]
    %v5814 = vld [vmem:[#allocation7 + $0x30] sm:$0xff]
    %v5815 = vld [vmem:[#allocation7 + $0x38] sm:$0xff]
    %v5816 = vld [vmem:[#allocation7 + $0x40] sm:$0xff]
    %v5817 = vld [vmem:[#allocation7 + $0x48] sm:$0xff]
    %v5818 = vld [vmem:[#allocation7 + $0x50] sm:$0xff]
    %v5819 = vld [vmem:[#allocation7 + $0x58] sm:$0xff]
    %v5820 = vld [vmem:[#allocation7 + $0x60] sm:$0xff]
    %v5821 = vld [vmem:[#allocation7 + $0x68] sm:$0xff]
    %v5822 = vld [vmem:[#allocation7 + $0x70] sm:$0xff]
    %v5823 = vld [vmem:[#allocation7 + $0x78] sm:$0xff]
    %v5824 = vld [vmem:[#allocation7 + $0x80] sm:$0xff]
    %v5825 = vld [vmem:[#allocation7 + $0x88] sm:$0xff]
    %v5826 = vld [vmem:[#allocation7 + $0x90] sm:$0xff]
    %v5827 = vld [vmem:[#allocation7 + $0x98] sm:$0xff]
    %v5828 = vld [vmem:[#allocation7 + $0xa0] sm:$0xff]
    %v5829 = vld [vmem:[#allocation7 + $0xa8] sm:$0xff]
    %v5830 = vld [vmem:[#allocation7 + $0xb0] sm:$0xff]
    %v5831 = vld [vmem:[#allocation7 + $0xb8] sm:$0xff]
    %v5832 = vld [vmem:[#allocation7 + $0xc0] sm:$0xff]
    %v5833 = vld [vmem:[#allocation7 + $0xc8] sm:$0xff]
    %v5834 = vld [vmem:[#allocation7 + $0xd0] sm:$0xff]
    %v5835 = vld [vmem:[#allocation7 + $0xd8] sm:$0xff]
    %v5836 = vld [vmem:[#allocation7 + $0xe0] sm:$0xff]
    %v5837 = vld [vmem:[#allocation7 + $0xe8] sm:$0xff]
    %v5838 = vld [vmem:[#allocation7 + $0xf0] sm:$0xff]
    %v5839 = vld [vmem:[#allocation7 + $0xf8] sm:$0xff]
    %v5840 = vld [vmem:[#allocation7 + $0x100] sm:$0xff]
    %v5841 = vld [vmem:[#allocation7 + $0x108] sm:$0xff]
    %v5842 = vld [vmem:[#allocation7 + $0x110] sm:$0xff]
    %v5843 = vld [vmem:[#allocation7 + $0x118] sm:$0xff]
    %v5844 = vld [vmem:[#allocation7 + $0x120] sm:$0xff]
    %v5845 = vld [vmem:[#allocation7 + $0x128] sm:$0xff]
    %v5846 = vld [vmem:[#allocation7 + $0x130] sm:$0xff]
    %v5847 = vld [vmem:[#allocation7 + $0x138] sm:$0xff]
    %v5848 = vld [vmem:[#allocation7 + $0x140] sm:$0xff]
    %v5849 = vld [vmem:[#allocation7 + $0x148] sm:$0xff]
    %v5850 = vld [vmem:[#allocation7 + $0x150] sm:$0xff]
    %v5851 = vld [vmem:[#allocation7 + $0x158] sm:$0xff]
    %v5852 = vld [vmem:[#allocation7 + $0x160] sm:$0xff]
    %v5853 = vld [vmem:[#allocation7 + $0x168] sm:$0xff]
    %v5854 = vld [vmem:[#allocation7 + $0x170] sm:$0xff]
    %v5855 = vld [vmem:[#allocation7 + $0x178] sm:$0xff]
    %v5856 = vld [vmem:[#allocation7 + $0x180] sm:$0xff]
    %v5857 = vld [vmem:[#allocation7 + $0x188] sm:$0xff]
    %v5858 = vld [vmem:[#allocation7 + $0x190] sm:$0xff]
    %v5859 = vld [vmem:[#allocation7 + $0x198] sm:$0xff]
    %v5860 = vld [vmem:[#allocation7 + $0x1a0] sm:$0xff]
    %v5861 = vld [vmem:[#allocation7 + $0x1a8] sm:$0xff]
    %v5862 = vld [vmem:[#allocation7 + $0x1b0] sm:$0xff]
    %v5863 = vld [vmem:[#allocation7 + $0x1b8] sm:$0xff]
    %v5864 = vld [vmem:[#allocation7 + $0x1c0] sm:$0xff]
    %v5865 = vld [vmem:[#allocation7 + $0x1c8] sm:$0xff]
    %v5866 = vld [vmem:[#allocation7 + $0x1d0] sm:$0xff]
    %v5867 = vld [vmem:[#allocation7 + $0x1d8] sm:$0xff]
    %v5868 = vld [vmem:[#allocation7 + $0x1e0] sm:$0xff]
    %v5869 = vld [vmem:[#allocation7 + $0x1e8] sm:$0xff]
    %v5870 = vld [vmem:[#allocation7 + $0x1f0] sm:$0xff]
    %v5871 = vld [vmem:[#allocation7 + $0x1f8] sm:$0xff]
    %v5872 = vld [vmem:[#allocation7 + $0x200] sm:$0xff]
    %v5873 = vld [vmem:[#allocation7 + $0x208] sm:$0xff]
    %v5874 = vld [vmem:[#allocation7 + $0x210] sm:$0xff]
    %v5875 = vld [vmem:[#allocation7 + $0x218] sm:$0xff]
    %v5876 = vld [vmem:[#allocation7 + $0x220] sm:$0xff]
    %v5877 = vld [vmem:[#allocation7 + $0x228] sm:$0xff]
    %v5878 = vld [vmem:[#allocation7 + $0x230] sm:$0xff]
    %v5879 = vld [vmem:[#allocation7 + $0x238] sm:$0xff]
    %v5880 = vld [vmem:[#allocation7 + $0x240] sm:$0xff]
    %v5881 = vld [vmem:[#allocation7 + $0x248] sm:$0xff]
    %v5882 = vld [vmem:[#allocation7 + $0x250] sm:$0xff]
    %v5883 = vld [vmem:[#allocation7 + $0x258] sm:$0xff]
    %v5884 = vld [vmem:[#allocation7 + $0x260] sm:$0xff]
    %v5885 = vld [vmem:[#allocation7 + $0x268] sm:$0xff]
    %v5886 = vld [vmem:[#allocation7 + $0x270] sm:$0xff]
    %v5887 = vld [vmem:[#allocation7 + $0x278] sm:$0xff]
    %v5888 = vld [vmem:[#allocation7 + $0x280] sm:$0xff]
    %v5889 = vld [vmem:[#allocation7 + $0x288] sm:$0xff]
    %v5890 = vld [vmem:[#allocation7 + $0x290] sm:$0xff]
    %v5891 = vld [vmem:[#allocation7 + $0x298] sm:$0xff]
    %v5892 = vld [vmem:[#allocation7 + $0x2a0] sm:$0xff]
    %v5893 = vld [vmem:[#allocation7 + $0x2a8] sm:$0xff]
    %v5894 = vld [vmem:[#allocation7 + $0x2b0] sm:$0xff]
    %v5895 = vld [vmem:[#allocation7 + $0x2b8] sm:$0xff]
    %v5896 = vld [vmem:[#allocation7 + $0x2c0] sm:$0xff]
    %v5897 = vld [vmem:[#allocation7 + $0x2c8] sm:$0xff]
    %v5898 = vld [vmem:[#allocation7 + $0x2d0] sm:$0xff]
    %v5899 = vld [vmem:[#allocation7 + $0x2d8] sm:$0xff]
    %v5900 = vld [vmem:[#allocation7 + $0x2e0] sm:$0xff]
    %v5901 = vld [vmem:[#allocation7 + $0x2e8] sm:$0xff]
    %v5902 = vld [vmem:[#allocation7 + $0x2f0] sm:$0xff]
    %v5903 = vld [vmem:[#allocation7 + $0x2f8] sm:$0xff]
    %v5904 = vld [vmem:[#allocation7 + $0x300] sm:$0xff]
    %v5905 = vld [vmem:[#allocation7 + $0x308] sm:$0xff]
    %v5906 = vld [vmem:[#allocation7 + $0x310] sm:$0xff]
    %v5907 = vld [vmem:[#allocation7 + $0x318] sm:$0xff]
    %v5908 = vld [vmem:[#allocation7 + $0x320] sm:$0xff]
    %v5909 = vld [vmem:[#allocation7 + $0x328] sm:$0xff]
    %v5910 = vld [vmem:[#allocation7 + $0x330] sm:$0xff]
    %v5911 = vld [vmem:[#allocation7 + $0x338] sm:$0xff]
    %v5912 = vld [vmem:[#allocation7 + $0x340] sm:$0xff]
    %v5913 = vld [vmem:[#allocation7 + $0x348] sm:$0xff]
    %v5914 = vld [vmem:[#allocation7 + $0x350] sm:$0xff]
    %v5915 = vld [vmem:[#allocation7 + $0x358] sm:$0xff]
    %v5916 = vld [vmem:[#allocation7 + $0x360] sm:$0xff]
    %v5917 = vld [vmem:[#allocation7 + $0x368] sm:$0xff]
    %v5918 = vld [vmem:[#allocation7 + $0x370] sm:$0xff]
    %v5919 = vld [vmem:[#allocation7 + $0x378] sm:$0xff]
    %v5920 = vld [vmem:[#allocation7 + $0x380] sm:$0xff]
    %v5921 = vld [vmem:[#allocation7 + $0x388] sm:$0xff]
    %v5922 = vld [vmem:[#allocation7 + $0x390] sm:$0xff]
    %v5923 = vld [vmem:[#allocation7 + $0x398] sm:$0xff]
    %v5924 = vld [vmem:[#allocation7 + $0x3a0] sm:$0xff]
    %v5925 = vld [vmem:[#allocation7 + $0x3a8] sm:$0xff]
    %v5926 = vld [vmem:[#allocation7 + $0x3b0] sm:$0xff]
    %v5927 = vld [vmem:[#allocation7 + $0x3b8] sm:$0xff]
    %v5928 = vld [vmem:[#allocation7 + $0x3c0] sm:$0xff]
    %v5929 = vld [vmem:[#allocation7 + $0x3c8] sm:$0xff]
    %v5930 = vld [vmem:[#allocation7 + $0x3d0] sm:$0xff]
    %v5931 = vld [vmem:[#allocation7 + $0x3d8] sm:$0xff]
    %v5932 = vld [vmem:[#allocation7 + $0x3e0] sm:$0xff]
    %v5933 = vld [vmem:[#allocation7 + $0x3e8] sm:$0xff]
    %v5934 = vld [vmem:[#allocation7 + $0x3f0] sm:$0xff]
    %v5935 = vld [vmem:[#allocation7 + $0x3f8] sm:$0xff]
    %v5936 = vld [vmem:[#allocation7 + $0x400] sm:$0xff]
    %v5937 = vld [vmem:[#allocation7 + $0x408] sm:$0xff]
    %v5938 = vld [vmem:[#allocation7 + $0x410] sm:$0xff]
    %v5939 = vld [vmem:[#allocation7 + $0x418] sm:$0xff]
    %v5940 = vld [vmem:[#allocation7 + $0x420] sm:$0xff]
    %v5941 = vld [vmem:[#allocation7 + $0x428] sm:$0xff]
    %v5942 = vld [vmem:[#allocation7 + $0x430] sm:$0xff]
    %v5943 = vld [vmem:[#allocation7 + $0x438] sm:$0xff]
    %v5944 = vld [vmem:[#allocation7 + $0x440] sm:$0xff]
    %v5945 = vld [vmem:[#allocation7 + $0x448] sm:$0xff]
    %v5946 = vld [vmem:[#allocation7 + $0x450] sm:$0xff]
    %v5947 = vld [vmem:[#allocation7 + $0x458] sm:$0xff]
    %v5948 = vld [vmem:[#allocation7 + $0x460] sm:$0xff]
    %v5949 = vld [vmem:[#allocation7 + $0x468] sm:$0xff]
    %v5950 = vld [vmem:[#allocation7 + $0x470] sm:$0xff]
    %v5951 = vld [vmem:[#allocation7 + $0x478] sm:$0xff]
    %5952 = vmatpush.msra.mxu0 %v5823
    %5953 = vmatpush.msra.mxu0 %v5822
    %5954 = vmatpush.msra.mxu0 %v5821
    %5955 = vmatpush.msra.mxu0 %v5820
    %5956 = vmatpush.msra.mxu0 %v5819
    %5957 = vmatpush.msra.mxu0 %v5818
    %5958 = vmatpush.msra.mxu0 %v5817
    %5959 = vmatpush.msra.mxu0 %v5816
    %5960 = vmatpush.msra.mxu0 %v5815
    %5961 = vmatpush.msra.mxu0 %v5814
    %5962 = vmatpush.msra.mxu0 %v5813
    %5963 = vmatpush.msra.mxu0 %v5812
    %5964 = vmatpush.msra.mxu0 %v5811
    %5965 = vmatpush.msra.mxu0 %v5810
    %5966 = vmatpush.msra.mxu0 %v5809
    %5967 = vmatpush.msra.mxu0 %v5808
    %5968 = vmatmul.f32.gmra.mxu0 %v5232
    %v5969 = vpop.f32.mrf.mxu0
    %v5970 = vadd.f32 0.0, %v5969
    %5971 = vmatmul.f32.gmra.mxu0 %v5241
    %v5972 = vpop.f32.mrf.mxu0
    %v5973 = vadd.f32 0.0, %v5972
    %5974 = vmatmul.f32.gmra.mxu0 %v5250
    %v5975 = vpop.f32.mrf.mxu0
    %v5976 = vadd.f32 0.0, %v5975
    %5977 = vmatmul.f32.gmra.mxu0 %v5259
    %v5978 = vpop.f32.mrf.mxu0
    %v5979 = vadd.f32 0.0, %v5978
    %5980 = vmatmul.f32.gmra.mxu0 %v5268
    %v5981 = vpop.f32.mrf.mxu0
    %v5982 = vadd.f32 0.0, %v5981
    %5983 = vmatmul.f32.gmra.mxu0 %v5277
    %v5984 = vpop.f32.mrf.mxu0
    %v5985 = vadd.f32 0.0, %v5984
    %5986 = vmatmul.f32.gmra.mxu0 %v5286
    %v5987 = vpop.f32.mrf.mxu0
    %v5988 = vadd.f32 0.0, %v5987
    %5989 = vmatmul.f32.gmra.mxu0 %v5295
    %v5990 = vpop.f32.mrf.mxu0
    %v5991 = vadd.f32 0.0, %v5990
    %5992 = vmatmul.f32.gmra.mxu0 %v5304
    %v5993 = vpop.f32.mrf.mxu0
    %v5994 = vadd.f32 0.0, %v5993
    %5995 = vmatmul.f32.gmra.mxu0 %v5313
    %v5996 = vpop.f32.mrf.mxu0
    %v5997 = vadd.f32 0.0, %v5996
    %5998 = vmatmul.f32.gmra.mxu0 %v5322
    %v5999 = vpop.f32.mrf.mxu0
    %v6000 = vadd.f32 0.0, %v5999
    %6001 = vmatmul.f32.gmra.mxu0 %v5331
    %v6002 = vpop.f32.mrf.mxu0
    %v6003 = vadd.f32 0.0, %v6002
    %6004 = vmatmul.f32.gmra.mxu0 %v5340
    %v6005 = vpop.f32.mrf.mxu0
    %v6006 = vadd.f32 0.0, %v6005
    %6007 = vmatmul.f32.gmra.mxu0 %v5349
    %v6008 = vpop.f32.mrf.mxu0
    %v6009 = vadd.f32 0.0, %v6008
    %6010 = vmatmul.f32.gmra.mxu0 %v5358
    %v6011 = vpop.f32.mrf.mxu0
    %v6012 = vadd.f32 0.0, %v6011
    %6013 = vmatmul.f32.gmra.mxu0 %v5367
    %v6014 = vpop.f32.mrf.mxu0
    %v6015 = vadd.f32 0.0, %v6014
    %6016 = vmatmul.f32.gmra.mxu0 %v5376
    %v6017 = vpop.f32.mrf.mxu0
    %v6018 = vadd.f32 0.0, %v6017
    %6019 = vmatmul.f32.gmra.mxu0 %v5385
    %v6020 = vpop.f32.mrf.mxu0
    %v6021 = vadd.f32 0.0, %v6020
    %6022 = vmatmul.f32.gmra.mxu0 %v5394
    %v6023 = vpop.f32.mrf.mxu0
    %v6024 = vadd.f32 0.0, %v6023
    %6025 = vmatmul.f32.gmra.mxu0 %v5403
    %v6026 = vpop.f32.mrf.mxu0
    %v6027 = vadd.f32 0.0, %v6026
    %6028 = vmatmul.f32.gmra.mxu0 %v5412
    %v6029 = vpop.f32.mrf.mxu0
    %v6030 = vadd.f32 0.0, %v6029
    %6031 = vmatmul.f32.gmra.mxu0 %v5421
    %v6032 = vpop.f32.mrf.mxu0
    %v6033 = vadd.f32 0.0, %v6032
    %6034 = vmatmul.f32.gmra.mxu0 %v5430
    %v6035 = vpop.f32.mrf.mxu0
    %v6036 = vadd.f32 0.0, %v6035
    %6037 = vmatmul.f32.gmra.mxu0 %v5439
    %v6038 = vpop.f32.mrf.mxu0
    %v6039 = vadd.f32 0.0, %v6038
    %6040 = vmatmul.f32.gmra.mxu0 %v5448
    %v6041 = vpop.f32.mrf.mxu0
    %v6042 = vadd.f32 0.0, %v6041
    %6043 = vmatmul.f32.gmra.mxu0 %v5457
    %v6044 = vpop.f32.mrf.mxu0
    %v6045 = vadd.f32 0.0, %v6044
    %6046 = vmatmul.f32.gmra.mxu0 %v5466
    %v6047 = vpop.f32.mrf.mxu0
    %v6048 = vadd.f32 0.0, %v6047
    %6049 = vmatmul.f32.gmra.mxu0 %v5475
    %v6050 = vpop.f32.mrf.mxu0
    %v6051 = vadd.f32 0.0, %v6050
    %6052 = vmatmul.f32.gmra.mxu0 %v5484
    %v6053 = vpop.f32.mrf.mxu0
    %v6054 = vadd.f32 0.0, %v6053
    %6055 = vmatmul.f32.gmra.mxu0 %v5493
    %v6056 = vpop.f32.mrf.mxu0
    %v6057 = vadd.f32 0.0, %v6056
    %6058 = vmatmul.f32.gmra.mxu0 %v5502
    %v6059 = vpop.f32.mrf.mxu0
    %v6060 = vadd.f32 0.0, %v6059
    %6061 = vmatmul.f32.gmra.mxu0 %v5511
    %v6062 = vpop.f32.mrf.mxu0
    %v6063 = vadd.f32 0.0, %v6062
    %6064 = vmatmul.f32.gmra.mxu0 %v5520
    %v6065 = vpop.f32.mrf.mxu0
    %v6066 = vadd.f32 0.0, %v6065
    %6067 = vmatmul.f32.gmra.mxu0 %v5529
    %v6068 = vpop.f32.mrf.mxu0
    %v6069 = vadd.f32 0.0, %v6068
    %6070 = vmatmul.f32.gmra.mxu0 %v5538
    %v6071 = vpop.f32.mrf.mxu0
    %v6072 = vadd.f32 0.0, %v6071
    %6073 = vmatmul.f32.gmra.mxu0 %v5547
    %v6074 = vpop.f32.mrf.mxu0
    %v6075 = vadd.f32 0.0, %v6074
    %6076 = vmatmul.f32.gmra.mxu0 %v5556
    %v6077 = vpop.f32.mrf.mxu0
    %v6078 = vadd.f32 0.0, %v6077
    %6079 = vmatmul.f32.gmra.mxu0 %v5565
    %v6080 = vpop.f32.mrf.mxu0
    %v6081 = vadd.f32 0.0, %v6080
    %6082 = vmatmul.f32.gmra.mxu0 %v5574
    %v6083 = vpop.f32.mrf.mxu0
    %v6084 = vadd.f32 0.0, %v6083
    %6085 = vmatmul.f32.gmra.mxu0 %v5583
    %v6086 = vpop.f32.mrf.mxu0
    %v6087 = vadd.f32 0.0, %v6086
    %6088 = vmatmul.f32.gmra.mxu0 %v5592
    %v6089 = vpop.f32.mrf.mxu0
    %v6090 = vadd.f32 0.0, %v6089
    %6091 = vmatmul.f32.gmra.mxu0 %v5601
    %v6092 = vpop.f32.mrf.mxu0
    %v6093 = vadd.f32 0.0, %v6092
    %6094 = vmatmul.f32.gmra.mxu0 %v5610
    %v6095 = vpop.f32.mrf.mxu0
    %v6096 = vadd.f32 0.0, %v6095
    %6097 = vmatmul.f32.gmra.mxu0 %v5619
    %v6098 = vpop.f32.mrf.mxu0
    %v6099 = vadd.f32 0.0, %v6098
    %6100 = vmatmul.f32.gmra.mxu0 %v5628
    %v6101 = vpop.f32.mrf.mxu0
    %v6102 = vadd.f32 0.0, %v6101
    %6103 = vmatmul.f32.gmra.mxu0 %v5637
    %v6104 = vpop.f32.mrf.mxu0
    %v6105 = vadd.f32 0.0, %v6104
    %6106 = vmatmul.f32.gmra.mxu0 %v5646
    %v6107 = vpop.f32.mrf.mxu0
    %v6108 = vadd.f32 0.0, %v6107
    %6109 = vmatmul.f32.gmra.mxu0 %v5655
    %v6110 = vpop.f32.mrf.mxu0
    %v6111 = vadd.f32 0.0, %v6110
    %6112 = vmatmul.f32.gmra.mxu0 %v5664
    %v6113 = vpop.f32.mrf.mxu0
    %v6114 = vadd.f32 0.0, %v6113
    %6115 = vmatmul.f32.gmra.mxu0 %v5673
    %v6116 = vpop.f32.mrf.mxu0
    %v6117 = vadd.f32 0.0, %v6116
    %6118 = vmatmul.f32.gmra.mxu0 %v5682
    %v6119 = vpop.f32.mrf.mxu0
    %v6120 = vadd.f32 0.0, %v6119
    %6121 = vmatmul.f32.gmra.mxu0 %v5691
    %v6122 = vpop.f32.mrf.mxu0
    %v6123 = vadd.f32 0.0, %v6122
    %6124 = vmatmul.f32.gmra.mxu0 %v5700
    %v6125 = vpop.f32.mrf.mxu0
    %v6126 = vadd.f32 0.0, %v6125
    %6127 = vmatmul.f32.gmra.mxu0 %v5709
    %v6128 = vpop.f32.mrf.mxu0
    %v6129 = vadd.f32 0.0, %v6128
    %6130 = vmatmul.f32.gmra.mxu0 %v5718
    %v6131 = vpop.f32.mrf.mxu0
    %v6132 = vadd.f32 0.0, %v6131
    %6133 = vmatmul.f32.gmra.mxu0 %v5727
    %v6134 = vpop.f32.mrf.mxu0
    %v6135 = vadd.f32 0.0, %v6134
    %6136 = vmatmul.f32.gmra.mxu0 %v5736
    %v6137 = vpop.f32.mrf.mxu0
    %v6138 = vadd.f32 0.0, %v6137
    %6139 = vmatmul.f32.gmra.mxu0 %v5745
    %v6140 = vpop.f32.mrf.mxu0
    %v6141 = vadd.f32 0.0, %v6140
    %6142 = vmatmul.f32.gmra.mxu0 %v5754
    %v6143 = vpop.f32.mrf.mxu0
    %v6144 = vadd.f32 0.0, %v6143
    %6145 = vmatmul.f32.gmra.mxu0 %v5763
    %v6146 = vpop.f32.mrf.mxu0
    %v6147 = vadd.f32 0.0, %v6146
    %6148 = vmatmul.f32.gmra.mxu0 %v5772
    %v6149 = vpop.f32.mrf.mxu0
    %v6150 = vadd.f32 0.0, %v6149
    %6151 = vmatmul.f32.gmra.mxu0 %v5781
    %v6152 = vpop.f32.mrf.mxu0
    %v6153 = vadd.f32 0.0, %v6152
    %6154 = vmatmul.f32.gmra.mxu0 %v5790
    %v6155 = vpop.f32.mrf.mxu0
    %v6156 = vadd.f32 0.0, %v6155
    %6157 = vmatmul.f32.gmra.mxu0 %v5799
    %v6158 = vpop.f32.mrf.mxu0
    %v6159 = vadd.f32 0.0, %v6158
    %6160 = vdwg.mxu0
    %6161 = vmatpush.msra.mxu0 %v5839
    %6162 = vmatpush.msra.mxu0 %v5838
    %6163 = vmatpush.msra.mxu0 %v5837
    %6164 = vmatpush.msra.mxu0 %v5836
    %6165 = vmatpush.msra.mxu0 %v5835
    %6166 = vmatpush.msra.mxu0 %v5834
    %6167 = vmatpush.msra.mxu0 %v5833
    %6168 = vmatpush.msra.mxu0 %v5832
    %6169 = vmatpush.msra.mxu0 %v5831
    %6170 = vmatpush.msra.mxu0 %v5830
    %6171 = vmatpush.msra.mxu0 %v5829
    %6172 = vmatpush.msra.mxu0 %v5828
    %6173 = vmatpush.msra.mxu0 %v5827
    %6174 = vmatpush.msra.mxu0 %v5826
    %6175 = vmatpush.msra.mxu0 %v5825
    %6176 = vmatpush.msra.mxu0 %v5824
    %6177 = vmatmul.f32.gmra.mxu0 %v5233
    %v6178 = vpop.f32.mrf.mxu0
    %v6179 = vadd.f32 %v5970, %v6178
    %6180 = vmatmul.f32.gmra.mxu0 %v5242
    %v6181 = vpop.f32.mrf.mxu0
    %v6182 = vadd.f32 %v5973, %v6181
    %6183 = vmatmul.f32.gmra.mxu0 %v5251
    %v6184 = vpop.f32.mrf.mxu0
    %v6185 = vadd.f32 %v5976, %v6184
    %6186 = vmatmul.f32.gmra.mxu0 %v5260
    %v6187 = vpop.f32.mrf.mxu0
    %v6188 = vadd.f32 %v5979, %v6187
    %6189 = vmatmul.f32.gmra.mxu0 %v5269
    %v6190 = vpop.f32.mrf.mxu0
    %v6191 = vadd.f32 %v5982, %v6190
    %6192 = vmatmul.f32.gmra.mxu0 %v5278
    %v6193 = vpop.f32.mrf.mxu0
    %v6194 = vadd.f32 %v5985, %v6193
    %6195 = vmatmul.f32.gmra.mxu0 %v5287
    %v6196 = vpop.f32.mrf.mxu0
    %v6197 = vadd.f32 %v5988, %v6196
    %6198 = vmatmul.f32.gmra.mxu0 %v5296
    %v6199 = vpop.f32.mrf.mxu0
    %v6200 = vadd.f32 %v5991, %v6199
    %6201 = vmatmul.f32.gmra.mxu0 %v5305
    %v6202 = vpop.f32.mrf.mxu0
    %v6203 = vadd.f32 %v5994, %v6202
    %6204 = vmatmul.f32.gmra.mxu0 %v5314
    %v6205 = vpop.f32.mrf.mxu0
    %v6206 = vadd.f32 %v5997, %v6205
    %6207 = vmatmul.f32.gmra.mxu0 %v5323
    %v6208 = vpop.f32.mrf.mxu0
    %v6209 = vadd.f32 %v6000, %v6208
    %6210 = vmatmul.f32.gmra.mxu0 %v5332
    %v6211 = vpop.f32.mrf.mxu0
    %v6212 = vadd.f32 %v6003, %v6211
    %6213 = vmatmul.f32.gmra.mxu0 %v5341
    %v6214 = vpop.f32.mrf.mxu0
    %v6215 = vadd.f32 %v6006, %v6214
    %6216 = vmatmul.f32.gmra.mxu0 %v5350
    %v6217 = vpop.f32.mrf.mxu0
    %v6218 = vadd.f32 %v6009, %v6217
    %6219 = vmatmul.f32.gmra.mxu0 %v5359
    %v6220 = vpop.f32.mrf.mxu0
    %v6221 = vadd.f32 %v6012, %v6220
    %6222 = vmatmul.f32.gmra.mxu0 %v5368
    %v6223 = vpop.f32.mrf.mxu0
    %v6224 = vadd.f32 %v6015, %v6223
    %6225 = vmatmul.f32.gmra.mxu0 %v5377
    %v6226 = vpop.f32.mrf.mxu0
    %v6227 = vadd.f32 %v6018, %v6226
    %6228 = vmatmul.f32.gmra.mxu0 %v5386
    %v6229 = vpop.f32.mrf.mxu0
    %v6230 = vadd.f32 %v6021, %v6229
    %6231 = vmatmul.f32.gmra.mxu0 %v5395
    %v6232 = vpop.f32.mrf.mxu0
    %v6233 = vadd.f32 %v6024, %v6232
    %6234 = vmatmul.f32.gmra.mxu0 %v5404
    %v6235 = vpop.f32.mrf.mxu0
    %v6236 = vadd.f32 %v6027, %v6235
    %6237 = vmatmul.f32.gmra.mxu0 %v5413
    %v6238 = vpop.f32.mrf.mxu0
    %v6239 = vadd.f32 %v6030, %v6238
    %6240 = vmatmul.f32.gmra.mxu0 %v5422
    %v6241 = vpop.f32.mrf.mxu0
    %v6242 = vadd.f32 %v6033, %v6241
    %6243 = vmatmul.f32.gmra.mxu0 %v5431
    %v6244 = vpop.f32.mrf.mxu0
    %v6245 = vadd.f32 %v6036, %v6244
    %6246 = vmatmul.f32.gmra.mxu0 %v5440
    %v6247 = vpop.f32.mrf.mxu0
    %v6248 = vadd.f32 %v6039, %v6247
    %6249 = vmatmul.f32.gmra.mxu0 %v5449
    %v6250 = vpop.f32.mrf.mxu0
    %v6251 = vadd.f32 %v6042, %v6250
    %6252 = vmatmul.f32.gmra.mxu0 %v5458
    %v6253 = vpop.f32.mrf.mxu0
    %v6254 = vadd.f32 %v6045, %v6253
    %6255 = vmatmul.f32.gmra.mxu0 %v5467
    %v6256 = vpop.f32.mrf.mxu0
    %v6257 = vadd.f32 %v6048, %v6256
    %6258 = vmatmul.f32.gmra.mxu0 %v5476
    %v6259 = vpop.f32.mrf.mxu0
    %v6260 = vadd.f32 %v6051, %v6259
    %6261 = vmatmul.f32.gmra.mxu0 %v5485
    %v6262 = vpop.f32.mrf.mxu0
    %v6263 = vadd.f32 %v6054, %v6262
    %6264 = vmatmul.f32.gmra.mxu0 %v5494
    %v6265 = vpop.f32.mrf.mxu0
    %v6266 = vadd.f32 %v6057, %v6265
    %6267 = vmatmul.f32.gmra.mxu0 %v5503
    %v6268 = vpop.f32.mrf.mxu0
    %v6269 = vadd.f32 %v6060, %v6268
    %6270 = vmatmul.f32.gmra.mxu0 %v5512
    %v6271 = vpop.f32.mrf.mxu0
    %v6272 = vadd.f32 %v6063, %v6271
    %6273 = vmatmul.f32.gmra.mxu0 %v5521
    %v6274 = vpop.f32.mrf.mxu0
    %v6275 = vadd.f32 %v6066, %v6274
    %6276 = vmatmul.f32.gmra.mxu0 %v5530
    %v6277 = vpop.f32.mrf.mxu0
    %v6278 = vadd.f32 %v6069, %v6277
    %6279 = vmatmul.f32.gmra.mxu0 %v5539
    %v6280 = vpop.f32.mrf.mxu0
    %v6281 = vadd.f32 %v6072, %v6280
    %6282 = vmatmul.f32.gmra.mxu0 %v5548
    %v6283 = vpop.f32.mrf.mxu0
    %v6284 = vadd.f32 %v6075, %v6283
    %6285 = vmatmul.f32.gmra.mxu0 %v5557
    %v6286 = vpop.f32.mrf.mxu0
    %v6287 = vadd.f32 %v6078, %v6286
    %6288 = vmatmul.f32.gmra.mxu0 %v5566
    %v6289 = vpop.f32.mrf.mxu0
    %v6290 = vadd.f32 %v6081, %v6289
    %6291 = vmatmul.f32.gmra.mxu0 %v5575
    %v6292 = vpop.f32.mrf.mxu0
    %v6293 = vadd.f32 %v6084, %v6292
    %6294 = vmatmul.f32.gmra.mxu0 %v5584
    %v6295 = vpop.f32.mrf.mxu0
    %v6296 = vadd.f32 %v6087, %v6295
    %6297 = vmatmul.f32.gmra.mxu0 %v5593
    %v6298 = vpop.f32.mrf.mxu0
    %v6299 = vadd.f32 %v6090, %v6298
    %6300 = vmatmul.f32.gmra.mxu0 %v5602
    %v6301 = vpop.f32.mrf.mxu0
    %v6302 = vadd.f32 %v6093, %v6301
    %6303 = vmatmul.f32.gmra.mxu0 %v5611
    %v6304 = vpop.f32.mrf.mxu0
    %v6305 = vadd.f32 %v6096, %v6304
    %6306 = vmatmul.f32.gmra.mxu0 %v5620
    %v6307 = vpop.f32.mrf.mxu0
    %v6308 = vadd.f32 %v6099, %v6307
    %6309 = vmatmul.f32.gmra.mxu0 %v5629
    %v6310 = vpop.f32.mrf.mxu0
    %v6311 = vadd.f32 %v6102, %v6310
    %6312 = vmatmul.f32.gmra.mxu0 %v5638
    %v6313 = vpop.f32.mrf.mxu0
    %v6314 = vadd.f32 %v6105, %v6313
    %6315 = vmatmul.f32.gmra.mxu0 %v5647
    %v6316 = vpop.f32.mrf.mxu0
    %v6317 = vadd.f32 %v6108, %v6316
    %6318 = vmatmul.f32.gmra.mxu0 %v5656
    %v6319 = vpop.f32.mrf.mxu0
    %v6320 = vadd.f32 %v6111, %v6319
    %6321 = vmatmul.f32.gmra.mxu0 %v5665
    %v6322 = vpop.f32.mrf.mxu0
    %v6323 = vadd.f32 %v6114, %v6322
    %6324 = vmatmul.f32.gmra.mxu0 %v5674
    %v6325 = vpop.f32.mrf.mxu0
    %v6326 = vadd.f32 %v6117, %v6325
    %6327 = vmatmul.f32.gmra.mxu0 %v5683
    %v6328 = vpop.f32.mrf.mxu0
    %v6329 = vadd.f32 %v6120, %v6328
    %6330 = vmatmul.f32.gmra.mxu0 %v5692
    %v6331 = vpop.f32.mrf.mxu0
    %v6332 = vadd.f32 %v6123, %v6331
    %6333 = vmatmul.f32.gmra.mxu0 %v5701
    %v6334 = vpop.f32.mrf.mxu0
    %v6335 = vadd.f32 %v6126, %v6334
    %6336 = vmatmul.f32.gmra.mxu0 %v5710
    %v6337 = vpop.f32.mrf.mxu0
    %v6338 = vadd.f32 %v6129, %v6337
    %6339 = vmatmul.f32.gmra.mxu0 %v5719
    %v6340 = vpop.f32.mrf.mxu0
    %v6341 = vadd.f32 %v6132, %v6340
    %6342 = vmatmul.f32.gmra.mxu0 %v5728
    %v6343 = vpop.f32.mrf.mxu0
    %v6344 = vadd.f32 %v6135, %v6343
    %6345 = vmatmul.f32.gmra.mxu0 %v5737
    %v6346 = vpop.f32.mrf.mxu0
    %v6347 = vadd.f32 %v6138, %v6346
    %6348 = vmatmul.f32.gmra.mxu0 %v5746
    %v6349 = vpop.f32.mrf.mxu0
    %v6350 = vadd.f32 %v6141, %v6349
    %6351 = vmatmul.f32.gmra.mxu0 %v5755
    %v6352 = vpop.f32.mrf.mxu0
    %v6353 = vadd.f32 %v6144, %v6352
    %6354 = vmatmul.f32.gmra.mxu0 %v5764
    %v6355 = vpop.f32.mrf.mxu0
    %v6356 = vadd.f32 %v6147, %v6355
    %6357 = vmatmul.f32.gmra.mxu0 %v5773
    %v6358 = vpop.f32.mrf.mxu0
    %v6359 = vadd.f32 %v6150, %v6358
    %6360 = vmatmul.f32.gmra.mxu0 %v5782
    %v6361 = vpop.f32.mrf.mxu0
    %v6362 = vadd.f32 %v6153, %v6361
    %6363 = vmatmul.f32.gmra.mxu0 %v5791
    %v6364 = vpop.f32.mrf.mxu0
    %v6365 = vadd.f32 %v6156, %v6364
    %6366 = vmatmul.f32.gmra.mxu0 %v5800
    %v6367 = vpop.f32.mrf.mxu0
    %v6368 = vadd.f32 %v6159, %v6367
    %6369 = vdwg.mxu0
    %6370 = vmatpush.msra.mxu0 %v5855
    %6371 = vmatpush.msra.mxu0 %v5854
    %6372 = vmatpush.msra.mxu0 %v5853
    %6373 = vmatpush.msra.mxu0 %v5852
    %6374 = vmatpush.msra.mxu0 %v5851
    %6375 = vmatpush.msra.mxu0 %v5850
    %6376 = vmatpush.msra.mxu0 %v5849
    %6377 = vmatpush.msra.mxu0 %v5848
    %6378 = vmatpush.msra.mxu0 %v5847
    %6379 = vmatpush.msra.mxu0 %v5846
    %6380 = vmatpush.msra.mxu0 %v5845
    %6381 = vmatpush.msra.mxu0 %v5844
    %6382 = vmatpush.msra.mxu0 %v5843
    %6383 = vmatpush.msra.mxu0 %v5842
    %6384 = vmatpush.msra.mxu0 %v5841
    %6385 = vmatpush.msra.mxu0 %v5840
    %6386 = vmatmul.f32.gmra.mxu0 %v5234
    %v6387 = vpop.f32.mrf.mxu0
    %v6388 = vadd.f32 %v6179, %v6387
    %6389 = vmatmul.f32.gmra.mxu0 %v5243
    %v6390 = vpop.f32.mrf.mxu0
    %v6391 = vadd.f32 %v6182, %v6390
    %6392 = vmatmul.f32.gmra.mxu0 %v5252
    %v6393 = vpop.f32.mrf.mxu0
    %v6394 = vadd.f32 %v6185, %v6393
    %6395 = vmatmul.f32.gmra.mxu0 %v5261
    %v6396 = vpop.f32.mrf.mxu0
    %v6397 = vadd.f32 %v6188, %v6396
    %6398 = vmatmul.f32.gmra.mxu0 %v5270
    %v6399 = vpop.f32.mrf.mxu0
    %v6400 = vadd.f32 %v6191, %v6399
    %6401 = vmatmul.f32.gmra.mxu0 %v5279
    %v6402 = vpop.f32.mrf.mxu0
    %v6403 = vadd.f32 %v6194, %v6402
    %6404 = vmatmul.f32.gmra.mxu0 %v5288
    %v6405 = vpop.f32.mrf.mxu0
    %v6406 = vadd.f32 %v6197, %v6405
    %6407 = vmatmul.f32.gmra.mxu0 %v5297
    %v6408 = vpop.f32.mrf.mxu0
    %v6409 = vadd.f32 %v6200, %v6408
    %6410 = vmatmul.f32.gmra.mxu0 %v5306
    %v6411 = vpop.f32.mrf.mxu0
    %v6412 = vadd.f32 %v6203, %v6411
    %6413 = vmatmul.f32.gmra.mxu0 %v5315
    %v6414 = vpop.f32.mrf.mxu0
    %v6415 = vadd.f32 %v6206, %v6414
    %6416 = vmatmul.f32.gmra.mxu0 %v5324
    %v6417 = vpop.f32.mrf.mxu0
    %v6418 = vadd.f32 %v6209, %v6417
    %6419 = vmatmul.f32.gmra.mxu0 %v5333
    %v6420 = vpop.f32.mrf.mxu0
    %v6421 = vadd.f32 %v6212, %v6420
    %6422 = vmatmul.f32.gmra.mxu0 %v5342
    %v6423 = vpop.f32.mrf.mxu0
    %v6424 = vadd.f32 %v6215, %v6423
    %6425 = vmatmul.f32.gmra.mxu0 %v5351
    %v6426 = vpop.f32.mrf.mxu0
    %v6427 = vadd.f32 %v6218, %v6426
    %6428 = vmatmul.f32.gmra.mxu0 %v5360
    %v6429 = vpop.f32.mrf.mxu0
    %v6430 = vadd.f32 %v6221, %v6429
    %6431 = vmatmul.f32.gmra.mxu0 %v5369
    %v6432 = vpop.f32.mrf.mxu0
    %v6433 = vadd.f32 %v6224, %v6432
    %6434 = vmatmul.f32.gmra.mxu0 %v5378
    %v6435 = vpop.f32.mrf.mxu0
    %v6436 = vadd.f32 %v6227, %v6435
    %6437 = vmatmul.f32.gmra.mxu0 %v5387
    %v6438 = vpop.f32.mrf.mxu0
    %v6439 = vadd.f32 %v6230, %v6438
    %6440 = vmatmul.f32.gmra.mxu0 %v5396
    %v6441 = vpop.f32.mrf.mxu0
    %v6442 = vadd.f32 %v6233, %v6441
    %6443 = vmatmul.f32.gmra.mxu0 %v5405
    %v6444 = vpop.f32.mrf.mxu0
    %v6445 = vadd.f32 %v6236, %v6444
    %6446 = vmatmul.f32.gmra.mxu0 %v5414
    %v6447 = vpop.f32.mrf.mxu0
    %v6448 = vadd.f32 %v6239, %v6447
    %6449 = vmatmul.f32.gmra.mxu0 %v5423
    %v6450 = vpop.f32.mrf.mxu0
    %v6451 = vadd.f32 %v6242, %v6450
    %6452 = vmatmul.f32.gmra.mxu0 %v5432
    %v6453 = vpop.f32.mrf.mxu0
    %v6454 = vadd.f32 %v6245, %v6453
    %6455 = vmatmul.f32.gmra.mxu0 %v5441
    %v6456 = vpop.f32.mrf.mxu0
    %v6457 = vadd.f32 %v6248, %v6456
    %6458 = vmatmul.f32.gmra.mxu0 %v5450
    %v6459 = vpop.f32.mrf.mxu0
    %v6460 = vadd.f32 %v6251, %v6459
    %6461 = vmatmul.f32.gmra.mxu0 %v5459
    %v6462 = vpop.f32.mrf.mxu0
    %v6463 = vadd.f32 %v6254, %v6462
    %6464 = vmatmul.f32.gmra.mxu0 %v5468
    %v6465 = vpop.f32.mrf.mxu0
    %v6466 = vadd.f32 %v6257, %v6465
    %6467 = vmatmul.f32.gmra.mxu0 %v5477
    %v6468 = vpop.f32.mrf.mxu0
    %v6469 = vadd.f32 %v6260, %v6468
    %6470 = vmatmul.f32.gmra.mxu0 %v5486
    %v6471 = vpop.f32.mrf.mxu0
    %v6472 = vadd.f32 %v6263, %v6471
    %6473 = vmatmul.f32.gmra.mxu0 %v5495
    %v6474 = vpop.f32.mrf.mxu0
    %v6475 = vadd.f32 %v6266, %v6474
    %6476 = vmatmul.f32.gmra.mxu0 %v5504
    %v6477 = vpop.f32.mrf.mxu0
    %v6478 = vadd.f32 %v6269, %v6477
    %6479 = vmatmul.f32.gmra.mxu0 %v5513
    %v6480 = vpop.f32.mrf.mxu0
    %v6481 = vadd.f32 %v6272, %v6480
    %6482 = vmatmul.f32.gmra.mxu0 %v5522
    %v6483 = vpop.f32.mrf.mxu0
    %v6484 = vadd.f32 %v6275, %v6483
    %6485 = vmatmul.f32.gmra.mxu0 %v5531
    %v6486 = vpop.f32.mrf.mxu0
    %v6487 = vadd.f32 %v6278, %v6486
    %6488 = vmatmul.f32.gmra.mxu0 %v5540
    %v6489 = vpop.f32.mrf.mxu0
    %v6490 = vadd.f32 %v6281, %v6489
    %6491 = vmatmul.f32.gmra.mxu0 %v5549
    %v6492 = vpop.f32.mrf.mxu0
    %v6493 = vadd.f32 %v6284, %v6492
    %6494 = vmatmul.f32.gmra.mxu0 %v5558
    %v6495 = vpop.f32.mrf.mxu0
    %v6496 = vadd.f32 %v6287, %v6495
    %6497 = vmatmul.f32.gmra.mxu0 %v5567
    %v6498 = vpop.f32.mrf.mxu0
    %v6499 = vadd.f32 %v6290, %v6498
    %6500 = vmatmul.f32.gmra.mxu0 %v5576
    %v6501 = vpop.f32.mrf.mxu0
    %v6502 = vadd.f32 %v6293, %v6501
    %6503 = vmatmul.f32.gmra.mxu0 %v5585
    %v6504 = vpop.f32.mrf.mxu0
    %v6505 = vadd.f32 %v6296, %v6504
    %6506 = vmatmul.f32.gmra.mxu0 %v5594
    %v6507 = vpop.f32.mrf.mxu0
    %v6508 = vadd.f32 %v6299, %v6507
    %6509 = vmatmul.f32.gmra.mxu0 %v5603
    %v6510 = vpop.f32.mrf.mxu0
    %v6511 = vadd.f32 %v6302, %v6510
    %6512 = vmatmul.f32.gmra.mxu0 %v5612
    %v6513 = vpop.f32.mrf.mxu0
    %v6514 = vadd.f32 %v6305, %v6513
    %6515 = vmatmul.f32.gmra.mxu0 %v5621
    %v6516 = vpop.f32.mrf.mxu0
    %v6517 = vadd.f32 %v6308, %v6516
    %6518 = vmatmul.f32.gmra.mxu0 %v5630
    %v6519 = vpop.f32.mrf.mxu0
    %v6520 = vadd.f32 %v6311, %v6519
    %6521 = vmatmul.f32.gmra.mxu0 %v5639
    %v6522 = vpop.f32.mrf.mxu0
    %v6523 = vadd.f32 %v6314, %v6522
    %6524 = vmatmul.f32.gmra.mxu0 %v5648
    %v6525 = vpop.f32.mrf.mxu0
    %v6526 = vadd.f32 %v6317, %v6525
    %6527 = vmatmul.f32.gmra.mxu0 %v5657
    %v6528 = vpop.f32.mrf.mxu0
    %v6529 = vadd.f32 %v6320, %v6528
    %6530 = vmatmul.f32.gmra.mxu0 %v5666
    %v6531 = vpop.f32.mrf.mxu0
    %v6532 = vadd.f32 %v6323, %v6531
    %6533 = vmatmul.f32.gmra.mxu0 %v5675
    %v6534 = vpop.f32.mrf.mxu0
    %v6535 = vadd.f32 %v6326, %v6534
    %6536 = vmatmul.f32.gmra.mxu0 %v5684
    %v6537 = vpop.f32.mrf.mxu0
    %v6538 = vadd.f32 %v6329, %v6537
    %6539 = vmatmul.f32.gmra.mxu0 %v5693
    %v6540 = vpop.f32.mrf.mxu0
    %v6541 = vadd.f32 %v6332, %v6540
    %6542 = vmatmul.f32.gmra.mxu0 %v5702
    %v6543 = vpop.f32.mrf.mxu0
    %v6544 = vadd.f32 %v6335, %v6543
    %6545 = vmatmul.f32.gmra.mxu0 %v5711
    %v6546 = vpop.f32.mrf.mxu0
    %v6547 = vadd.f32 %v6338, %v6546
    %6548 = vmatmul.f32.gmra.mxu0 %v5720
    %v6549 = vpop.f32.mrf.mxu0
    %v6550 = vadd.f32 %v6341, %v6549
    %6551 = vmatmul.f32.gmra.mxu0 %v5729
    %v6552 = vpop.f32.mrf.mxu0
    %v6553 = vadd.f32 %v6344, %v6552
    %6554 = vmatmul.f32.gmra.mxu0 %v5738
    %v6555 = vpop.f32.mrf.mxu0
    %v6556 = vadd.f32 %v6347, %v6555
    %6557 = vmatmul.f32.gmra.mxu0 %v5747
    %v6558 = vpop.f32.mrf.mxu0
    %v6559 = vadd.f32 %v6350, %v6558
    %6560 = vmatmul.f32.gmra.mxu0 %v5756
    %v6561 = vpop.f32.mrf.mxu0
    %v6562 = vadd.f32 %v6353, %v6561
    %6563 = vmatmul.f32.gmra.mxu0 %v5765
    %v6564 = vpop.f32.mrf.mxu0
    %v6565 = vadd.f32 %v6356, %v6564
    %6566 = vmatmul.f32.gmra.mxu0 %v5774
    %v6567 = vpop.f32.mrf.mxu0
    %v6568 = vadd.f32 %v6359, %v6567
    %6569 = vmatmul.f32.gmra.mxu0 %v5783
    %v6570 = vpop.f32.mrf.mxu0
    %v6571 = vadd.f32 %v6362, %v6570
    %6572 = vmatmul.f32.gmra.mxu0 %v5792
    %v6573 = vpop.f32.mrf.mxu0
    %v6574 = vadd.f32 %v6365, %v6573
    %6575 = vmatmul.f32.gmra.mxu0 %v5801
    %v6576 = vpop.f32.mrf.mxu0
    %v6577 = vadd.f32 %v6368, %v6576
    %6578 = vdwg.mxu0
    %6579 = vmatpush.msra.mxu0 %v5871
    %6580 = vmatpush.msra.mxu0 %v5870
    %6581 = vmatpush.msra.mxu0 %v5869
    %6582 = vmatpush.msra.mxu0 %v5868
    %6583 = vmatpush.msra.mxu0 %v5867
    %6584 = vmatpush.msra.mxu0 %v5866
    %6585 = vmatpush.msra.mxu0 %v5865
    %6586 = vmatpush.msra.mxu0 %v5864
    %6587 = vmatpush.msra.mxu0 %v5863
    %6588 = vmatpush.msra.mxu0 %v5862
    %6589 = vmatpush.msra.mxu0 %v5861
    %6590 = vmatpush.msra.mxu0 %v5860
    %6591 = vmatpush.msra.mxu0 %v5859
    %6592 = vmatpush.msra.mxu0 %v5858
    %6593 = vmatpush.msra.mxu0 %v5857
    %6594 = vmatpush.msra.mxu0 %v5856
    %6595 = vmatmul.f32.gmra.mxu0 %v5235
    %v6596 = vpop.f32.mrf.mxu0
    %v6597 = vadd.f32 %v6388, %v6596
    %6598 = vmatmul.f32.gmra.mxu0 %v5244
    %v6599 = vpop.f32.mrf.mxu0
    %v6600 = vadd.f32 %v6391, %v6599
    %6601 = vmatmul.f32.gmra.mxu0 %v5253
    %v6602 = vpop.f32.mrf.mxu0
    %v6603 = vadd.f32 %v6394, %v6602
    %6604 = vmatmul.f32.gmra.mxu0 %v5262
    %v6605 = vpop.f32.mrf.mxu0
    %v6606 = vadd.f32 %v6397, %v6605
    %6607 = vmatmul.f32.gmra.mxu0 %v5271
    %v6608 = vpop.f32.mrf.mxu0
    %v6609 = vadd.f32 %v6400, %v6608
    %6610 = vmatmul.f32.gmra.mxu0 %v5280
    %v6611 = vpop.f32.mrf.mxu0
    %v6612 = vadd.f32 %v6403, %v6611
    %6613 = vmatmul.f32.gmra.mxu0 %v5289
    %v6614 = vpop.f32.mrf.mxu0
    %v6615 = vadd.f32 %v6406, %v6614
    %6616 = vmatmul.f32.gmra.mxu0 %v5298
    %v6617 = vpop.f32.mrf.mxu0
    %v6618 = vadd.f32 %v6409, %v6617
    %6619 = vmatmul.f32.gmra.mxu0 %v5307
    %v6620 = vpop.f32.mrf.mxu0
    %v6621 = vadd.f32 %v6412, %v6620
    %6622 = vmatmul.f32.gmra.mxu0 %v5316
    %v6623 = vpop.f32.mrf.mxu0
    %v6624 = vadd.f32 %v6415, %v6623
    %6625 = vmatmul.f32.gmra.mxu0 %v5325
    %v6626 = vpop.f32.mrf.mxu0
    %v6627 = vadd.f32 %v6418, %v6626
    %6628 = vmatmul.f32.gmra.mxu0 %v5334
    %v6629 = vpop.f32.mrf.mxu0
    %v6630 = vadd.f32 %v6421, %v6629
    %6631 = vmatmul.f32.gmra.mxu0 %v5343
    %v6632 = vpop.f32.mrf.mxu0
    %v6633 = vadd.f32 %v6424, %v6632
    %6634 = vmatmul.f32.gmra.mxu0 %v5352
    %v6635 = vpop.f32.mrf.mxu0
    %v6636 = vadd.f32 %v6427, %v6635
    %6637 = vmatmul.f32.gmra.mxu0 %v5361
    %v6638 = vpop.f32.mrf.mxu0
    %v6639 = vadd.f32 %v6430, %v6638
    %6640 = vmatmul.f32.gmra.mxu0 %v5370
    %v6641 = vpop.f32.mrf.mxu0
    %v6642 = vadd.f32 %v6433, %v6641
    %6643 = vmatmul.f32.gmra.mxu0 %v5379
    %v6644 = vpop.f32.mrf.mxu0
    %v6645 = vadd.f32 %v6436, %v6644
    %6646 = vmatmul.f32.gmra.mxu0 %v5388
    %v6647 = vpop.f32.mrf.mxu0
    %v6648 = vadd.f32 %v6439, %v6647
    %6649 = vmatmul.f32.gmra.mxu0 %v5397
    %v6650 = vpop.f32.mrf.mxu0
    %v6651 = vadd.f32 %v6442, %v6650
    %6652 = vmatmul.f32.gmra.mxu0 %v5406
    %v6653 = vpop.f32.mrf.mxu0
    %v6654 = vadd.f32 %v6445, %v6653
    %6655 = vmatmul.f32.gmra.mxu0 %v5415
    %v6656 = vpop.f32.mrf.mxu0
    %v6657 = vadd.f32 %v6448, %v6656
    %6658 = vmatmul.f32.gmra.mxu0 %v5424
    %v6659 = vpop.f32.mrf.mxu0
    %v6660 = vadd.f32 %v6451, %v6659
    %6661 = vmatmul.f32.gmra.mxu0 %v5433
    %v6662 = vpop.f32.mrf.mxu0
    %v6663 = vadd.f32 %v6454, %v6662
    %6664 = vmatmul.f32.gmra.mxu0 %v5442
    %v6665 = vpop.f32.mrf.mxu0
    %v6666 = vadd.f32 %v6457, %v6665
    %6667 = vmatmul.f32.gmra.mxu0 %v5451
    %v6668 = vpop.f32.mrf.mxu0
    %v6669 = vadd.f32 %v6460, %v6668
    %6670 = vmatmul.f32.gmra.mxu0 %v5460
    %v6671 = vpop.f32.mrf.mxu0
    %v6672 = vadd.f32 %v6463, %v6671
    %6673 = vmatmul.f32.gmra.mxu0 %v5469
    %v6674 = vpop.f32.mrf.mxu0
    %v6675 = vadd.f32 %v6466, %v6674
    %6676 = vmatmul.f32.gmra.mxu0 %v5478
    %v6677 = vpop.f32.mrf.mxu0
    %v6678 = vadd.f32 %v6469, %v6677
    %6679 = vmatmul.f32.gmra.mxu0 %v5487
    %v6680 = vpop.f32.mrf.mxu0
    %v6681 = vadd.f32 %v6472, %v6680
    %6682 = vmatmul.f32.gmra.mxu0 %v5496
    %v6683 = vpop.f32.mrf.mxu0
    %v6684 = vadd.f32 %v6475, %v6683
    %6685 = vmatmul.f32.gmra.mxu0 %v5505
    %v6686 = vpop.f32.mrf.mxu0
    %v6687 = vadd.f32 %v6478, %v6686
    %6688 = vmatmul.f32.gmra.mxu0 %v5514
    %v6689 = vpop.f32.mrf.mxu0
    %v6690 = vadd.f32 %v6481, %v6689
    %6691 = vmatmul.f32.gmra.mxu0 %v5523
    %v6692 = vpop.f32.mrf.mxu0
    %v6693 = vadd.f32 %v6484, %v6692
    %6694 = vmatmul.f32.gmra.mxu0 %v5532
    %v6695 = vpop.f32.mrf.mxu0
    %v6696 = vadd.f32 %v6487, %v6695
    %6697 = vmatmul.f32.gmra.mxu0 %v5541
    %v6698 = vpop.f32.mrf.mxu0
    %v6699 = vadd.f32 %v6490, %v6698
    %6700 = vmatmul.f32.gmra.mxu0 %v5550
    %v6701 = vpop.f32.mrf.mxu0
    %v6702 = vadd.f32 %v6493, %v6701
    %6703 = vmatmul.f32.gmra.mxu0 %v5559
    %v6704 = vpop.f32.mrf.mxu0
    %v6705 = vadd.f32 %v6496, %v6704
    %6706 = vmatmul.f32.gmra.mxu0 %v5568
    %v6707 = vpop.f32.mrf.mxu0
    %v6708 = vadd.f32 %v6499, %v6707
    %6709 = vmatmul.f32.gmra.mxu0 %v5577
    %v6710 = vpop.f32.mrf.mxu0
    %v6711 = vadd.f32 %v6502, %v6710
    %6712 = vmatmul.f32.gmra.mxu0 %v5586
    %v6713 = vpop.f32.mrf.mxu0
    %v6714 = vadd.f32 %v6505, %v6713
    %6715 = vmatmul.f32.gmra.mxu0 %v5595
    %v6716 = vpop.f32.mrf.mxu0
    %v6717 = vadd.f32 %v6508, %v6716
    %6718 = vmatmul.f32.gmra.mxu0 %v5604
    %v6719 = vpop.f32.mrf.mxu0
    %v6720 = vadd.f32 %v6511, %v6719
    %6721 = vmatmul.f32.gmra.mxu0 %v5613
    %v6722 = vpop.f32.mrf.mxu0
    %v6723 = vadd.f32 %v6514, %v6722
    %6724 = vmatmul.f32.gmra.mxu0 %v5622
    %v6725 = vpop.f32.mrf.mxu0
    %v6726 = vadd.f32 %v6517, %v6725
    %6727 = vmatmul.f32.gmra.mxu0 %v5631
    %v6728 = vpop.f32.mrf.mxu0
    %v6729 = vadd.f32 %v6520, %v6728
    %6730 = vmatmul.f32.gmra.mxu0 %v5640
    %v6731 = vpop.f32.mrf.mxu0
    %v6732 = vadd.f32 %v6523, %v6731
    %6733 = vmatmul.f32.gmra.mxu0 %v5649
    %v6734 = vpop.f32.mrf.mxu0
    %v6735 = vadd.f32 %v6526, %v6734
    %6736 = vmatmul.f32.gmra.mxu0 %v5658
    %v6737 = vpop.f32.mrf.mxu0
    %v6738 = vadd.f32 %v6529, %v6737
    %6739 = vmatmul.f32.gmra.mxu0 %v5667
    %v6740 = vpop.f32.mrf.mxu0
    %v6741 = vadd.f32 %v6532, %v6740
    %6742 = vmatmul.f32.gmra.mxu0 %v5676
    %v6743 = vpop.f32.mrf.mxu0
    %v6744 = vadd.f32 %v6535, %v6743
    %6745 = vmatmul.f32.gmra.mxu0 %v5685
    %v6746 = vpop.f32.mrf.mxu0
    %v6747 = vadd.f32 %v6538, %v6746
    %6748 = vmatmul.f32.gmra.mxu0 %v5694
    %v6749 = vpop.f32.mrf.mxu0
    %v6750 = vadd.f32 %v6541, %v6749
    %6751 = vmatmul.f32.gmra.mxu0 %v5703
    %v6752 = vpop.f32.mrf.mxu0
    %v6753 = vadd.f32 %v6544, %v6752
    %6754 = vmatmul.f32.gmra.mxu0 %v5712
    %v6755 = vpop.f32.mrf.mxu0
    %v6756 = vadd.f32 %v6547, %v6755
    %6757 = vmatmul.f32.gmra.mxu0 %v5721
    %v6758 = vpop.f32.mrf.mxu0
    %v6759 = vadd.f32 %v6550, %v6758
    %6760 = vmatmul.f32.gmra.mxu0 %v5730
    %v6761 = vpop.f32.mrf.mxu0
    %v6762 = vadd.f32 %v6553, %v6761
    %6763 = vmatmul.f32.gmra.mxu0 %v5739
    %v6764 = vpop.f32.mrf.mxu0
    %v6765 = vadd.f32 %v6556, %v6764
    %6766 = vmatmul.f32.gmra.mxu0 %v5748
    %v6767 = vpop.f32.mrf.mxu0
    %v6768 = vadd.f32 %v6559, %v6767
    %6769 = vmatmul.f32.gmra.mxu0 %v5757
    %v6770 = vpop.f32.mrf.mxu0
    %v6771 = vadd.f32 %v6562, %v6770
    %6772 = vmatmul.f32.gmra.mxu0 %v5766
    %v6773 = vpop.f32.mrf.mxu0
    %v6774 = vadd.f32 %v6565, %v6773
    %6775 = vmatmul.f32.gmra.mxu0 %v5775
    %v6776 = vpop.f32.mrf.mxu0
    %v6777 = vadd.f32 %v6568, %v6776
    %6778 = vmatmul.f32.gmra.mxu0 %v5784
    %v6779 = vpop.f32.mrf.mxu0
    %v6780 = vadd.f32 %v6571, %v6779
    %6781 = vmatmul.f32.gmra.mxu0 %v5793
    %v6782 = vpop.f32.mrf.mxu0
    %v6783 = vadd.f32 %v6574, %v6782
    %6784 = vmatmul.f32.gmra.mxu0 %v5802
    %v6785 = vpop.f32.mrf.mxu0
    %v6786 = vadd.f32 %v6577, %v6785
    %6787 = vdwg.mxu0
    %6788 = vmatpush.msra.mxu0 %v5887
    %6789 = vmatpush.msra.mxu0 %v5886
    %6790 = vmatpush.msra.mxu0 %v5885
    %6791 = vmatpush.msra.mxu0 %v5884
    %6792 = vmatpush.msra.mxu0 %v5883
    %6793 = vmatpush.msra.mxu0 %v5882
    %6794 = vmatpush.msra.mxu0 %v5881
    %6795 = vmatpush.msra.mxu0 %v5880
    %6796 = vmatpush.msra.mxu0 %v5879
    %6797 = vmatpush.msra.mxu0 %v5878
    %6798 = vmatpush.msra.mxu0 %v5877
    %6799 = vmatpush.msra.mxu0 %v5876
    %6800 = vmatpush.msra.mxu0 %v5875
    %6801 = vmatpush.msra.mxu0 %v5874
    %6802 = vmatpush.msra.mxu0 %v5873
    %6803 = vmatpush.msra.mxu0 %v5872
    %6804 = vmatmul.f32.gmra.mxu0 %v5236
    %v6805 = vpop.f32.mrf.mxu0
    %v6806 = vadd.f32 %v6597, %v6805
    %6807 = vmatmul.f32.gmra.mxu0 %v5245
    %v6808 = vpop.f32.mrf.mxu0
    %v6809 = vadd.f32 %v6600, %v6808
    %6810 = vmatmul.f32.gmra.mxu0 %v5254
    %v6811 = vpop.f32.mrf.mxu0
    %v6812 = vadd.f32 %v6603, %v6811
    %6813 = vmatmul.f32.gmra.mxu0 %v5263
    %v6814 = vpop.f32.mrf.mxu0
    %v6815 = vadd.f32 %v6606, %v6814
    %6816 = vmatmul.f32.gmra.mxu0 %v5272
    %v6817 = vpop.f32.mrf.mxu0
    %v6818 = vadd.f32 %v6609, %v6817
    %6819 = vmatmul.f32.gmra.mxu0 %v5281
    %v6820 = vpop.f32.mrf.mxu0
    %v6821 = vadd.f32 %v6612, %v6820
    %6822 = vmatmul.f32.gmra.mxu0 %v5290
    %v6823 = vpop.f32.mrf.mxu0
    %v6824 = vadd.f32 %v6615, %v6823
    %6825 = vmatmul.f32.gmra.mxu0 %v5299
    %v6826 = vpop.f32.mrf.mxu0
    %v6827 = vadd.f32 %v6618, %v6826
    %6828 = vmatmul.f32.gmra.mxu0 %v5308
    %v6829 = vpop.f32.mrf.mxu0
    %v6830 = vadd.f32 %v6621, %v6829
    %6831 = vmatmul.f32.gmra.mxu0 %v5317
    %v6832 = vpop.f32.mrf.mxu0
    %v6833 = vadd.f32 %v6624, %v6832
    %6834 = vmatmul.f32.gmra.mxu0 %v5326
    %v6835 = vpop.f32.mrf.mxu0
    %v6836 = vadd.f32 %v6627, %v6835
    %6837 = vmatmul.f32.gmra.mxu0 %v5335
    %v6838 = vpop.f32.mrf.mxu0
    %v6839 = vadd.f32 %v6630, %v6838
    %6840 = vmatmul.f32.gmra.mxu0 %v5344
    %v6841 = vpop.f32.mrf.mxu0
    %v6842 = vadd.f32 %v6633, %v6841
    %6843 = vmatmul.f32.gmra.mxu0 %v5353
    %v6844 = vpop.f32.mrf.mxu0
    %v6845 = vadd.f32 %v6636, %v6844
    %6846 = vmatmul.f32.gmra.mxu0 %v5362
    %v6847 = vpop.f32.mrf.mxu0
    %v6848 = vadd.f32 %v6639, %v6847
    %6849 = vmatmul.f32.gmra.mxu0 %v5371
    %v6850 = vpop.f32.mrf.mxu0
    %v6851 = vadd.f32 %v6642, %v6850
    %6852 = vmatmul.f32.gmra.mxu0 %v5380
    %v6853 = vpop.f32.mrf.mxu0
    %v6854 = vadd.f32 %v6645, %v6853
    %6855 = vmatmul.f32.gmra.mxu0 %v5389
    %v6856 = vpop.f32.mrf.mxu0
    %v6857 = vadd.f32 %v6648, %v6856
    %6858 = vmatmul.f32.gmra.mxu0 %v5398
    %v6859 = vpop.f32.mrf.mxu0
    %v6860 = vadd.f32 %v6651, %v6859
    %6861 = vmatmul.f32.gmra.mxu0 %v5407
    %v6862 = vpop.f32.mrf.mxu0
    %v6863 = vadd.f32 %v6654, %v6862
    %6864 = vmatmul.f32.gmra.mxu0 %v5416
    %v6865 = vpop.f32.mrf.mxu0
    %v6866 = vadd.f32 %v6657, %v6865
    %6867 = vmatmul.f32.gmra.mxu0 %v5425
    %v6868 = vpop.f32.mrf.mxu0
    %v6869 = vadd.f32 %v6660, %v6868
    %6870 = vmatmul.f32.gmra.mxu0 %v5434
    %v6871 = vpop.f32.mrf.mxu0
    %v6872 = vadd.f32 %v6663, %v6871
    %6873 = vmatmul.f32.gmra.mxu0 %v5443
    %v6874 = vpop.f32.mrf.mxu0
    %v6875 = vadd.f32 %v6666, %v6874
    %6876 = vmatmul.f32.gmra.mxu0 %v5452
    %v6877 = vpop.f32.mrf.mxu0
    %v6878 = vadd.f32 %v6669, %v6877
    %6879 = vmatmul.f32.gmra.mxu0 %v5461
    %v6880 = vpop.f32.mrf.mxu0
    %v6881 = vadd.f32 %v6672, %v6880
    %6882 = vmatmul.f32.gmra.mxu0 %v5470
    %v6883 = vpop.f32.mrf.mxu0
    %v6884 = vadd.f32 %v6675, %v6883
    %6885 = vmatmul.f32.gmra.mxu0 %v5479
    %v6886 = vpop.f32.mrf.mxu0
    %v6887 = vadd.f32 %v6678, %v6886
    %6888 = vmatmul.f32.gmra.mxu0 %v5488
    %v6889 = vpop.f32.mrf.mxu0
    %v6890 = vadd.f32 %v6681, %v6889
    %6891 = vmatmul.f32.gmra.mxu0 %v5497
    %v6892 = vpop.f32.mrf.mxu0
    %v6893 = vadd.f32 %v6684, %v6892
    %6894 = vmatmul.f32.gmra.mxu0 %v5506
    %v6895 = vpop.f32.mrf.mxu0
    %v6896 = vadd.f32 %v6687, %v6895
    %6897 = vmatmul.f32.gmra.mxu0 %v5515
    %v6898 = vpop.f32.mrf.mxu0
    %v6899 = vadd.f32 %v6690, %v6898
    %6900 = vmatmul.f32.gmra.mxu0 %v5524
    %v6901 = vpop.f32.mrf.mxu0
    %v6902 = vadd.f32 %v6693, %v6901
    %6903 = vmatmul.f32.gmra.mxu0 %v5533
    %v6904 = vpop.f32.mrf.mxu0
    %v6905 = vadd.f32 %v6696, %v6904
    %6906 = vmatmul.f32.gmra.mxu0 %v5542
    %v6907 = vpop.f32.mrf.mxu0
    %v6908 = vadd.f32 %v6699, %v6907
    %6909 = vmatmul.f32.gmra.mxu0 %v5551
    %v6910 = vpop.f32.mrf.mxu0
    %v6911 = vadd.f32 %v6702, %v6910
    %6912 = vmatmul.f32.gmra.mxu0 %v5560
    %v6913 = vpop.f32.mrf.mxu0
    %v6914 = vadd.f32 %v6705, %v6913
    %6915 = vmatmul.f32.gmra.mxu0 %v5569
    %v6916 = vpop.f32.mrf.mxu0
    %v6917 = vadd.f32 %v6708, %v6916
    %6918 = vmatmul.f32.gmra.mxu0 %v5578
    %v6919 = vpop.f32.mrf.mxu0
    %v6920 = vadd.f32 %v6711, %v6919
    %6921 = vmatmul.f32.gmra.mxu0 %v5587
    %v6922 = vpop.f32.mrf.mxu0
    %v6923 = vadd.f32 %v6714, %v6922
    %6924 = vmatmul.f32.gmra.mxu0 %v5596
    %v6925 = vpop.f32.mrf.mxu0
    %v6926 = vadd.f32 %v6717, %v6925
    %6927 = vmatmul.f32.gmra.mxu0 %v5605
    %v6928 = vpop.f32.mrf.mxu0
    %v6929 = vadd.f32 %v6720, %v6928
    %6930 = vmatmul.f32.gmra.mxu0 %v5614
    %v6931 = vpop.f32.mrf.mxu0
    %v6932 = vadd.f32 %v6723, %v6931
    %6933 = vmatmul.f32.gmra.mxu0 %v5623
    %v6934 = vpop.f32.mrf.mxu0
    %v6935 = vadd.f32 %v6726, %v6934
    %6936 = vmatmul.f32.gmra.mxu0 %v5632
    %v6937 = vpop.f32.mrf.mxu0
    %v6938 = vadd.f32 %v6729, %v6937
    %6939 = vmatmul.f32.gmra.mxu0 %v5641
    %v6940 = vpop.f32.mrf.mxu0
    %v6941 = vadd.f32 %v6732, %v6940
    %6942 = vmatmul.f32.gmra.mxu0 %v5650
    %v6943 = vpop.f32.mrf.mxu0
    %v6944 = vadd.f32 %v6735, %v6943
    %6945 = vmatmul.f32.gmra.mxu0 %v5659
    %v6946 = vpop.f32.mrf.mxu0
    %v6947 = vadd.f32 %v6738, %v6946
    %6948 = vmatmul.f32.gmra.mxu0 %v5668
    %v6949 = vpop.f32.mrf.mxu0
    %v6950 = vadd.f32 %v6741, %v6949
    %6951 = vmatmul.f32.gmra.mxu0 %v5677
    %v6952 = vpop.f32.mrf.mxu0
    %v6953 = vadd.f32 %v6744, %v6952
    %6954 = vmatmul.f32.gmra.mxu0 %v5686
    %v6955 = vpop.f32.mrf.mxu0
    %v6956 = vadd.f32 %v6747, %v6955
    %6957 = vmatmul.f32.gmra.mxu0 %v5695
    %v6958 = vpop.f32.mrf.mxu0
    %v6959 = vadd.f32 %v6750, %v6958
    %6960 = vmatmul.f32.gmra.mxu0 %v5704
    %v6961 = vpop.f32.mrf.mxu0
    %v6962 = vadd.f32 %v6753, %v6961
    %6963 = vmatmul.f32.gmra.mxu0 %v5713
    %v6964 = vpop.f32.mrf.mxu0
    %v6965 = vadd.f32 %v6756, %v6964
    %6966 = vmatmul.f32.gmra.mxu0 %v5722
    %v6967 = vpop.f32.mrf.mxu0
    %v6968 = vadd.f32 %v6759, %v6967
    %6969 = vmatmul.f32.gmra.mxu0 %v5731
    %v6970 = vpop.f32.mrf.mxu0
    %v6971 = vadd.f32 %v6762, %v6970
    %6972 = vmatmul.f32.gmra.mxu0 %v5740
    %v6973 = vpop.f32.mrf.mxu0
    %v6974 = vadd.f32 %v6765, %v6973
    %6975 = vmatmul.f32.gmra.mxu0 %v5749
    %v6976 = vpop.f32.mrf.mxu0
    %v6977 = vadd.f32 %v6768, %v6976
    %6978 = vmatmul.f32.gmra.mxu0 %v5758
    %v6979 = vpop.f32.mrf.mxu0
    %v6980 = vadd.f32 %v6771, %v6979
    %6981 = vmatmul.f32.gmra.mxu0 %v5767
    %v6982 = vpop.f32.mrf.mxu0
    %v6983 = vadd.f32 %v6774, %v6982
    %6984 = vmatmul.f32.gmra.mxu0 %v5776
    %v6985 = vpop.f32.mrf.mxu0
    %v6986 = vadd.f32 %v6777, %v6985
    %6987 = vmatmul.f32.gmra.mxu0 %v5785
    %v6988 = vpop.f32.mrf.mxu0
    %v6989 = vadd.f32 %v6780, %v6988
    %6990 = vmatmul.f32.gmra.mxu0 %v5794
    %v6991 = vpop.f32.mrf.mxu0
    %v6992 = vadd.f32 %v6783, %v6991
    %6993 = vmatmul.f32.gmra.mxu0 %v5803
    %v6994 = vpop.f32.mrf.mxu0
    %v6995 = vadd.f32 %v6786, %v6994
    %6996 = vdwg.mxu0
    %6997 = vmatpush.msra.mxu0 %v5903
    %6998 = vmatpush.msra.mxu0 %v5902
    %6999 = vmatpush.msra.mxu0 %v5901
    %7000 = vmatpush.msra.mxu0 %v5900
    %7001 = vmatpush.msra.mxu0 %v5899
    %7002 = vmatpush.msra.mxu0 %v5898
    %7003 = vmatpush.msra.mxu0 %v5897
    %7004 = vmatpush.msra.mxu0 %v5896
    %7005 = vmatpush.msra.mxu0 %v5895
    %7006 = vmatpush.msra.mxu0 %v5894
    %7007 = vmatpush.msra.mxu0 %v5893
    %7008 = vmatpush.msra.mxu0 %v5892
    %7009 = vmatpush.msra.mxu0 %v5891
    %7010 = vmatpush.msra.mxu0 %v5890
    %7011 = vmatpush.msra.mxu0 %v5889
    %7012 = vmatpush.msra.mxu0 %v5888
    %7013 = vmatmul.f32.gmra.mxu0 %v5237
    %v7014 = vpop.f32.mrf.mxu0
    %v7015 = vadd.f32 %v6806, %v7014
    %7016 = vmatmul.f32.gmra.mxu0 %v5246
    %v7017 = vpop.f32.mrf.mxu0
    %v7018 = vadd.f32 %v6809, %v7017
    %7019 = vmatmul.f32.gmra.mxu0 %v5255
    %v7020 = vpop.f32.mrf.mxu0
    %v7021 = vadd.f32 %v6812, %v7020
    %7022 = vmatmul.f32.gmra.mxu0 %v5264
    %v7023 = vpop.f32.mrf.mxu0
    %v7024 = vadd.f32 %v6815, %v7023
    %7025 = vmatmul.f32.gmra.mxu0 %v5273
    %v7026 = vpop.f32.mrf.mxu0
    %v7027 = vadd.f32 %v6818, %v7026
    %7028 = vmatmul.f32.gmra.mxu0 %v5282
    %v7029 = vpop.f32.mrf.mxu0
    %v7030 = vadd.f32 %v6821, %v7029
    %7031 = vmatmul.f32.gmra.mxu0 %v5291
    %v7032 = vpop.f32.mrf.mxu0
    %v7033 = vadd.f32 %v6824, %v7032
    %7034 = vmatmul.f32.gmra.mxu0 %v5300
    %v7035 = vpop.f32.mrf.mxu0
    %v7036 = vadd.f32 %v6827, %v7035
    %7037 = vmatmul.f32.gmra.mxu0 %v5309
    %v7038 = vpop.f32.mrf.mxu0
    %v7039 = vadd.f32 %v6830, %v7038
    %7040 = vmatmul.f32.gmra.mxu0 %v5318
    %v7041 = vpop.f32.mrf.mxu0
    %v7042 = vadd.f32 %v6833, %v7041
    %7043 = vmatmul.f32.gmra.mxu0 %v5327
    %v7044 = vpop.f32.mrf.mxu0
    %v7045 = vadd.f32 %v6836, %v7044
    %7046 = vmatmul.f32.gmra.mxu0 %v5336
    %v7047 = vpop.f32.mrf.mxu0
    %v7048 = vadd.f32 %v6839, %v7047
    %7049 = vmatmul.f32.gmra.mxu0 %v5345
    %v7050 = vpop.f32.mrf.mxu0
    %v7051 = vadd.f32 %v6842, %v7050
    %7052 = vmatmul.f32.gmra.mxu0 %v5354
    %v7053 = vpop.f32.mrf.mxu0
    %v7054 = vadd.f32 %v6845, %v7053
    %7055 = vmatmul.f32.gmra.mxu0 %v5363
    %v7056 = vpop.f32.mrf.mxu0
    %v7057 = vadd.f32 %v6848, %v7056
    %7058 = vmatmul.f32.gmra.mxu0 %v5372
    %v7059 = vpop.f32.mrf.mxu0
    %v7060 = vadd.f32 %v6851, %v7059
    %7061 = vmatmul.f32.gmra.mxu0 %v5381
    %v7062 = vpop.f32.mrf.mxu0
    %v7063 = vadd.f32 %v6854, %v7062
    %7064 = vmatmul.f32.gmra.mxu0 %v5390
    %v7065 = vpop.f32.mrf.mxu0
    %v7066 = vadd.f32 %v6857, %v7065
    %7067 = vmatmul.f32.gmra.mxu0 %v5399
    %v7068 = vpop.f32.mrf.mxu0
    %v7069 = vadd.f32 %v6860, %v7068
    %7070 = vmatmul.f32.gmra.mxu0 %v5408
    %v7071 = vpop.f32.mrf.mxu0
    %v7072 = vadd.f32 %v6863, %v7071
    %7073 = vmatmul.f32.gmra.mxu0 %v5417
    %v7074 = vpop.f32.mrf.mxu0
    %v7075 = vadd.f32 %v6866, %v7074
    %7076 = vmatmul.f32.gmra.mxu0 %v5426
    %v7077 = vpop.f32.mrf.mxu0
    %v7078 = vadd.f32 %v6869, %v7077
    %7079 = vmatmul.f32.gmra.mxu0 %v5435
    %v7080 = vpop.f32.mrf.mxu0
    %v7081 = vadd.f32 %v6872, %v7080
    %7082 = vmatmul.f32.gmra.mxu0 %v5444
    %v7083 = vpop.f32.mrf.mxu0
    %v7084 = vadd.f32 %v6875, %v7083
    %7085 = vmatmul.f32.gmra.mxu0 %v5453
    %v7086 = vpop.f32.mrf.mxu0
    %v7087 = vadd.f32 %v6878, %v7086
    %7088 = vmatmul.f32.gmra.mxu0 %v5462
    %v7089 = vpop.f32.mrf.mxu0
    %v7090 = vadd.f32 %v6881, %v7089
    %7091 = vmatmul.f32.gmra.mxu0 %v5471
    %v7092 = vpop.f32.mrf.mxu0
    %v7093 = vadd.f32 %v6884, %v7092
    %7094 = vmatmul.f32.gmra.mxu0 %v5480
    %v7095 = vpop.f32.mrf.mxu0
    %v7096 = vadd.f32 %v6887, %v7095
    %7097 = vmatmul.f32.gmra.mxu0 %v5489
    %v7098 = vpop.f32.mrf.mxu0
    %v7099 = vadd.f32 %v6890, %v7098
    %7100 = vmatmul.f32.gmra.mxu0 %v5498
    %v7101 = vpop.f32.mrf.mxu0
    %v7102 = vadd.f32 %v6893, %v7101
    %7103 = vmatmul.f32.gmra.mxu0 %v5507
    %v7104 = vpop.f32.mrf.mxu0
    %v7105 = vadd.f32 %v6896, %v7104
    %7106 = vmatmul.f32.gmra.mxu0 %v5516
    %v7107 = vpop.f32.mrf.mxu0
    %v7108 = vadd.f32 %v6899, %v7107
    %7109 = vmatmul.f32.gmra.mxu0 %v5525
    %v7110 = vpop.f32.mrf.mxu0
    %v7111 = vadd.f32 %v6902, %v7110
    %7112 = vmatmul.f32.gmra.mxu0 %v5534
    %v7113 = vpop.f32.mrf.mxu0
    %v7114 = vadd.f32 %v6905, %v7113
    %7115 = vmatmul.f32.gmra.mxu0 %v5543
    %v7116 = vpop.f32.mrf.mxu0
    %v7117 = vadd.f32 %v6908, %v7116
    %7118 = vmatmul.f32.gmra.mxu0 %v5552
    %v7119 = vpop.f32.mrf.mxu0
    %v7120 = vadd.f32 %v6911, %v7119
    %7121 = vmatmul.f32.gmra.mxu0 %v5561
    %v7122 = vpop.f32.mrf.mxu0
    %v7123 = vadd.f32 %v6914, %v7122
    %7124 = vmatmul.f32.gmra.mxu0 %v5570
    %v7125 = vpop.f32.mrf.mxu0
    %v7126 = vadd.f32 %v6917, %v7125
    %7127 = vmatmul.f32.gmra.mxu0 %v5579
    %v7128 = vpop.f32.mrf.mxu0
    %v7129 = vadd.f32 %v6920, %v7128
    %7130 = vmatmul.f32.gmra.mxu0 %v5588
    %v7131 = vpop.f32.mrf.mxu0
    %v7132 = vadd.f32 %v6923, %v7131
    %7133 = vmatmul.f32.gmra.mxu0 %v5597
    %v7134 = vpop.f32.mrf.mxu0
    %v7135 = vadd.f32 %v6926, %v7134
    %7136 = vmatmul.f32.gmra.mxu0 %v5606
    %v7137 = vpop.f32.mrf.mxu0
    %v7138 = vadd.f32 %v6929, %v7137
    %7139 = vmatmul.f32.gmra.mxu0 %v5615
    %v7140 = vpop.f32.mrf.mxu0
    %v7141 = vadd.f32 %v6932, %v7140
    %7142 = vmatmul.f32.gmra.mxu0 %v5624
    %v7143 = vpop.f32.mrf.mxu0
    %v7144 = vadd.f32 %v6935, %v7143
    %7145 = vmatmul.f32.gmra.mxu0 %v5633
    %v7146 = vpop.f32.mrf.mxu0
    %v7147 = vadd.f32 %v6938, %v7146
    %7148 = vmatmul.f32.gmra.mxu0 %v5642
    %v7149 = vpop.f32.mrf.mxu0
    %v7150 = vadd.f32 %v6941, %v7149
    %7151 = vmatmul.f32.gmra.mxu0 %v5651
    %v7152 = vpop.f32.mrf.mxu0
    %v7153 = vadd.f32 %v6944, %v7152
    %7154 = vmatmul.f32.gmra.mxu0 %v5660
    %v7155 = vpop.f32.mrf.mxu0
    %v7156 = vadd.f32 %v6947, %v7155
    %7157 = vmatmul.f32.gmra.mxu0 %v5669
    %v7158 = vpop.f32.mrf.mxu0
    %v7159 = vadd.f32 %v6950, %v7158
    %7160 = vmatmul.f32.gmra.mxu0 %v5678
    %v7161 = vpop.f32.mrf.mxu0
    %v7162 = vadd.f32 %v6953, %v7161
    %7163 = vmatmul.f32.gmra.mxu0 %v5687
    %v7164 = vpop.f32.mrf.mxu0
    %v7165 = vadd.f32 %v6956, %v7164
    %7166 = vmatmul.f32.gmra.mxu0 %v5696
    %v7167 = vpop.f32.mrf.mxu0
    %v7168 = vadd.f32 %v6959, %v7167
    %7169 = vmatmul.f32.gmra.mxu0 %v5705
    %v7170 = vpop.f32.mrf.mxu0
    %v7171 = vadd.f32 %v6962, %v7170
    %7172 = vmatmul.f32.gmra.mxu0 %v5714
    %v7173 = vpop.f32.mrf.mxu0
    %v7174 = vadd.f32 %v6965, %v7173
    %7175 = vmatmul.f32.gmra.mxu0 %v5723
    %v7176 = vpop.f32.mrf.mxu0
    %v7177 = vadd.f32 %v6968, %v7176
    %7178 = vmatmul.f32.gmra.mxu0 %v5732
    %v7179 = vpop.f32.mrf.mxu0
    %v7180 = vadd.f32 %v6971, %v7179
    %7181 = vmatmul.f32.gmra.mxu0 %v5741
    %v7182 = vpop.f32.mrf.mxu0
    %v7183 = vadd.f32 %v6974, %v7182
    %7184 = vmatmul.f32.gmra.mxu0 %v5750
    %v7185 = vpop.f32.mrf.mxu0
    %v7186 = vadd.f32 %v6977, %v7185
    %7187 = vmatmul.f32.gmra.mxu0 %v5759
    %v7188 = vpop.f32.mrf.mxu0
    %v7189 = vadd.f32 %v6980, %v7188
    %7190 = vmatmul.f32.gmra.mxu0 %v5768
    %v7191 = vpop.f32.mrf.mxu0
    %v7192 = vadd.f32 %v6983, %v7191
    %7193 = vmatmul.f32.gmra.mxu0 %v5777
    %v7194 = vpop.f32.mrf.mxu0
    %v7195 = vadd.f32 %v6986, %v7194
    %7196 = vmatmul.f32.gmra.mxu0 %v5786
    %v7197 = vpop.f32.mrf.mxu0
    %v7198 = vadd.f32 %v6989, %v7197
    %7199 = vmatmul.f32.gmra.mxu0 %v5795
    %v7200 = vpop.f32.mrf.mxu0
    %v7201 = vadd.f32 %v6992, %v7200
    %7202 = vmatmul.f32.gmra.mxu0 %v5804
    %v7203 = vpop.f32.mrf.mxu0
    %v7204 = vadd.f32 %v6995, %v7203
    %7205 = vdwg.mxu0
    %7206 = vmatpush.msra.mxu0 %v5919
    %7207 = vmatpush.msra.mxu0 %v5918
    %7208 = vmatpush.msra.mxu0 %v5917
    %7209 = vmatpush.msra.mxu0 %v5916
    %7210 = vmatpush.msra.mxu0 %v5915
    %7211 = vmatpush.msra.mxu0 %v5914
    %7212 = vmatpush.msra.mxu0 %v5913
    %7213 = vmatpush.msra.mxu0 %v5912
    %7214 = vmatpush.msra.mxu0 %v5911
    %7215 = vmatpush.msra.mxu0 %v5910
    %7216 = vmatpush.msra.mxu0 %v5909
    %7217 = vmatpush.msra.mxu0 %v5908
    %7218 = vmatpush.msra.mxu0 %v5907
    %7219 = vmatpush.msra.mxu0 %v5906
    %7220 = vmatpush.msra.mxu0 %v5905
    %7221 = vmatpush.msra.mxu0 %v5904
    %7222 = vmatmul.f32.gmra.mxu0 %v5238
    %v7223 = vpop.f32.mrf.mxu0
    %v7224 = vadd.f32 %v7015, %v7223
    %7225 = vmatmul.f32.gmra.mxu0 %v5247
    %v7226 = vpop.f32.mrf.mxu0
    %v7227 = vadd.f32 %v7018, %v7226
    %7228 = vmatmul.f32.gmra.mxu0 %v5256
    %v7229 = vpop.f32.mrf.mxu0
    %v7230 = vadd.f32 %v7021, %v7229
    %7231 = vmatmul.f32.gmra.mxu0 %v5265
    %v7232 = vpop.f32.mrf.mxu0
    %v7233 = vadd.f32 %v7024, %v7232
    %7234 = vmatmul.f32.gmra.mxu0 %v5274
    %v7235 = vpop.f32.mrf.mxu0
    %v7236 = vadd.f32 %v7027, %v7235
    %7237 = vmatmul.f32.gmra.mxu0 %v5283
    %v7238 = vpop.f32.mrf.mxu0
    %v7239 = vadd.f32 %v7030, %v7238
    %7240 = vmatmul.f32.gmra.mxu0 %v5292
    %v7241 = vpop.f32.mrf.mxu0
    %v7242 = vadd.f32 %v7033, %v7241
    %7243 = vmatmul.f32.gmra.mxu0 %v5301
    %v7244 = vpop.f32.mrf.mxu0
    %v7245 = vadd.f32 %v7036, %v7244
    %7246 = vmatmul.f32.gmra.mxu0 %v5310
    %v7247 = vpop.f32.mrf.mxu0
    %v7248 = vadd.f32 %v7039, %v7247
    %7249 = vmatmul.f32.gmra.mxu0 %v5319
    %v7250 = vpop.f32.mrf.mxu0
    %v7251 = vadd.f32 %v7042, %v7250
    %7252 = vmatmul.f32.gmra.mxu0 %v5328
    %v7253 = vpop.f32.mrf.mxu0
    %v7254 = vadd.f32 %v7045, %v7253
    %7255 = vmatmul.f32.gmra.mxu0 %v5337
    %v7256 = vpop.f32.mrf.mxu0
    %v7257 = vadd.f32 %v7048, %v7256
    %7258 = vmatmul.f32.gmra.mxu0 %v5346
    %v7259 = vpop.f32.mrf.mxu0
    %v7260 = vadd.f32 %v7051, %v7259
    %7261 = vmatmul.f32.gmra.mxu0 %v5355
    %v7262 = vpop.f32.mrf.mxu0
    %v7263 = vadd.f32 %v7054, %v7262
    %7264 = vmatmul.f32.gmra.mxu0 %v5364
    %v7265 = vpop.f32.mrf.mxu0
    %v7266 = vadd.f32 %v7057, %v7265
    %7267 = vmatmul.f32.gmra.mxu0 %v5373
    %v7268 = vpop.f32.mrf.mxu0
    %v7269 = vadd.f32 %v7060, %v7268
    %7270 = vmatmul.f32.gmra.mxu0 %v5382
    %v7271 = vpop.f32.mrf.mxu0
    %v7272 = vadd.f32 %v7063, %v7271
    %7273 = vmatmul.f32.gmra.mxu0 %v5391
    %v7274 = vpop.f32.mrf.mxu0
    %v7275 = vadd.f32 %v7066, %v7274
    %7276 = vmatmul.f32.gmra.mxu0 %v5400
    %v7277 = vpop.f32.mrf.mxu0
    %v7278 = vadd.f32 %v7069, %v7277
    %7279 = vmatmul.f32.gmra.mxu0 %v5409
    %v7280 = vpop.f32.mrf.mxu0
    %v7281 = vadd.f32 %v7072, %v7280
    %7282 = vmatmul.f32.gmra.mxu0 %v5418
    %v7283 = vpop.f32.mrf.mxu0
    %v7284 = vadd.f32 %v7075, %v7283
    %7285 = vmatmul.f32.gmra.mxu0 %v5427
    %v7286 = vpop.f32.mrf.mxu0
    %v7287 = vadd.f32 %v7078, %v7286
    %7288 = vmatmul.f32.gmra.mxu0 %v5436
    %v7289 = vpop.f32.mrf.mxu0
    %v7290 = vadd.f32 %v7081, %v7289
    %7291 = vmatmul.f32.gmra.mxu0 %v5445
    %v7292 = vpop.f32.mrf.mxu0
    %v7293 = vadd.f32 %v7084, %v7292
    %7294 = vmatmul.f32.gmra.mxu0 %v5454
    %v7295 = vpop.f32.mrf.mxu0
    %v7296 = vadd.f32 %v7087, %v7295
    %7297 = vmatmul.f32.gmra.mxu0 %v5463
    %v7298 = vpop.f32.mrf.mxu0
    %v7299 = vadd.f32 %v7090, %v7298
    %7300 = vmatmul.f32.gmra.mxu0 %v5472
    %v7301 = vpop.f32.mrf.mxu0
    %v7302 = vadd.f32 %v7093, %v7301
    %7303 = vmatmul.f32.gmra.mxu0 %v5481
    %v7304 = vpop.f32.mrf.mxu0
    %v7305 = vadd.f32 %v7096, %v7304
    %7306 = vmatmul.f32.gmra.mxu0 %v5490
    %v7307 = vpop.f32.mrf.mxu0
    %v7308 = vadd.f32 %v7099, %v7307
    %7309 = vmatmul.f32.gmra.mxu0 %v5499
    %v7310 = vpop.f32.mrf.mxu0
    %v7311 = vadd.f32 %v7102, %v7310
    %7312 = vmatmul.f32.gmra.mxu0 %v5508
    %v7313 = vpop.f32.mrf.mxu0
    %v7314 = vadd.f32 %v7105, %v7313
    %7315 = vmatmul.f32.gmra.mxu0 %v5517
    %v7316 = vpop.f32.mrf.mxu0
    %v7317 = vadd.f32 %v7108, %v7316
    %7318 = vmatmul.f32.gmra.mxu0 %v5526
    %v7319 = vpop.f32.mrf.mxu0
    %v7320 = vadd.f32 %v7111, %v7319
    %7321 = vmatmul.f32.gmra.mxu0 %v5535
    %v7322 = vpop.f32.mrf.mxu0
    %v7323 = vadd.f32 %v7114, %v7322
    %7324 = vmatmul.f32.gmra.mxu0 %v5544
    %v7325 = vpop.f32.mrf.mxu0
    %v7326 = vadd.f32 %v7117, %v7325
    %7327 = vmatmul.f32.gmra.mxu0 %v5553
    %v7328 = vpop.f32.mrf.mxu0
    %v7329 = vadd.f32 %v7120, %v7328
    %7330 = vmatmul.f32.gmra.mxu0 %v5562
    %v7331 = vpop.f32.mrf.mxu0
    %v7332 = vadd.f32 %v7123, %v7331
    %7333 = vmatmul.f32.gmra.mxu0 %v5571
    %v7334 = vpop.f32.mrf.mxu0
    %v7335 = vadd.f32 %v7126, %v7334
    %7336 = vmatmul.f32.gmra.mxu0 %v5580
    %v7337 = vpop.f32.mrf.mxu0
    %v7338 = vadd.f32 %v7129, %v7337
    %7339 = vmatmul.f32.gmra.mxu0 %v5589
    %v7340 = vpop.f32.mrf.mxu0
    %v7341 = vadd.f32 %v7132, %v7340
    %7342 = vmatmul.f32.gmra.mxu0 %v5598
    %v7343 = vpop.f32.mrf.mxu0
    %v7344 = vadd.f32 %v7135, %v7343
    %7345 = vmatmul.f32.gmra.mxu0 %v5607
    %v7346 = vpop.f32.mrf.mxu0
    %v7347 = vadd.f32 %v7138, %v7346
    %7348 = vmatmul.f32.gmra.mxu0 %v5616
    %v7349 = vpop.f32.mrf.mxu0
    %v7350 = vadd.f32 %v7141, %v7349
    %7351 = vmatmul.f32.gmra.mxu0 %v5625
    %v7352 = vpop.f32.mrf.mxu0
    %v7353 = vadd.f32 %v7144, %v7352
    %7354 = vmatmul.f32.gmra.mxu0 %v5634
    %v7355 = vpop.f32.mrf.mxu0
    %v7356 = vadd.f32 %v7147, %v7355
    %7357 = vmatmul.f32.gmra.mxu0 %v5643
    %v7358 = vpop.f32.mrf.mxu0
    %v7359 = vadd.f32 %v7150, %v7358
    %7360 = vmatmul.f32.gmra.mxu0 %v5652
    %v7361 = vpop.f32.mrf.mxu0
    %v7362 = vadd.f32 %v7153, %v7361
    %7363 = vmatmul.f32.gmra.mxu0 %v5661
    %v7364 = vpop.f32.mrf.mxu0
    %v7365 = vadd.f32 %v7156, %v7364
    %7366 = vmatmul.f32.gmra.mxu0 %v5670
    %v7367 = vpop.f32.mrf.mxu0
    %v7368 = vadd.f32 %v7159, %v7367
    %7369 = vmatmul.f32.gmra.mxu0 %v5679
    %v7370 = vpop.f32.mrf.mxu0
    %v7371 = vadd.f32 %v7162, %v7370
    %7372 = vmatmul.f32.gmra.mxu0 %v5688
    %v7373 = vpop.f32.mrf.mxu0
    %v7374 = vadd.f32 %v7165, %v7373
    %7375 = vmatmul.f32.gmra.mxu0 %v5697
    %v7376 = vpop.f32.mrf.mxu0
    %v7377 = vadd.f32 %v7168, %v7376
    %7378 = vmatmul.f32.gmra.mxu0 %v5706
    %v7379 = vpop.f32.mrf.mxu0
    %v7380 = vadd.f32 %v7171, %v7379
    %7381 = vmatmul.f32.gmra.mxu0 %v5715
    %v7382 = vpop.f32.mrf.mxu0
    %v7383 = vadd.f32 %v7174, %v7382
    %7384 = vmatmul.f32.gmra.mxu0 %v5724
    %v7385 = vpop.f32.mrf.mxu0
    %v7386 = vadd.f32 %v7177, %v7385
    %7387 = vmatmul.f32.gmra.mxu0 %v5733
    %v7388 = vpop.f32.mrf.mxu0
    %v7389 = vadd.f32 %v7180, %v7388
    %7390 = vmatmul.f32.gmra.mxu0 %v5742
    %v7391 = vpop.f32.mrf.mxu0
    %v7392 = vadd.f32 %v7183, %v7391
    %7393 = vmatmul.f32.gmra.mxu0 %v5751
    %v7394 = vpop.f32.mrf.mxu0
    %v7395 = vadd.f32 %v7186, %v7394
    %7396 = vmatmul.f32.gmra.mxu0 %v5760
    %v7397 = vpop.f32.mrf.mxu0
    %v7398 = vadd.f32 %v7189, %v7397
    %7399 = vmatmul.f32.gmra.mxu0 %v5769
    %v7400 = vpop.f32.mrf.mxu0
    %v7401 = vadd.f32 %v7192, %v7400
    %7402 = vmatmul.f32.gmra.mxu0 %v5778
    %v7403 = vpop.f32.mrf.mxu0
    %v7404 = vadd.f32 %v7195, %v7403
    %7405 = vmatmul.f32.gmra.mxu0 %v5787
    %v7406 = vpop.f32.mrf.mxu0
    %v7407 = vadd.f32 %v7198, %v7406
    %7408 = vmatmul.f32.gmra.mxu0 %v5796
    %v7409 = vpop.f32.mrf.mxu0
    %v7410 = vadd.f32 %v7201, %v7409
    %7411 = vmatmul.f32.gmra.mxu0 %v5805
    %v7412 = vpop.f32.mrf.mxu0
    %v7413 = vadd.f32 %v7204, %v7412
    %7414 = vdwg.mxu0
    %7415 = vmatpush.msra.mxu0 %v5935
    %7416 = vmatpush.msra.mxu0 %v5934
    %7417 = vmatpush.msra.mxu0 %v5933
    %7418 = vmatpush.msra.mxu0 %v5932
    %7419 = vmatpush.msra.mxu0 %v5931
    %7420 = vmatpush.msra.mxu0 %v5930
    %7421 = vmatpush.msra.mxu0 %v5929
    %7422 = vmatpush.msra.mxu0 %v5928
    %7423 = vmatpush.msra.mxu0 %v5927
    %7424 = vmatpush.msra.mxu0 %v5926
    %7425 = vmatpush.msra.mxu0 %v5925
    %7426 = vmatpush.msra.mxu0 %v5924
    %7427 = vmatpush.msra.mxu0 %v5923
    %7428 = vmatpush.msra.mxu0 %v5922
    %7429 = vmatpush.msra.mxu0 %v5921
    %7430 = vmatpush.msra.mxu0 %v5920
    %7431 = vmatmul.f32.gmra.mxu0 %v5239
    %v7432 = vpop.f32.mrf.mxu0
    %v7433 = vadd.f32 %v7224, %v7432
    %7434 = vmatmul.f32.gmra.mxu0 %v5248
    %v7435 = vpop.f32.mrf.mxu0
    %v7436 = vadd.f32 %v7227, %v7435
    %7437 = vmatmul.f32.gmra.mxu0 %v5257
    %v7438 = vpop.f32.mrf.mxu0
    %v7439 = vadd.f32 %v7230, %v7438
    %7440 = vmatmul.f32.gmra.mxu0 %v5266
    %v7441 = vpop.f32.mrf.mxu0
    %v7442 = vadd.f32 %v7233, %v7441
    %7443 = vmatmul.f32.gmra.mxu0 %v5275
    %v7444 = vpop.f32.mrf.mxu0
    %v7445 = vadd.f32 %v7236, %v7444
    %7446 = vmatmul.f32.gmra.mxu0 %v5284
    %v7447 = vpop.f32.mrf.mxu0
    %v7448 = vadd.f32 %v7239, %v7447
    %7449 = vmatmul.f32.gmra.mxu0 %v5293
    %v7450 = vpop.f32.mrf.mxu0
    %v7451 = vadd.f32 %v7242, %v7450
    %7452 = vmatmul.f32.gmra.mxu0 %v5302
    %v7453 = vpop.f32.mrf.mxu0
    %v7454 = vadd.f32 %v7245, %v7453
    %7455 = vmatmul.f32.gmra.mxu0 %v5311
    %v7456 = vpop.f32.mrf.mxu0
    %v7457 = vadd.f32 %v7248, %v7456
    %7458 = vmatmul.f32.gmra.mxu0 %v5320
    %v7459 = vpop.f32.mrf.mxu0
    %v7460 = vadd.f32 %v7251, %v7459
    %7461 = vmatmul.f32.gmra.mxu0 %v5329
    %v7462 = vpop.f32.mrf.mxu0
    %v7463 = vadd.f32 %v7254, %v7462
    %7464 = vmatmul.f32.gmra.mxu0 %v5338
    %v7465 = vpop.f32.mrf.mxu0
    %v7466 = vadd.f32 %v7257, %v7465
    %7467 = vmatmul.f32.gmra.mxu0 %v5347
    %v7468 = vpop.f32.mrf.mxu0
    %v7469 = vadd.f32 %v7260, %v7468
    %7470 = vmatmul.f32.gmra.mxu0 %v5356
    %v7471 = vpop.f32.mrf.mxu0
    %v7472 = vadd.f32 %v7263, %v7471
    %7473 = vmatmul.f32.gmra.mxu0 %v5365
    %v7474 = vpop.f32.mrf.mxu0
    %v7475 = vadd.f32 %v7266, %v7474
    %7476 = vmatmul.f32.gmra.mxu0 %v5374
    %v7477 = vpop.f32.mrf.mxu0
    %v7478 = vadd.f32 %v7269, %v7477
    %7479 = vmatmul.f32.gmra.mxu0 %v5383
    %v7480 = vpop.f32.mrf.mxu0
    %v7481 = vadd.f32 %v7272, %v7480
    %7482 = vmatmul.f32.gmra.mxu0 %v5392
    %v7483 = vpop.f32.mrf.mxu0
    %v7484 = vadd.f32 %v7275, %v7483
    %7485 = vmatmul.f32.gmra.mxu0 %v5401
    %v7486 = vpop.f32.mrf.mxu0
    %v7487 = vadd.f32 %v7278, %v7486
    %7488 = vmatmul.f32.gmra.mxu0 %v5410
    %v7489 = vpop.f32.mrf.mxu0
    %v7490 = vadd.f32 %v7281, %v7489
    %7491 = vmatmul.f32.gmra.mxu0 %v5419
    %v7492 = vpop.f32.mrf.mxu0
    %v7493 = vadd.f32 %v7284, %v7492
    %7494 = vmatmul.f32.gmra.mxu0 %v5428
    %v7495 = vpop.f32.mrf.mxu0
    %v7496 = vadd.f32 %v7287, %v7495
    %7497 = vmatmul.f32.gmra.mxu0 %v5437
    %v7498 = vpop.f32.mrf.mxu0
    %v7499 = vadd.f32 %v7290, %v7498
    %7500 = vmatmul.f32.gmra.mxu0 %v5446
    %v7501 = vpop.f32.mrf.mxu0
    %v7502 = vadd.f32 %v7293, %v7501
    %7503 = vmatmul.f32.gmra.mxu0 %v5455
    %v7504 = vpop.f32.mrf.mxu0
    %v7505 = vadd.f32 %v7296, %v7504
    %7506 = vmatmul.f32.gmra.mxu0 %v5464
    %v7507 = vpop.f32.mrf.mxu0
    %v7508 = vadd.f32 %v7299, %v7507
    %7509 = vmatmul.f32.gmra.mxu0 %v5473
    %v7510 = vpop.f32.mrf.mxu0
    %v7511 = vadd.f32 %v7302, %v7510
    %7512 = vmatmul.f32.gmra.mxu0 %v5482
    %v7513 = vpop.f32.mrf.mxu0
    %v7514 = vadd.f32 %v7305, %v7513
    %7515 = vmatmul.f32.gmra.mxu0 %v5491
    %v7516 = vpop.f32.mrf.mxu0
    %v7517 = vadd.f32 %v7308, %v7516
    %7518 = vmatmul.f32.gmra.mxu0 %v5500
    %v7519 = vpop.f32.mrf.mxu0
    %v7520 = vadd.f32 %v7311, %v7519
    %7521 = vmatmul.f32.gmra.mxu0 %v5509
    %v7522 = vpop.f32.mrf.mxu0
    %v7523 = vadd.f32 %v7314, %v7522
    %7524 = vmatmul.f32.gmra.mxu0 %v5518
    %v7525 = vpop.f32.mrf.mxu0
    %v7526 = vadd.f32 %v7317, %v7525
    %7527 = vmatmul.f32.gmra.mxu0 %v5527
    %v7528 = vpop.f32.mrf.mxu0
    %v7529 = vadd.f32 %v7320, %v7528
    %7530 = vmatmul.f32.gmra.mxu0 %v5536
    %v7531 = vpop.f32.mrf.mxu0
    %v7532 = vadd.f32 %v7323, %v7531
    %7533 = vmatmul.f32.gmra.mxu0 %v5545
    %v7534 = vpop.f32.mrf.mxu0
    %v7535 = vadd.f32 %v7326, %v7534
    %7536 = vmatmul.f32.gmra.mxu0 %v5554
    %v7537 = vpop.f32.mrf.mxu0
    %v7538 = vadd.f32 %v7329, %v7537
    %7539 = vmatmul.f32.gmra.mxu0 %v5563
    %v7540 = vpop.f32.mrf.mxu0
    %v7541 = vadd.f32 %v7332, %v7540
    %7542 = vmatmul.f32.gmra.mxu0 %v5572
    %v7543 = vpop.f32.mrf.mxu0
    %v7544 = vadd.f32 %v7335, %v7543
    %7545 = vmatmul.f32.gmra.mxu0 %v5581
    %v7546 = vpop.f32.mrf.mxu0
    %v7547 = vadd.f32 %v7338, %v7546
    %7548 = vmatmul.f32.gmra.mxu0 %v5590
    %v7549 = vpop.f32.mrf.mxu0
    %v7550 = vadd.f32 %v7341, %v7549
    %7551 = vmatmul.f32.gmra.mxu0 %v5599
    %v7552 = vpop.f32.mrf.mxu0
    %v7553 = vadd.f32 %v7344, %v7552
    %7554 = vmatmul.f32.gmra.mxu0 %v5608
    %v7555 = vpop.f32.mrf.mxu0
    %v7556 = vadd.f32 %v7347, %v7555
    %7557 = vmatmul.f32.gmra.mxu0 %v5617
    %v7558 = vpop.f32.mrf.mxu0
    %v7559 = vadd.f32 %v7350, %v7558
    %7560 = vmatmul.f32.gmra.mxu0 %v5626
    %v7561 = vpop.f32.mrf.mxu0
    %v7562 = vadd.f32 %v7353, %v7561
    %7563 = vmatmul.f32.gmra.mxu0 %v5635
    %v7564 = vpop.f32.mrf.mxu0
    %v7565 = vadd.f32 %v7356, %v7564
    %7566 = vmatmul.f32.gmra.mxu0 %v5644
    %v7567 = vpop.f32.mrf.mxu0
    %v7568 = vadd.f32 %v7359, %v7567
    %7569 = vmatmul.f32.gmra.mxu0 %v5653
    %v7570 = vpop.f32.mrf.mxu0
    %v7571 = vadd.f32 %v7362, %v7570
    %7572 = vmatmul.f32.gmra.mxu0 %v5662
    %v7573 = vpop.f32.mrf.mxu0
    %v7574 = vadd.f32 %v7365, %v7573
    %7575 = vmatmul.f32.gmra.mxu0 %v5671
    %v7576 = vpop.f32.mrf.mxu0
    %v7577 = vadd.f32 %v7368, %v7576
    %7578 = vmatmul.f32.gmra.mxu0 %v5680
    %v7579 = vpop.f32.mrf.mxu0
    %v7580 = vadd.f32 %v7371, %v7579
    %7581 = vmatmul.f32.gmra.mxu0 %v5689
    %v7582 = vpop.f32.mrf.mxu0
    %v7583 = vadd.f32 %v7374, %v7582
    %7584 = vmatmul.f32.gmra.mxu0 %v5698
    %v7585 = vpop.f32.mrf.mxu0
    %v7586 = vadd.f32 %v7377, %v7585
    %7587 = vmatmul.f32.gmra.mxu0 %v5707
    %v7588 = vpop.f32.mrf.mxu0
    %v7589 = vadd.f32 %v7380, %v7588
    %7590 = vmatmul.f32.gmra.mxu0 %v5716
    %v7591 = vpop.f32.mrf.mxu0
    %v7592 = vadd.f32 %v7383, %v7591
    %7593 = vmatmul.f32.gmra.mxu0 %v5725
    %v7594 = vpop.f32.mrf.mxu0
    %v7595 = vadd.f32 %v7386, %v7594
    %7596 = vmatmul.f32.gmra.mxu0 %v5734
    %v7597 = vpop.f32.mrf.mxu0
    %v7598 = vadd.f32 %v7389, %v7597
    %7599 = vmatmul.f32.gmra.mxu0 %v5743
    %v7600 = vpop.f32.mrf.mxu0
    %v7601 = vadd.f32 %v7392, %v7600
    %7602 = vmatmul.f32.gmra.mxu0 %v5752
    %v7603 = vpop.f32.mrf.mxu0
    %v7604 = vadd.f32 %v7395, %v7603
    %7605 = vmatmul.f32.gmra.mxu0 %v5761
    %v7606 = vpop.f32.mrf.mxu0
    %v7607 = vadd.f32 %v7398, %v7606
    %7608 = vmatmul.f32.gmra.mxu0 %v5770
    %v7609 = vpop.f32.mrf.mxu0
    %v7610 = vadd.f32 %v7401, %v7609
    %7611 = vmatmul.f32.gmra.mxu0 %v5779
    %v7612 = vpop.f32.mrf.mxu0
    %v7613 = vadd.f32 %v7404, %v7612
    %7614 = vmatmul.f32.gmra.mxu0 %v5788
    %v7615 = vpop.f32.mrf.mxu0
    %v7616 = vadd.f32 %v7407, %v7615
    %7617 = vmatmul.f32.gmra.mxu0 %v5797
    %v7618 = vpop.f32.mrf.mxu0
    %v7619 = vadd.f32 %v7410, %v7618
    %7620 = vmatmul.f32.gmra.mxu0 %v5806
    %v7621 = vpop.f32.mrf.mxu0
    %v7622 = vadd.f32 %v7413, %v7621
    %7623 = vdwg.mxu0
    %7624 = vmatpush.msra.mxu0 %v5951
    %7625 = vmatpush.msra.mxu0 %v5950
    %7626 = vmatpush.msra.mxu0 %v5949
    %7627 = vmatpush.msra.mxu0 %v5948
    %7628 = vmatpush.msra.mxu0 %v5947
    %7629 = vmatpush.msra.mxu0 %v5946
    %7630 = vmatpush.msra.mxu0 %v5945
    %7631 = vmatpush.msra.mxu0 %v5944
    %7632 = vmatpush.msra.mxu0 %v5943
    %7633 = vmatpush.msra.mxu0 %v5942
    %7634 = vmatpush.msra.mxu0 %v5941
    %7635 = vmatpush.msra.mxu0 %v5940
    %7636 = vmatpush.msra.mxu0 %v5939
    %7637 = vmatpush.msra.mxu0 %v5938
    %7638 = vmatpush.msra.mxu0 %v5937
    %7639 = vmatpush.msra.mxu0 %v5936
    %7640 = vmatmul.f32.gmra.mxu0 %v5240
    %v7641 = vpop.f32.mrf.mxu0
    %v7642 = vadd.f32 %v7433, %v7641
    %7643 = vmatmul.f32.gmra.mxu0 %v5249
    %v7644 = vpop.f32.mrf.mxu0
    %v7645 = vadd.f32 %v7436, %v7644
    %7646 = vmatmul.f32.gmra.mxu0 %v5258
    %v7647 = vpop.f32.mrf.mxu0
    %v7648 = vadd.f32 %v7439, %v7647
    %7649 = vmatmul.f32.gmra.mxu0 %v5267
    %v7650 = vpop.f32.mrf.mxu0
    %v7651 = vadd.f32 %v7442, %v7650
    %7652 = vmatmul.f32.gmra.mxu0 %v5276
    %v7653 = vpop.f32.mrf.mxu0
    %v7654 = vadd.f32 %v7445, %v7653
    %7655 = vmatmul.f32.gmra.mxu0 %v5285
    %v7656 = vpop.f32.mrf.mxu0
    %v7657 = vadd.f32 %v7448, %v7656
    %7658 = vmatmul.f32.gmra.mxu0 %v5294
    %v7659 = vpop.f32.mrf.mxu0
    %v7660 = vadd.f32 %v7451, %v7659
    %7661 = vmatmul.f32.gmra.mxu0 %v5303
    %v7662 = vpop.f32.mrf.mxu0
    %v7663 = vadd.f32 %v7454, %v7662
    %7664 = vmatmul.f32.gmra.mxu0 %v5312
    %v7665 = vpop.f32.mrf.mxu0
    %v7666 = vadd.f32 %v7457, %v7665
    %7667 = vmatmul.f32.gmra.mxu0 %v5321
    %v7668 = vpop.f32.mrf.mxu0
    %v7669 = vadd.f32 %v7460, %v7668
    %7670 = vmatmul.f32.gmra.mxu0 %v5330
    %v7671 = vpop.f32.mrf.mxu0
    %v7672 = vadd.f32 %v7463, %v7671
    %7673 = vmatmul.f32.gmra.mxu0 %v5339
    %v7674 = vpop.f32.mrf.mxu0
    %v7675 = vadd.f32 %v7466, %v7674
    %7676 = vmatmul.f32.gmra.mxu0 %v5348
    %v7677 = vpop.f32.mrf.mxu0
    %v7678 = vadd.f32 %v7469, %v7677
    %7679 = vmatmul.f32.gmra.mxu0 %v5357
    %v7680 = vpop.f32.mrf.mxu0
    %v7681 = vadd.f32 %v7472, %v7680
    %7682 = vmatmul.f32.gmra.mxu0 %v5366
    %v7683 = vpop.f32.mrf.mxu0
    %v7684 = vadd.f32 %v7475, %v7683
    %7685 = vmatmul.f32.gmra.mxu0 %v5375
    %v7686 = vpop.f32.mrf.mxu0
    %v7687 = vadd.f32 %v7478, %v7686
    %7688 = vmatmul.f32.gmra.mxu0 %v5384
    %v7689 = vpop.f32.mrf.mxu0
    %v7690 = vadd.f32 %v7481, %v7689
    %7691 = vmatmul.f32.gmra.mxu0 %v5393
    %v7692 = vpop.f32.mrf.mxu0
    %v7693 = vadd.f32 %v7484, %v7692
    %7694 = vmatmul.f32.gmra.mxu0 %v5402
    %v7695 = vpop.f32.mrf.mxu0
    %v7696 = vadd.f32 %v7487, %v7695
    %7697 = vmatmul.f32.gmra.mxu0 %v5411
    %v7698 = vpop.f32.mrf.mxu0
    %v7699 = vadd.f32 %v7490, %v7698
    %7700 = vmatmul.f32.gmra.mxu0 %v5420
    %v7701 = vpop.f32.mrf.mxu0
    %v7702 = vadd.f32 %v7493, %v7701
    %7703 = vmatmul.f32.gmra.mxu0 %v5429
    %v7704 = vpop.f32.mrf.mxu0
    %v7705 = vadd.f32 %v7496, %v7704
    %7706 = vmatmul.f32.gmra.mxu0 %v5438
    %v7707 = vpop.f32.mrf.mxu0
    %v7708 = vadd.f32 %v7499, %v7707
    %7709 = vmatmul.f32.gmra.mxu0 %v5447
    %v7710 = vpop.f32.mrf.mxu0
    %v7711 = vadd.f32 %v7502, %v7710
    %7712 = vmatmul.f32.gmra.mxu0 %v5456
    %v7713 = vpop.f32.mrf.mxu0
    %v7714 = vadd.f32 %v7505, %v7713
    %7715 = vmatmul.f32.gmra.mxu0 %v5465
    %v7716 = vpop.f32.mrf.mxu0
    %v7717 = vadd.f32 %v7508, %v7716
    %7718 = vmatmul.f32.gmra.mxu0 %v5474
    %v7719 = vpop.f32.mrf.mxu0
    %v7720 = vadd.f32 %v7511, %v7719
    %7721 = vmatmul.f32.gmra.mxu0 %v5483
    %v7722 = vpop.f32.mrf.mxu0
    %v7723 = vadd.f32 %v7514, %v7722
    %7724 = vmatmul.f32.gmra.mxu0 %v5492
    %v7725 = vpop.f32.mrf.mxu0
    %v7726 = vadd.f32 %v7517, %v7725
    %7727 = vmatmul.f32.gmra.mxu0 %v5501
    %v7728 = vpop.f32.mrf.mxu0
    %v7729 = vadd.f32 %v7520, %v7728
    %7730 = vmatmul.f32.gmra.mxu0 %v5510
    %v7731 = vpop.f32.mrf.mxu0
    %v7732 = vadd.f32 %v7523, %v7731
    %7733 = vmatmul.f32.gmra.mxu0 %v5519
    %v7734 = vpop.f32.mrf.mxu0
    %v7735 = vadd.f32 %v7526, %v7734
    %7736 = vmatmul.f32.gmra.mxu0 %v5528
    %v7737 = vpop.f32.mrf.mxu0
    %v7738 = vadd.f32 %v7529, %v7737
    %7739 = vmatmul.f32.gmra.mxu0 %v5537
    %v7740 = vpop.f32.mrf.mxu0
    %v7741 = vadd.f32 %v7532, %v7740
    %7742 = vmatmul.f32.gmra.mxu0 %v5546
    %v7743 = vpop.f32.mrf.mxu0
    %v7744 = vadd.f32 %v7535, %v7743
    %7745 = vmatmul.f32.gmra.mxu0 %v5555
    %v7746 = vpop.f32.mrf.mxu0
    %v7747 = vadd.f32 %v7538, %v7746
    %7748 = vmatmul.f32.gmra.mxu0 %v5564
    %v7749 = vpop.f32.mrf.mxu0
    %v7750 = vadd.f32 %v7541, %v7749
    %7751 = vmatmul.f32.gmra.mxu0 %v5573
    %v7752 = vpop.f32.mrf.mxu0
    %v7753 = vadd.f32 %v7544, %v7752
    %7754 = vmatmul.f32.gmra.mxu0 %v5582
    %v7755 = vpop.f32.mrf.mxu0
    %v7756 = vadd.f32 %v7547, %v7755
    %7757 = vmatmul.f32.gmra.mxu0 %v5591
    %v7758 = vpop.f32.mrf.mxu0
    %v7759 = vadd.f32 %v7550, %v7758
    %7760 = vmatmul.f32.gmra.mxu0 %v5600
    %v7761 = vpop.f32.mrf.mxu0
    %v7762 = vadd.f32 %v7553, %v7761
    %7763 = vmatmul.f32.gmra.mxu0 %v5609
    %v7764 = vpop.f32.mrf.mxu0
    %v7765 = vadd.f32 %v7556, %v7764
    %7766 = vmatmul.f32.gmra.mxu0 %v5618
    %v7767 = vpop.f32.mrf.mxu0
    %v7768 = vadd.f32 %v7559, %v7767
    %7769 = vmatmul.f32.gmra.mxu0 %v5627
    %v7770 = vpop.f32.mrf.mxu0
    %v7771 = vadd.f32 %v7562, %v7770
    %7772 = vmatmul.f32.gmra.mxu0 %v5636
    %v7773 = vpop.f32.mrf.mxu0
    %v7774 = vadd.f32 %v7565, %v7773
    %7775 = vmatmul.f32.gmra.mxu0 %v5645
    %v7776 = vpop.f32.mrf.mxu0
    %v7777 = vadd.f32 %v7568, %v7776
    %7778 = vmatmul.f32.gmra.mxu0 %v5654
    %v7779 = vpop.f32.mrf.mxu0
    %v7780 = vadd.f32 %v7571, %v7779
    %7781 = vmatmul.f32.gmra.mxu0 %v5663
    %v7782 = vpop.f32.mrf.mxu0
    %v7783 = vadd.f32 %v7574, %v7782
    %7784 = vmatmul.f32.gmra.mxu0 %v5672
    %v7785 = vpop.f32.mrf.mxu0
    %v7786 = vadd.f32 %v7577, %v7785
    %7787 = vmatmul.f32.gmra.mxu0 %v5681
    %v7788 = vpop.f32.mrf.mxu0
    %v7789 = vadd.f32 %v7580, %v7788
    %7790 = vmatmul.f32.gmra.mxu0 %v5690
    %v7791 = vpop.f32.mrf.mxu0
    %v7792 = vadd.f32 %v7583, %v7791
    %7793 = vmatmul.f32.gmra.mxu0 %v5699
    %v7794 = vpop.f32.mrf.mxu0
    %v7795 = vadd.f32 %v7586, %v7794
    %7796 = vmatmul.f32.gmra.mxu0 %v5708
    %v7797 = vpop.f32.mrf.mxu0
    %v7798 = vadd.f32 %v7589, %v7797
    %7799 = vmatmul.f32.gmra.mxu0 %v5717
    %v7800 = vpop.f32.mrf.mxu0
    %v7801 = vadd.f32 %v7592, %v7800
    %7802 = vmatmul.f32.gmra.mxu0 %v5726
    %v7803 = vpop.f32.mrf.mxu0
    %v7804 = vadd.f32 %v7595, %v7803
    %7805 = vmatmul.f32.gmra.mxu0 %v5735
    %v7806 = vpop.f32.mrf.mxu0
    %v7807 = vadd.f32 %v7598, %v7806
    %7808 = vmatmul.f32.gmra.mxu0 %v5744
    %v7809 = vpop.f32.mrf.mxu0
    %v7810 = vadd.f32 %v7601, %v7809
    %7811 = vmatmul.f32.gmra.mxu0 %v5753
    %v7812 = vpop.f32.mrf.mxu0
    %v7813 = vadd.f32 %v7604, %v7812
    %7814 = vmatmul.f32.gmra.mxu0 %v5762
    %v7815 = vpop.f32.mrf.mxu0
    %v7816 = vadd.f32 %v7607, %v7815
    %7817 = vmatmul.f32.gmra.mxu0 %v5771
    %v7818 = vpop.f32.mrf.mxu0
    %v7819 = vadd.f32 %v7610, %v7818
    %7820 = vmatmul.f32.gmra.mxu0 %v5780
    %v7821 = vpop.f32.mrf.mxu0
    %v7822 = vadd.f32 %v7613, %v7821
    %7823 = vmatmul.f32.gmra.mxu0 %v5789
    %v7824 = vpop.f32.mrf.mxu0
    %v7825 = vadd.f32 %v7616, %v7824
    %7826 = vmatmul.f32.gmra.mxu0 %v5798
    %v7827 = vpop.f32.mrf.mxu0
    %v7828 = vadd.f32 %v7619, %v7827
    %7829 = vmatmul.f32.gmra.mxu0 %v5807
    %v7830 = vpop.f32.mrf.mxu0
    %v7831 = vadd.f32 %v7622, %v7830
    %7832 = vdwg.mxu0
    %7833 = vst [vmem:[#allocation9] sm:$0xff] %v7642
    %7834 = vst [vmem:[#allocation9 + $0x8] sm:$0xff] %v7645
    %7835 = vst [vmem:[#allocation9 + $0x10] sm:$0xff] %v7648
    %7836 = vst [vmem:[#allocation9 + $0x18] sm:$0xff] %v7651
    %7837 = vst [vmem:[#allocation9 + $0x20] sm:$0xff] %v7654
    %7838 = vst [vmem:[#allocation9 + $0x28] sm:$0xff] %v7657
    %7839 = vst [vmem:[#allocation9 + $0x30] sm:$0xff] %v7660
    %7840 = vst [vmem:[#allocation9 + $0x38] sm:$0xff] %v7663
    %7841 = vst [vmem:[#allocation9 + $0x40] sm:$0xff] %v7666
    %7842 = vst [vmem:[#allocation9 + $0x48] sm:$0xff] %v7669
    %7843 = vst [vmem:[#allocation9 + $0x50] sm:$0xff] %v7672
    %7844 = vst [vmem:[#allocation9 + $0x58] sm:$0xff] %v7675
    %7845 = vst [vmem:[#allocation9 + $0x60] sm:$0xff] %v7678
    %7846 = vst [vmem:[#allocation9 + $0x68] sm:$0xff] %v7681
    %7847 = vst [vmem:[#allocation9 + $0x70] sm:$0xff] %v7684
    %7848 = vst [vmem:[#allocation9 + $0x78] sm:$0xff] %v7687
    %7849 = vst [vmem:[#allocation9 + $0x80] sm:$0xff] %v7690
    %7850 = vst [vmem:[#allocation9 + $0x88] sm:$0xff] %v7693
    %7851 = vst [vmem:[#allocation9 + $0x90] sm:$0xff] %v7696
    %7852 = vst [vmem:[#allocation9 + $0x98] sm:$0xff] %v7699
    %7853 = vst [vmem:[#allocation9 + $0xa0] sm:$0xff] %v7702
    %7854 = vst [vmem:[#allocation9 + $0xa8] sm:$0xff] %v7705
    %7855 = vst [vmem:[#allocation9 + $0xb0] sm:$0xff] %v7708
    %7856 = vst [vmem:[#allocation9 + $0xb8] sm:$0xff] %v7711
    %7857 = vst [vmem:[#allocation9 + $0xc0] sm:$0xff] %v7714
    %7858 = vst [vmem:[#allocation9 + $0xc8] sm:$0xff] %v7717
    %7859 = vst [vmem:[#allocation9 + $0xd0] sm:$0xff] %v7720
    %7860 = vst [vmem:[#allocation9 + $0xd8] sm:$0xff] %v7723
    %7861 = vst [vmem:[#allocation9 + $0xe0] sm:$0xff] %v7726
    %7862 = vst [vmem:[#allocation9 + $0xe8] sm:$0xff] %v7729
    %7863 = vst [vmem:[#allocation9 + $0xf0] sm:$0xff] %v7732
    %7864 = vst [vmem:[#allocation9 + $0xf8] sm:$0xff] %v7735
    %7865 = vst [vmem:[#allocation9 + $0x100] sm:$0xff] %v7738
    %7866 = vst [vmem:[#allocation9 + $0x108] sm:$0xff] %v7741
    %7867 = vst [vmem:[#allocation9 + $0x110] sm:$0xff] %v7744
    %7868 = vst [vmem:[#allocation9 + $0x118] sm:$0xff] %v7747
    %7869 = vst [vmem:[#allocation9 + $0x120] sm:$0xff] %v7750
    %7870 = vst [vmem:[#allocation9 + $0x128] sm:$0xff] %v7753
    %7871 = vst [vmem:[#allocation9 + $0x130] sm:$0xff] %v7756
    %7872 = vst [vmem:[#allocation9 + $0x138] sm:$0xff] %v7759
    %7873 = vst [vmem:[#allocation9 + $0x140] sm:$0xff] %v7762
    %7874 = vst [vmem:[#allocation9 + $0x148] sm:$0xff] %v7765
    %7875 = vst [vmem:[#allocation9 + $0x150] sm:$0xff] %v7768
    %7876 = vst [vmem:[#allocation9 + $0x158] sm:$0xff] %v7771
    %7877 = vst [vmem:[#allocation9 + $0x160] sm:$0xff] %v7774
    %7878 = vst [vmem:[#allocation9 + $0x168] sm:$0xff] %v7777
    %7879 = vst [vmem:[#allocation9 + $0x170] sm:$0xff] %v7780
    %7880 = vst [vmem:[#allocation9 + $0x178] sm:$0xff] %v7783
    %7881 = vst [vmem:[#allocation9 + $0x180] sm:$0xff] %v7786
    %7882 = vst [vmem:[#allocation9 + $0x188] sm:$0xff] %v7789
    %7883 = vst [vmem:[#allocation9 + $0x190] sm:$0xff] %v7792
    %7884 = vst [vmem:[#allocation9 + $0x198] sm:$0xff] %v7795
    %7885 = vst [vmem:[#allocation9 + $0x1a0] sm:$0xff] %v7798
    %7886 = vst [vmem:[#allocation9 + $0x1a8] sm:$0xff] %v7801
    %7887 = vst [vmem:[#allocation9 + $0x1b0] sm:$0xff] %v7804
    %7888 = vst [vmem:[#allocation9 + $0x1b8] sm:$0xff] %v7807
    %7889 = vst [vmem:[#allocation9 + $0x1c0] sm:$0xff] %v7810
    %7890 = vst [vmem:[#allocation9 + $0x1c8] sm:$0xff] %v7813
    %7891 = vst [vmem:[#allocation9 + $0x1d0] sm:$0xff] %v7816
    %7892 = vst [vmem:[#allocation9 + $0x1d8] sm:$0xff] %v7819
    %7893 = vst [vmem:[#allocation9 + $0x1e0] sm:$0xff] %v7822
    %7894 = vst [vmem:[#allocation9 + $0x1e8] sm:$0xff] %v7825
    %7895 = vst [vmem:[#allocation9 + $0x1f0] sm:$0xff] %v7828
    %7896 = vst [vmem:[#allocation9 + $0x1f8] sm:$0xff] %v7831
    // Predicated region
    $region22: #{tpu_custom_call.1} parent=1 // pred_check
      _
    $region23: #{tpu_custom_call.1} parent=1 // pred_check_branch
      %7898 = sbr.rel (0) target = $region25
    $region24: #{tpu_custom_call.1} parent=1 // pred_region
      %7900 = vsyncadd [#allocation6], 0
      %s7901 = sshll.u32 [#allocation9], 4
      %s7902 = int_to_ptr.vmem [resolvable:$true] %s7901
      %s7903 = sshll.u32 %s2, 4
      %s7904 = int_to_ptr.hbm [resolvable:$true] %s7903
      %7909 = dma.vmem_to_hbm [thread:$0]  %s7902, 8192, %s7904, [#allocation6], 128, 128, 8
    $region25: #{tpu_custom_call.1} parent=1 // pred_fallthru
      _
    // Predicated region
    $region26: #{tpu_custom_call.1} parent=1 // pred_check
      _
    $region27: #{tpu_custom_call.1} parent=1 // pred_check_branch
      %7911 = sbr.rel (0) target = $region29
    $region28: #{tpu_custom_call.1} parent=1 // pred_region
      %7913 = dma.done [#allocation6], 8192
    $region29: #{tpu_custom_call.1} parent=1 // pred_fallthru
      _
    %7914 = vsyncpa [#allocation5], 1
    %7915 = vsyncpa [#allocation8], 1
    %7916 = vsyncpa [#allocation6], 1

</llo_original>
